<compile_context>
chip_gen: v6e
topology: v6e:2x2x1
jax: 0.10.0
libtpu: 0.0.40
codegen_flags: <defaults>
</compile_context>

<pallas_src>
import functools

import jax
import jax.numpy as jnp
import numpy as np
from jax import lax
from jax.experimental import pallas as pl
from jax.experimental.pallas import tpu as pltpu


def _round_up(x, m):
    return (x + m - 1) // m * m


def _bf16_gates_supported():
    """bf16 VPU/EUP exists on v6e/v7x; on v5e and older it only adds casts."""
    try:
        kind = jax.devices()[0].device_kind.lower()
    except Exception:
        return True
    return not any(tag in kind for tag in ("v2", "v3", "v4", "v5"))


def lstm_classifier_kernel(x_ref, wx_ref, b_ref, wh_hbm,
                           w1_hbm, b1_ref, w2_hbm, b2_ref,
                           out_ref,
                           gx_scr, wh_vmem, w1_vmem, w2_vmem, sems,
                           *, seq_len, batch_p, num_labels,
                           use_bf16_gates, unroll):
    """Whole forward in one invocation.

    x_ref   : (T*Bp, Dinp)   bf16  n-gram inputs, time-major, flattened (VMEM)
    wx_ref  : (Dinp, 4*Hp)   bf16  fused input->gate weights i|f|g|o     (VMEM)
    b_ref   : (1, 4*Hp)      f32   fused gate bias                       (VMEM)
    wh_hbm  : (Hp, 4*Hp)     bf16  fused hidden->gate weights            (HBM)
    w1_hbm  : (Hp, Mp)  bf16 (HBM),  b1_ref : (1, Mp) f32 (VMEM)   head layer 1
    w2_hbm  : (Mp, Lp)  bf16 (HBM),  b2_ref : (1, Lp) f32 (VMEM)   head layer 2
    out_ref : (Bp, Lp)       f32   masked log-softmax output
    gx_scr  : (T*Bp, 4*Hp)   f32   hoisted input-projection cache
    wh_vmem / w1_vmem / w2_vmem : VMEM landing buffers for the manual DMAs
    sems    : DMA semaphores (3,)
    """
    T = seq_len
    Bp = batch_p
    G4 = gx_scr.shape[1]
    Hp = G4 // 4
    act_dtype = jnp.bfloat16 if use_bf16_gates else jnp.float32

    # ---- start weight DMAs; they overlap with the hoisted projection ----
    wh_cp = pltpu.make_async_copy(wh_hbm, wh_vmem, sems.at[0])
    w1_cp = pltpu.make_async_copy(w1_hbm, w1_vmem, sems.at[1])
    w2_cp = pltpu.make_async_copy(w2_hbm, w2_vmem, sems.at[2])
    wh_cp.start()
    w1_cp.start()
    w2_cp.start()

    # ---- hoisted input projection: one large matmul for all time steps ----
    # Stored flat (T*Bp, 4*Hp): aligned, unmasked (8,128) store, no reshape.
    gx_scr[...] = (jnp.dot(x_ref[...], wx_ref[...],
                           preferred_element_type=jnp.float32) + b_ref[...])

    # Wh is first needed at the first recurrence step.
    wh_cp.wait()
    wh = wh_vmem[...]

    # ---- serial recurrence: only h_prev @ Wh (fused 4 gates) per step ----
    # Invariant keeping padded lanes inert: wx/wh/b padding is exactly zero,
    # so padded gate pre-activations are 0 -> g_g = tanh(0) = 0 and c starts
    # at 0, hence padded c/h/hsum lanes stay 0 for all t.
    def step(t, carry):
        h, c, hsum = carry
        row = pl.multiple_of(t * Bp, 8)
        g = (gx_scr[pl.ds(row, Bp), :] +
             jnp.dot(h.astype(wh.dtype), wh,
                     preferred_element_type=jnp.float32))
        ga = g.astype(act_dtype)                     # bf16 EUP on v6e/v7x
        i_g = jax.nn.sigmoid(ga[:, 0 * Hp:1 * Hp]).astype(jnp.float32)
        f_g = jax.nn.sigmoid(ga[:, 1 * Hp:2 * Hp]).astype(jnp.float32)
        g_g = jnp.tanh(ga[:, 2 * Hp:3 * Hp]).astype(jnp.float32)
        o_g = jax.nn.sigmoid(ga[:, 3 * Hp:4 * Hp]).astype(jnp.float32)
        c_new = f_g * c + i_g * g_g                  # f32 state
        h_new = o_g * jnp.tanh(c_new.astype(act_dtype)).astype(jnp.float32)
        return h_new, c_new, hsum + h_new

    zeros = jnp.zeros((Bp, Hp), jnp.float32)
    _, _, hsum = lax.fori_loop(0, T, step, (zeros, zeros, zeros),
                               unroll=unroll)

    # mean pooling over time == AvgPool2d((T, 1)) + squeeze
    pooled = hsum * (1.0 / T)

    # ---- two-layer sigmoid head (wait on each weight just before use) ----
    w1_cp.wait()
    z1 = jax.nn.sigmoid(
        jnp.dot(pooled.astype(w1_vmem.dtype), w1_vmem[...],
                preferred_element_type=jnp.float32) + b1_ref[...])
    w2_cp.wait()
    z2 = jax.nn.sigmoid(
        jnp.dot(z1.astype(w2_vmem.dtype), w2_vmem[...],
                preferred_element_type=jnp.float32) + b2_ref[...])

    # ---- LogSoftmax(dim=1), masked to the real label lanes ----
    Lp = out_ref.shape[1]
    lane = lax.broadcasted_iota(jnp.int32, (Bp, Lp), 1)
    valid = lane < num_labels
    zm = jnp.where(valid, z2, -jnp.inf)
    m = jnp.max(zm, axis=1, keepdims=True)
    lse = jnp.log(jnp.sum(jnp.where(valid, jnp.exp(z2 - m), 0.0),
                          axis=1, keepdims=True)) + m
    out_ref[...] = jnp.where(valid, z2 - lse, 0.0).astype(out_ref.dtype)


def build_ngram_inputs(indices, glove, T, n_gram):
    """Embedding lookup + faithful reproduction of the PyTorch n-gram logic.

    The PyTorch forward writes zeros into input[:, i - index, :] when
    i - index < 0, which (negative indexing) zeroes the LAST (n_gram - 1)
    time steps of the embedded input before they are consumed.  The per-step
    input is concat(x[t], x[t-1], ..., x[t-n_gram+1]) with zeros for t-k < 0.
    """
    B = indices.shape[0]
    E = glove.shape[1]
    emb = jnp.take(glove, indices, axis=0).astype(jnp.float32)    # (B, T, E)
    if n_gram > 1:
        emb = emb.at[:, T - (n_gram - 1):, :].set(0.0)
    parts = []
    for k in range(n_gram):
        shifted = jnp.concatenate(
            [jnp.zeros((B, k, E), jnp.float32), emb[:, :T - k, :]], axis=1)
        parts.append(shifted)
    x = jnp.concatenate(parts, axis=2)          # (B, T, E * n_gram)
    return jnp.transpose(x, (1, 0, 2))          # (T, B, Din) time-major


def pack_lstm_params(params, Hp, Dinp, Mp, Lp, matmul_dtype=jnp.bfloat16):
    """Fuse gate weights to (.., 4*Hp) and zero-pad every dim to lane multiples."""
    wx, wh, b = params["wx"], params["wh"], params["b"]
    w1, b1, w2, b2 = params["w1"], params["b1"], params["w2"], params["b2"]
    Din, H = wx.shape[1], wh.shape[-1]
    M, L = w2.shape

    wx4 = jnp.zeros((Dinp, 4 * Hp), jnp.float32)
    wh4 = jnp.zeros((Hp, 4 * Hp), jnp.float32)
    b4 = jnp.zeros((1, 4 * Hp), jnp.float32)
    for k in range(4):                               # gate order i, f, g, o
        wx4 = wx4.at[:Din, k * Hp:k * Hp + H].set(wx[k])
        wh4 = wh4.at[:H, k * Hp:k * Hp + H].set(wh[k])
        b4 = b4.at[:, k * Hp:k * Hp + H].set(b[k])

    w1p = jnp.zeros((Hp, Mp), jnp.float32).at[:H, :M].set(w1)
    b1p = jnp.zeros((1, Mp), jnp.float32).at[:, :M].set(b1)
    w2p = jnp.zeros((Mp, Lp), jnp.float32).at[:M, :L].set(w2)
    b2p = jnp.zeros((1, Lp), jnp.float32).at[:, :L].set(b2)

    return (wx4.astype(matmul_dtype), wh4.astype(matmul_dtype), b4,
            w1p.astype(matmul_dtype), b1p,
            w2p.astype(matmul_dtype), b2p)


def lstm_classifier_forward(indices, params, max_num_of_words, n_gram):
    glove = params["glove"]
    B, T = indices.shape
    assert T == max_num_of_words
    H = params["wh"].shape[-1]
    Din = params["wx"].shape[1]
    M = params["w1"].shape[1]
    L = params["w2"].shape[-1]

    # Pad to TPU-friendly extents: lanes multiple of 128, batch (sublane /
    # MXU-M) multiple of 8.  NOTE: each h@Wh step is weight-load bound, so
    # raising the served batch toward the MXU M width (128/256) is nearly free
    # throughput — Bp only tracks the actual request size here.
    Hp = _round_up(H, 128)
    Dinp = _round_up(Din, 128)
    Mp = _round_up(M, 128)
    Lp = _round_up(L, 128)
    Bp = max(_round_up(B, 8), 8)

    # Embedding gather + n-gram concat (JAX glue), then pad & cast for MXU.
    x = build_ngram_inputs(indices, glove, T, n_gram)              # (T, B, Din)
    xp = jnp.zeros((T, Bp, Dinp), jnp.float32).at[:, :B, :Din].set(x)
    xp = xp.reshape(T * Bp, Dinp).astype(jnp.bfloat16)

    wx4, wh4, b4, w1p, b1p, w2p, b2p = pack_lstm_params(params, Hp, Dinp, Mp, Lp)

    use_bf16_gates = _bf16_gates_supported()
    unroll = True if T <= 16 else 4

    kernel = functools.partial(
        lstm_classifier_kernel,
        seq_len=T, batch_p=Bp, num_labels=L,
        use_bf16_gates=use_bf16_gates, unroll=unroll)

    vmem = pl.BlockSpec(memory_space=pltpu.MemorySpace.VMEM)
    hbm = pl.BlockSpec(memory_space=pl.ANY)      # manual DMA inside the kernel

    flops = (2 * T * Bp * Dinp * 4 * Hp          # hoisted X @ Wx
             + 2 * T * Bp * Hp * 4 * Hp          # recurrence h @ Wh
             + 2 * Bp * Hp * Mp + 2 * Bp * Mp * Lp)
    transcendentals = 5 * T * Bp * Hp + Bp * (Mp + 2 * Lp)
    bytes_accessed = ((T * Bp * Dinp + Dinp * 4 * Hp + Hp * 4 * Hp
                       + Hp * Mp + Mp * Lp) * 2              # bf16 operands
                      + (4 * Hp + Mp + Lp) * 4               # f32 biases
                      + Bp * Lp * 4)                          # f32 output

    out = pl.pallas_call(
        kernel,
        out_shape=jax.ShapeDtypeStruct((Bp, Lp), jnp.float32),
        in_specs=[vmem, vmem, vmem, hbm, hbm, vmem, hbm, vmem],
        out_specs=vmem,
        scratch_shapes=[
            pltpu.VMEM((T * Bp, 4 * Hp), jnp.float32),   # hoisted X@Wx cache
            pltpu.VMEM((Hp, 4 * Hp), jnp.bfloat16),      # Wh landing buffer
            pltpu.VMEM((Hp, Mp), jnp.bfloat16),          # W1 landing buffer
            pltpu.VMEM((Mp, Lp), jnp.bfloat16),          # W2 landing buffer
            pltpu.SemaphoreType.DMA((3,)),
        ],
        cost_estimate=pl.CostEstimate(flops=flops,
                                      transcendentals=transcendentals,
                                      bytes_accessed=bytes_accessed),
    )(xp, wx4, b4, wh4, w1p, b1p, w2p, b2p)

    return out[:B, :L]


def reference_forward(indices, params, T, n_gram):
    """Pure-JAX f32 reference mirroring the PyTorch forward (for validation)."""
    glove = params["glove"]
    wx, wh, b = params["wx"], params["wh"], params["b"]
    w1, b1 = params["w1"], params["b1"]
    w2, b2 = params["w2"], params["b2"]
    B = indices.shape[0]
    E = glove.shape[1]
    H = wh.shape[-1]

    emb = jnp.take(glove, indices, axis=0).astype(jnp.float32)
    if n_gram > 1:
        emb = emb.at[:, T - (n_gram - 1):, :].set(0.0)
    h = jnp.zeros((B, H), jnp.float32)
    c = jnp.zeros((B, H), jnp.float32)
    hs = []
    for t in range(T):
        parts = [emb[:, t, :]]
        for k in range(1, n_gram):
            parts.append(emb[:, t - k, :] if t - k >= 0
                         else jnp.zeros((B, E), jnp.float32))
        xt = jnp.concatenate(parts, axis=1)
        g = [xt @ wx[k] + h @ wh[k] + b[k] for k in range(4)]
        i_g = jax.nn.sigmoid(g[0])
        f_g = jax.nn.sigmoid(g[1])
        g_g = jnp.tanh(g[2])
        o_g = jax.nn.sigmoid(g[3])
        c = f_g * c + i_g * g_g
        h = o_g * jnp.tanh(c)
        hs.append(h)
    pooled = jnp.mean(jnp.stack(hs, axis=1), axis=1)
    z1 = jax.nn.sigmoid(pooled @ w1 + b1)
    z2 = jax.nn.sigmoid(z1 @ w2 + b2)
    return jax.nn.log_softmax(z2, axis=1)


if __name__ == "__main__":
    # shapes implied by the module: embedding dim = hidden = 300 (hard-coded),
    # small batch/seq/vocab/labels for the synthetic run.
    B, T = 2, 8
    VOCAB, EMB = 50, 300
    HIDDEN = 300
    N_GRAM = 2
    LABELS = 4
    DIN = EMB * N_GRAM

    key = jax.random.PRNGKey(0)
    ks = jax.random.split(key, 10)
    params = {
        "glove": jax.random.normal(ks[0], (VOCAB, EMB), jnp.float32) * 0.1,
        "wx":    jax.random.normal(ks[1], (4, DIN, HIDDEN), jnp.float32) * 0.05,
        "wh":    jax.random.normal(ks[2], (4, HIDDEN, HIDDEN), jnp.float32) * 0.05,
        "b":     jax.random.normal(ks[3], (4, 1, HIDDEN), jnp.float32) * 0.05,
        "w1":    jax.random.normal(ks[4], (HIDDEN, 100), jnp.float32) * 0.05,
        "b1":    jax.random.normal(ks[5], (1, 100), jnp.float32) * 0.05,
        "w2":    jax.random.normal(ks[6], (100, LABELS), jnp.float32) * 0.05,
        "b2":    jax.random.normal(ks[7], (1, LABELS), jnp.float32) * 0.05,
    }
    indices = jax.random.randint(ks[8], (B, T), 0, VOCAB, dtype=jnp.int32)

    out = lstm_classifier_forward(indices, params, T, N_GRAM)
    out = jax.block_until_ready(out)

    ref = reference_forward(indices, params, T, N_GRAM)
    # bf16 matmul operands / gate activations (f32 accumulation) -> loose tol.
    np.testing.assert_allclose(np.asarray(out), np.asarray(ref),
                               rtol=2e-2, atol=2e-2)
    print("KERNEL_OK")
</pallas_src>

<mosaic_0001>
module attributes {stable_mosaic.version = 11 : i64} {
  func.func @lstm_classifier_kernel(%arg0: memref<64x640xbf16, #tpu.memory_space<vmem>>, %arg1: memref<640x1536xbf16, #tpu.memory_space<vmem>>, %arg2: memref<1x1536xf32, #tpu.memory_space<vmem>>, %arg3: memref<384x1536xbf16, #tpu.memory_space<any>>, %arg4: memref<384x128xbf16, #tpu.memory_space<any>>, %arg5: memref<1x128xf32, #tpu.memory_space<vmem>>, %arg6: memref<128x128xbf16, #tpu.memory_space<any>>, %arg7: memref<1x128xf32, #tpu.memory_space<vmem>>, %arg8: memref<8x128xf32, #tpu.memory_space<vmem>>, %arg9: memref<64x1536xf32, #tpu.memory_space<vmem>>, %arg10: memref<384x1536xbf16, #tpu.memory_space<vmem>>, %arg11: memref<384x128xbf16, #tpu.memory_space<vmem>>, %arg12: memref<128x128xbf16, #tpu.memory_space<vmem>>, %arg13: memref<3x!tpu.dma_semaphore, #tpu.memory_space<semaphore_mem>>) attributes {dimension_semantics = [], scalar_prefetch = 0 : i64, scratch_operands = 5 : i64, tpu.core_type = #tpu.core_type<tc>} {
    %c0_i32 = arith.constant 0 : i32
    %0 = tpu.memref_slice %arg13[%c0_i32] : memref<3x!tpu.dma_semaphore, #tpu.memory_space<semaphore_mem>> -> memref<1x!tpu.dma_semaphore, #tpu.memory_space<semaphore_mem>>
    %1 = tpu.memref_squeeze %0 : memref<1x!tpu.dma_semaphore, #tpu.memory_space<semaphore_mem>> -> memref<!tpu.dma_semaphore, #tpu.memory_space<semaphore_mem>>
    tpu.enqueue_dma source(%arg3 : memref<384x1536xbf16, #tpu.memory_space<any>>) target(%arg10 : memref<384x1536xbf16, #tpu.memory_space<vmem>>) target_semaphore(%1 : memref<!tpu.dma_semaphore, #tpu.memory_space<semaphore_mem>>)
    %c1_i32 = arith.constant 1 : i32
    %2 = tpu.memref_slice %arg13[%c1_i32] : memref<3x!tpu.dma_semaphore, #tpu.memory_space<semaphore_mem>> -> memref<1x!tpu.dma_semaphore, #tpu.memory_space<semaphore_mem>>
    %3 = tpu.memref_squeeze %2 : memref<1x!tpu.dma_semaphore, #tpu.memory_space<semaphore_mem>> -> memref<!tpu.dma_semaphore, #tpu.memory_space<semaphore_mem>>
    tpu.enqueue_dma source(%arg4 : memref<384x128xbf16, #tpu.memory_space<any>>) target(%arg11 : memref<384x128xbf16, #tpu.memory_space<vmem>>) target_semaphore(%3 : memref<!tpu.dma_semaphore, #tpu.memory_space<semaphore_mem>>)
    %c2_i32 = arith.constant 2 : i32
    %4 = tpu.memref_slice %arg13[%c2_i32] : memref<3x!tpu.dma_semaphore, #tpu.memory_space<semaphore_mem>> -> memref<1x!tpu.dma_semaphore, #tpu.memory_space<semaphore_mem>>
    %5 = tpu.memref_squeeze %4 : memref<1x!tpu.dma_semaphore, #tpu.memory_space<semaphore_mem>> -> memref<!tpu.dma_semaphore, #tpu.memory_space<semaphore_mem>>
    tpu.enqueue_dma source(%arg6 : memref<128x128xbf16, #tpu.memory_space<any>>) target(%arg12 : memref<128x128xbf16, #tpu.memory_space<vmem>>) target_semaphore(%5 : memref<!tpu.dma_semaphore, #tpu.memory_space<semaphore_mem>>)
    %c0 = arith.constant 0 : index
    %c0_0 = arith.constant 0 : index
    %6 = vector.load %arg0[%c0, %c0_0] : memref<64x640xbf16, #tpu.memory_space<vmem>>, vector<64x640xbf16>
    %c0_1 = arith.constant 0 : index
    %c0_2 = arith.constant 0 : index
    %7 = vector.load %arg1[%c0_1, %c0_2] : memref<640x1536xbf16, #tpu.memory_space<vmem>>, vector<640x1536xbf16>
    %cst = arith.constant dense<0.000000e+00> : vector<64x1536xf32>
    %8 = tpu.matmul %6, %7, %cst {dimension_numbers = #tpu.dot_dimension_numbers<[1], [0], [0], [1], [0, 0, 1, 1], [], []>} : vector<64x640xbf16>, vector<640x1536xbf16>, vector<64x1536xf32> -> vector<64x1536xf32>
    %c0_3 = arith.constant 0 : index
    %c0_4 = arith.constant 0 : index
    %9 = vector.load %arg2[%c0_3, %c0_4] : memref<1x1536xf32, #tpu.memory_space<vmem>>, vector<1x1536xf32>
    %10 = vector.broadcast %9 : vector<1x1536xf32> to vector<64x1536xf32>
    %11 = arith.addf %8, %10 : vector<64x1536xf32>
    %c0_5 = arith.constant 0 : index
    %c0_6 = arith.constant 0 : index
    %12 = vector.load %arg9[%c0_5, %c0_6] : memref<64x1536xf32, #tpu.memory_space<vmem>>, vector<64x1536xf32>
    tpu.vector_store %arg9[%c0_5, %c0_6], %11 {strides = array<i32>} : memref<64x1536xf32, #tpu.memory_space<vmem>>, vector<64x1536xf32>,
    %c0_i32_7 = arith.constant 0 : i32
    %13 = tpu.memref_slice %arg13[%c0_i32_7] : memref<3x!tpu.dma_semaphore, #tpu.memory_space<semaphore_mem>> -> memref<1x!tpu.dma_semaphore, #tpu.memory_space<semaphore_mem>>
    %14 = tpu.memref_squeeze %13 : memref<1x!tpu.dma_semaphore, #tpu.memory_space<semaphore_mem>> -> memref<!tpu.dma_semaphore, #tpu.memory_space<semaphore_mem>>
    tpu.wait_dma2 semaphore(%14 : memref<!tpu.dma_semaphore, #tpu.memory_space<semaphore_mem>>) src(%arg3 : memref<384x1536xbf16, #tpu.memory_space<any>>) dst(%arg10 : memref<384x1536xbf16, #tpu.memory_space<vmem>>)
    %c0_8 = arith.constant 0 : index
    %c0_9 = arith.constant 0 : index
    %15 = vector.load %arg10[%c0_8, %c0_9] : memref<384x1536xbf16, #tpu.memory_space<vmem>>, vector<384x1536xbf16>
    %cst_10 = arith.constant 0.000000e+00 : f32
    %16 = vector.broadcast %cst_10 : f32 to vector<8x384xf32>
    %c0_i32_11 = arith.constant 0 : i32
    %c8_i32 = arith.constant 8 : i32
    %17 = arith.muli %c0_i32_11, %c8_i32 : i32
    %18 = tpu.assume_multiple %17, 8 : i32
    %19 = arith.index_cast %18 : i32 to index
    %c0_12 = arith.constant 0 : index
    %20 = vector.load %arg9[%19, %c0_12] : memref<64x1536xf32, #tpu.memory_space<vmem>>, vector<8x1536xf32>
    %21 = arith.truncf %16 : vector<8x384xf32> to vector<8x384xbf16>
    %cst_13 = arith.constant dense<0.000000e+00> : vector<8x1536xf32>
    %22 = tpu.matmul %21, %15, %cst_13 {dimension_numbers = #tpu.dot_dimension_numbers<[1], [0], [0], [1], [0, 0, 1, 1], [], []>} : vector<8x384xbf16>, vector<384x1536xbf16>, vector<8x1536xf32> -> vector<8x1536xf32>
    %23 = arith.addf %20, %22 : vector<8x1536xf32>
    %24 = arith.truncf %23 : vector<8x1536xf32> to vector<8x1536xbf16>
    %25 = vector.extract_strided_slice %24 {offsets = [0, 0], sizes = [8, 384], strides = [1, 1]} : vector<8x1536xbf16> to vector<8x384xbf16>
    %26 = arith.negf %25 : vector<8x384xbf16>
    %27 = math.exp %26 : vector<8x384xbf16>
    %cst_14 = arith.constant 1.000000e+00 : bf16
    %28 = vector.broadcast %cst_14 : bf16 to vector<8x384xbf16>
    %29 = arith.addf %28, %27 : vector<8x384xbf16>
    %30 = arith.divf %28, %29 : vector<8x384xbf16>
    %31 = arith.extf %30 : vector<8x384xbf16> to vector<8x384xf32>
    %32 = vector.extract_strided_slice %24 {offsets = [0, 384], sizes = [8, 384], strides = [1, 1]} : vector<8x1536xbf16> to vector<8x384xbf16>
    %33 = arith.negf %32 : vector<8x384xbf16>
    %34 = math.exp %33 : vector<8x384xbf16>
    %cst_15 = arith.constant 1.000000e+00 : bf16
    %35 = vector.broadcast %cst_15 : bf16 to vector<8x384xbf16>
    %36 = arith.addf %35, %34 : vector<8x384xbf16>
    %37 = arith.divf %35, %36 : vector<8x384xbf16>
    %38 = arith.extf %37 : vector<8x384xbf16> to vector<8x384xf32>
    %39 = vector.extract_strided_slice %24 {offsets = [0, 768], sizes = [8, 384], strides = [1, 1]} : vector<8x1536xbf16> to vector<8x384xbf16>
    %40 = math.tanh %39 : vector<8x384xbf16>
    %41 = arith.extf %40 : vector<8x384xbf16> to vector<8x384xf32>
    %42 = vector.extract_strided_slice %24 {offsets = [0, 1152], sizes = [8, 384], strides = [1, 1]} : vector<8x1536xbf16> to vector<8x384xbf16>
    %43 = arith.negf %42 : vector<8x384xbf16>
    %44 = math.exp %43 : vector<8x384xbf16>
    %cst_16 = arith.constant 1.000000e+00 : bf16
    %45 = vector.broadcast %cst_16 : bf16 to vector<8x384xbf16>
    %46 = arith.addf %45, %44 : vector<8x384xbf16>
    %47 = arith.divf %45, %46 : vector<8x384xbf16>
    %48 = arith.extf %47 : vector<8x384xbf16> to vector<8x384xf32>
    %49 = arith.mulf %38, %16 : vector<8x384xf32>
    %50 = arith.mulf %31, %41 : vector<8x384xf32>
    %51 = arith.addf %49, %50 : vector<8x384xf32>
    %52 = arith.truncf %51 : vector<8x384xf32> to vector<8x384xbf16>
    %53 = math.tanh %52 : vector<8x384xbf16>
    %54 = arith.extf %53 : vector<8x384xbf16> to vector<8x384xf32>
    %55 = arith.mulf %48, %54 : vector<8x384xf32>
    %56 = arith.addf %16, %55 : vector<8x384xf32>
    %c1_i32_17 = arith.constant 1 : i32
    %c8_i32_18 = arith.constant 8 : i32
    %57 = arith.muli %c1_i32_17, %c8_i32_18 : i32
    %58 = tpu.assume_multiple %57, 8 : i32
    %59 = arith.index_cast %58 : i32 to index
    %c0_19 = arith.constant 0 : index
    %60 = vector.load %arg9[%59, %c0_19] : memref<64x1536xf32, #tpu.memory_space<vmem>>, vector<8x1536xf32>
    %61 = arith.truncf %55 : vector<8x384xf32> to vector<8x384xbf16>
    %cst_20 = arith.constant dense<0.000000e+00> : vector<8x1536xf32>
    %62 = tpu.matmul %61, %15, %cst_20 {dimension_numbers = #tpu.dot_dimension_numbers<[1], [0], [0], [1], [0, 0, 1, 1], [], []>} : vector<8x384xbf16>, vector<384x1536xbf16>, vector<8x1536xf32> -> vector<8x1536xf32>
    %63 = arith.addf %60, %62 : vector<8x1536xf32>
    %64 = arith.truncf %63 : vector<8x1536xf32> to vector<8x1536xbf16>
    %65 = vector.extract_strided_slice %64 {offsets = [0, 0], sizes = [8, 384], strides = [1, 1]} : vector<8x1536xbf16> to vector<8x384xbf16>
    %66 = arith.negf %65 : vector<8x384xbf16>
    %67 = math.exp %66 : vector<8x384xbf16>
    %cst_21 = arith.constant 1.000000e+00 : bf16
    %68 = vector.broadcast %cst_21 : bf16 to vector<8x384xbf16>
    %69 = arith.addf %68, %67 : vector<8x384xbf16>
    %70 = arith.divf %68, %69 : vector<8x384xbf16>
    %71 = arith.extf %70 : vector<8x384xbf16> to vector<8x384xf32>
    %72 = vector.extract_strided_slice %64 {offsets = [0, 384], sizes = [8, 384], strides = [1, 1]} : vector<8x1536xbf16> to vector<8x384xbf16>
    %73 = arith.negf %72 : vector<8x384xbf16>
    %74 = math.exp %73 : vector<8x384xbf16>
    %cst_22 = arith.constant 1.000000e+00 : bf16
    %75 = vector.broadcast %cst_22 : bf16 to vector<8x384xbf16>
    %76 = arith.addf %75, %74 : vector<8x384xbf16>
    %77 = arith.divf %75, %76 : vector<8x384xbf16>
    %78 = arith.extf %77 : vector<8x384xbf16> to vector<8x384xf32>
    %79 = vector.extract_strided_slice %64 {offsets = [0, 768], sizes = [8, 384], strides = [1, 1]} : vector<8x1536xbf16> to vector<8x384xbf16>
    %80 = math.tanh %79 : vector<8x384xbf16>
    %81 = arith.extf %80 : vector<8x384xbf16> to vector<8x384xf32>
    %82 = vector.extract_strided_slice %64 {offsets = [0, 1152], sizes = [8, 384], strides = [1, 1]} : vector<8x1536xbf16> to vector<8x384xbf16>
    %83 = arith.negf %82 : vector<8x384xbf16>
    %84 = math.exp %83 : vector<8x384xbf16>
    %cst_23 = arith.constant 1.000000e+00 : bf16
    %85 = vector.broadcast %cst_23 : bf16 to vector<8x384xbf16>
    %86 = arith.addf %85, %84 : vector<8x384xbf16>
    %87 = arith.divf %85, %86 : vector<8x384xbf16>
    %88 = arith.extf %87 : vector<8x384xbf16> to vector<8x384xf32>
    %89 = arith.mulf %78, %51 : vector<8x384xf32>
    %90 = arith.mulf %71, %81 : vector<8x384xf32>
    %91 = arith.addf %89, %90 : vector<8x384xf32>
    %92 = arith.truncf %91 : vector<8x384xf32> to vector<8x384xbf16>
    %93 = math.tanh %92 : vector<8x384xbf16>
    %94 = arith.extf %93 : vector<8x384xbf16> to vector<8x384xf32>
    %95 = arith.mulf %88, %94 : vector<8x384xf32>
    %96 = arith.addf %56, %95 : vector<8x384xf32>
    %c2_i32_24 = arith.constant 2 : i32
    %c8_i32_25 = arith.constant 8 : i32
    %97 = arith.muli %c2_i32_24, %c8_i32_25 : i32
    %98 = tpu.assume_multiple %97, 8 : i32
    %99 = arith.index_cast %98 : i32 to index
    %c0_26 = arith.constant 0 : index
    %100 = vector.load %arg9[%99, %c0_26] : memref<64x1536xf32, #tpu.memory_space<vmem>>, vector<8x1536xf32>
    %101 = arith.truncf %95 : vector<8x384xf32> to vector<8x384xbf16>
    %cst_27 = arith.constant dense<0.000000e+00> : vector<8x1536xf32>
    %102 = tpu.matmul %101, %15, %cst_27 {dimension_numbers = #tpu.dot_dimension_numbers<[1], [0], [0], [1], [0, 0, 1, 1], [], []>} : vector<8x384xbf16>, vector<384x1536xbf16>, vector<8x1536xf32> -> vector<8x1536xf32>
    %103 = arith.addf %100, %102 : vector<8x1536xf32>
    %104 = arith.truncf %103 : vector<8x1536xf32> to vector<8x1536xbf16>
    %105 = vector.extract_strided_slice %104 {offsets = [0, 0], sizes = [8, 384], strides = [1, 1]} : vector<8x1536xbf16> to vector<8x384xbf16>
    %106 = arith.negf %105 : vector<8x384xbf16>
    %107 = math.exp %106 : vector<8x384xbf16>
    %cst_28 = arith.constant 1.000000e+00 : bf16
    %108 = vector.broadcast %cst_28 : bf16 to vector<8x384xbf16>
    %109 = arith.addf %108, %107 : vector<8x384xbf16>
    %110 = arith.divf %108, %109 : vector<8x384xbf16>
    %111 = arith.extf %110 : vector<8x384xbf16> to vector<8x384xf32>
    %112 = vector.extract_strided_slice %104 {offsets = [0, 384], sizes = [8, 384], strides = [1, 1]} : vector<8x1536xbf16> to vector<8x384xbf16>
    %113 = arith.negf %112 : vector<8x384xbf16>
    %114 = math.exp %113 : vector<8x384xbf16>
    %cst_29 = arith.constant 1.000000e+00 : bf16
    %115 = vector.broadcast %cst_29 : bf16 to vector<8x384xbf16>
    %116 = arith.addf %115, %114 : vector<8x384xbf16>
    %117 = arith.divf %115, %116 : vector<8x384xbf16>
    %118 = arith.extf %117 : vector<8x384xbf16> to vector<8x384xf32>
    %119 = vector.extract_strided_slice %104 {offsets = [0, 768], sizes = [8, 384], strides = [1, 1]} : vector<8x1536xbf16> to vector<8x384xbf16>
    %120 = math.tanh %119 : vector<8x384xbf16>
    %121 = arith.extf %120 : vector<8x384xbf16> to vector<8x384xf32>
    %122 = vector.extract_strided_slice %104 {offsets = [0, 1152], sizes = [8, 384], strides = [1, 1]} : vector<8x1536xbf16> to vector<8x384xbf16>
    %123 = arith.negf %122 : vector<8x384xbf16>
    %124 = math.exp %123 : vector<8x384xbf16>
    %cst_30 = arith.constant 1.000000e+00 : bf16
    %125 = vector.broadcast %cst_30 : bf16 to vector<8x384xbf16>
    %126 = arith.addf %125, %124 : vector<8x384xbf16>
    %127 = arith.divf %125, %126 : vector<8x384xbf16>
    %128 = arith.extf %127 : vector<8x384xbf16> to vector<8x384xf32>
    %129 = arith.mulf %118, %91 : vector<8x384xf32>
    %130 = arith.mulf %111, %121 : vector<8x384xf32>
    %131 = arith.addf %129, %130 : vector<8x384xf32>
    %132 = arith.truncf %131 : vector<8x384xf32> to vector<8x384xbf16>
    %133 = math.tanh %132 : vector<8x384xbf16>
    %134 = arith.extf %133 : vector<8x384xbf16> to vector<8x384xf32>
    %135 = arith.mulf %128, %134 : vector<8x384xf32>
    %136 = arith.addf %96, %135 : vector<8x384xf32>
    %c3_i32 = arith.constant 3 : i32
    %c8_i32_31 = arith.constant 8 : i32
    %137 = arith.muli %c3_i32, %c8_i32_31 : i32
    %138 = tpu.assume_multiple %137, 8 : i32
    %139 = arith.index_cast %138 : i32 to index
    %c0_32 = arith.constant 0 : index
    %140 = vector.load %arg9[%139, %c0_32] : memref<64x1536xf32, #tpu.memory_space<vmem>>, vector<8x1536xf32>
    %141 = arith.truncf %135 : vector<8x384xf32> to vector<8x384xbf16>
    %cst_33 = arith.constant dense<0.000000e+00> : vector<8x1536xf32>
    %142 = tpu.matmul %141, %15, %cst_33 {dimension_numbers = #tpu.dot_dimension_numbers<[1], [0], [0], [1], [0, 0, 1, 1], [], []>} : vector<8x384xbf16>, vector<384x1536xbf16>, vector<8x1536xf32> -> vector<8x1536xf32>
    %143 = arith.addf %140, %142 : vector<8x1536xf32>
    %144 = arith.truncf %143 : vector<8x1536xf32> to vector<8x1536xbf16>
    %145 = vector.extract_strided_slice %144 {offsets = [0, 0], sizes = [8, 384], strides = [1, 1]} : vector<8x1536xbf16> to vector<8x384xbf16>
    %146 = arith.negf %145 : vector<8x384xbf16>
    %147 = math.exp %146 : vector<8x384xbf16>
    %cst_34 = arith.constant 1.000000e+00 : bf16
    %148 = vector.broadcast %cst_34 : bf16 to vector<8x384xbf16>
    %149 = arith.addf %148, %147 : vector<8x384xbf16>
    %150 = arith.divf %148, %149 : vector<8x384xbf16>
    %151 = arith.extf %150 : vector<8x384xbf16> to vector<8x384xf32>
    %152 = vector.extract_strided_slice %144 {offsets = [0, 384], sizes = [8, 384], strides = [1, 1]} : vector<8x1536xbf16> to vector<8x384xbf16>
    %153 = arith.negf %152 : vector<8x384xbf16>
    %154 = math.exp %153 : vector<8x384xbf16>
    %cst_35 = arith.constant 1.000000e+00 : bf16
    %155 = vector.broadcast %cst_35 : bf16 to vector<8x384xbf16>
    %156 = arith.addf %155, %154 : vector<8x384xbf16>
    %157 = arith.divf %155, %156 : vector<8x384xbf16>
    %158 = arith.extf %157 : vector<8x384xbf16> to vector<8x384xf32>
    %159 = vector.extract_strided_slice %144 {offsets = [0, 768], sizes = [8, 384], strides = [1, 1]} : vector<8x1536xbf16> to vector<8x384xbf16>
    %160 = math.tanh %159 : vector<8x384xbf16>
    %161 = arith.extf %160 : vector<8x384xbf16> to vector<8x384xf32>
    %162 = vector.extract_strided_slice %144 {offsets = [0, 1152], sizes = [8, 384], strides = [1, 1]} : vector<8x1536xbf16> to vector<8x384xbf16>
    %163 = arith.negf %162 : vector<8x384xbf16>
    %164 = math.exp %163 : vector<8x384xbf16>
    %cst_36 = arith.constant 1.000000e+00 : bf16
    %165 = vector.broadcast %cst_36 : bf16 to vector<8x384xbf16>
    %166 = arith.addf %165, %164 : vector<8x384xbf16>
    %167 = arith.divf %165, %166 : vector<8x384xbf16>
    %168 = arith.extf %167 : vector<8x384xbf16> to vector<8x384xf32>
    %169 = arith.mulf %158, %131 : vector<8x384xf32>
    %170 = arith.mulf %151, %161 : vector<8x384xf32>
    %171 = arith.addf %169, %170 : vector<8x384xf32>
    %172 = arith.truncf %171 : vector<8x384xf32> to vector<8x384xbf16>
    %173 = math.tanh %172 : vector<8x384xbf16>
    %174 = arith.extf %173 : vector<8x384xbf16> to vector<8x384xf32>
    %175 = arith.mulf %168, %174 : vector<8x384xf32>
    %176 = arith.addf %136, %175 : vector<8x384xf32>
    %c4_i32 = arith.constant 4 : i32
    %c8_i32_37 = arith.constant 8 : i32
    %177 = arith.muli %c4_i32, %c8_i32_37 : i32
    %178 = tpu.assume_multiple %177, 8 : i32
    %179 = arith.index_cast %178 : i32 to index
    %c0_38 = arith.constant 0 : index
    %180 = vector.load %arg9[%179, %c0_38] : memref<64x1536xf32, #tpu.memory_space<vmem>>, vector<8x1536xf32>
    %181 = arith.truncf %175 : vector<8x384xf32> to vector<8x384xbf16>
    %cst_39 = arith.constant dense<0.000000e+00> : vector<8x1536xf32>
    %182 = tpu.matmul %181, %15, %cst_39 {dimension_numbers = #tpu.dot_dimension_numbers<[1], [0], [0], [1], [0, 0, 1, 1], [], []>} : vector<8x384xbf16>, vector<384x1536xbf16>, vector<8x1536xf32> -> vector<8x1536xf32>
    %183 = arith.addf %180, %182 : vector<8x1536xf32>
    %184 = arith.truncf %183 : vector<8x1536xf32> to vector<8x1536xbf16>
    %185 = vector.extract_strided_slice %184 {offsets = [0, 0], sizes = [8, 384], strides = [1, 1]} : vector<8x1536xbf16> to vector<8x384xbf16>
    %186 = arith.negf %185 : vector<8x384xbf16>
    %187 = math.exp %186 : vector<8x384xbf16>
    %cst_40 = arith.constant 1.000000e+00 : bf16
    %188 = vector.broadcast %cst_40 : bf16 to vector<8x384xbf16>
    %189 = arith.addf %188, %187 : vector<8x384xbf16>
    %190 = arith.divf %188, %189 : vector<8x384xbf16>
    %191 = arith.extf %190 : vector<8x384xbf16> to vector<8x384xf32>
    %192 = vector.extract_strided_slice %184 {offsets = [0, 384], sizes = [8, 384], strides = [1, 1]} : vector<8x1536xbf16> to vector<8x384xbf16>
    %193 = arith.negf %192 : vector<8x384xbf16>
    %194 = math.exp %193 : vector<8x384xbf16>
    %cst_41 = arith.constant 1.000000e+00 : bf16
    %195 = vector.broadcast %cst_41 : bf16 to vector<8x384xbf16>
    %196 = arith.addf %195, %194 : vector<8x384xbf16>
    %197 = arith.divf %195, %196 : vector<8x384xbf16>
    %198 = arith.extf %197 : vector<8x384xbf16> to vector<8x384xf32>
    %199 = vector.extract_strided_slice %184 {offsets = [0, 768], sizes = [8, 384], strides = [1, 1]} : vector<8x1536xbf16> to vector<8x384xbf16>
    %200 = math.tanh %199 : vector<8x384xbf16>
    %201 = arith.extf %200 : vector<8x384xbf16> to vector<8x384xf32>
    %202 = vector.extract_strided_slice %184 {offsets = [0, 1152], sizes = [8, 384], strides = [1, 1]} : vector<8x1536xbf16> to vector<8x384xbf16>
    %203 = arith.negf %202 : vector<8x384xbf16>
    %204 = math.exp %203 : vector<8x384xbf16>
    %cst_42 = arith.constant 1.000000e+00 : bf16
    %205 = vector.broadcast %cst_42 : bf16 to vector<8x384xbf16>
    %206 = arith.addf %205, %204 : vector<8x384xbf16>
    %207 = arith.divf %205, %206 : vector<8x384xbf16>
    %208 = arith.extf %207 : vector<8x384xbf16> to vector<8x384xf32>
    %209 = arith.mulf %198, %171 : vector<8x384xf32>
    %210 = arith.mulf %191, %201 : vector<8x384xf32>
    %211 = arith.addf %209, %210 : vector<8x384xf32>
    %212 = arith.truncf %211 : vector<8x384xf32> to vector<8x384xbf16>
    %213 = math.tanh %212 : vector<8x384xbf16>
    %214 = arith.extf %213 : vector<8x384xbf16> to vector<8x384xf32>
    %215 = arith.mulf %208, %214 : vector<8x384xf32>
    %216 = arith.addf %176, %215 : vector<8x384xf32>
    %c5_i32 = arith.constant 5 : i32
    %c8_i32_43 = arith.constant 8 : i32
    %217 = arith.muli %c5_i32, %c8_i32_43 : i32
    %218 = tpu.assume_multiple %217, 8 : i32
    %219 = arith.index_cast %218 : i32 to index
    %c0_44 = arith.constant 0 : index
    %220 = vector.load %arg9[%219, %c0_44] : memref<64x1536xf32, #tpu.memory_space<vmem>>, vector<8x1536xf32>
    %221 = arith.truncf %215 : vector<8x384xf32> to vector<8x384xbf16>
    %cst_45 = arith.constant dense<0.000000e+00> : vector<8x1536xf32>
    %222 = tpu.matmul %221, %15, %cst_45 {dimension_numbers = #tpu.dot_dimension_numbers<[1], [0], [0], [1], [0, 0, 1, 1], [], []>} : vector<8x384xbf16>, vector<384x1536xbf16>, vector<8x1536xf32> -> vector<8x1536xf32>
    %223 = arith.addf %220, %222 : vector<8x1536xf32>
    %224 = arith.truncf %223 : vector<8x1536xf32> to vector<8x1536xbf16>
    %225 = vector.extract_strided_slice %224 {offsets = [0, 0], sizes = [8, 384], strides = [1, 1]} : vector<8x1536xbf16> to vector<8x384xbf16>
    %226 = arith.negf %225 : vector<8x384xbf16>
    %227 = math.exp %226 : vector<8x384xbf16>
    %cst_46 = arith.constant 1.000000e+00 : bf16
    %228 = vector.broadcast %cst_46 : bf16 to vector<8x384xbf16>
    %229 = arith.addf %228, %227 : vector<8x384xbf16>
    %230 = arith.divf %228, %229 : vector<8x384xbf16>
    %231 = arith.extf %230 : vector<8x384xbf16> to vector<8x384xf32>
    %232 = vector.extract_strided_slice %224 {offsets = [0, 384], sizes = [8, 384], strides = [1, 1]} : vector<8x1536xbf16> to vector<8x384xbf16>
    %233 = arith.negf %232 : vector<8x384xbf16>
    %234 = math.exp %233 : vector<8x384xbf16>
    %cst_47 = arith.constant 1.000000e+00 : bf16
    %235 = vector.broadcast %cst_47 : bf16 to vector<8x384xbf16>
    %236 = arith.addf %235, %234 : vector<8x384xbf16>
    %237 = arith.divf %235, %236 : vector<8x384xbf16>
    %238 = arith.extf %237 : vector<8x384xbf16> to vector<8x384xf32>
    %239 = vector.extract_strided_slice %224 {offsets = [0, 768], sizes = [8, 384], strides = [1, 1]} : vector<8x1536xbf16> to vector<8x384xbf16>
    %240 = math.tanh %239 : vector<8x384xbf16>
    %241 = arith.extf %240 : vector<8x384xbf16> to vector<8x384xf32>
    %242 = vector.extract_strided_slice %224 {offsets = [0, 1152], sizes = [8, 384], strides = [1, 1]} : vector<8x1536xbf16> to vector<8x384xbf16>
    %243 = arith.negf %242 : vector<8x384xbf16>
    %244 = math.exp %243 : vector<8x384xbf16>
    %cst_48 = arith.constant 1.000000e+00 : bf16
    %245 = vector.broadcast %cst_48 : bf16 to vector<8x384xbf16>
    %246 = arith.addf %245, %244 : vector<8x384xbf16>
    %247 = arith.divf %245, %246 : vector<8x384xbf16>
    %248 = arith.extf %247 : vector<8x384xbf16> to vector<8x384xf32>
    %249 = arith.mulf %238, %211 : vector<8x384xf32>
    %250 = arith.mulf %231, %241 : vector<8x384xf32>
    %251 = arith.addf %249, %250 : vector<8x384xf32>
    %252 = arith.truncf %251 : vector<8x384xf32> to vector<8x384xbf16>
    %253 = math.tanh %252 : vector<8x384xbf16>
    %254 = arith.extf %253 : vector<8x384xbf16> to vector<8x384xf32>
    %255 = arith.mulf %248, %254 : vector<8x384xf32>
    %256 = arith.addf %216, %255 : vector<8x384xf32>
    %c6_i32 = arith.constant 6 : i32
    %c8_i32_49 = arith.constant 8 : i32
    %257 = arith.muli %c6_i32, %c8_i32_49 : i32
    %258 = tpu.assume_multiple %257, 8 : i32
    %259 = arith.index_cast %258 : i32 to index
    %c0_50 = arith.constant 0 : index
    %260 = vector.load %arg9[%259, %c0_50] : memref<64x1536xf32, #tpu.memory_space<vmem>>, vector<8x1536xf32>
    %261 = arith.truncf %255 : vector<8x384xf32> to vector<8x384xbf16>
    %cst_51 = arith.constant dense<0.000000e+00> : vector<8x1536xf32>
    %262 = tpu.matmul %261, %15, %cst_51 {dimension_numbers = #tpu.dot_dimension_numbers<[1], [0], [0], [1], [0, 0, 1, 1], [], []>} : vector<8x384xbf16>, vector<384x1536xbf16>, vector<8x1536xf32> -> vector<8x1536xf32>
    %263 = arith.addf %260, %262 : vector<8x1536xf32>
    %264 = arith.truncf %263 : vector<8x1536xf32> to vector<8x1536xbf16>
    %265 = vector.extract_strided_slice %264 {offsets = [0, 0], sizes = [8, 384], strides = [1, 1]} : vector<8x1536xbf16> to vector<8x384xbf16>
    %266 = arith.negf %265 : vector<8x384xbf16>
    %267 = math.exp %266 : vector<8x384xbf16>
    %cst_52 = arith.constant 1.000000e+00 : bf16
    %268 = vector.broadcast %cst_52 : bf16 to vector<8x384xbf16>
    %269 = arith.addf %268, %267 : vector<8x384xbf16>
    %270 = arith.divf %268, %269 : vector<8x384xbf16>
    %271 = arith.extf %270 : vector<8x384xbf16> to vector<8x384xf32>
    %272 = vector.extract_strided_slice %264 {offsets = [0, 384], sizes = [8, 384], strides = [1, 1]} : vector<8x1536xbf16> to vector<8x384xbf16>
    %273 = arith.negf %272 : vector<8x384xbf16>
    %274 = math.exp %273 : vector<8x384xbf16>
    %cst_53 = arith.constant 1.000000e+00 : bf16
    %275 = vector.broadcast %cst_53 : bf16 to vector<8x384xbf16>
    %276 = arith.addf %275, %274 : vector<8x384xbf16>
    %277 = arith.divf %275, %276 : vector<8x384xbf16>
    %278 = arith.extf %277 : vector<8x384xbf16> to vector<8x384xf32>
    %279 = vector.extract_strided_slice %264 {offsets = [0, 768], sizes = [8, 384], strides = [1, 1]} : vector<8x1536xbf16> to vector<8x384xbf16>
    %280 = math.tanh %279 : vector<8x384xbf16>
    %281 = arith.extf %280 : vector<8x384xbf16> to vector<8x384xf32>
    %282 = vector.extract_strided_slice %264 {offsets = [0, 1152], sizes = [8, 384], strides = [1, 1]} : vector<8x1536xbf16> to vector<8x384xbf16>
    %283 = arith.negf %282 : vector<8x384xbf16>
    %284 = math.exp %283 : vector<8x384xbf16>
    %cst_54 = arith.constant 1.000000e+00 : bf16
    %285 = vector.broadcast %cst_54 : bf16 to vector<8x384xbf16>
    %286 = arith.addf %285, %284 : vector<8x384xbf16>
    %287 = arith.divf %285, %286 : vector<8x384xbf16>
    %288 = arith.extf %287 : vector<8x384xbf16> to vector<8x384xf32>
    %289 = arith.mulf %278, %251 : vector<8x384xf32>
    %290 = arith.mulf %271, %281 : vector<8x384xf32>
    %291 = arith.addf %289, %290 : vector<8x384xf32>
    %292 = arith.truncf %291 : vector<8x384xf32> to vector<8x384xbf16>
    %293 = math.tanh %292 : vector<8x384xbf16>
    %294 = arith.extf %293 : vector<8x384xbf16> to vector<8x384xf32>
    %295 = arith.mulf %288, %294 : vector<8x384xf32>
    %296 = arith.addf %256, %295 : vector<8x384xf32>
    %c7_i32 = arith.constant 7 : i32
    %c8_i32_55 = arith.constant 8 : i32
    %297 = arith.muli %c7_i32, %c8_i32_55 : i32
    %298 = tpu.assume_multiple %297, 8 : i32
    %299 = arith.index_cast %298 : i32 to index
    %c0_56 = arith.constant 0 : index
    %300 = vector.load %arg9[%299, %c0_56] : memref<64x1536xf32, #tpu.memory_space<vmem>>, vector<8x1536xf32>
    %301 = arith.truncf %295 : vector<8x384xf32> to vector<8x384xbf16>
    %cst_57 = arith.constant dense<0.000000e+00> : vector<8x1536xf32>
    %302 = tpu.matmul %301, %15, %cst_57 {dimension_numbers = #tpu.dot_dimension_numbers<[1], [0], [0], [1], [0, 0, 1, 1], [], []>} : vector<8x384xbf16>, vector<384x1536xbf16>, vector<8x1536xf32> -> vector<8x1536xf32>
    %303 = arith.addf %300, %302 : vector<8x1536xf32>
    %304 = arith.truncf %303 : vector<8x1536xf32> to vector<8x1536xbf16>
    %305 = vector.extract_strided_slice %304 {offsets = [0, 0], sizes = [8, 384], strides = [1, 1]} : vector<8x1536xbf16> to vector<8x384xbf16>
    %306 = arith.negf %305 : vector<8x384xbf16>
    %307 = math.exp %306 : vector<8x384xbf16>
    %cst_58 = arith.constant 1.000000e+00 : bf16
    %308 = vector.broadcast %cst_58 : bf16 to vector<8x384xbf16>
    %309 = arith.addf %308, %307 : vector<8x384xbf16>
    %310 = arith.divf %308, %309 : vector<8x384xbf16>
    %311 = arith.extf %310 : vector<8x384xbf16> to vector<8x384xf32>
    %312 = vector.extract_strided_slice %304 {offsets = [0, 384], sizes = [8, 384], strides = [1, 1]} : vector<8x1536xbf16> to vector<8x384xbf16>
    %313 = arith.negf %312 : vector<8x384xbf16>
    %314 = math.exp %313 : vector<8x384xbf16>
    %cst_59 = arith.constant 1.000000e+00 : bf16
    %315 = vector.broadcast %cst_59 : bf16 to vector<8x384xbf16>
    %316 = arith.addf %315, %314 : vector<8x384xbf16>
    %317 = arith.divf %315, %316 : vector<8x384xbf16>
    %318 = arith.extf %317 : vector<8x384xbf16> to vector<8x384xf32>
    %319 = vector.extract_strided_slice %304 {offsets = [0, 768], sizes = [8, 384], strides = [1, 1]} : vector<8x1536xbf16> to vector<8x384xbf16>
    %320 = math.tanh %319 : vector<8x384xbf16>
    %321 = arith.extf %320 : vector<8x384xbf16> to vector<8x384xf32>
    %322 = vector.extract_strided_slice %304 {offsets = [0, 1152], sizes = [8, 384], strides = [1, 1]} : vector<8x1536xbf16> to vector<8x384xbf16>
    %323 = arith.negf %322 : vector<8x384xbf16>
    %324 = math.exp %323 : vector<8x384xbf16>
    %cst_60 = arith.constant 1.000000e+00 : bf16
    %325 = vector.broadcast %cst_60 : bf16 to vector<8x384xbf16>
    %326 = arith.addf %325, %324 : vector<8x384xbf16>
    %327 = arith.divf %325, %326 : vector<8x384xbf16>
    %328 = arith.extf %327 : vector<8x384xbf16> to vector<8x384xf32>
    %329 = arith.mulf %318, %291 : vector<8x384xf32>
    %330 = arith.mulf %311, %321 : vector<8x384xf32>
    %331 = arith.addf %329, %330 : vector<8x384xf32>
    %332 = arith.truncf %331 : vector<8x384xf32> to vector<8x384xbf16>
    %333 = math.tanh %332 : vector<8x384xbf16>
    %334 = arith.extf %333 : vector<8x384xbf16> to vector<8x384xf32>
    %335 = arith.mulf %328, %334 : vector<8x384xf32>
    %336 = arith.addf %296, %335 : vector<8x384xf32>
    %c8_i32_61 = arith.constant 8 : i32
    %cst_62 = arith.constant 1.250000e-01 : f32
    %337 = vector.broadcast %cst_62 : f32 to vector<8x384xf32>
    %338 = arith.mulf %336, %337 : vector<8x384xf32>
    %c1_i32_63 = arith.constant 1 : i32
    %339 = tpu.memref_slice %arg13[%c1_i32_63] : memref<3x!tpu.dma_semaphore, #tpu.memory_space<semaphore_mem>> -> memref<1x!tpu.dma_semaphore, #tpu.memory_space<semaphore_mem>>
    %340 = tpu.memref_squeeze %339 : memref<1x!tpu.dma_semaphore, #tpu.memory_space<semaphore_mem>> -> memref<!tpu.dma_semaphore, #tpu.memory_space<semaphore_mem>>
    tpu.wait_dma2 semaphore(%340 : memref<!tpu.dma_semaphore, #tpu.memory_space<semaphore_mem>>) src(%arg4 : memref<384x128xbf16, #tpu.memory_space<any>>) dst(%arg11 : memref<384x128xbf16, #tpu.memory_space<vmem>>)
    %341 = arith.truncf %338 : vector<8x384xf32> to vector<8x384xbf16>
    %c0_64 = arith.constant 0 : index
    %c0_65 = arith.constant 0 : index
    %342 = vector.load %arg11[%c0_64, %c0_65] : memref<384x128xbf16, #tpu.memory_space<vmem>>, vector<384x128xbf16>
    %cst_66 = arith.constant dense<0.000000e+00> : vector<8x128xf32>
    %343 = tpu.matmul %341, %342, %cst_66 {dimension_numbers = #tpu.dot_dimension_numbers<[1], [0], [0], [1], [0, 0, 1, 1], [], []>} : vector<8x384xbf16>, vector<384x128xbf16>, vector<8x128xf32> -> vector<8x128xf32>
    %c0_67 = arith.constant 0 : index
    %c0_68 = arith.constant 0 : index
    %344 = vector.load %arg5[%c0_67, %c0_68] : memref<1x128xf32, #tpu.memory_space<vmem>>, vector<1x128xf32>
    %345 = vector.broadcast %344 : vector<1x128xf32> to vector<8x128xf32>
    %346 = arith.addf %343, %345 : vector<8x128xf32>
    %347 = arith.negf %346 : vector<8x128xf32>
    %348 = math.exp %347 : vector<8x128xf32>
    %cst_69 = arith.constant 1.000000e+00 : f32
    %349 = vector.broadcast %cst_69 : f32 to vector<8x128xf32>
    %350 = arith.addf %349, %348 : vector<8x128xf32>
    %351 = arith.divf %349, %350 : vector<8x128xf32>
    %c2_i32_70 = arith.constant 2 : i32
    %352 = tpu.memref_slice %arg13[%c2_i32_70] : memref<3x!tpu.dma_semaphore, #tpu.memory_space<semaphore_mem>> -> memref<1x!tpu.dma_semaphore, #tpu.memory_space<semaphore_mem>>
    %353 = tpu.memref_squeeze %352 : memref<1x!tpu.dma_semaphore, #tpu.memory_space<semaphore_mem>> -> memref<!tpu.dma_semaphore, #tpu.memory_space<semaphore_mem>>
    tpu.wait_dma2 semaphore(%353 : memref<!tpu.dma_semaphore, #tpu.memory_space<semaphore_mem>>) src(%arg6 : memref<128x128xbf16, #tpu.memory_space<any>>) dst(%arg12 : memref<128x128xbf16, #tpu.memory_space<vmem>>)
    %354 = arith.truncf %351 : vector<8x128xf32> to vector<8x128xbf16>
    %c0_71 = arith.constant 0 : index
    %c0_72 = arith.constant 0 : index
    %355 = vector.load %arg12[%c0_71, %c0_72] : memref<128x128xbf16, #tpu.memory_space<vmem>>, vector<128x128xbf16>
    %cst_73 = arith.constant dense<0.000000e+00> : vector<8x128xf32>
    %356 = tpu.matmul %354, %355, %cst_73 {dimension_numbers = #tpu.dot_dimension_numbers<[1], [0], [0], [1], [0, 0, 1, 1], [], []>} : vector<8x128xbf16>, vector<128x128xbf16>, vector<8x128xf32> -> vector<8x128xf32>
    %c0_74 = arith.constant 0 : index
    %c0_75 = arith.constant 0 : index
    %357 = vector.load %arg7[%c0_74, %c0_75] : memref<1x128xf32, #tpu.memory_space<vmem>>, vector<1x128xf32>
    %358 = vector.broadcast %357 : vector<1x128xf32> to vector<8x128xf32>
    %359 = arith.addf %356, %358 : vector<8x128xf32>
    %360 = arith.negf %359 : vector<8x128xf32>
    %361 = math.exp %360 : vector<8x128xf32>
    %cst_76 = arith.constant 1.000000e+00 : f32
    %362 = vector.broadcast %cst_76 : f32 to vector<8x128xf32>
    %363 = arith.addf %362, %361 : vector<8x128xf32>
    %364 = arith.divf %362, %363 : vector<8x128xf32>
    %365 = tpu.iota {dimensions = array<i32: 1>} : vector<8x128xi32>
    %c4_i32_77 = arith.constant 4 : i32
    %366 = vector.broadcast %c4_i32_77 : i32 to vector<8x128xi32>
    %367 = arith.cmpi slt, %365, %366 : vector<8x128xi32>
    %cst_78 = arith.constant 0xFF800000 : f32
    %368 = vector.broadcast %cst_78 : f32 to vector<8x128xf32>
    %369 = arith.select %367, %364, %368 : vector<8x128xi1>, vector<8x128xf32>
    %cst_79 = arith.constant dense<0xFF800000> : vector<8xf32>
    %370 = vector.multi_reduction <maximumf>, %369, %cst_79 [1] : vector<8x128xf32> to vector<8xf32>
    %371 = vector.shape_cast %370 : vector<8xf32> to vector<8x1xf32>
    %372 = vector.broadcast %371 : vector<8x1xf32> to vector<8x128xf32>
    %373 = arith.subf %364, %372 : vector<8x128xf32>
    %374 = math.exp %373 : vector<8x128xf32>
    %cst_80 = arith.constant 0.000000e+00 : f32
    %375 = vector.broadcast %cst_80 : f32 to vector<8x128xf32>
    %376 = arith.select %367, %374, %375 : vector<8x128xi1>, vector<8x128xf32>
    %cst_81 = arith.constant dense<0.000000e+00> : vector<8xf32>
    %377 = vector.multi_reduction <add>, %376, %cst_81 [1] : vector<8x128xf32> to vector<8xf32>
    %378 = vector.shape_cast %377 : vector<8xf32> to vector<8x1xf32>
    %379 = math.log %378 : vector<8x1xf32>
    %380 = arith.addf %379, %371 : vector<8x1xf32>
    %381 = vector.broadcast %380 : vector<8x1xf32> to vector<8x128xf32>
    %382 = arith.subf %364, %381 : vector<8x128xf32>
    %cst_82 = arith.constant 0.000000e+00 : f32
    %383 = vector.broadcast %cst_82 : f32 to vector<8x128xf32>
    %384 = arith.select %367, %382, %383 : vector<8x128xi1>, vector<8x128xf32>
    %c0_83 = arith.constant 0 : index
    %c0_84 = arith.constant 0 : index
    %385 = vector.load %arg8[%c0_83, %c0_84] : memref<8x128xf32, #tpu.memory_space<vmem>>, vector<8x128xf32>
    tpu.vector_store %arg8[%c0_83, %c0_84], %384 {strides = array<i32>} : memref<8x128xf32, #tpu.memory_space<vmem>>, vector<8x128xf32>,
    return
  }
}

</mosaic_0001>

<llo_original>
// kernel: tpu_custom_call.1
$region0: #{tpu_custom_call.1}
  #allocation0 [shape = 'u32[]', space=smem, size = 0x4, offset = 0x4, fixed_abs, tag = 'smem constant byte address 0x4 - core index']
  #allocation1 [shape = 'u32[144,128]{1,0:T(1,128)}', space=vmem, size = 0x12000, scoped, tag = 'internal scratch']
  #allocation2 [shape = 'f32[64,1536]{1,0:T(8,128)}', space=vmem, size = 0x60000, scoped, tag = 'scratch operand']
  #allocation3 [shape = 'bf16[384,1536]{1,0:T(8,128)(2,1)}', space=vmem, size = 0x120000, scoped, tag = 'scratch operand']
  #allocation4 [shape = 'bf16[384,128]{1,0:T(8,128)(2,1)}', space=vmem, size = 0x18000, scoped, tag = 'scratch operand']
  #allocation5 [shape = 'bf16[128,128]{1,0:T(8,128)(2,1)}', space=vmem, size = 0x8000, scoped, tag = 'scratch operand']
  #allocation6 [shape = 's32[3]{0}', space=sflag, size = 0xc, scoped, tag = 'scratch operand']
  #allocation17 [shape = 's32[]', space=sflag, size = 0x4, offset = 0, fixed_abs, tag = 'sflag constant byte address 0x0 - dummy sync flag']
  #allocation18 [shape = 's32[]', space=sflag, size = 0x4, offset = 0, fixed_abs, tag = 'sflag constant byte address 0x0 - dummy sync flag']
  #allocation19 [shape = 'u32[]', space=smem, size = 0x4, offset = 0x44, fixed_abs, tag = 'smem constant byte address 0x44 - assertion arg 0']
  #allocation20 [shape = 'u32[]', space=smem, size = 0x4, offset = 0x48, fixed_abs, tag = 'smem constant byte address 0x48 - assertion arg 1']
  #allocation21 [shape = 's32[]', space=sflag, size = 0x4, offset = 0, fixed_abs, tag = 'sflag constant byte address 0x0 - dummy sync flag']
  #allocation22 [shape = 's32[]', space=sflag, size = 0x4, offset = 0, fixed_abs, tag = 'sflag constant byte address 0x0 - dummy sync flag']
  #allocation23 [shape = 's32[]', space=sflag, size = 0x4, offset = 0, fixed_abs, tag = 'sflag constant byte address 0x0 - dummy sync flag']
  #allocation24 [shape = 's32[]', space=sflag, size = 0x4, offset = 0, fixed_abs, tag = 'sflag constant byte address 0x0 - dummy sync flag']
  %s0 = inlined_call_operand.hbm [shape: bf16[64,640], index: 0, kind: input, shape index: {}]
  %s1 = inlined_call_operand.hbm [shape: bf16[640,1536], index: 1, kind: input, shape index: {}]
  %s2 = inlined_call_operand.hbm [shape: f32[1,1536], index: 2, kind: input, shape index: {}]
  %s3 = inlined_call_operand.hbm [shape: bf16[384,1536], index: 3, kind: input, shape index: {}]
  %s4 = inlined_call_operand.hbm [shape: bf16[384,128], index: 4, kind: input, shape index: {}]
  %s5 = inlined_call_operand.hbm [shape: f32[1,128], index: 5, kind: input, shape index: {}]
  %s6 = inlined_call_operand.hbm [shape: bf16[128,128], index: 6, kind: input, shape index: {}]
  %s7 = inlined_call_operand.hbm [shape: f32[1,128], index: 7, kind: input, shape index: {}]
  %s8 = inlined_call_operand.hbm [shape: f32[8,128], index: 8, kind: output, shape index: {}]
  %s9 = sld [smem:[#allocation0]]
  $region62: #{tpu_custom_call.1} parent=0
    _
  %s11 = ssub.s32 1, %s9
  %s12 = scalar_select 0, %s11, %s9
  $region1: #{tpu_custom_call.1} parent=0
    #allocation7 [shape = 'u8[81920]{0}', space=vmem, size = 0x14000, scoped, tag = 'input window, operand 0, single buffered']
    #allocation8 [shape = 's32[1]{0}', space=sflag, size = 0x4, scoped, tag = 'scoped memory for tpu_custom_call.1']
    #allocation9 [shape = 's32[1]{0}', space=sflag, size = 0x4, scoped, tag = 'scoped memory for tpu_custom_call.1']
    #allocation10 [shape = 'u8[1966080]{0}', space=vmem, size = 0x1e0000, scoped, tag = 'input window, operand 1, single buffered']
    #allocation11 [shape = 's32[1]{0}', space=sflag, size = 0x4, scoped, tag = 'scoped memory for tpu_custom_call.1']
    #allocation12 [shape = 'u8[6144]{0}', space=vmem, size = 0x1800, scoped, tag = 'input window, operand 2, single buffered']
    #allocation13 [shape = 'u8[512]{0}', space=vmem, size = 0x400, scoped, tag = 'input window, operand 5, single buffered']
    #allocation14 [shape = 's32[1]{0}', space=sflag, size = 0x4, scoped, tag = 'scoped memory for tpu_custom_call.1']
    #allocation15 [shape = 'u8[512]{0}', space=vmem, size = 0x400, scoped, tag = 'input window, operand 7, single buffered']
    #allocation16 [shape = 'u8[4096]{0}', space=vmem, size = 0x1000, scoped, tag = 'output window, operand 0, single buffered']
    %13 = vsyncpa [#allocation8], 0
    %14 = vsyncpa [#allocation11], 0
    %15 = vsyncpa [#allocation14], 0
    %16 = vsyncpa [#allocation9], 0
    // Predicated region
    $region2: #{tpu_custom_call.1} parent=1 // pred_check
      _
    $region3: #{tpu_custom_call.1} parent=1 // pred_check_branch
      %18 = sbr.rel (0) target = $region5
    $region4: #{tpu_custom_call.1} parent=1 // pred_region
      %s20 = ssub.s32 2560, 2560
      %21 = vsyncadd [#allocation8], %s20
      %s22 = sshll.u32 [#allocation7], 4
      %s23 = int_to_ptr.vmem [resolvable:$true] %s22
      %28 = dma.hbm_to_vmem [thread:$0]  %s0, 2560, %s23, [#allocation8], 320, 320, 20
    $region5: #{tpu_custom_call.1} parent=1 // pred_fallthru
      _
    // Predicated region
    $region6: #{tpu_custom_call.1} parent=1 // pred_check
      _
    $region7: #{tpu_custom_call.1} parent=1 // pred_check_branch
      %30 = sbr.rel (0) target = $region9
    $region8: #{tpu_custom_call.1} parent=1 // pred_region
      %s32 = ssub.s32 61440, 61440
      %33 = vsyncadd [#allocation11], %s32
      %s34 = sshll.u32 [#allocation10], 4
      %s35 = int_to_ptr.vmem [resolvable:$true] %s34
      %40 = dma.hbm_to_vmem [thread:$0]  %s1, 61440, %s35, [#allocation11], 768, 768, 48
    $region9: #{tpu_custom_call.1} parent=1 // pred_fallthru
      _
    // Predicated region
    $region10: #{tpu_custom_call.1} parent=1 // pred_check
      _
    $region11: #{tpu_custom_call.1} parent=1 // pred_check_branch
      %42 = sbr.rel (0) target = $region13
    $region12: #{tpu_custom_call.1} parent=1 // pred_region
      %s44 = ssub.s32 192, 192
      %45 = vsyncadd [#allocation11], %s44
      %s47 = sshll.u32 [#allocation12], 4
      %s48 = int_to_ptr.vmem [resolvable:$true] %s47
      %50 = dma.hbm_to_vmem [thread:$0]  %s2, 192, %s48, [#allocation11]
    $region13: #{tpu_custom_call.1} parent=1 // pred_fallthru
      _
    // Predicated region
    $region14: #{tpu_custom_call.1} parent=1 // pred_check
      _
    $region15: #{tpu_custom_call.1} parent=1 // pred_check_branch
      %52 = sbr.rel (0) target = $region17
    $region16: #{tpu_custom_call.1} parent=1 // pred_region
      %s54 = ssub.s32 16, 16
      %55 = vsyncadd [#allocation14], %s54
      %s57 = sshll.u32 [#allocation13], 4
      %s58 = int_to_ptr.vmem [resolvable:$true] %s57
      %60 = dma.hbm_to_vmem [thread:$0]  %s5, 16, %s58, [#allocation14]
    $region17: #{tpu_custom_call.1} parent=1 // pred_fallthru
      _
    // Predicated region
    $region18: #{tpu_custom_call.1} parent=1 // pred_check
      _
    $region19: #{tpu_custom_call.1} parent=1 // pred_check_branch
      %62 = sbr.rel (0) target = $region21
    $region20: #{tpu_custom_call.1} parent=1 // pred_region
      %s64 = ssub.s32 16, 16
      %65 = vsyncadd [#allocation14], %s64
      %s67 = sshll.u32 [#allocation15], 4
      %s68 = int_to_ptr.vmem [resolvable:$true] %s67
      %70 = dma.hbm_to_vmem [thread:$0]  %s7, 16, %s68, [#allocation14]
    $region21: #{tpu_custom_call.1} parent=1 // pred_fallthru
      _
    // Predicated region
    $region22: #{tpu_custom_call.1} parent=1 // pred_check
      _
    $region23: #{tpu_custom_call.1} parent=1 // pred_check_branch
      %72 = sbr.rel (0) target = $region25
    $region24: #{tpu_custom_call.1} parent=1 // pred_region
      %73 = dma.done [#allocation8], 2560
    $region25: #{tpu_custom_call.1} parent=1 // pred_fallthru
      _
    // Predicated region
    $region26: #{tpu_custom_call.1} parent=1 // pred_check
      _
    $region27: #{tpu_custom_call.1} parent=1 // pred_check_branch
      %75 = sbr.rel (0) target = $region29
    $region28: #{tpu_custom_call.1} parent=1 // pred_region
      %76 = dma.done [#allocation11], 61440
    $region29: #{tpu_custom_call.1} parent=1 // pred_fallthru
      _
    // Predicated region
    $region30: #{tpu_custom_call.1} parent=1 // pred_check
      _
    $region31: #{tpu_custom_call.1} parent=1 // pred_check_branch
      %78 = sbr.rel (0) target = $region33
    $region32: #{tpu_custom_call.1} parent=1 // pred_region
      %79 = dma.done [#allocation11], 192
    $region33: #{tpu_custom_call.1} parent=1 // pred_fallthru
      _
    // Predicated region
    $region34: #{tpu_custom_call.1} parent=1 // pred_check
      _
    $region35: #{tpu_custom_call.1} parent=1 // pred_check_branch
      %81 = sbr.rel (0) target = $region37
    $region36: #{tpu_custom_call.1} parent=1 // pred_region
      %82 = dma.done [#allocation14], 16
    $region37: #{tpu_custom_call.1} parent=1 // pred_fallthru
      _
    // Predicated region
    $region38: #{tpu_custom_call.1} parent=1 // pred_check
      _
    $region39: #{tpu_custom_call.1} parent=1 // pred_check_branch
      %84 = sbr.rel (0) target = $region41
    $region40: #{tpu_custom_call.1} parent=1 // pred_region
      %85 = dma.done [#allocation14], 16
    $region41: #{tpu_custom_call.1} parent=1 // pred_fallthru
      _
    // Predicated region
    $region42: #{tpu_custom_call.1} parent=1 // pred_check
      _
    $region43: #{tpu_custom_call.1} parent=1 // pred_check_branch
      %89 = sbr.rel target = $region45
    $region44: #{tpu_custom_call.1} parent=1 // pred_region
      %90 = sst [smem:[#allocation19]] [#allocation18]
      %91 = sst [smem:[#allocation20]] [#allocation17]
    $region45: #{tpu_custom_call.1} parent=1 // pred_fallthru
      _
    %93 = shalt.err (0)
    %s95 = sshll.u32 [#allocation3], 4
    %s96 = int_to_ptr.vmem [resolvable:$true] %s95
    %98 = dma.hbm_to_vmem [thread:$0]  %s3, 36864, %s96, [#allocation6]
    %s99 = scalar_lea.sflag [#allocation6], 1
    // Predicated region
    $region46: #{tpu_custom_call.1} parent=1 // pred_check
      _
    $region47: #{tpu_custom_call.1} parent=1 // pred_check_branch
      %101 = sbr.rel target = $region49
    $region48: #{tpu_custom_call.1} parent=1 // pred_region
      %102 = sst [smem:[#allocation19]] [#allocation22]
      %103 = sst [smem:[#allocation20]] [#allocation21]
    $region49: #{tpu_custom_call.1} parent=1 // pred_fallthru
      _
    %105 = shalt.err (0)
    %s107 = sshll.u32 [#allocation4], 4
    %s108 = int_to_ptr.vmem [resolvable:$true] %s107
    %110 = dma.hbm_to_vmem [thread:$0]  %s4, 3072, %s108, %s99
    %s111 = scalar_lea.sflag [#allocation6], 2
    // Predicated region
    $region50: #{tpu_custom_call.1} parent=1 // pred_check
      _
    $region51: #{tpu_custom_call.1} parent=1 // pred_check_branch
      %113 = sbr.rel target = $region53
    $region52: #{tpu_custom_call.1} parent=1 // pred_region
      %114 = sst [smem:[#allocation19]] [#allocation24]
      %115 = sst [smem:[#allocation20]] [#allocation23]
    $region53: #{tpu_custom_call.1} parent=1 // pred_fallthru
      _
    %117 = shalt.err (0)
    %s119 = sshll.u32 [#allocation5], 4
    %s120 = int_to_ptr.vmem [resolvable:$true] %s119
    %122 = dma.hbm_to_vmem [thread:$0]  %s6, 1024, %s120, %s111
    %v123 = vld [vmem:[#allocation7] sm:$0xff]
    %v124 = vld [vmem:[#allocation7 + $0x8] sm:$0xff]
    %v125 = vld [vmem:[#allocation7 + $0x10] sm:$0xf]
    %v126 = vld [vmem:[#allocation7 + $0x14] sm:$0xff]
    %v127 = vld [vmem:[#allocation7 + $0x1c] sm:$0xff]
    %v128 = vld [vmem:[#allocation7 + $0x24] sm:$0xf]
    %v129 = vld [vmem:[#allocation7 + $0x28] sm:$0xff]
    %v130 = vld [vmem:[#allocation7 + $0x30] sm:$0xff]
    %v131 = vld [vmem:[#allocation7 + $0x38] sm:$0xf]
    %v132 = vld [vmem:[#allocation7 + $0x3c] sm:$0xff]
    %v133 = vld [vmem:[#allocation7 + $0x44] sm:$0xff]
    %v134 = vld [vmem:[#allocation7 + $0x4c] sm:$0xf]
    %v135 = vld [vmem:[#allocation7 + $0x50] sm:$0xff]
    %v136 = vld [vmem:[#allocation7 + $0x58] sm:$0xff]
    %v137 = vld [vmem:[#allocation7 + $0x60] sm:$0xf]
    %v138 = vld [vmem:[#allocation7 + $0x64] sm:$0xff]
    %v139 = vld [vmem:[#allocation7 + $0x6c] sm:$0xff]
    %v140 = vld [vmem:[#allocation7 + $0x74] sm:$0xf]
    %v141 = vld [vmem:[#allocation7 + $0x78] sm:$0xff]
    %v142 = vld [vmem:[#allocation7 + $0x80] sm:$0xff]
    %v143 = vld [vmem:[#allocation7 + $0x88] sm:$0xf]
    %v144 = vld [vmem:[#allocation7 + $0x8c] sm:$0xff]
    %v145 = vld [vmem:[#allocation7 + $0x94] sm:$0xff]
    %v146 = vld [vmem:[#allocation7 + $0x9c] sm:$0xf]
    %v147 = vld [vmem:[#allocation10] sm:$0xff]
    %v148 = vld [vmem:[#allocation10 + $0x8] sm:$0xff]
    %v149 = vld [vmem:[#allocation10 + $0x10] sm:$0xff]
    %v150 = vld [vmem:[#allocation10 + $0x18] sm:$0xff]
    %v151 = vld [vmem:[#allocation10 + $0x20] sm:$0xff]
    %v152 = vld [vmem:[#allocation10 + $0x28] sm:$0xff]
    %v153 = vld [vmem:[#allocation10 + $0x30] sm:$0xff]
    %v154 = vld [vmem:[#allocation10 + $0x38] sm:$0xff]
    %v155 = vld [vmem:[#allocation10 + $0x40] sm:$0xff]
    %v156 = vld [vmem:[#allocation10 + $0x48] sm:$0xff]
    %v157 = vld [vmem:[#allocation10 + $0x50] sm:$0xff]
    %v158 = vld [vmem:[#allocation10 + $0x58] sm:$0xff]
    %v159 = vld [vmem:[#allocation10 + $0x60] sm:$0xff]
    %v160 = vld [vmem:[#allocation10 + $0x68] sm:$0xff]
    %v161 = vld [vmem:[#allocation10 + $0x70] sm:$0xff]
    %v162 = vld [vmem:[#allocation10 + $0x78] sm:$0xff]
    %v163 = vld [vmem:[#allocation10 + $0x80] sm:$0xff]
    %v164 = vld [vmem:[#allocation10 + $0x88] sm:$0xff]
    %v165 = vld [vmem:[#allocation10 + $0x90] sm:$0xff]
    %v166 = vld [vmem:[#allocation10 + $0x98] sm:$0xff]
    %v167 = vld [vmem:[#allocation10 + $0xa0] sm:$0xff]
    %v168 = vld [vmem:[#allocation10 + $0xa8] sm:$0xff]
    %v169 = vld [vmem:[#allocation10 + $0xb0] sm:$0xff]
    %v170 = vld [vmem:[#allocation10 + $0xb8] sm:$0xff]
    %v171 = vld [vmem:[#allocation10 + $0xc0] sm:$0xff]
    %v172 = vld [vmem:[#allocation10 + $0xc8] sm:$0xff]
    %v173 = vld [vmem:[#allocation10 + $0xd0] sm:$0xff]
    %v174 = vld [vmem:[#allocation10 + $0xd8] sm:$0xff]
    %v175 = vld [vmem:[#allocation10 + $0xe0] sm:$0xff]
    %v176 = vld [vmem:[#allocation10 + $0xe8] sm:$0xff]
    %v177 = vld [vmem:[#allocation10 + $0xf0] sm:$0xff]
    %v178 = vld [vmem:[#allocation10 + $0xf8] sm:$0xff]
    %v179 = vld [vmem:[#allocation10 + $0x100] sm:$0xff]
    %v180 = vld [vmem:[#allocation10 + $0x108] sm:$0xff]
    %v181 = vld [vmem:[#allocation10 + $0x110] sm:$0xff]
    %v182 = vld [vmem:[#allocation10 + $0x118] sm:$0xff]
    %v183 = vld [vmem:[#allocation10 + $0x120] sm:$0xff]
    %v184 = vld [vmem:[#allocation10 + $0x128] sm:$0xff]
    %v185 = vld [vmem:[#allocation10 + $0x130] sm:$0xff]
    %v186 = vld [vmem:[#allocation10 + $0x138] sm:$0xff]
    %v187 = vld [vmem:[#allocation10 + $0x140] sm:$0xff]
    %v188 = vld [vmem:[#allocation10 + $0x148] sm:$0xff]
    %v189 = vld [vmem:[#allocation10 + $0x150] sm:$0xff]
    %v190 = vld [vmem:[#allocation10 + $0x158] sm:$0xff]
    %v191 = vld [vmem:[#allocation10 + $0x160] sm:$0xff]
    %v192 = vld [vmem:[#allocation10 + $0x168] sm:$0xff]
    %v193 = vld [vmem:[#allocation10 + $0x170] sm:$0xff]
    %v194 = vld [vmem:[#allocation10 + $0x178] sm:$0xff]
    %v195 = vld [vmem:[#allocation10 + $0x180] sm:$0xff]
    %v196 = vld [vmem:[#allocation10 + $0x188] sm:$0xff]
    %v197 = vld [vmem:[#allocation10 + $0x190] sm:$0xff]
    %v198 = vld [vmem:[#allocation10 + $0x198] sm:$0xff]
    %v199 = vld [vmem:[#allocation10 + $0x1a0] sm:$0xff]
    %v200 = vld [vmem:[#allocation10 + $0x1a8] sm:$0xff]
    %v201 = vld [vmem:[#allocation10 + $0x1b0] sm:$0xff]
    %v202 = vld [vmem:[#allocation10 + $0x1b8] sm:$0xff]
    %v203 = vld [vmem:[#allocation10 + $0x1c0] sm:$0xff]
    %v204 = vld [vmem:[#allocation10 + $0x1c8] sm:$0xff]
    %v205 = vld [vmem:[#allocation10 + $0x1d0] sm:$0xff]
    %v206 = vld [vmem:[#allocation10 + $0x1d8] sm:$0xff]
    %v207 = vld [vmem:[#allocation10 + $0x1e0] sm:$0xff]
    %v208 = vld [vmem:[#allocation10 + $0x1e8] sm:$0xff]
    %v209 = vld [vmem:[#allocation10 + $0x1f0] sm:$0xff]
    %v210 = vld [vmem:[#allocation10 + $0x1f8] sm:$0xff]
    %v211 = vld [vmem:[#allocation10 + $0x200] sm:$0xff]
    %v212 = vld [vmem:[#allocation10 + $0x208] sm:$0xff]
    %v213 = vld [vmem:[#allocation10 + $0x210] sm:$0xff]
    %v214 = vld [vmem:[#allocation10 + $0x218] sm:$0xff]
    %v215 = vld [vmem:[#allocation10 + $0x220] sm:$0xff]
    %v216 = vld [vmem:[#allocation10 + $0x228] sm:$0xff]
    %v217 = vld [vmem:[#allocation10 + $0x230] sm:$0xff]
    %v218 = vld [vmem:[#allocation10 + $0x238] sm:$0xff]
    %v219 = vld [vmem:[#allocation10 + $0x240] sm:$0xff]
    %v220 = vld [vmem:[#allocation10 + $0x248] sm:$0xff]
    %v221 = vld [vmem:[#allocation10 + $0x250] sm:$0xff]
    %v222 = vld [vmem:[#allocation10 + $0x258] sm:$0xff]
    %v223 = vld [vmem:[#allocation10 + $0x260] sm:$0xff]
    %v224 = vld [vmem:[#allocation10 + $0x268] sm:$0xff]
    %v225 = vld [vmem:[#allocation10 + $0x270] sm:$0xff]
    %v226 = vld [vmem:[#allocation10 + $0x278] sm:$0xff]
    %v227 = vld [vmem:[#allocation10 + $0x280] sm:$0xff]
    %v228 = vld [vmem:[#allocation10 + $0x288] sm:$0xff]
    %v229 = vld [vmem:[#allocation10 + $0x290] sm:$0xff]
    %v230 = vld [vmem:[#allocation10 + $0x298] sm:$0xff]
    %v231 = vld [vmem:[#allocation10 + $0x2a0] sm:$0xff]
    %v232 = vld [vmem:[#allocation10 + $0x2a8] sm:$0xff]
    %v233 = vld [vmem:[#allocation10 + $0x2b0] sm:$0xff]
    %v234 = vld [vmem:[#allocation10 + $0x2b8] sm:$0xff]
    %v235 = vld [vmem:[#allocation10 + $0x2c0] sm:$0xff]
    %v236 = vld [vmem:[#allocation10 + $0x2c8] sm:$0xff]
    %v237 = vld [vmem:[#allocation10 + $0x2d0] sm:$0xff]
    %v238 = vld [vmem:[#allocation10 + $0x2d8] sm:$0xff]
    %v239 = vld [vmem:[#allocation10 + $0x2e0] sm:$0xff]
    %v240 = vld [vmem:[#allocation10 + $0x2e8] sm:$0xff]
    %v241 = vld [vmem:[#allocation10 + $0x2f0] sm:$0xff]
    %v242 = vld [vmem:[#allocation10 + $0x2f8] sm:$0xff]
    %v243 = vld [vmem:[#allocation10 + $0x300] sm:$0xff]
    %v244 = vld [vmem:[#allocation10 + $0x308] sm:$0xff]
    %v245 = vld [vmem:[#allocation10 + $0x310] sm:$0xff]
    %v246 = vld [vmem:[#allocation10 + $0x318] sm:$0xff]
    %v247 = vld [vmem:[#allocation10 + $0x320] sm:$0xff]
    %v248 = vld [vmem:[#allocation10 + $0x328] sm:$0xff]
    %v249 = vld [vmem:[#allocation10 + $0x330] sm:$0xff]
    %v250 = vld [vmem:[#allocation10 + $0x338] sm:$0xff]
    %v251 = vld [vmem:[#allocation10 + $0x340] sm:$0xff]
    %v252 = vld [vmem:[#allocation10 + $0x348] sm:$0xff]
    %v253 = vld [vmem:[#allocation10 + $0x350] sm:$0xff]
    %v254 = vld [vmem:[#allocation10 + $0x358] sm:$0xff]
    %v255 = vld [vmem:[#allocation10 + $0x360] sm:$0xff]
    %v256 = vld [vmem:[#allocation10 + $0x368] sm:$0xff]
    %v257 = vld [vmem:[#allocation10 + $0x370] sm:$0xff]
    %v258 = vld [vmem:[#allocation10 + $0x378] sm:$0xff]
    %v259 = vld [vmem:[#allocation10 + $0x380] sm:$0xff]
    %v260 = vld [vmem:[#allocation10 + $0x388] sm:$0xff]
    %v261 = vld [vmem:[#allocation10 + $0x390] sm:$0xff]
    %v262 = vld [vmem:[#allocation10 + $0x398] sm:$0xff]
    %v263 = vld [vmem:[#allocation10 + $0x3a0] sm:$0xff]
    %v264 = vld [vmem:[#allocation10 + $0x3a8] sm:$0xff]
    %v265 = vld [vmem:[#allocation10 + $0x3b0] sm:$0xff]
    %v266 = vld [vmem:[#allocation10 + $0x3b8] sm:$0xff]
    %v267 = vld [vmem:[#allocation10 + $0x3c0] sm:$0xff]
    %v268 = vld [vmem:[#allocation10 + $0x3c8] sm:$0xff]
    %v269 = vld [vmem:[#allocation10 + $0x3d0] sm:$0xff]
    %v270 = vld [vmem:[#allocation10 + $0x3d8] sm:$0xff]
    %v271 = vld [vmem:[#allocation10 + $0x3e0] sm:$0xff]
    %v272 = vld [vmem:[#allocation10 + $0x3e8] sm:$0xff]
    %v273 = vld [vmem:[#allocation10 + $0x3f0] sm:$0xff]
    %v274 = vld [vmem:[#allocation10 + $0x3f8] sm:$0xff]
    %v275 = vld [vmem:[#allocation10 + $0x400] sm:$0xff]
    %v276 = vld [vmem:[#allocation10 + $0x408] sm:$0xff]
    %v277 = vld [vmem:[#allocation10 + $0x410] sm:$0xff]
    %v278 = vld [vmem:[#allocation10 + $0x418] sm:$0xff]
    %v279 = vld [vmem:[#allocation10 + $0x420] sm:$0xff]
    %v280 = vld [vmem:[#allocation10 + $0x428] sm:$0xff]
    %v281 = vld [vmem:[#allocation10 + $0x430] sm:$0xff]
    %v282 = vld [vmem:[#allocation10 + $0x438] sm:$0xff]
    %v283 = vld [vmem:[#allocation10 + $0x440] sm:$0xff]
    %v284 = vld [vmem:[#allocation10 + $0x448] sm:$0xff]
    %v285 = vld [vmem:[#allocation10 + $0x450] sm:$0xff]
    %v286 = vld [vmem:[#allocation10 + $0x458] sm:$0xff]
    %v287 = vld [vmem:[#allocation10 + $0x460] sm:$0xff]
    %v288 = vld [vmem:[#allocation10 + $0x468] sm:$0xff]
    %v289 = vld [vmem:[#allocation10 + $0x470] sm:$0xff]
    %v290 = vld [vmem:[#allocation10 + $0x478] sm:$0xff]
    %v291 = vld [vmem:[#allocation10 + $0x480] sm:$0xff]
    %v292 = vld [vmem:[#allocation10 + $0x488] sm:$0xff]
    %v293 = vld [vmem:[#allocation10 + $0x490] sm:$0xff]
    %v294 = vld [vmem:[#allocation10 + $0x498] sm:$0xff]
    %v295 = vld [vmem:[#allocation10 + $0x4a0] sm:$0xff]
    %v296 = vld [vmem:[#allocation10 + $0x4a8] sm:$0xff]
    %v297 = vld [vmem:[#allocation10 + $0x4b0] sm:$0xff]
    %v298 = vld [vmem:[#allocation10 + $0x4b8] sm:$0xff]
    %v299 = vld [vmem:[#allocation10 + $0x4c0] sm:$0xff]
    %v300 = vld [vmem:[#allocation10 + $0x4c8] sm:$0xff]
    %v301 = vld [vmem:[#allocation10 + $0x4d0] sm:$0xff]
    %v302 = vld [vmem:[#allocation10 + $0x4d8] sm:$0xff]
    %v303 = vld [vmem:[#allocation10 + $0x4e0] sm:$0xff]
    %v304 = vld [vmem:[#allocation10 + $0x4e8] sm:$0xff]
    %v305 = vld [vmem:[#allocation10 + $0x4f0] sm:$0xff]
    %v306 = vld [vmem:[#allocation10 + $0x4f8] sm:$0xff]
    %v307 = vld [vmem:[#allocation10 + $0x500] sm:$0xff]
    %v308 = vld [vmem:[#allocation10 + $0x508] sm:$0xff]
    %v309 = vld [vmem:[#allocation10 + $0x510] sm:$0xff]
    %v310 = vld [vmem:[#allocation10 + $0x518] sm:$0xff]
    %v311 = vld [vmem:[#allocation10 + $0x520] sm:$0xff]
    %v312 = vld [vmem:[#allocation10 + $0x528] sm:$0xff]
    %v313 = vld [vmem:[#allocation10 + $0x530] sm:$0xff]
    %v314 = vld [vmem:[#allocation10 + $0x538] sm:$0xff]
    %v315 = vld [vmem:[#allocation10 + $0x540] sm:$0xff]
    %v316 = vld [vmem:[#allocation10 + $0x548] sm:$0xff]
    %v317 = vld [vmem:[#allocation10 + $0x550] sm:$0xff]
    %v318 = vld [vmem:[#allocation10 + $0x558] sm:$0xff]
    %v319 = vld [vmem:[#allocation10 + $0x560] sm:$0xff]
    %v320 = vld [vmem:[#allocation10 + $0x568] sm:$0xff]
    %v321 = vld [vmem:[#allocation10 + $0x570] sm:$0xff]
    %v322 = vld [vmem:[#allocation10 + $0x578] sm:$0xff]
    %v323 = vld [vmem:[#allocation10 + $0x580] sm:$0xff]
    %v324 = vld [vmem:[#allocation10 + $0x588] sm:$0xff]
    %v325 = vld [vmem:[#allocation10 + $0x590] sm:$0xff]
    %v326 = vld [vmem:[#allocation10 + $0x598] sm:$0xff]
    %v327 = vld [vmem:[#allocation10 + $0x5a0] sm:$0xff]
    %v328 = vld [vmem:[#allocation10 + $0x5a8] sm:$0xff]
    %v329 = vld [vmem:[#allocation10 + $0x5b0] sm:$0xff]
    %v330 = vld [vmem:[#allocation10 + $0x5b8] sm:$0xff]
    %v331 = vld [vmem:[#allocation10 + $0x5c0] sm:$0xff]
    %v332 = vld [vmem:[#allocation10 + $0x5c8] sm:$0xff]
    %v333 = vld [vmem:[#allocation10 + $0x5d0] sm:$0xff]
    %v334 = vld [vmem:[#allocation10 + $0x5d8] sm:$0xff]
    %v335 = vld [vmem:[#allocation10 + $0x5e0] sm:$0xff]
    %v336 = vld [vmem:[#allocation10 + $0x5e8] sm:$0xff]
    %v337 = vld [vmem:[#allocation10 + $0x5f0] sm:$0xff]
    %v338 = vld [vmem:[#allocation10 + $0x5f8] sm:$0xff]
    %v339 = vld [vmem:[#allocation10 + $0x600] sm:$0xff]
    %v340 = vld [vmem:[#allocation10 + $0x608] sm:$0xff]
    %v341 = vld [vmem:[#allocation10 + $0x610] sm:$0xff]
    %v342 = vld [vmem:[#allocation10 + $0x618] sm:$0xff]
    %v343 = vld [vmem:[#allocation10 + $0x620] sm:$0xff]
    %v344 = vld [vmem:[#allocation10 + $0x628] sm:$0xff]
    %v345 = vld [vmem:[#allocation10 + $0x630] sm:$0xff]
    %v346 = vld [vmem:[#allocation10 + $0x638] sm:$0xff]
    %v347 = vld [vmem:[#allocation10 + $0x640] sm:$0xff]
    %v348 = vld [vmem:[#allocation10 + $0x648] sm:$0xff]
    %v349 = vld [vmem:[#allocation10 + $0x650] sm:$0xff]
    %v350 = vld [vmem:[#allocation10 + $0x658] sm:$0xff]
    %v351 = vld [vmem:[#allocation10 + $0x660] sm:$0xff]
    %v352 = vld [vmem:[#allocation10 + $0x668] sm:$0xff]
    %v353 = vld [vmem:[#allocation10 + $0x670] sm:$0xff]
    %v354 = vld [vmem:[#allocation10 + $0x678] sm:$0xff]
    %v355 = vld [vmem:[#allocation10 + $0x680] sm:$0xff]
    %v356 = vld [vmem:[#allocation10 + $0x688] sm:$0xff]
    %v357 = vld [vmem:[#allocation10 + $0x690] sm:$0xff]
    %v358 = vld [vmem:[#allocation10 + $0x698] sm:$0xff]
    %v359 = vld [vmem:[#allocation10 + $0x6a0] sm:$0xff]
    %v360 = vld [vmem:[#allocation10 + $0x6a8] sm:$0xff]
    %v361 = vld [vmem:[#allocation10 + $0x6b0] sm:$0xff]
    %v362 = vld [vmem:[#allocation10 + $0x6b8] sm:$0xff]
    %v363 = vld [vmem:[#allocation10 + $0x6c0] sm:$0xff]
    %v364 = vld [vmem:[#allocation10 + $0x6c8] sm:$0xff]
    %v365 = vld [vmem:[#allocation10 + $0x6d0] sm:$0xff]
    %v366 = vld [vmem:[#allocation10 + $0x6d8] sm:$0xff]
    %v367 = vld [vmem:[#allocation10 + $0x6e0] sm:$0xff]
    %v368 = vld [vmem:[#allocation10 + $0x6e8] sm:$0xff]
    %v369 = vld [vmem:[#allocation10 + $0x6f0] sm:$0xff]
    %v370 = vld [vmem:[#allocation10 + $0x6f8] sm:$0xff]
    %v371 = vld [vmem:[#allocation10 + $0x700] sm:$0xff]
    %v372 = vld [vmem:[#allocation10 + $0x708] sm:$0xff]
    %v373 = vld [vmem:[#allocation10 + $0x710] sm:$0xff]
    %v374 = vld [vmem:[#allocation10 + $0x718] sm:$0xff]
    %v375 = vld [vmem:[#allocation10 + $0x720] sm:$0xff]
    %v376 = vld [vmem:[#allocation10 + $0x728] sm:$0xff]
    %v377 = vld [vmem:[#allocation10 + $0x730] sm:$0xff]
    %v378 = vld [vmem:[#allocation10 + $0x738] sm:$0xff]
    %v379 = vld [vmem:[#allocation10 + $0x740] sm:$0xff]
    %v380 = vld [vmem:[#allocation10 + $0x748] sm:$0xff]
    %v381 = vld [vmem:[#allocation10 + $0x750] sm:$0xff]
    %v382 = vld [vmem:[#allocation10 + $0x758] sm:$0xff]
    %v383 = vld [vmem:[#allocation10 + $0x760] sm:$0xff]
    %v384 = vld [vmem:[#allocation10 + $0x768] sm:$0xff]
    %v385 = vld [vmem:[#allocation10 + $0x770] sm:$0xff]
    %v386 = vld [vmem:[#allocation10 + $0x778] sm:$0xff]
    %v387 = vld [vmem:[#allocation10 + $0x780] sm:$0xff]
    %v388 = vld [vmem:[#allocation10 + $0x788] sm:$0xff]
    %v389 = vld [vmem:[#allocation10 + $0x790] sm:$0xff]
    %v390 = vld [vmem:[#allocation10 + $0x798] sm:$0xff]
    %v391 = vld [vmem:[#allocation10 + $0x7a0] sm:$0xff]
    %v392 = vld [vmem:[#allocation10 + $0x7a8] sm:$0xff]
    %v393 = vld [vmem:[#allocation10 + $0x7b0] sm:$0xff]
    %v394 = vld [vmem:[#allocation10 + $0x7b8] sm:$0xff]
    %v395 = vld [vmem:[#allocation10 + $0x7c0] sm:$0xff]
    %v396 = vld [vmem:[#allocation10 + $0x7c8] sm:$0xff]
    %v397 = vld [vmem:[#allocation10 + $0x7d0] sm:$0xff]
    %v398 = vld [vmem:[#allocation10 + $0x7d8] sm:$0xff]
    %v399 = vld [vmem:[#allocation10 + $0x7e0] sm:$0xff]
    %v400 = vld [vmem:[#allocation10 + $0x7e8] sm:$0xff]
    %v401 = vld [vmem:[#allocation10 + $0x7f0] sm:$0xff]
    %v402 = vld [vmem:[#allocation10 + $0x7f8] sm:$0xff]
    %v403 = vld [vmem:[#allocation10 + $0x800] sm:$0xff]
    %v404 = vld [vmem:[#allocation10 + $0x808] sm:$0xff]
    %v405 = vld [vmem:[#allocation10 + $0x810] sm:$0xff]
    %v406 = vld [vmem:[#allocation10 + $0x818] sm:$0xff]
    %v407 = vld [vmem:[#allocation10 + $0x820] sm:$0xff]
    %v408 = vld [vmem:[#allocation10 + $0x828] sm:$0xff]
    %v409 = vld [vmem:[#allocation10 + $0x830] sm:$0xff]
    %v410 = vld [vmem:[#allocation10 + $0x838] sm:$0xff]
    %v411 = vld [vmem:[#allocation10 + $0x840] sm:$0xff]
    %v412 = vld [vmem:[#allocation10 + $0x848] sm:$0xff]
    %v413 = vld [vmem:[#allocation10 + $0x850] sm:$0xff]
    %v414 = vld [vmem:[#allocation10 + $0x858] sm:$0xff]
    %v415 = vld [vmem:[#allocation10 + $0x860] sm:$0xff]
    %v416 = vld [vmem:[#allocation10 + $0x868] sm:$0xff]
    %v417 = vld [vmem:[#allocation10 + $0x870] sm:$0xff]
    %v418 = vld [vmem:[#allocation10 + $0x878] sm:$0xff]
    %v419 = vld [vmem:[#allocation10 + $0x880] sm:$0xff]
    %v420 = vld [vmem:[#allocation10 + $0x888] sm:$0xff]
    %v421 = vld [vmem:[#allocation10 + $0x890] sm:$0xff]
    %v422 = vld [vmem:[#allocation10 + $0x898] sm:$0xff]
    %v423 = vld [vmem:[#allocation10 + $0x8a0] sm:$0xff]
    %v424 = vld [vmem:[#allocation10 + $0x8a8] sm:$0xff]
    %v425 = vld [vmem:[#allocation10 + $0x8b0] sm:$0xff]
    %v426 = vld [vmem:[#allocation10 + $0x8b8] sm:$0xff]
    %v427 = vld [vmem:[#allocation10 + $0x8c0] sm:$0xff]
    %v428 = vld [vmem:[#allocation10 + $0x8c8] sm:$0xff]
    %v429 = vld [vmem:[#allocation10 + $0x8d0] sm:$0xff]
    %v430 = vld [vmem:[#allocation10 + $0x8d8] sm:$0xff]
    %v431 = vld [vmem:[#allocation10 + $0x8e0] sm:$0xff]
    %v432 = vld [vmem:[#allocation10 + $0x8e8] sm:$0xff]
    %v433 = vld [vmem:[#allocation10 + $0x8f0] sm:$0xff]
    %v434 = vld [vmem:[#allocation10 + $0x8f8] sm:$0xff]
    %v435 = vld [vmem:[#allocation10 + $0x900] sm:$0xff]
    %v436 = vld [vmem:[#allocation10 + $0x908] sm:$0xff]
    %v437 = vld [vmem:[#allocation10 + $0x910] sm:$0xff]
    %v438 = vld [vmem:[#allocation10 + $0x918] sm:$0xff]
    %v439 = vld [vmem:[#allocation10 + $0x920] sm:$0xff]
    %v440 = vld [vmem:[#allocation10 + $0x928] sm:$0xff]
    %v441 = vld [vmem:[#allocation10 + $0x930] sm:$0xff]
    %v442 = vld [vmem:[#allocation10 + $0x938] sm:$0xff]
    %v443 = vld [vmem:[#allocation10 + $0x940] sm:$0xff]
    %v444 = vld [vmem:[#allocation10 + $0x948] sm:$0xff]
    %v445 = vld [vmem:[#allocation10 + $0x950] sm:$0xff]
    %v446 = vld [vmem:[#allocation10 + $0x958] sm:$0xff]
    %v447 = vld [vmem:[#allocation10 + $0x960] sm:$0xff]
    %v448 = vld [vmem:[#allocation10 + $0x968] sm:$0xff]
    %v449 = vld [vmem:[#allocation10 + $0x970] sm:$0xff]
    %v450 = vld [vmem:[#allocation10 + $0x978] sm:$0xff]
    %v451 = vld [vmem:[#allocation10 + $0x980] sm:$0xff]
    %v452 = vld [vmem:[#allocation10 + $0x988] sm:$0xff]
    %v453 = vld [vmem:[#allocation10 + $0x990] sm:$0xff]
    %v454 = vld [vmem:[#allocation10 + $0x998] sm:$0xff]
    %v455 = vld [vmem:[#allocation10 + $0x9a0] sm:$0xff]
    %v456 = vld [vmem:[#allocation10 + $0x9a8] sm:$0xff]
    %v457 = vld [vmem:[#allocation10 + $0x9b0] sm:$0xff]
    %v458 = vld [vmem:[#allocation10 + $0x9b8] sm:$0xff]
    %v459 = vld [vmem:[#allocation10 + $0x9c0] sm:$0xff]
    %v460 = vld [vmem:[#allocation10 + $0x9c8] sm:$0xff]
    %v461 = vld [vmem:[#allocation10 + $0x9d0] sm:$0xff]
    %v462 = vld [vmem:[#allocation10 + $0x9d8] sm:$0xff]
    %v463 = vld [vmem:[#allocation10 + $0x9e0] sm:$0xff]
    %v464 = vld [vmem:[#allocation10 + $0x9e8] sm:$0xff]
    %v465 = vld [vmem:[#allocation10 + $0x9f0] sm:$0xff]
    %v466 = vld [vmem:[#allocation10 + $0x9f8] sm:$0xff]
    %v467 = vld [vmem:[#allocation10 + $0xa00] sm:$0xff]
    %v468 = vld [vmem:[#allocation10 + $0xa08] sm:$0xff]
    %v469 = vld [vmem:[#allocation10 + $0xa10] sm:$0xff]
    %v470 = vld [vmem:[#allocation10 + $0xa18] sm:$0xff]
    %v471 = vld [vmem:[#allocation10 + $0xa20] sm:$0xff]
    %v472 = vld [vmem:[#allocation10 + $0xa28] sm:$0xff]
    %v473 = vld [vmem:[#allocation10 + $0xa30] sm:$0xff]
    %v474 = vld [vmem:[#allocation10 + $0xa38] sm:$0xff]
    %v475 = vld [vmem:[#allocation10 + $0xa40] sm:$0xff]
    %v476 = vld [vmem:[#allocation10 + $0xa48] sm:$0xff]
    %v477 = vld [vmem:[#allocation10 + $0xa50] sm:$0xff]
    %v478 = vld [vmem:[#allocation10 + $0xa58] sm:$0xff]
    %v479 = vld [vmem:[#allocation10 + $0xa60] sm:$0xff]
    %v480 = vld [vmem:[#allocation10 + $0xa68] sm:$0xff]
    %v481 = vld [vmem:[#allocation10 + $0xa70] sm:$0xff]
    %v482 = vld [vmem:[#allocation10 + $0xa78] sm:$0xff]
    %v483 = vld [vmem:[#allocation10 + $0xa80] sm:$0xff]
    %v484 = vld [vmem:[#allocation10 + $0xa88] sm:$0xff]
    %v485 = vld [vmem:[#allocation10 + $0xa90] sm:$0xff]
    %v486 = vld [vmem:[#allocation10 + $0xa98] sm:$0xff]
    %v487 = vld [vmem:[#allocation10 + $0xaa0] sm:$0xff]
    %v488 = vld [vmem:[#allocation10 + $0xaa8] sm:$0xff]
    %v489 = vld [vmem:[#allocation10 + $0xab0] sm:$0xff]
    %v490 = vld [vmem:[#allocation10 + $0xab8] sm:$0xff]
    %v491 = vld [vmem:[#allocation10 + $0xac0] sm:$0xff]
    %v492 = vld [vmem:[#allocation10 + $0xac8] sm:$0xff]
    %v493 = vld [vmem:[#allocation10 + $0xad0] sm:$0xff]
    %v494 = vld [vmem:[#allocation10 + $0xad8] sm:$0xff]
    %v495 = vld [vmem:[#allocation10 + $0xae0] sm:$0xff]
    %v496 = vld [vmem:[#allocation10 + $0xae8] sm:$0xff]
    %v497 = vld [vmem:[#allocation10 + $0xaf0] sm:$0xff]
    %v498 = vld [vmem:[#allocation10 + $0xaf8] sm:$0xff]
    %v499 = vld [vmem:[#allocation10 + $0xb00] sm:$0xff]
    %v500 = vld [vmem:[#allocation10 + $0xb08] sm:$0xff]
    %v501 = vld [vmem:[#allocation10 + $0xb10] sm:$0xff]
    %v502 = vld [vmem:[#allocation10 + $0xb18] sm:$0xff]
    %v503 = vld [vmem:[#allocation10 + $0xb20] sm:$0xff]
    %v504 = vld [vmem:[#allocation10 + $0xb28] sm:$0xff]
    %v505 = vld [vmem:[#allocation10 + $0xb30] sm:$0xff]
    %v506 = vld [vmem:[#allocation10 + $0xb38] sm:$0xff]
    %v507 = vld [vmem:[#allocation10 + $0xb40] sm:$0xff]
    %v508 = vld [vmem:[#allocation10 + $0xb48] sm:$0xff]
    %v509 = vld [vmem:[#allocation10 + $0xb50] sm:$0xff]
    %v510 = vld [vmem:[#allocation10 + $0xb58] sm:$0xff]
    %v511 = vld [vmem:[#allocation10 + $0xb60] sm:$0xff]
    %v512 = vld [vmem:[#allocation10 + $0xb68] sm:$0xff]
    %v513 = vld [vmem:[#allocation10 + $0xb70] sm:$0xff]
    %v514 = vld [vmem:[#allocation10 + $0xb78] sm:$0xff]
    %v515 = vld [vmem:[#allocation10 + $0xb80] sm:$0xff]
    %v516 = vld [vmem:[#allocation10 + $0xb88] sm:$0xff]
    %v517 = vld [vmem:[#allocation10 + $0xb90] sm:$0xff]
    %v518 = vld [vmem:[#allocation10 + $0xb98] sm:$0xff]
    %v519 = vld [vmem:[#allocation10 + $0xba0] sm:$0xff]
    %v520 = vld [vmem:[#allocation10 + $0xba8] sm:$0xff]
    %v521 = vld [vmem:[#allocation10 + $0xbb0] sm:$0xff]
    %v522 = vld [vmem:[#allocation10 + $0xbb8] sm:$0xff]
    %v523 = vld [vmem:[#allocation10 + $0xbc0] sm:$0xff]
    %v524 = vld [vmem:[#allocation10 + $0xbc8] sm:$0xff]
    %v525 = vld [vmem:[#allocation10 + $0xbd0] sm:$0xff]
    %v526 = vld [vmem:[#allocation10 + $0xbd8] sm:$0xff]
    %v527 = vld [vmem:[#allocation10 + $0xbe0] sm:$0xff]
    %v528 = vld [vmem:[#allocation10 + $0xbe8] sm:$0xff]
    %v529 = vld [vmem:[#allocation10 + $0xbf0] sm:$0xff]
    %v530 = vld [vmem:[#allocation10 + $0xbf8] sm:$0xff]
    %v531 = vld [vmem:[#allocation10 + $0xc00] sm:$0xff]
    %v532 = vld [vmem:[#allocation10 + $0xc08] sm:$0xff]
    %v533 = vld [vmem:[#allocation10 + $0xc10] sm:$0xff]
    %v534 = vld [vmem:[#allocation10 + $0xc18] sm:$0xff]
    %v535 = vld [vmem:[#allocation10 + $0xc20] sm:$0xff]
    %v536 = vld [vmem:[#allocation10 + $0xc28] sm:$0xff]
    %v537 = vld [vmem:[#allocation10 + $0xc30] sm:$0xff]
    %v538 = vld [vmem:[#allocation10 + $0xc38] sm:$0xff]
    %v539 = vld [vmem:[#allocation10 + $0xc40] sm:$0xff]
    %v540 = vld [vmem:[#allocation10 + $0xc48] sm:$0xff]
    %v541 = vld [vmem:[#allocation10 + $0xc50] sm:$0xff]
    %v542 = vld [vmem:[#allocation10 + $0xc58] sm:$0xff]
    %v543 = vld [vmem:[#allocation10 + $0xc60] sm:$0xff]
    %v544 = vld [vmem:[#allocation10 + $0xc68] sm:$0xff]
    %v545 = vld [vmem:[#allocation10 + $0xc70] sm:$0xff]
    %v546 = vld [vmem:[#allocation10 + $0xc78] sm:$0xff]
    %v547 = vld [vmem:[#allocation10 + $0xc80] sm:$0xff]
    %v548 = vld [vmem:[#allocation10 + $0xc88] sm:$0xff]
    %v549 = vld [vmem:[#allocation10 + $0xc90] sm:$0xff]
    %v550 = vld [vmem:[#allocation10 + $0xc98] sm:$0xff]
    %v551 = vld [vmem:[#allocation10 + $0xca0] sm:$0xff]
    %v552 = vld [vmem:[#allocation10 + $0xca8] sm:$0xff]
    %v553 = vld [vmem:[#allocation10 + $0xcb0] sm:$0xff]
    %v554 = vld [vmem:[#allocation10 + $0xcb8] sm:$0xff]
    %v555 = vld [vmem:[#allocation10 + $0xcc0] sm:$0xff]
    %v556 = vld [vmem:[#allocation10 + $0xcc8] sm:$0xff]
    %v557 = vld [vmem:[#allocation10 + $0xcd0] sm:$0xff]
    %v558 = vld [vmem:[#allocation10 + $0xcd8] sm:$0xff]
    %v559 = vld [vmem:[#allocation10 + $0xce0] sm:$0xff]
    %v560 = vld [vmem:[#allocation10 + $0xce8] sm:$0xff]
    %v561 = vld [vmem:[#allocation10 + $0xcf0] sm:$0xff]
    %v562 = vld [vmem:[#allocation10 + $0xcf8] sm:$0xff]
    %v563 = vld [vmem:[#allocation10 + $0xd00] sm:$0xff]
    %v564 = vld [vmem:[#allocation10 + $0xd08] sm:$0xff]
    %v565 = vld [vmem:[#allocation10 + $0xd10] sm:$0xff]
    %v566 = vld [vmem:[#allocation10 + $0xd18] sm:$0xff]
    %v567 = vld [vmem:[#allocation10 + $0xd20] sm:$0xff]
    %v568 = vld [vmem:[#allocation10 + $0xd28] sm:$0xff]
    %v569 = vld [vmem:[#allocation10 + $0xd30] sm:$0xff]
    %v570 = vld [vmem:[#allocation10 + $0xd38] sm:$0xff]
    %v571 = vld [vmem:[#allocation10 + $0xd40] sm:$0xff]
    %v572 = vld [vmem:[#allocation10 + $0xd48] sm:$0xff]
    %v573 = vld [vmem:[#allocation10 + $0xd50] sm:$0xff]
    %v574 = vld [vmem:[#allocation10 + $0xd58] sm:$0xff]
    %v575 = vld [vmem:[#allocation10 + $0xd60] sm:$0xff]
    %v576 = vld [vmem:[#allocation10 + $0xd68] sm:$0xff]
    %v577 = vld [vmem:[#allocation10 + $0xd70] sm:$0xff]
    %v578 = vld [vmem:[#allocation10 + $0xd78] sm:$0xff]
    %v579 = vld [vmem:[#allocation10 + $0xd80] sm:$0xff]
    %v580 = vld [vmem:[#allocation10 + $0xd88] sm:$0xff]
    %v581 = vld [vmem:[#allocation10 + $0xd90] sm:$0xff]
    %v582 = vld [vmem:[#allocation10 + $0xd98] sm:$0xff]
    %v583 = vld [vmem:[#allocation10 + $0xda0] sm:$0xff]
    %v584 = vld [vmem:[#allocation10 + $0xda8] sm:$0xff]
    %v585 = vld [vmem:[#allocation10 + $0xdb0] sm:$0xff]
    %v586 = vld [vmem:[#allocation10 + $0xdb8] sm:$0xff]
    %v587 = vld [vmem:[#allocation10 + $0xdc0] sm:$0xff]
    %v588 = vld [vmem:[#allocation10 + $0xdc8] sm:$0xff]
    %v589 = vld [vmem:[#allocation10 + $0xdd0] sm:$0xff]
    %v590 = vld [vmem:[#allocation10 + $0xdd8] sm:$0xff]
    %v591 = vld [vmem:[#allocation10 + $0xde0] sm:$0xff]
    %v592 = vld [vmem:[#allocation10 + $0xde8] sm:$0xff]
    %v593 = vld [vmem:[#allocation10 + $0xdf0] sm:$0xff]
    %v594 = vld [vmem:[#allocation10 + $0xdf8] sm:$0xff]
    %v595 = vld [vmem:[#allocation10 + $0xe00] sm:$0xff]
    %v596 = vld [vmem:[#allocation10 + $0xe08] sm:$0xff]
    %v597 = vld [vmem:[#allocation10 + $0xe10] sm:$0xff]
    %v598 = vld [vmem:[#allocation10 + $0xe18] sm:$0xff]
    %v599 = vld [vmem:[#allocation10 + $0xe20] sm:$0xff]
    %v600 = vld [vmem:[#allocation10 + $0xe28] sm:$0xff]
    %v601 = vld [vmem:[#allocation10 + $0xe30] sm:$0xff]
    %v602 = vld [vmem:[#allocation10 + $0xe38] sm:$0xff]
    %v603 = vld [vmem:[#allocation10 + $0xe40] sm:$0xff]
    %v604 = vld [vmem:[#allocation10 + $0xe48] sm:$0xff]
    %v605 = vld [vmem:[#allocation10 + $0xe50] sm:$0xff]
    %v606 = vld [vmem:[#allocation10 + $0xe58] sm:$0xff]
    %v607 = vld [vmem:[#allocation10 + $0xe60] sm:$0xff]
    %v608 = vld [vmem:[#allocation10 + $0xe68] sm:$0xff]
    %v609 = vld [vmem:[#allocation10 + $0xe70] sm:$0xff]
    %v610 = vld [vmem:[#allocation10 + $0xe78] sm:$0xff]
    %v611 = vld [vmem:[#allocation10 + $0xe80] sm:$0xff]
    %v612 = vld [vmem:[#allocation10 + $0xe88] sm:$0xff]
    %v613 = vld [vmem:[#allocation10 + $0xe90] sm:$0xff]
    %v614 = vld [vmem:[#allocation10 + $0xe98] sm:$0xff]
    %v615 = vld [vmem:[#allocation10 + $0xea0] sm:$0xff]
    %v616 = vld [vmem:[#allocation10 + $0xea8] sm:$0xff]
    %v617 = vld [vmem:[#allocation10 + $0xeb0] sm:$0xff]
    %v618 = vld [vmem:[#allocation10 + $0xeb8] sm:$0xff]
    %v619 = vld [vmem:[#allocation10 + $0xec0] sm:$0xff]
    %v620 = vld [vmem:[#allocation10 + $0xec8] sm:$0xff]
    %v621 = vld [vmem:[#allocation10 + $0xed0] sm:$0xff]
    %v622 = vld [vmem:[#allocation10 + $0xed8] sm:$0xff]
    %v623 = vld [vmem:[#allocation10 + $0xee0] sm:$0xff]
    %v624 = vld [vmem:[#allocation10 + $0xee8] sm:$0xff]
    %v625 = vld [vmem:[#allocation10 + $0xef0] sm:$0xff]
    %v626 = vld [vmem:[#allocation10 + $0xef8] sm:$0xff]
    %v627 = vld [vmem:[#allocation12] sm:$0xff]
    %v628 = vld [vmem:[#allocation12 + $0x8] sm:$0xf]
    %v631 = vlaneseq
    %v632 = vshrl.u32 %v631, 7
    %v633 = vsub.s32 0, %v632
    %v634 = vrot.slane %v627, %v633
    %v635 = vlaneseq
    %v636 = vshrl.u32 %v635, 7
    %v637 = vsub.s32 1, %v636
    %v638 = vrot.slane %v627, %v637
    %v639 = vlaneseq
    %v640 = vshrl.u32 %v639, 7
    %v641 = vsub.s32 2, %v640
    %v642 = vrot.slane %v627, %v641
    %v643 = vlaneseq
    %v644 = vshrl.u32 %v643, 7
    %v645 = vsub.s32 3, %v644
    %v646 = vrot.slane %v627, %v645
    %v647 = vlaneseq
    %v648 = vshrl.u32 %v647, 7
    %v649 = vsub.s32 4, %v648
    %v650 = vrot.slane %v627, %v649
    %v651 = vlaneseq
    %v652 = vshrl.u32 %v651, 7
    %v653 = vsub.s32 5, %v652
    %v654 = vrot.slane %v627, %v653
    %v655 = vlaneseq
    %v656 = vshrl.u32 %v655, 7
    %v657 = vsub.s32 6, %v656
    %v658 = vrot.slane %v627, %v657
    %v659 = vlaneseq
    %v660 = vshrl.u32 %v659, 7
    %v661 = vsub.s32 7, %v660
    %v662 = vrot.slane %v627, %v661
    %v663 = vlaneseq
    %v664 = vshrl.u32 %v663, 7
    %v665 = vsub.s32 0, %v664
    %v666 = vrot.slane %v628, %v665
    %v667 = vlaneseq
    %v668 = vshrl.u32 %v667, 7
    %v669 = vsub.s32 1, %v668
    %v670 = vrot.slane %v628, %v669
    %v671 = vlaneseq
    %v672 = vshrl.u32 %v671, 7
    %v673 = vsub.s32 2, %v672
    %v674 = vrot.slane %v628, %v673
    %v675 = vlaneseq
    %v676 = vshrl.u32 %v675, 7
    %v677 = vsub.s32 3, %v676
    %v678 = vrot.slane %v628, %v677
    %v715 = vunpack.c.l.b16 %v123
    %v716 = vunpack.c.h.b16 %v123
    %v717 = vunpack.c.l.b16 %v124
    %v718 = vunpack.c.h.b16 %v124
    %v719 = vunpack.c.l.b16 %v125
    %v720 = vunpack.c.l.b16 %v126
    %v721 = vunpack.c.h.b16 %v126
    %v722 = vunpack.c.l.b16 %v127
    %v723 = vunpack.c.h.b16 %v127
    %v724 = vunpack.c.l.b16 %v128
    %v725 = vunpack.c.l.b16 %v129
    %v726 = vunpack.c.h.b16 %v129
    %v727 = vunpack.c.l.b16 %v130
    %v728 = vunpack.c.h.b16 %v130
    %v729 = vunpack.c.l.b16 %v131
    %v730 = vunpack.c.l.b16 %v132
    %v731 = vunpack.c.h.b16 %v132
    %v732 = vunpack.c.l.b16 %v133
    %v733 = vunpack.c.h.b16 %v133
    %v734 = vunpack.c.l.b16 %v134
    %v735 = vunpack.c.l.b16 %v135
    %v736 = vunpack.c.h.b16 %v135
    %v737 = vunpack.c.l.b16 %v136
    %v738 = vunpack.c.h.b16 %v136
    %v739 = vunpack.c.l.b16 %v137
    %v740 = vunpack.c.l.b16 %v138
    %v741 = vunpack.c.h.b16 %v138
    %v742 = vunpack.c.l.b16 %v139
    %v743 = vunpack.c.h.b16 %v139
    %v744 = vunpack.c.l.b16 %v140
    %v745 = vunpack.c.l.b16 %v141
    %v746 = vunpack.c.h.b16 %v141
    %v747 = vunpack.c.l.b16 %v142
    %v748 = vunpack.c.h.b16 %v142
    %v749 = vunpack.c.l.b16 %v143
    %v750 = vunpack.c.l.b16 %v144
    %v751 = vunpack.c.h.b16 %v144
    %v752 = vunpack.c.l.b16 %v145
    %v753 = vunpack.c.h.b16 %v145
    %v754 = vunpack.c.l.b16 %v146
    %v755 = vpack.c.b16 %v720, %v715
    %v756 = vpack.c.b16 %v721, %v716
    %v757 = vpack.c.b16 %v722, %v717
    %v758 = vpack.c.b16 %v723, %v718
    %v759 = vpack.c.b16 %v724, %v719
    %v760 = vpack.c.b16 %v730, %v725
    %v761 = vpack.c.b16 %v731, %v726
    %v762 = vpack.c.b16 %v732, %v727
    %v763 = vpack.c.b16 %v733, %v728
    %v764 = vpack.c.b16 %v734, %v729
    %v765 = vpack.c.b16 %v740, %v735
    %v766 = vpack.c.b16 %v741, %v736
    %v767 = vpack.c.b16 %v742, %v737
    %v768 = vpack.c.b16 %v743, %v738
    %v769 = vpack.c.b16 %v744, %v739
    %v770 = vpack.c.b16 %v750, %v745
    %v771 = vpack.c.b16 %v751, %v746
    %v772 = vpack.c.b16 %v752, %v747
    %v773 = vpack.c.b16 %v753, %v748
    %v774 = vpack.c.b16 %v754, %v749
    %v1275 = vunpack.c.l.b16 %v147
    %v1276 = vunpack.c.h.b16 %v147
    %v1277 = vunpack.c.l.b16 %v148
    %v1278 = vunpack.c.h.b16 %v148
    %v1279 = vunpack.c.l.b16 %v149
    %v1280 = vunpack.c.h.b16 %v149
    %v1281 = vunpack.c.l.b16 %v150
    %v1282 = vunpack.c.h.b16 %v150
    %v1283 = vunpack.c.l.b16 %v151
    %v1284 = vunpack.c.h.b16 %v151
    %v1285 = vunpack.c.l.b16 %v152
    %v1286 = vunpack.c.h.b16 %v152
    %v1287 = vunpack.c.l.b16 %v153
    %v1288 = vunpack.c.h.b16 %v153
    %v1289 = vunpack.c.l.b16 %v154
    %v1290 = vunpack.c.h.b16 %v154
    %v1291 = vunpack.c.l.b16 %v155
    %v1292 = vunpack.c.h.b16 %v155
    %v1293 = vunpack.c.l.b16 %v156
    %v1294 = vunpack.c.h.b16 %v156
    %v1295 = vunpack.c.l.b16 %v157
    %v1296 = vunpack.c.h.b16 %v157
    %v1297 = vunpack.c.l.b16 %v158
    %v1298 = vunpack.c.h.b16 %v158
    %v1299 = vunpack.c.l.b16 %v159
    %v1300 = vunpack.c.h.b16 %v159
    %v1301 = vunpack.c.l.b16 %v160
    %v1302 = vunpack.c.h.b16 %v160
    %v1303 = vunpack.c.l.b16 %v161
    %v1304 = vunpack.c.h.b16 %v161
    %v1305 = vunpack.c.l.b16 %v162
    %v1306 = vunpack.c.h.b16 %v162
    %v1307 = vunpack.c.l.b16 %v163
    %v1308 = vunpack.c.h.b16 %v163
    %v1309 = vunpack.c.l.b16 %v164
    %v1310 = vunpack.c.h.b16 %v164
    %v1311 = vunpack.c.l.b16 %v165
    %v1312 = vunpack.c.h.b16 %v165
    %v1313 = vunpack.c.l.b16 %v166
    %v1314 = vunpack.c.h.b16 %v166
    %v1315 = vunpack.c.l.b16 %v167
    %v1316 = vunpack.c.h.b16 %v167
    %v1317 = vunpack.c.l.b16 %v168
    %v1318 = vunpack.c.h.b16 %v168
    %v1319 = vunpack.c.l.b16 %v169
    %v1320 = vunpack.c.h.b16 %v169
    %v1321 = vunpack.c.l.b16 %v170
    %v1322 = vunpack.c.h.b16 %v170
    %v1323 = vunpack.c.l.b16 %v171
    %v1324 = vunpack.c.h.b16 %v171
    %v1325 = vunpack.c.l.b16 %v172
    %v1326 = vunpack.c.h.b16 %v172
    %v1327 = vunpack.c.l.b16 %v173
    %v1328 = vunpack.c.h.b16 %v173
    %v1329 = vunpack.c.l.b16 %v174
    %v1330 = vunpack.c.h.b16 %v174
    %v1331 = vunpack.c.l.b16 %v175
    %v1332 = vunpack.c.h.b16 %v175
    %v1333 = vunpack.c.l.b16 %v176
    %v1334 = vunpack.c.h.b16 %v176
    %v1335 = vunpack.c.l.b16 %v177
    %v1336 = vunpack.c.h.b16 %v177
    %v1337 = vunpack.c.l.b16 %v178
    %v1338 = vunpack.c.h.b16 %v178
    %v1339 = vunpack.c.l.b16 %v179
    %v1340 = vunpack.c.h.b16 %v179
    %v1341 = vunpack.c.l.b16 %v180
    %v1342 = vunpack.c.h.b16 %v180
    %v1343 = vunpack.c.l.b16 %v181
    %v1344 = vunpack.c.h.b16 %v181
    %v1345 = vunpack.c.l.b16 %v182
    %v1346 = vunpack.c.h.b16 %v182
    %v1347 = vunpack.c.l.b16 %v183
    %v1348 = vunpack.c.h.b16 %v183
    %v1349 = vunpack.c.l.b16 %v184
    %v1350 = vunpack.c.h.b16 %v184
    %v1351 = vunpack.c.l.b16 %v185
    %v1352 = vunpack.c.h.b16 %v185
    %v1353 = vunpack.c.l.b16 %v186
    %v1354 = vunpack.c.h.b16 %v186
    %v1355 = vunpack.c.l.b16 %v187
    %v1356 = vunpack.c.h.b16 %v187
    %v1357 = vunpack.c.l.b16 %v188
    %v1358 = vunpack.c.h.b16 %v188
    %v1359 = vunpack.c.l.b16 %v189
    %v1360 = vunpack.c.h.b16 %v189
    %v1361 = vunpack.c.l.b16 %v190
    %v1362 = vunpack.c.h.b16 %v190
    %v1363 = vunpack.c.l.b16 %v191
    %v1364 = vunpack.c.h.b16 %v191
    %v1365 = vunpack.c.l.b16 %v192
    %v1366 = vunpack.c.h.b16 %v192
    %v1367 = vunpack.c.l.b16 %v193
    %v1368 = vunpack.c.h.b16 %v193
    %v1369 = vunpack.c.l.b16 %v194
    %v1370 = vunpack.c.h.b16 %v194
    %v1371 = vunpack.c.l.b16 %v195
    %v1372 = vunpack.c.h.b16 %v195
    %v1373 = vunpack.c.l.b16 %v196
    %v1374 = vunpack.c.h.b16 %v196
    %v1375 = vunpack.c.l.b16 %v197
    %v1376 = vunpack.c.h.b16 %v197
    %v1377 = vunpack.c.l.b16 %v198
    %v1378 = vunpack.c.h.b16 %v198
    %v1379 = vunpack.c.l.b16 %v199
    %v1380 = vunpack.c.h.b16 %v199
    %v1381 = vunpack.c.l.b16 %v200
    %v1382 = vunpack.c.h.b16 %v200
    %v1383 = vunpack.c.l.b16 %v201
    %v1384 = vunpack.c.h.b16 %v201
    %v1385 = vunpack.c.l.b16 %v202
    %v1386 = vunpack.c.h.b16 %v202
    %v1387 = vunpack.c.l.b16 %v203
    %v1388 = vunpack.c.h.b16 %v203
    %v1389 = vunpack.c.l.b16 %v204
    %v1390 = vunpack.c.h.b16 %v204
    %v1391 = vunpack.c.l.b16 %v205
    %v1392 = vunpack.c.h.b16 %v205
    %v1393 = vunpack.c.l.b16 %v206
    %v1394 = vunpack.c.h.b16 %v206
    %v1395 = vunpack.c.l.b16 %v207
    %v1396 = vunpack.c.h.b16 %v207
    %v1397 = vunpack.c.l.b16 %v208
    %v1398 = vunpack.c.h.b16 %v208
    %v1399 = vunpack.c.l.b16 %v209
    %v1400 = vunpack.c.h.b16 %v209
    %v1401 = vunpack.c.l.b16 %v210
    %v1402 = vunpack.c.h.b16 %v210
    %v1403 = vunpack.c.l.b16 %v211
    %v1404 = vunpack.c.h.b16 %v211
    %v1405 = vunpack.c.l.b16 %v212
    %v1406 = vunpack.c.h.b16 %v212
    %v1407 = vunpack.c.l.b16 %v213
    %v1408 = vunpack.c.h.b16 %v213
    %v1409 = vunpack.c.l.b16 %v214
    %v1410 = vunpack.c.h.b16 %v214
    %v1411 = vunpack.c.l.b16 %v215
    %v1412 = vunpack.c.h.b16 %v215
    %v1413 = vunpack.c.l.b16 %v216
    %v1414 = vunpack.c.h.b16 %v216
    %v1415 = vunpack.c.l.b16 %v217
    %v1416 = vunpack.c.h.b16 %v217
    %v1417 = vunpack.c.l.b16 %v218
    %v1418 = vunpack.c.h.b16 %v218
    %v1419 = vunpack.c.l.b16 %v219
    %v1420 = vunpack.c.h.b16 %v219
    %v1421 = vunpack.c.l.b16 %v220
    %v1422 = vunpack.c.h.b16 %v220
    %v1423 = vunpack.c.l.b16 %v221
    %v1424 = vunpack.c.h.b16 %v221
    %v1425 = vunpack.c.l.b16 %v222
    %v1426 = vunpack.c.h.b16 %v222
    %v1427 = vunpack.c.l.b16 %v223
    %v1428 = vunpack.c.h.b16 %v223
    %v1429 = vunpack.c.l.b16 %v224
    %v1430 = vunpack.c.h.b16 %v224
    %v1431 = vunpack.c.l.b16 %v225
    %v1432 = vunpack.c.h.b16 %v225
    %v1433 = vunpack.c.l.b16 %v226
    %v1434 = vunpack.c.h.b16 %v226
    %v1435 = vunpack.c.l.b16 %v227
    %v1436 = vunpack.c.h.b16 %v227
    %v1437 = vunpack.c.l.b16 %v228
    %v1438 = vunpack.c.h.b16 %v228
    %v1439 = vunpack.c.l.b16 %v229
    %v1440 = vunpack.c.h.b16 %v229
    %v1441 = vunpack.c.l.b16 %v230
    %v1442 = vunpack.c.h.b16 %v230
    %v1443 = vunpack.c.l.b16 %v231
    %v1444 = vunpack.c.h.b16 %v231
    %v1445 = vunpack.c.l.b16 %v232
    %v1446 = vunpack.c.h.b16 %v232
    %v1447 = vunpack.c.l.b16 %v233
    %v1448 = vunpack.c.h.b16 %v233
    %v1449 = vunpack.c.l.b16 %v234
    %v1450 = vunpack.c.h.b16 %v234
    %v1451 = vunpack.c.l.b16 %v235
    %v1452 = vunpack.c.h.b16 %v235
    %v1453 = vunpack.c.l.b16 %v236
    %v1454 = vunpack.c.h.b16 %v236
    %v1455 = vunpack.c.l.b16 %v237
    %v1456 = vunpack.c.h.b16 %v237
    %v1457 = vunpack.c.l.b16 %v238
    %v1458 = vunpack.c.h.b16 %v238
    %v1459 = vunpack.c.l.b16 %v239
    %v1460 = vunpack.c.h.b16 %v239
    %v1461 = vunpack.c.l.b16 %v240
    %v1462 = vunpack.c.h.b16 %v240
    %v1463 = vunpack.c.l.b16 %v241
    %v1464 = vunpack.c.h.b16 %v241
    %v1465 = vunpack.c.l.b16 %v242
    %v1466 = vunpack.c.h.b16 %v242
    %v1467 = vunpack.c.l.b16 %v243
    %v1468 = vunpack.c.h.b16 %v243
    %v1469 = vunpack.c.l.b16 %v244
    %v1470 = vunpack.c.h.b16 %v244
    %v1471 = vunpack.c.l.b16 %v245
    %v1472 = vunpack.c.h.b16 %v245
    %v1473 = vunpack.c.l.b16 %v246
    %v1474 = vunpack.c.h.b16 %v246
    %v1475 = vunpack.c.l.b16 %v247
    %v1476 = vunpack.c.h.b16 %v247
    %v1477 = vunpack.c.l.b16 %v248
    %v1478 = vunpack.c.h.b16 %v248
    %v1479 = vunpack.c.l.b16 %v249
    %v1480 = vunpack.c.h.b16 %v249
    %v1481 = vunpack.c.l.b16 %v250
    %v1482 = vunpack.c.h.b16 %v250
    %v1483 = vunpack.c.l.b16 %v251
    %v1484 = vunpack.c.h.b16 %v251
    %v1485 = vunpack.c.l.b16 %v252
    %v1486 = vunpack.c.h.b16 %v252
    %v1487 = vunpack.c.l.b16 %v253
    %v1488 = vunpack.c.h.b16 %v253
    %v1489 = vunpack.c.l.b16 %v254
    %v1490 = vunpack.c.h.b16 %v254
    %v1491 = vunpack.c.l.b16 %v255
    %v1492 = vunpack.c.h.b16 %v255
    %v1493 = vunpack.c.l.b16 %v256
    %v1494 = vunpack.c.h.b16 %v256
    %v1495 = vunpack.c.l.b16 %v257
    %v1496 = vunpack.c.h.b16 %v257
    %v1497 = vunpack.c.l.b16 %v258
    %v1498 = vunpack.c.h.b16 %v258
    %v1499 = vunpack.c.l.b16 %v259
    %v1500 = vunpack.c.h.b16 %v259
    %v1501 = vunpack.c.l.b16 %v260
    %v1502 = vunpack.c.h.b16 %v260
    %v1503 = vunpack.c.l.b16 %v261
    %v1504 = vunpack.c.h.b16 %v261
    %v1505 = vunpack.c.l.b16 %v262
    %v1506 = vunpack.c.h.b16 %v262
    %v1507 = vunpack.c.l.b16 %v263
    %v1508 = vunpack.c.h.b16 %v263
    %v1509 = vunpack.c.l.b16 %v264
    %v1510 = vunpack.c.h.b16 %v264
    %v1511 = vunpack.c.l.b16 %v265
    %v1512 = vunpack.c.h.b16 %v265
    %v1513 = vunpack.c.l.b16 %v266
    %v1514 = vunpack.c.h.b16 %v266
    %v1515 = vunpack.c.l.b16 %v267
    %v1516 = vunpack.c.h.b16 %v267
    %v1517 = vunpack.c.l.b16 %v268
    %v1518 = vunpack.c.h.b16 %v268
    %v1519 = vunpack.c.l.b16 %v269
    %v1520 = vunpack.c.h.b16 %v269
    %v1521 = vunpack.c.l.b16 %v270
    %v1522 = vunpack.c.h.b16 %v270
    %v1523 = vunpack.c.l.b16 %v271
    %v1524 = vunpack.c.h.b16 %v271
    %v1525 = vunpack.c.l.b16 %v272
    %v1526 = vunpack.c.h.b16 %v272
    %v1527 = vunpack.c.l.b16 %v273
    %v1528 = vunpack.c.h.b16 %v273
    %v1529 = vunpack.c.l.b16 %v274
    %v1530 = vunpack.c.h.b16 %v274
    %v1531 = vunpack.c.l.b16 %v275
    %v1532 = vunpack.c.h.b16 %v275
    %v1533 = vunpack.c.l.b16 %v276
    %v1534 = vunpack.c.h.b16 %v276
    %v1535 = vunpack.c.l.b16 %v277
    %v1536 = vunpack.c.h.b16 %v277
    %v1537 = vunpack.c.l.b16 %v278
    %v1538 = vunpack.c.h.b16 %v278
    %v1539 = vunpack.c.l.b16 %v279
    %v1540 = vunpack.c.h.b16 %v279
    %v1541 = vunpack.c.l.b16 %v280
    %v1542 = vunpack.c.h.b16 %v280
    %v1543 = vunpack.c.l.b16 %v281
    %v1544 = vunpack.c.h.b16 %v281
    %v1545 = vunpack.c.l.b16 %v282
    %v1546 = vunpack.c.h.b16 %v282
    %v1547 = vunpack.c.l.b16 %v283
    %v1548 = vunpack.c.h.b16 %v283
    %v1549 = vunpack.c.l.b16 %v284
    %v1550 = vunpack.c.h.b16 %v284
    %v1551 = vunpack.c.l.b16 %v285
    %v1552 = vunpack.c.h.b16 %v285
    %v1553 = vunpack.c.l.b16 %v286
    %v1554 = vunpack.c.h.b16 %v286
    %v1555 = vunpack.c.l.b16 %v287
    %v1556 = vunpack.c.h.b16 %v287
    %v1557 = vunpack.c.l.b16 %v288
    %v1558 = vunpack.c.h.b16 %v288
    %v1559 = vunpack.c.l.b16 %v289
    %v1560 = vunpack.c.h.b16 %v289
    %v1561 = vunpack.c.l.b16 %v290
    %v1562 = vunpack.c.h.b16 %v290
    %v1563 = vunpack.c.l.b16 %v291
    %v1564 = vunpack.c.h.b16 %v291
    %v1565 = vunpack.c.l.b16 %v292
    %v1566 = vunpack.c.h.b16 %v292
    %v1567 = vunpack.c.l.b16 %v293
    %v1568 = vunpack.c.h.b16 %v293
    %v1569 = vunpack.c.l.b16 %v294
    %v1570 = vunpack.c.h.b16 %v294
    %v1571 = vunpack.c.l.b16 %v295
    %v1572 = vunpack.c.h.b16 %v295
    %v1573 = vunpack.c.l.b16 %v296
    %v1574 = vunpack.c.h.b16 %v296
    %v1575 = vunpack.c.l.b16 %v297
    %v1576 = vunpack.c.h.b16 %v297
    %v1577 = vunpack.c.l.b16 %v298
    %v1578 = vunpack.c.h.b16 %v298
    %v1579 = vunpack.c.l.b16 %v299
    %v1580 = vunpack.c.h.b16 %v299
    %v1581 = vunpack.c.l.b16 %v300
    %v1582 = vunpack.c.h.b16 %v300
    %v1583 = vunpack.c.l.b16 %v301
    %v1584 = vunpack.c.h.b16 %v301
    %v1585 = vunpack.c.l.b16 %v302
    %v1586 = vunpack.c.h.b16 %v302
    %v1587 = vunpack.c.l.b16 %v303
    %v1588 = vunpack.c.h.b16 %v303
    %v1589 = vunpack.c.l.b16 %v304
    %v1590 = vunpack.c.h.b16 %v304
    %v1591 = vunpack.c.l.b16 %v305
    %v1592 = vunpack.c.h.b16 %v305
    %v1593 = vunpack.c.l.b16 %v306
    %v1594 = vunpack.c.h.b16 %v306
    %v1595 = vunpack.c.l.b16 %v307
    %v1596 = vunpack.c.h.b16 %v307
    %v1597 = vunpack.c.l.b16 %v308
    %v1598 = vunpack.c.h.b16 %v308
    %v1599 = vunpack.c.l.b16 %v309
    %v1600 = vunpack.c.h.b16 %v309
    %v1601 = vunpack.c.l.b16 %v310
    %v1602 = vunpack.c.h.b16 %v310
    %v1603 = vunpack.c.l.b16 %v311
    %v1604 = vunpack.c.h.b16 %v311
    %v1605 = vunpack.c.l.b16 %v312
    %v1606 = vunpack.c.h.b16 %v312
    %v1607 = vunpack.c.l.b16 %v313
    %v1608 = vunpack.c.h.b16 %v313
    %v1609 = vunpack.c.l.b16 %v314
    %v1610 = vunpack.c.h.b16 %v314
    %v1611 = vunpack.c.l.b16 %v315
    %v1612 = vunpack.c.h.b16 %v315
    %v1613 = vunpack.c.l.b16 %v316
    %v1614 = vunpack.c.h.b16 %v316
    %v1615 = vunpack.c.l.b16 %v317
    %v1616 = vunpack.c.h.b16 %v317
    %v1617 = vunpack.c.l.b16 %v318
    %v1618 = vunpack.c.h.b16 %v318
    %v1619 = vunpack.c.l.b16 %v319
    %v1620 = vunpack.c.h.b16 %v319
    %v1621 = vunpack.c.l.b16 %v320
    %v1622 = vunpack.c.h.b16 %v320
    %v1623 = vunpack.c.l.b16 %v321
    %v1624 = vunpack.c.h.b16 %v321
    %v1625 = vunpack.c.l.b16 %v322
    %v1626 = vunpack.c.h.b16 %v322
    %v1627 = vunpack.c.l.b16 %v323
    %v1628 = vunpack.c.h.b16 %v323
    %v1629 = vunpack.c.l.b16 %v324
    %v1630 = vunpack.c.h.b16 %v324
    %v1631 = vunpack.c.l.b16 %v325
    %v1632 = vunpack.c.h.b16 %v325
    %v1633 = vunpack.c.l.b16 %v326
    %v1634 = vunpack.c.h.b16 %v326
    %v1635 = vunpack.c.l.b16 %v327
    %v1636 = vunpack.c.h.b16 %v327
    %v1637 = vunpack.c.l.b16 %v328
    %v1638 = vunpack.c.h.b16 %v328
    %v1639 = vunpack.c.l.b16 %v329
    %v1640 = vunpack.c.h.b16 %v329
    %v1641 = vunpack.c.l.b16 %v330
    %v1642 = vunpack.c.h.b16 %v330
    %v1643 = vunpack.c.l.b16 %v331
    %v1644 = vunpack.c.h.b16 %v331
    %v1645 = vunpack.c.l.b16 %v332
    %v1646 = vunpack.c.h.b16 %v332
    %v1647 = vunpack.c.l.b16 %v333
    %v1648 = vunpack.c.h.b16 %v333
    %v1649 = vunpack.c.l.b16 %v334
    %v1650 = vunpack.c.h.b16 %v334
    %v1651 = vunpack.c.l.b16 %v335
    %v1652 = vunpack.c.h.b16 %v335
    %v1653 = vunpack.c.l.b16 %v336
    %v1654 = vunpack.c.h.b16 %v336
    %v1655 = vunpack.c.l.b16 %v337
    %v1656 = vunpack.c.h.b16 %v337
    %v1657 = vunpack.c.l.b16 %v338
    %v1658 = vunpack.c.h.b16 %v338
    %v1659 = vunpack.c.l.b16 %v339
    %v1660 = vunpack.c.h.b16 %v339
    %v1661 = vunpack.c.l.b16 %v340
    %v1662 = vunpack.c.h.b16 %v340
    %v1663 = vunpack.c.l.b16 %v341
    %v1664 = vunpack.c.h.b16 %v341
    %v1665 = vunpack.c.l.b16 %v342
    %v1666 = vunpack.c.h.b16 %v342
    %v1667 = vunpack.c.l.b16 %v343
    %v1668 = vunpack.c.h.b16 %v343
    %v1669 = vunpack.c.l.b16 %v344
    %v1670 = vunpack.c.h.b16 %v344
    %v1671 = vunpack.c.l.b16 %v345
    %v1672 = vunpack.c.h.b16 %v345
    %v1673 = vunpack.c.l.b16 %v346
    %v1674 = vunpack.c.h.b16 %v346
    %v1675 = vunpack.c.l.b16 %v347
    %v1676 = vunpack.c.h.b16 %v347
    %v1677 = vunpack.c.l.b16 %v348
    %v1678 = vunpack.c.h.b16 %v348
    %v1679 = vunpack.c.l.b16 %v349
    %v1680 = vunpack.c.h.b16 %v349
    %v1681 = vunpack.c.l.b16 %v350
    %v1682 = vunpack.c.h.b16 %v350
    %v1683 = vunpack.c.l.b16 %v351
    %v1684 = vunpack.c.h.b16 %v351
    %v1685 = vunpack.c.l.b16 %v352
    %v1686 = vunpack.c.h.b16 %v352
    %v1687 = vunpack.c.l.b16 %v353
    %v1688 = vunpack.c.h.b16 %v353
    %v1689 = vunpack.c.l.b16 %v354
    %v1690 = vunpack.c.h.b16 %v354
    %v1691 = vunpack.c.l.b16 %v355
    %v1692 = vunpack.c.h.b16 %v355
    %v1693 = vunpack.c.l.b16 %v356
    %v1694 = vunpack.c.h.b16 %v356
    %v1695 = vunpack.c.l.b16 %v357
    %v1696 = vunpack.c.h.b16 %v357
    %v1697 = vunpack.c.l.b16 %v358
    %v1698 = vunpack.c.h.b16 %v358
    %v1699 = vunpack.c.l.b16 %v359
    %v1700 = vunpack.c.h.b16 %v359
    %v1701 = vunpack.c.l.b16 %v360
    %v1702 = vunpack.c.h.b16 %v360
    %v1703 = vunpack.c.l.b16 %v361
    %v1704 = vunpack.c.h.b16 %v361
    %v1705 = vunpack.c.l.b16 %v362
    %v1706 = vunpack.c.h.b16 %v362
    %v1707 = vunpack.c.l.b16 %v363
    %v1708 = vunpack.c.h.b16 %v363
    %v1709 = vunpack.c.l.b16 %v364
    %v1710 = vunpack.c.h.b16 %v364
    %v1711 = vunpack.c.l.b16 %v365
    %v1712 = vunpack.c.h.b16 %v365
    %v1713 = vunpack.c.l.b16 %v366
    %v1714 = vunpack.c.h.b16 %v366
    %v1715 = vunpack.c.l.b16 %v367
    %v1716 = vunpack.c.h.b16 %v367
    %v1717 = vunpack.c.l.b16 %v368
    %v1718 = vunpack.c.h.b16 %v368
    %v1719 = vunpack.c.l.b16 %v369
    %v1720 = vunpack.c.h.b16 %v369
    %v1721 = vunpack.c.l.b16 %v370
    %v1722 = vunpack.c.h.b16 %v370
    %v1723 = vunpack.c.l.b16 %v371
    %v1724 = vunpack.c.h.b16 %v371
    %v1725 = vunpack.c.l.b16 %v372
    %v1726 = vunpack.c.h.b16 %v372
    %v1727 = vunpack.c.l.b16 %v373
    %v1728 = vunpack.c.h.b16 %v373
    %v1729 = vunpack.c.l.b16 %v374
    %v1730 = vunpack.c.h.b16 %v374
    %v1731 = vunpack.c.l.b16 %v375
    %v1732 = vunpack.c.h.b16 %v375
    %v1733 = vunpack.c.l.b16 %v376
    %v1734 = vunpack.c.h.b16 %v376
    %v1735 = vunpack.c.l.b16 %v377
    %v1736 = vunpack.c.h.b16 %v377
    %v1737 = vunpack.c.l.b16 %v378
    %v1738 = vunpack.c.h.b16 %v378
    %v1739 = vunpack.c.l.b16 %v379
    %v1740 = vunpack.c.h.b16 %v379
    %v1741 = vunpack.c.l.b16 %v380
    %v1742 = vunpack.c.h.b16 %v380
    %v1743 = vunpack.c.l.b16 %v381
    %v1744 = vunpack.c.h.b16 %v381
    %v1745 = vunpack.c.l.b16 %v382
    %v1746 = vunpack.c.h.b16 %v382
    %v1747 = vunpack.c.l.b16 %v383
    %v1748 = vunpack.c.h.b16 %v383
    %v1749 = vunpack.c.l.b16 %v384
    %v1750 = vunpack.c.h.b16 %v384
    %v1751 = vunpack.c.l.b16 %v385
    %v1752 = vunpack.c.h.b16 %v385
    %v1753 = vunpack.c.l.b16 %v386
    %v1754 = vunpack.c.h.b16 %v386
    %v1755 = vunpack.c.l.b16 %v387
    %v1756 = vunpack.c.h.b16 %v387
    %v1757 = vunpack.c.l.b16 %v388
    %v1758 = vunpack.c.h.b16 %v388
    %v1759 = vunpack.c.l.b16 %v389
    %v1760 = vunpack.c.h.b16 %v389
    %v1761 = vunpack.c.l.b16 %v390
    %v1762 = vunpack.c.h.b16 %v390
    %v1763 = vunpack.c.l.b16 %v391
    %v1764 = vunpack.c.h.b16 %v391
    %v1765 = vunpack.c.l.b16 %v392
    %v1766 = vunpack.c.h.b16 %v392
    %v1767 = vunpack.c.l.b16 %v393
    %v1768 = vunpack.c.h.b16 %v393
    %v1769 = vunpack.c.l.b16 %v394
    %v1770 = vunpack.c.h.b16 %v394
    %v1771 = vunpack.c.l.b16 %v395
    %v1772 = vunpack.c.h.b16 %v395
    %v1773 = vunpack.c.l.b16 %v396
    %v1774 = vunpack.c.h.b16 %v396
    %v1775 = vunpack.c.l.b16 %v397
    %v1776 = vunpack.c.h.b16 %v397
    %v1777 = vunpack.c.l.b16 %v398
    %v1778 = vunpack.c.h.b16 %v398
    %v1779 = vunpack.c.l.b16 %v399
    %v1780 = vunpack.c.h.b16 %v399
    %v1781 = vunpack.c.l.b16 %v400
    %v1782 = vunpack.c.h.b16 %v400
    %v1783 = vunpack.c.l.b16 %v401
    %v1784 = vunpack.c.h.b16 %v401
    %v1785 = vunpack.c.l.b16 %v402
    %v1786 = vunpack.c.h.b16 %v402
    %v1787 = vunpack.c.l.b16 %v403
    %v1788 = vunpack.c.h.b16 %v403
    %v1789 = vunpack.c.l.b16 %v404
    %v1790 = vunpack.c.h.b16 %v404
    %v1791 = vunpack.c.l.b16 %v405
    %v1792 = vunpack.c.h.b16 %v405
    %v1793 = vunpack.c.l.b16 %v406
    %v1794 = vunpack.c.h.b16 %v406
    %v1795 = vunpack.c.l.b16 %v407
    %v1796 = vunpack.c.h.b16 %v407
    %v1797 = vunpack.c.l.b16 %v408
    %v1798 = vunpack.c.h.b16 %v408
    %v1799 = vunpack.c.l.b16 %v409
    %v1800 = vunpack.c.h.b16 %v409
    %v1801 = vunpack.c.l.b16 %v410
    %v1802 = vunpack.c.h.b16 %v410
    %v1803 = vunpack.c.l.b16 %v411
    %v1804 = vunpack.c.h.b16 %v411
    %v1805 = vunpack.c.l.b16 %v412
    %v1806 = vunpack.c.h.b16 %v412
    %v1807 = vunpack.c.l.b16 %v413
    %v1808 = vunpack.c.h.b16 %v413
    %v1809 = vunpack.c.l.b16 %v414
    %v1810 = vunpack.c.h.b16 %v414
    %v1811 = vunpack.c.l.b16 %v415
    %v1812 = vunpack.c.h.b16 %v415
    %v1813 = vunpack.c.l.b16 %v416
    %v1814 = vunpack.c.h.b16 %v416
    %v1815 = vunpack.c.l.b16 %v417
    %v1816 = vunpack.c.h.b16 %v417
    %v1817 = vunpack.c.l.b16 %v418
    %v1818 = vunpack.c.h.b16 %v418
    %v1819 = vunpack.c.l.b16 %v419
    %v1820 = vunpack.c.h.b16 %v419
    %v1821 = vunpack.c.l.b16 %v420
    %v1822 = vunpack.c.h.b16 %v420
    %v1823 = vunpack.c.l.b16 %v421
    %v1824 = vunpack.c.h.b16 %v421
    %v1825 = vunpack.c.l.b16 %v422
    %v1826 = vunpack.c.h.b16 %v422
    %v1827 = vunpack.c.l.b16 %v423
    %v1828 = vunpack.c.h.b16 %v423
    %v1829 = vunpack.c.l.b16 %v424
    %v1830 = vunpack.c.h.b16 %v424
    %v1831 = vunpack.c.l.b16 %v425
    %v1832 = vunpack.c.h.b16 %v425
    %v1833 = vunpack.c.l.b16 %v426
    %v1834 = vunpack.c.h.b16 %v426
    %v1835 = vunpack.c.l.b16 %v427
    %v1836 = vunpack.c.h.b16 %v427
    %v1837 = vunpack.c.l.b16 %v428
    %v1838 = vunpack.c.h.b16 %v428
    %v1839 = vunpack.c.l.b16 %v429
    %v1840 = vunpack.c.h.b16 %v429
    %v1841 = vunpack.c.l.b16 %v430
    %v1842 = vunpack.c.h.b16 %v430
    %v1843 = vunpack.c.l.b16 %v431
    %v1844 = vunpack.c.h.b16 %v431
    %v1845 = vunpack.c.l.b16 %v432
    %v1846 = vunpack.c.h.b16 %v432
    %v1847 = vunpack.c.l.b16 %v433
    %v1848 = vunpack.c.h.b16 %v433
    %v1849 = vunpack.c.l.b16 %v434
    %v1850 = vunpack.c.h.b16 %v434
    %v1851 = vunpack.c.l.b16 %v435
    %v1852 = vunpack.c.h.b16 %v435
    %v1853 = vunpack.c.l.b16 %v436
    %v1854 = vunpack.c.h.b16 %v436
    %v1855 = vunpack.c.l.b16 %v437
    %v1856 = vunpack.c.h.b16 %v437
    %v1857 = vunpack.c.l.b16 %v438
    %v1858 = vunpack.c.h.b16 %v438
    %v1859 = vunpack.c.l.b16 %v439
    %v1860 = vunpack.c.h.b16 %v439
    %v1861 = vunpack.c.l.b16 %v440
    %v1862 = vunpack.c.h.b16 %v440
    %v1863 = vunpack.c.l.b16 %v441
    %v1864 = vunpack.c.h.b16 %v441
    %v1865 = vunpack.c.l.b16 %v442
    %v1866 = vunpack.c.h.b16 %v442
    %v1867 = vunpack.c.l.b16 %v443
    %v1868 = vunpack.c.h.b16 %v443
    %v1869 = vunpack.c.l.b16 %v444
    %v1870 = vunpack.c.h.b16 %v444
    %v1871 = vunpack.c.l.b16 %v445
    %v1872 = vunpack.c.h.b16 %v445
    %v1873 = vunpack.c.l.b16 %v446
    %v1874 = vunpack.c.h.b16 %v446
    %v1875 = vunpack.c.l.b16 %v447
    %v1876 = vunpack.c.h.b16 %v447
    %v1877 = vunpack.c.l.b16 %v448
    %v1878 = vunpack.c.h.b16 %v448
    %v1879 = vunpack.c.l.b16 %v449
    %v1880 = vunpack.c.h.b16 %v449
    %v1881 = vunpack.c.l.b16 %v450
    %v1882 = vunpack.c.h.b16 %v450
    %v1883 = vunpack.c.l.b16 %v451
    %v1884 = vunpack.c.h.b16 %v451
    %v1885 = vunpack.c.l.b16 %v452
    %v1886 = vunpack.c.h.b16 %v452
    %v1887 = vunpack.c.l.b16 %v453
    %v1888 = vunpack.c.h.b16 %v453
    %v1889 = vunpack.c.l.b16 %v454
    %v1890 = vunpack.c.h.b16 %v454
    %v1891 = vunpack.c.l.b16 %v455
    %v1892 = vunpack.c.h.b16 %v455
    %v1893 = vunpack.c.l.b16 %v456
    %v1894 = vunpack.c.h.b16 %v456
    %v1895 = vunpack.c.l.b16 %v457
    %v1896 = vunpack.c.h.b16 %v457
    %v1897 = vunpack.c.l.b16 %v458
    %v1898 = vunpack.c.h.b16 %v458
    %v1899 = vunpack.c.l.b16 %v459
    %v1900 = vunpack.c.h.b16 %v459
    %v1901 = vunpack.c.l.b16 %v460
    %v1902 = vunpack.c.h.b16 %v460
    %v1903 = vunpack.c.l.b16 %v461
    %v1904 = vunpack.c.h.b16 %v461
    %v1905 = vunpack.c.l.b16 %v462
    %v1906 = vunpack.c.h.b16 %v462
    %v1907 = vunpack.c.l.b16 %v463
    %v1908 = vunpack.c.h.b16 %v463
    %v1909 = vunpack.c.l.b16 %v464
    %v1910 = vunpack.c.h.b16 %v464
    %v1911 = vunpack.c.l.b16 %v465
    %v1912 = vunpack.c.h.b16 %v465
    %v1913 = vunpack.c.l.b16 %v466
    %v1914 = vunpack.c.h.b16 %v466
    %v1915 = vunpack.c.l.b16 %v467
    %v1916 = vunpack.c.h.b16 %v467
    %v1917 = vunpack.c.l.b16 %v468
    %v1918 = vunpack.c.h.b16 %v468
    %v1919 = vunpack.c.l.b16 %v469
    %v1920 = vunpack.c.h.b16 %v469
    %v1921 = vunpack.c.l.b16 %v470
    %v1922 = vunpack.c.h.b16 %v470
    %v1923 = vunpack.c.l.b16 %v471
    %v1924 = vunpack.c.h.b16 %v471
    %v1925 = vunpack.c.l.b16 %v472
    %v1926 = vunpack.c.h.b16 %v472
    %v1927 = vunpack.c.l.b16 %v473
    %v1928 = vunpack.c.h.b16 %v473
    %v1929 = vunpack.c.l.b16 %v474
    %v1930 = vunpack.c.h.b16 %v474
    %v1931 = vunpack.c.l.b16 %v475
    %v1932 = vunpack.c.h.b16 %v475
    %v1933 = vunpack.c.l.b16 %v476
    %v1934 = vunpack.c.h.b16 %v476
    %v1935 = vunpack.c.l.b16 %v477
    %v1936 = vunpack.c.h.b16 %v477
    %v1937 = vunpack.c.l.b16 %v478
    %v1938 = vunpack.c.h.b16 %v478
    %v1939 = vunpack.c.l.b16 %v479
    %v1940 = vunpack.c.h.b16 %v479
    %v1941 = vunpack.c.l.b16 %v480
    %v1942 = vunpack.c.h.b16 %v480
    %v1943 = vunpack.c.l.b16 %v481
    %v1944 = vunpack.c.h.b16 %v481
    %v1945 = vunpack.c.l.b16 %v482
    %v1946 = vunpack.c.h.b16 %v482
    %v1947 = vunpack.c.l.b16 %v483
    %v1948 = vunpack.c.h.b16 %v483
    %v1949 = vunpack.c.l.b16 %v484
    %v1950 = vunpack.c.h.b16 %v484
    %v1951 = vunpack.c.l.b16 %v485
    %v1952 = vunpack.c.h.b16 %v485
    %v1953 = vunpack.c.l.b16 %v486
    %v1954 = vunpack.c.h.b16 %v486
    %v1955 = vunpack.c.l.b16 %v487
    %v1956 = vunpack.c.h.b16 %v487
    %v1957 = vunpack.c.l.b16 %v488
    %v1958 = vunpack.c.h.b16 %v488
    %v1959 = vunpack.c.l.b16 %v489
    %v1960 = vunpack.c.h.b16 %v489
    %v1961 = vunpack.c.l.b16 %v490
    %v1962 = vunpack.c.h.b16 %v490
    %v1963 = vunpack.c.l.b16 %v491
    %v1964 = vunpack.c.h.b16 %v491
    %v1965 = vunpack.c.l.b16 %v492
    %v1966 = vunpack.c.h.b16 %v492
    %v1967 = vunpack.c.l.b16 %v493
    %v1968 = vunpack.c.h.b16 %v493
    %v1969 = vunpack.c.l.b16 %v494
    %v1970 = vunpack.c.h.b16 %v494
    %v1971 = vunpack.c.l.b16 %v495
    %v1972 = vunpack.c.h.b16 %v495
    %v1973 = vunpack.c.l.b16 %v496
    %v1974 = vunpack.c.h.b16 %v496
    %v1975 = vunpack.c.l.b16 %v497
    %v1976 = vunpack.c.h.b16 %v497
    %v1977 = vunpack.c.l.b16 %v498
    %v1978 = vunpack.c.h.b16 %v498
    %v1979 = vunpack.c.l.b16 %v499
    %v1980 = vunpack.c.h.b16 %v499
    %v1981 = vunpack.c.l.b16 %v500
    %v1982 = vunpack.c.h.b16 %v500
    %v1983 = vunpack.c.l.b16 %v501
    %v1984 = vunpack.c.h.b16 %v501
    %v1985 = vunpack.c.l.b16 %v502
    %v1986 = vunpack.c.h.b16 %v502
    %v1987 = vunpack.c.l.b16 %v503
    %v1988 = vunpack.c.h.b16 %v503
    %v1989 = vunpack.c.l.b16 %v504
    %v1990 = vunpack.c.h.b16 %v504
    %v1991 = vunpack.c.l.b16 %v505
    %v1992 = vunpack.c.h.b16 %v505
    %v1993 = vunpack.c.l.b16 %v506
    %v1994 = vunpack.c.h.b16 %v506
    %v1995 = vunpack.c.l.b16 %v507
    %v1996 = vunpack.c.h.b16 %v507
    %v1997 = vunpack.c.l.b16 %v508
    %v1998 = vunpack.c.h.b16 %v508
    %v1999 = vunpack.c.l.b16 %v509
    %v2000 = vunpack.c.h.b16 %v509
    %v2001 = vunpack.c.l.b16 %v510
    %v2002 = vunpack.c.h.b16 %v510
    %v2003 = vunpack.c.l.b16 %v511
    %v2004 = vunpack.c.h.b16 %v511
    %v2005 = vunpack.c.l.b16 %v512
    %v2006 = vunpack.c.h.b16 %v512
    %v2007 = vunpack.c.l.b16 %v513
    %v2008 = vunpack.c.h.b16 %v513
    %v2009 = vunpack.c.l.b16 %v514
    %v2010 = vunpack.c.h.b16 %v514
    %v2011 = vunpack.c.l.b16 %v515
    %v2012 = vunpack.c.h.b16 %v515
    %v2013 = vunpack.c.l.b16 %v516
    %v2014 = vunpack.c.h.b16 %v516
    %v2015 = vunpack.c.l.b16 %v517
    %v2016 = vunpack.c.h.b16 %v517
    %v2017 = vunpack.c.l.b16 %v518
    %v2018 = vunpack.c.h.b16 %v518
    %v2019 = vunpack.c.l.b16 %v519
    %v2020 = vunpack.c.h.b16 %v519
    %v2021 = vunpack.c.l.b16 %v520
    %v2022 = vunpack.c.h.b16 %v520
    %v2023 = vunpack.c.l.b16 %v521
    %v2024 = vunpack.c.h.b16 %v521
    %v2025 = vunpack.c.l.b16 %v522
    %v2026 = vunpack.c.h.b16 %v522
    %v2027 = vunpack.c.l.b16 %v523
    %v2028 = vunpack.c.h.b16 %v523
    %v2029 = vunpack.c.l.b16 %v524
    %v2030 = vunpack.c.h.b16 %v524
    %v2031 = vunpack.c.l.b16 %v525
    %v2032 = vunpack.c.h.b16 %v525
    %v2033 = vunpack.c.l.b16 %v526
    %v2034 = vunpack.c.h.b16 %v526
    %v2035 = vunpack.c.l.b16 %v527
    %v2036 = vunpack.c.h.b16 %v527
    %v2037 = vunpack.c.l.b16 %v528
    %v2038 = vunpack.c.h.b16 %v528
    %v2039 = vunpack.c.l.b16 %v529
    %v2040 = vunpack.c.h.b16 %v529
    %v2041 = vunpack.c.l.b16 %v530
    %v2042 = vunpack.c.h.b16 %v530
    %v2043 = vunpack.c.l.b16 %v531
    %v2044 = vunpack.c.h.b16 %v531
    %v2045 = vunpack.c.l.b16 %v532
    %v2046 = vunpack.c.h.b16 %v532
    %v2047 = vunpack.c.l.b16 %v533
    %v2048 = vunpack.c.h.b16 %v533
    %v2049 = vunpack.c.l.b16 %v534
    %v2050 = vunpack.c.h.b16 %v534
    %v2051 = vunpack.c.l.b16 %v535
    %v2052 = vunpack.c.h.b16 %v535
    %v2053 = vunpack.c.l.b16 %v536
    %v2054 = vunpack.c.h.b16 %v536
    %v2055 = vunpack.c.l.b16 %v537
    %v2056 = vunpack.c.h.b16 %v537
    %v2057 = vunpack.c.l.b16 %v538
    %v2058 = vunpack.c.h.b16 %v538
    %v2059 = vunpack.c.l.b16 %v539
    %v2060 = vunpack.c.h.b16 %v539
    %v2061 = vunpack.c.l.b16 %v540
    %v2062 = vunpack.c.h.b16 %v540
    %v2063 = vunpack.c.l.b16 %v541
    %v2064 = vunpack.c.h.b16 %v541
    %v2065 = vunpack.c.l.b16 %v542
    %v2066 = vunpack.c.h.b16 %v542
    %v2067 = vunpack.c.l.b16 %v543
    %v2068 = vunpack.c.h.b16 %v543
    %v2069 = vunpack.c.l.b16 %v544
    %v2070 = vunpack.c.h.b16 %v544
    %v2071 = vunpack.c.l.b16 %v545
    %v2072 = vunpack.c.h.b16 %v545
    %v2073 = vunpack.c.l.b16 %v546
    %v2074 = vunpack.c.h.b16 %v546
    %v2075 = vunpack.c.l.b16 %v547
    %v2076 = vunpack.c.h.b16 %v547
    %v2077 = vunpack.c.l.b16 %v548
    %v2078 = vunpack.c.h.b16 %v548
    %v2079 = vunpack.c.l.b16 %v549
    %v2080 = vunpack.c.h.b16 %v549
    %v2081 = vunpack.c.l.b16 %v550
    %v2082 = vunpack.c.h.b16 %v550
    %v2083 = vunpack.c.l.b16 %v551
    %v2084 = vunpack.c.h.b16 %v551
    %v2085 = vunpack.c.l.b16 %v552
    %v2086 = vunpack.c.h.b16 %v552
    %v2087 = vunpack.c.l.b16 %v553
    %v2088 = vunpack.c.h.b16 %v553
    %v2089 = vunpack.c.l.b16 %v554
    %v2090 = vunpack.c.h.b16 %v554
    %v2091 = vunpack.c.l.b16 %v555
    %v2092 = vunpack.c.h.b16 %v555
    %v2093 = vunpack.c.l.b16 %v556
    %v2094 = vunpack.c.h.b16 %v556
    %v2095 = vunpack.c.l.b16 %v557
    %v2096 = vunpack.c.h.b16 %v557
    %v2097 = vunpack.c.l.b16 %v558
    %v2098 = vunpack.c.h.b16 %v558
    %v2099 = vunpack.c.l.b16 %v559
    %v2100 = vunpack.c.h.b16 %v559
    %v2101 = vunpack.c.l.b16 %v560
    %v2102 = vunpack.c.h.b16 %v560
    %v2103 = vunpack.c.l.b16 %v561
    %v2104 = vunpack.c.h.b16 %v561
    %v2105 = vunpack.c.l.b16 %v562
    %v2106 = vunpack.c.h.b16 %v562
    %v2107 = vunpack.c.l.b16 %v563
    %v2108 = vunpack.c.h.b16 %v563
    %v2109 = vunpack.c.l.b16 %v564
    %v2110 = vunpack.c.h.b16 %v564
    %v2111 = vunpack.c.l.b16 %v565
    %v2112 = vunpack.c.h.b16 %v565
    %v2113 = vunpack.c.l.b16 %v566
    %v2114 = vunpack.c.h.b16 %v566
    %v2115 = vunpack.c.l.b16 %v567
    %v2116 = vunpack.c.h.b16 %v567
    %v2117 = vunpack.c.l.b16 %v568
    %v2118 = vunpack.c.h.b16 %v568
    %v2119 = vunpack.c.l.b16 %v569
    %v2120 = vunpack.c.h.b16 %v569
    %v2121 = vunpack.c.l.b16 %v570
    %v2122 = vunpack.c.h.b16 %v570
    %v2123 = vunpack.c.l.b16 %v571
    %v2124 = vunpack.c.h.b16 %v571
    %v2125 = vunpack.c.l.b16 %v572
    %v2126 = vunpack.c.h.b16 %v572
    %v2127 = vunpack.c.l.b16 %v573
    %v2128 = vunpack.c.h.b16 %v573
    %v2129 = vunpack.c.l.b16 %v574
    %v2130 = vunpack.c.h.b16 %v574
    %v2131 = vunpack.c.l.b16 %v575
    %v2132 = vunpack.c.h.b16 %v575
    %v2133 = vunpack.c.l.b16 %v576
    %v2134 = vunpack.c.h.b16 %v576
    %v2135 = vunpack.c.l.b16 %v577
    %v2136 = vunpack.c.h.b16 %v577
    %v2137 = vunpack.c.l.b16 %v578
    %v2138 = vunpack.c.h.b16 %v578
    %v2139 = vunpack.c.l.b16 %v579
    %v2140 = vunpack.c.h.b16 %v579
    %v2141 = vunpack.c.l.b16 %v580
    %v2142 = vunpack.c.h.b16 %v580
    %v2143 = vunpack.c.l.b16 %v581
    %v2144 = vunpack.c.h.b16 %v581
    %v2145 = vunpack.c.l.b16 %v582
    %v2146 = vunpack.c.h.b16 %v582
    %v2147 = vunpack.c.l.b16 %v583
    %v2148 = vunpack.c.h.b16 %v583
    %v2149 = vunpack.c.l.b16 %v584
    %v2150 = vunpack.c.h.b16 %v584
    %v2151 = vunpack.c.l.b16 %v585
    %v2152 = vunpack.c.h.b16 %v585
    %v2153 = vunpack.c.l.b16 %v586
    %v2154 = vunpack.c.h.b16 %v586
    %v2155 = vunpack.c.l.b16 %v587
    %v2156 = vunpack.c.h.b16 %v587
    %v2157 = vunpack.c.l.b16 %v588
    %v2158 = vunpack.c.h.b16 %v588
    %v2159 = vunpack.c.l.b16 %v589
    %v2160 = vunpack.c.h.b16 %v589
    %v2161 = vunpack.c.l.b16 %v590
    %v2162 = vunpack.c.h.b16 %v590
    %v2163 = vunpack.c.l.b16 %v591
    %v2164 = vunpack.c.h.b16 %v591
    %v2165 = vunpack.c.l.b16 %v592
    %v2166 = vunpack.c.h.b16 %v592
    %v2167 = vunpack.c.l.b16 %v593
    %v2168 = vunpack.c.h.b16 %v593
    %v2169 = vunpack.c.l.b16 %v594
    %v2170 = vunpack.c.h.b16 %v594
    %v2171 = vunpack.c.l.b16 %v595
    %v2172 = vunpack.c.h.b16 %v595
    %v2173 = vunpack.c.l.b16 %v596
    %v2174 = vunpack.c.h.b16 %v596
    %v2175 = vunpack.c.l.b16 %v597
    %v2176 = vunpack.c.h.b16 %v597
    %v2177 = vunpack.c.l.b16 %v598
    %v2178 = vunpack.c.h.b16 %v598
    %v2179 = vunpack.c.l.b16 %v599
    %v2180 = vunpack.c.h.b16 %v599
    %v2181 = vunpack.c.l.b16 %v600
    %v2182 = vunpack.c.h.b16 %v600
    %v2183 = vunpack.c.l.b16 %v601
    %v2184 = vunpack.c.h.b16 %v601
    %v2185 = vunpack.c.l.b16 %v602
    %v2186 = vunpack.c.h.b16 %v602
    %v2187 = vunpack.c.l.b16 %v603
    %v2188 = vunpack.c.h.b16 %v603
    %v2189 = vunpack.c.l.b16 %v604
    %v2190 = vunpack.c.h.b16 %v604
    %v2191 = vunpack.c.l.b16 %v605
    %v2192 = vunpack.c.h.b16 %v605
    %v2193 = vunpack.c.l.b16 %v606
    %v2194 = vunpack.c.h.b16 %v606
    %v2195 = vunpack.c.l.b16 %v607
    %v2196 = vunpack.c.h.b16 %v607
    %v2197 = vunpack.c.l.b16 %v608
    %v2198 = vunpack.c.h.b16 %v608
    %v2199 = vunpack.c.l.b16 %v609
    %v2200 = vunpack.c.h.b16 %v609
    %v2201 = vunpack.c.l.b16 %v610
    %v2202 = vunpack.c.h.b16 %v610
    %v2203 = vunpack.c.l.b16 %v611
    %v2204 = vunpack.c.h.b16 %v611
    %v2205 = vunpack.c.l.b16 %v612
    %v2206 = vunpack.c.h.b16 %v612
    %v2207 = vunpack.c.l.b16 %v613
    %v2208 = vunpack.c.h.b16 %v613
    %v2209 = vunpack.c.l.b16 %v614
    %v2210 = vunpack.c.h.b16 %v614
    %v2211 = vunpack.c.l.b16 %v615
    %v2212 = vunpack.c.h.b16 %v615
    %v2213 = vunpack.c.l.b16 %v616
    %v2214 = vunpack.c.h.b16 %v616
    %v2215 = vunpack.c.l.b16 %v617
    %v2216 = vunpack.c.h.b16 %v617
    %v2217 = vunpack.c.l.b16 %v618
    %v2218 = vunpack.c.h.b16 %v618
    %v2219 = vunpack.c.l.b16 %v619
    %v2220 = vunpack.c.h.b16 %v619
    %v2221 = vunpack.c.l.b16 %v620
    %v2222 = vunpack.c.h.b16 %v620
    %v2223 = vunpack.c.l.b16 %v621
    %v2224 = vunpack.c.h.b16 %v621
    %v2225 = vunpack.c.l.b16 %v622
    %v2226 = vunpack.c.h.b16 %v622
    %v2227 = vunpack.c.l.b16 %v623
    %v2228 = vunpack.c.h.b16 %v623
    %v2229 = vunpack.c.l.b16 %v624
    %v2230 = vunpack.c.h.b16 %v624
    %v2231 = vunpack.c.l.b16 %v625
    %v2232 = vunpack.c.h.b16 %v625
    %v2233 = vunpack.c.l.b16 %v626
    %v2234 = vunpack.c.h.b16 %v626
    %v2235 = vpack.c.b16 %v1287, %v1275
    %v2236 = vpack.c.b16 %v1288, %v1276
    %v2237 = vpack.c.b16 %v1289, %v1277
    %v2238 = vpack.c.b16 %v1290, %v1278
    %v2239 = vpack.c.b16 %v1291, %v1279
    %v2240 = vpack.c.b16 %v1292, %v1280
    %v2241 = vpack.c.b16 %v1293, %v1281
    %v2242 = vpack.c.b16 %v1294, %v1282
    %v2243 = vpack.c.b16 %v1295, %v1283
    %v2244 = vpack.c.b16 %v1296, %v1284
    %v2245 = vpack.c.b16 %v1297, %v1285
    %v2246 = vpack.c.b16 %v1298, %v1286
    %v2247 = vpack.c.b16 %v1311, %v1299
    %v2248 = vpack.c.b16 %v1312, %v1300
    %v2249 = vpack.c.b16 %v1313, %v1301
    %v2250 = vpack.c.b16 %v1314, %v1302
    %v2251 = vpack.c.b16 %v1315, %v1303
    %v2252 = vpack.c.b16 %v1316, %v1304
    %v2253 = vpack.c.b16 %v1317, %v1305
    %v2254 = vpack.c.b16 %v1318, %v1306
    %v2255 = vpack.c.b16 %v1319, %v1307
    %v2256 = vpack.c.b16 %v1320, %v1308
    %v2257 = vpack.c.b16 %v1321, %v1309
    %v2258 = vpack.c.b16 %v1322, %v1310
    %v2259 = vpack.c.b16 %v1335, %v1323
    %v2260 = vpack.c.b16 %v1336, %v1324
    %v2261 = vpack.c.b16 %v1337, %v1325
    %v2262 = vpack.c.b16 %v1338, %v1326
    %v2263 = vpack.c.b16 %v1339, %v1327
    %v2264 = vpack.c.b16 %v1340, %v1328
    %v2265 = vpack.c.b16 %v1341, %v1329
    %v2266 = vpack.c.b16 %v1342, %v1330
    %v2267 = vpack.c.b16 %v1343, %v1331
    %v2268 = vpack.c.b16 %v1344, %v1332
    %v2269 = vpack.c.b16 %v1345, %v1333
    %v2270 = vpack.c.b16 %v1346, %v1334
    %v2271 = vpack.c.b16 %v1359, %v1347
    %v2272 = vpack.c.b16 %v1360, %v1348
    %v2273 = vpack.c.b16 %v1361, %v1349
    %v2274 = vpack.c.b16 %v1362, %v1350
    %v2275 = vpack.c.b16 %v1363, %v1351
    %v2276 = vpack.c.b16 %v1364, %v1352
    %v2277 = vpack.c.b16 %v1365, %v1353
    %v2278 = vpack.c.b16 %v1366, %v1354
    %v2279 = vpack.c.b16 %v1367, %v1355
    %v2280 = vpack.c.b16 %v1368, %v1356
    %v2281 = vpack.c.b16 %v1369, %v1357
    %v2282 = vpack.c.b16 %v1370, %v1358
    %v2283 = vpack.c.b16 %v1383, %v1371
    %v2284 = vpack.c.b16 %v1384, %v1372
    %v2285 = vpack.c.b16 %v1385, %v1373
    %v2286 = vpack.c.b16 %v1386, %v1374
    %v2287 = vpack.c.b16 %v1387, %v1375
    %v2288 = vpack.c.b16 %v1388, %v1376
    %v2289 = vpack.c.b16 %v1389, %v1377
    %v2290 = vpack.c.b16 %v1390, %v1378
    %v2291 = vpack.c.b16 %v1391, %v1379
    %v2292 = vpack.c.b16 %v1392, %v1380
    %v2293 = vpack.c.b16 %v1393, %v1381
    %v2294 = vpack.c.b16 %v1394, %v1382
    %v2295 = vpack.c.b16 %v1407, %v1395
    %v2296 = vpack.c.b16 %v1408, %v1396
    %v2297 = vpack.c.b16 %v1409, %v1397
    %v2298 = vpack.c.b16 %v1410, %v1398
    %v2299 = vpack.c.b16 %v1411, %v1399
    %v2300 = vpack.c.b16 %v1412, %v1400
    %v2301 = vpack.c.b16 %v1413, %v1401
    %v2302 = vpack.c.b16 %v1414, %v1402
    %v2303 = vpack.c.b16 %v1415, %v1403
    %v2304 = vpack.c.b16 %v1416, %v1404
    %v2305 = vpack.c.b16 %v1417, %v1405
    %v2306 = vpack.c.b16 %v1418, %v1406
    %v2307 = vpack.c.b16 %v1431, %v1419
    %v2308 = vpack.c.b16 %v1432, %v1420
    %v2309 = vpack.c.b16 %v1433, %v1421
    %v2310 = vpack.c.b16 %v1434, %v1422
    %v2311 = vpack.c.b16 %v1435, %v1423
    %v2312 = vpack.c.b16 %v1436, %v1424
    %v2313 = vpack.c.b16 %v1437, %v1425
    %v2314 = vpack.c.b16 %v1438, %v1426
    %v2315 = vpack.c.b16 %v1439, %v1427
    %v2316 = vpack.c.b16 %v1440, %v1428
    %v2317 = vpack.c.b16 %v1441, %v1429
    %v2318 = vpack.c.b16 %v1442, %v1430
    %v2319 = vpack.c.b16 %v1455, %v1443
    %v2320 = vpack.c.b16 %v1456, %v1444
    %v2321 = vpack.c.b16 %v1457, %v1445
    %v2322 = vpack.c.b16 %v1458, %v1446
    %v2323 = vpack.c.b16 %v1459, %v1447
    %v2324 = vpack.c.b16 %v1460, %v1448
    %v2325 = vpack.c.b16 %v1461, %v1449
    %v2326 = vpack.c.b16 %v1462, %v1450
    %v2327 = vpack.c.b16 %v1463, %v1451
    %v2328 = vpack.c.b16 %v1464, %v1452
    %v2329 = vpack.c.b16 %v1465, %v1453
    %v2330 = vpack.c.b16 %v1466, %v1454
    %v2331 = vpack.c.b16 %v1479, %v1467
    %v2332 = vpack.c.b16 %v1480, %v1468
    %v2333 = vpack.c.b16 %v1481, %v1469
    %v2334 = vpack.c.b16 %v1482, %v1470
    %v2335 = vpack.c.b16 %v1483, %v1471
    %v2336 = vpack.c.b16 %v1484, %v1472
    %v2337 = vpack.c.b16 %v1485, %v1473
    %v2338 = vpack.c.b16 %v1486, %v1474
    %v2339 = vpack.c.b16 %v1487, %v1475
    %v2340 = vpack.c.b16 %v1488, %v1476
    %v2341 = vpack.c.b16 %v1489, %v1477
    %v2342 = vpack.c.b16 %v1490, %v1478
    %v2343 = vpack.c.b16 %v1503, %v1491
    %v2344 = vpack.c.b16 %v1504, %v1492
    %v2345 = vpack.c.b16 %v1505, %v1493
    %v2346 = vpack.c.b16 %v1506, %v1494
    %v2347 = vpack.c.b16 %v1507, %v1495
    %v2348 = vpack.c.b16 %v1508, %v1496
    %v2349 = vpack.c.b16 %v1509, %v1497
    %v2350 = vpack.c.b16 %v1510, %v1498
    %v2351 = vpack.c.b16 %v1511, %v1499
    %v2352 = vpack.c.b16 %v1512, %v1500
    %v2353 = vpack.c.b16 %v1513, %v1501
    %v2354 = vpack.c.b16 %v1514, %v1502
    %v2355 = vpack.c.b16 %v1527, %v1515
    %v2356 = vpack.c.b16 %v1528, %v1516
    %v2357 = vpack.c.b16 %v1529, %v1517
    %v2358 = vpack.c.b16 %v1530, %v1518
    %v2359 = vpack.c.b16 %v1531, %v1519
    %v2360 = vpack.c.b16 %v1532, %v1520
    %v2361 = vpack.c.b16 %v1533, %v1521
    %v2362 = vpack.c.b16 %v1534, %v1522
    %v2363 = vpack.c.b16 %v1535, %v1523
    %v2364 = vpack.c.b16 %v1536, %v1524
    %v2365 = vpack.c.b16 %v1537, %v1525
    %v2366 = vpack.c.b16 %v1538, %v1526
    %v2367 = vpack.c.b16 %v1551, %v1539
    %v2368 = vpack.c.b16 %v1552, %v1540
    %v2369 = vpack.c.b16 %v1553, %v1541
    %v2370 = vpack.c.b16 %v1554, %v1542
    %v2371 = vpack.c.b16 %v1555, %v1543
    %v2372 = vpack.c.b16 %v1556, %v1544
    %v2373 = vpack.c.b16 %v1557, %v1545
    %v2374 = vpack.c.b16 %v1558, %v1546
    %v2375 = vpack.c.b16 %v1559, %v1547
    %v2376 = vpack.c.b16 %v1560, %v1548
    %v2377 = vpack.c.b16 %v1561, %v1549
    %v2378 = vpack.c.b16 %v1562, %v1550
    %v2379 = vpack.c.b16 %v1575, %v1563
    %v2380 = vpack.c.b16 %v1576, %v1564
    %v2381 = vpack.c.b16 %v1577, %v1565
    %v2382 = vpack.c.b16 %v1578, %v1566
    %v2383 = vpack.c.b16 %v1579, %v1567
    %v2384 = vpack.c.b16 %v1580, %v1568
    %v2385 = vpack.c.b16 %v1581, %v1569
    %v2386 = vpack.c.b16 %v1582, %v1570
    %v2387 = vpack.c.b16 %v1583, %v1571
    %v2388 = vpack.c.b16 %v1584, %v1572
    %v2389 = vpack.c.b16 %v1585, %v1573
    %v2390 = vpack.c.b16 %v1586, %v1574
    %v2391 = vpack.c.b16 %v1599, %v1587
    %v2392 = vpack.c.b16 %v1600, %v1588
    %v2393 = vpack.c.b16 %v1601, %v1589
    %v2394 = vpack.c.b16 %v1602, %v1590
    %v2395 = vpack.c.b16 %v1603, %v1591
    %v2396 = vpack.c.b16 %v1604, %v1592
    %v2397 = vpack.c.b16 %v1605, %v1593
    %v2398 = vpack.c.b16 %v1606, %v1594
    %v2399 = vpack.c.b16 %v1607, %v1595
    %v2400 = vpack.c.b16 %v1608, %v1596
    %v2401 = vpack.c.b16 %v1609, %v1597
    %v2402 = vpack.c.b16 %v1610, %v1598
    %v2403 = vpack.c.b16 %v1623, %v1611
    %v2404 = vpack.c.b16 %v1624, %v1612
    %v2405 = vpack.c.b16 %v1625, %v1613
    %v2406 = vpack.c.b16 %v1626, %v1614
    %v2407 = vpack.c.b16 %v1627, %v1615
    %v2408 = vpack.c.b16 %v1628, %v1616
    %v2409 = vpack.c.b16 %v1629, %v1617
    %v2410 = vpack.c.b16 %v1630, %v1618
    %v2411 = vpack.c.b16 %v1631, %v1619
    %v2412 = vpack.c.b16 %v1632, %v1620
    %v2413 = vpack.c.b16 %v1633, %v1621
    %v2414 = vpack.c.b16 %v1634, %v1622
    %v2415 = vpack.c.b16 %v1647, %v1635
    %v2416 = vpack.c.b16 %v1648, %v1636
    %v2417 = vpack.c.b16 %v1649, %v1637
    %v2418 = vpack.c.b16 %v1650, %v1638
    %v2419 = vpack.c.b16 %v1651, %v1639
    %v2420 = vpack.c.b16 %v1652, %v1640
    %v2421 = vpack.c.b16 %v1653, %v1641
    %v2422 = vpack.c.b16 %v1654, %v1642
    %v2423 = vpack.c.b16 %v1655, %v1643
    %v2424 = vpack.c.b16 %v1656, %v1644
    %v2425 = vpack.c.b16 %v1657, %v1645
    %v2426 = vpack.c.b16 %v1658, %v1646
    %v2427 = vpack.c.b16 %v1671, %v1659
    %v2428 = vpack.c.b16 %v1672, %v1660
    %v2429 = vpack.c.b16 %v1673, %v1661
    %v2430 = vpack.c.b16 %v1674, %v1662
    %v2431 = vpack.c.b16 %v1675, %v1663
    %v2432 = vpack.c.b16 %v1676, %v1664
    %v2433 = vpack.c.b16 %v1677, %v1665
    %v2434 = vpack.c.b16 %v1678, %v1666
    %v2435 = vpack.c.b16 %v1679, %v1667
    %v2436 = vpack.c.b16 %v1680, %v1668
    %v2437 = vpack.c.b16 %v1681, %v1669
    %v2438 = vpack.c.b16 %v1682, %v1670
    %v2439 = vpack.c.b16 %v1695, %v1683
    %v2440 = vpack.c.b16 %v1696, %v1684
    %v2441 = vpack.c.b16 %v1697, %v1685
    %v2442 = vpack.c.b16 %v1698, %v1686
    %v2443 = vpack.c.b16 %v1699, %v1687
    %v2444 = vpack.c.b16 %v1700, %v1688
    %v2445 = vpack.c.b16 %v1701, %v1689
    %v2446 = vpack.c.b16 %v1702, %v1690
    %v2447 = vpack.c.b16 %v1703, %v1691
    %v2448 = vpack.c.b16 %v1704, %v1692
    %v2449 = vpack.c.b16 %v1705, %v1693
    %v2450 = vpack.c.b16 %v1706, %v1694
    %v2451 = vpack.c.b16 %v1719, %v1707
    %v2452 = vpack.c.b16 %v1720, %v1708
    %v2453 = vpack.c.b16 %v1721, %v1709
    %v2454 = vpack.c.b16 %v1722, %v1710
    %v2455 = vpack.c.b16 %v1723, %v1711
    %v2456 = vpack.c.b16 %v1724, %v1712
    %v2457 = vpack.c.b16 %v1725, %v1713
    %v2458 = vpack.c.b16 %v1726, %v1714
    %v2459 = vpack.c.b16 %v1727, %v1715
    %v2460 = vpack.c.b16 %v1728, %v1716
    %v2461 = vpack.c.b16 %v1729, %v1717
    %v2462 = vpack.c.b16 %v1730, %v1718
    %v2463 = vpack.c.b16 %v1743, %v1731
    %v2464 = vpack.c.b16 %v1744, %v1732
    %v2465 = vpack.c.b16 %v1745, %v1733
    %v2466 = vpack.c.b16 %v1746, %v1734
    %v2467 = vpack.c.b16 %v1747, %v1735
    %v2468 = vpack.c.b16 %v1748, %v1736
    %v2469 = vpack.c.b16 %v1749, %v1737
    %v2470 = vpack.c.b16 %v1750, %v1738
    %v2471 = vpack.c.b16 %v1751, %v1739
    %v2472 = vpack.c.b16 %v1752, %v1740
    %v2473 = vpack.c.b16 %v1753, %v1741
    %v2474 = vpack.c.b16 %v1754, %v1742
    %v2475 = vpack.c.b16 %v1767, %v1755
    %v2476 = vpack.c.b16 %v1768, %v1756
    %v2477 = vpack.c.b16 %v1769, %v1757
    %v2478 = vpack.c.b16 %v1770, %v1758
    %v2479 = vpack.c.b16 %v1771, %v1759
    %v2480 = vpack.c.b16 %v1772, %v1760
    %v2481 = vpack.c.b16 %v1773, %v1761
    %v2482 = vpack.c.b16 %v1774, %v1762
    %v2483 = vpack.c.b16 %v1775, %v1763
    %v2484 = vpack.c.b16 %v1776, %v1764
    %v2485 = vpack.c.b16 %v1777, %v1765
    %v2486 = vpack.c.b16 %v1778, %v1766
    %v2487 = vpack.c.b16 %v1791, %v1779
    %v2488 = vpack.c.b16 %v1792, %v1780
    %v2489 = vpack.c.b16 %v1793, %v1781
    %v2490 = vpack.c.b16 %v1794, %v1782
    %v2491 = vpack.c.b16 %v1795, %v1783
    %v2492 = vpack.c.b16 %v1796, %v1784
    %v2493 = vpack.c.b16 %v1797, %v1785
    %v2494 = vpack.c.b16 %v1798, %v1786
    %v2495 = vpack.c.b16 %v1799, %v1787
    %v2496 = vpack.c.b16 %v1800, %v1788
    %v2497 = vpack.c.b16 %v1801, %v1789
    %v2498 = vpack.c.b16 %v1802, %v1790
    %v2499 = vpack.c.b16 %v1815, %v1803
    %v2500 = vpack.c.b16 %v1816, %v1804
    %v2501 = vpack.c.b16 %v1817, %v1805
    %v2502 = vpack.c.b16 %v1818, %v1806
    %v2503 = vpack.c.b16 %v1819, %v1807
    %v2504 = vpack.c.b16 %v1820, %v1808
    %v2505 = vpack.c.b16 %v1821, %v1809
    %v2506 = vpack.c.b16 %v1822, %v1810
    %v2507 = vpack.c.b16 %v1823, %v1811
    %v2508 = vpack.c.b16 %v1824, %v1812
    %v2509 = vpack.c.b16 %v1825, %v1813
    %v2510 = vpack.c.b16 %v1826, %v1814
    %v2511 = vpack.c.b16 %v1839, %v1827
    %v2512 = vpack.c.b16 %v1840, %v1828
    %v2513 = vpack.c.b16 %v1841, %v1829
    %v2514 = vpack.c.b16 %v1842, %v1830
    %v2515 = vpack.c.b16 %v1843, %v1831
    %v2516 = vpack.c.b16 %v1844, %v1832
    %v2517 = vpack.c.b16 %v1845, %v1833
    %v2518 = vpack.c.b16 %v1846, %v1834
    %v2519 = vpack.c.b16 %v1847, %v1835
    %v2520 = vpack.c.b16 %v1848, %v1836
    %v2521 = vpack.c.b16 %v1849, %v1837
    %v2522 = vpack.c.b16 %v1850, %v1838
    %v2523 = vpack.c.b16 %v1863, %v1851
    %v2524 = vpack.c.b16 %v1864, %v1852
    %v2525 = vpack.c.b16 %v1865, %v1853
    %v2526 = vpack.c.b16 %v1866, %v1854
    %v2527 = vpack.c.b16 %v1867, %v1855
    %v2528 = vpack.c.b16 %v1868, %v1856
    %v2529 = vpack.c.b16 %v1869, %v1857
    %v2530 = vpack.c.b16 %v1870, %v1858
    %v2531 = vpack.c.b16 %v1871, %v1859
    %v2532 = vpack.c.b16 %v1872, %v1860
    %v2533 = vpack.c.b16 %v1873, %v1861
    %v2534 = vpack.c.b16 %v1874, %v1862
    %v2535 = vpack.c.b16 %v1887, %v1875
    %v2536 = vpack.c.b16 %v1888, %v1876
    %v2537 = vpack.c.b16 %v1889, %v1877
    %v2538 = vpack.c.b16 %v1890, %v1878
    %v2539 = vpack.c.b16 %v1891, %v1879
    %v2540 = vpack.c.b16 %v1892, %v1880
    %v2541 = vpack.c.b16 %v1893, %v1881
    %v2542 = vpack.c.b16 %v1894, %v1882
    %v2543 = vpack.c.b16 %v1895, %v1883
    %v2544 = vpack.c.b16 %v1896, %v1884
    %v2545 = vpack.c.b16 %v1897, %v1885
    %v2546 = vpack.c.b16 %v1898, %v1886
    %v2547 = vpack.c.b16 %v1911, %v1899
    %v2548 = vpack.c.b16 %v1912, %v1900
    %v2549 = vpack.c.b16 %v1913, %v1901
    %v2550 = vpack.c.b16 %v1914, %v1902
    %v2551 = vpack.c.b16 %v1915, %v1903
    %v2552 = vpack.c.b16 %v1916, %v1904
    %v2553 = vpack.c.b16 %v1917, %v1905
    %v2554 = vpack.c.b16 %v1918, %v1906
    %v2555 = vpack.c.b16 %v1919, %v1907
    %v2556 = vpack.c.b16 %v1920, %v1908
    %v2557 = vpack.c.b16 %v1921, %v1909
    %v2558 = vpack.c.b16 %v1922, %v1910
    %v2559 = vpack.c.b16 %v1935, %v1923
    %v2560 = vpack.c.b16 %v1936, %v1924
    %v2561 = vpack.c.b16 %v1937, %v1925
    %v2562 = vpack.c.b16 %v1938, %v1926
    %v2563 = vpack.c.b16 %v1939, %v1927
    %v2564 = vpack.c.b16 %v1940, %v1928
    %v2565 = vpack.c.b16 %v1941, %v1929
    %v2566 = vpack.c.b16 %v1942, %v1930
    %v2567 = vpack.c.b16 %v1943, %v1931
    %v2568 = vpack.c.b16 %v1944, %v1932
    %v2569 = vpack.c.b16 %v1945, %v1933
    %v2570 = vpack.c.b16 %v1946, %v1934
    %v2571 = vpack.c.b16 %v1959, %v1947
    %v2572 = vpack.c.b16 %v1960, %v1948
    %v2573 = vpack.c.b16 %v1961, %v1949
    %v2574 = vpack.c.b16 %v1962, %v1950
    %v2575 = vpack.c.b16 %v1963, %v1951
    %v2576 = vpack.c.b16 %v1964, %v1952
    %v2577 = vpack.c.b16 %v1965, %v1953
    %v2578 = vpack.c.b16 %v1966, %v1954
    %v2579 = vpack.c.b16 %v1967, %v1955
    %v2580 = vpack.c.b16 %v1968, %v1956
    %v2581 = vpack.c.b16 %v1969, %v1957
    %v2582 = vpack.c.b16 %v1970, %v1958
    %v2583 = vpack.c.b16 %v1983, %v1971
    %v2584 = vpack.c.b16 %v1984, %v1972
    %v2585 = vpack.c.b16 %v1985, %v1973
    %v2586 = vpack.c.b16 %v1986, %v1974
    %v2587 = vpack.c.b16 %v1987, %v1975
    %v2588 = vpack.c.b16 %v1988, %v1976
    %v2589 = vpack.c.b16 %v1989, %v1977
    %v2590 = vpack.c.b16 %v1990, %v1978
    %v2591 = vpack.c.b16 %v1991, %v1979
    %v2592 = vpack.c.b16 %v1992, %v1980
    %v2593 = vpack.c.b16 %v1993, %v1981
    %v2594 = vpack.c.b16 %v1994, %v1982
    %v2595 = vpack.c.b16 %v2007, %v1995
    %v2596 = vpack.c.b16 %v2008, %v1996
    %v2597 = vpack.c.b16 %v2009, %v1997
    %v2598 = vpack.c.b16 %v2010, %v1998
    %v2599 = vpack.c.b16 %v2011, %v1999
    %v2600 = vpack.c.b16 %v2012, %v2000
    %v2601 = vpack.c.b16 %v2013, %v2001
    %v2602 = vpack.c.b16 %v2014, %v2002
    %v2603 = vpack.c.b16 %v2015, %v2003
    %v2604 = vpack.c.b16 %v2016, %v2004
    %v2605 = vpack.c.b16 %v2017, %v2005
    %v2606 = vpack.c.b16 %v2018, %v2006
    %v2607 = vpack.c.b16 %v2031, %v2019
    %v2608 = vpack.c.b16 %v2032, %v2020
    %v2609 = vpack.c.b16 %v2033, %v2021
    %v2610 = vpack.c.b16 %v2034, %v2022
    %v2611 = vpack.c.b16 %v2035, %v2023
    %v2612 = vpack.c.b16 %v2036, %v2024
    %v2613 = vpack.c.b16 %v2037, %v2025
    %v2614 = vpack.c.b16 %v2038, %v2026
    %v2615 = vpack.c.b16 %v2039, %v2027
    %v2616 = vpack.c.b16 %v2040, %v2028
    %v2617 = vpack.c.b16 %v2041, %v2029
    %v2618 = vpack.c.b16 %v2042, %v2030
    %v2619 = vpack.c.b16 %v2055, %v2043
    %v2620 = vpack.c.b16 %v2056, %v2044
    %v2621 = vpack.c.b16 %v2057, %v2045
    %v2622 = vpack.c.b16 %v2058, %v2046
    %v2623 = vpack.c.b16 %v2059, %v2047
    %v2624 = vpack.c.b16 %v2060, %v2048
    %v2625 = vpack.c.b16 %v2061, %v2049
    %v2626 = vpack.c.b16 %v2062, %v2050
    %v2627 = vpack.c.b16 %v2063, %v2051
    %v2628 = vpack.c.b16 %v2064, %v2052
    %v2629 = vpack.c.b16 %v2065, %v2053
    %v2630 = vpack.c.b16 %v2066, %v2054
    %v2631 = vpack.c.b16 %v2079, %v2067
    %v2632 = vpack.c.b16 %v2080, %v2068
    %v2633 = vpack.c.b16 %v2081, %v2069
    %v2634 = vpack.c.b16 %v2082, %v2070
    %v2635 = vpack.c.b16 %v2083, %v2071
    %v2636 = vpack.c.b16 %v2084, %v2072
    %v2637 = vpack.c.b16 %v2085, %v2073
    %v2638 = vpack.c.b16 %v2086, %v2074
    %v2639 = vpack.c.b16 %v2087, %v2075
    %v2640 = vpack.c.b16 %v2088, %v2076
    %v2641 = vpack.c.b16 %v2089, %v2077
    %v2642 = vpack.c.b16 %v2090, %v2078
    %v2643 = vpack.c.b16 %v2103, %v2091
    %v2644 = vpack.c.b16 %v2104, %v2092
    %v2645 = vpack.c.b16 %v2105, %v2093
    %v2646 = vpack.c.b16 %v2106, %v2094
    %v2647 = vpack.c.b16 %v2107, %v2095
    %v2648 = vpack.c.b16 %v2108, %v2096
    %v2649 = vpack.c.b16 %v2109, %v2097
    %v2650 = vpack.c.b16 %v2110, %v2098
    %v2651 = vpack.c.b16 %v2111, %v2099
    %v2652 = vpack.c.b16 %v2112, %v2100
    %v2653 = vpack.c.b16 %v2113, %v2101
    %v2654 = vpack.c.b16 %v2114, %v2102
    %v2655 = vpack.c.b16 %v2127, %v2115
    %v2656 = vpack.c.b16 %v2128, %v2116
    %v2657 = vpack.c.b16 %v2129, %v2117
    %v2658 = vpack.c.b16 %v2130, %v2118
    %v2659 = vpack.c.b16 %v2131, %v2119
    %v2660 = vpack.c.b16 %v2132, %v2120
    %v2661 = vpack.c.b16 %v2133, %v2121
    %v2662 = vpack.c.b16 %v2134, %v2122
    %v2663 = vpack.c.b16 %v2135, %v2123
    %v2664 = vpack.c.b16 %v2136, %v2124
    %v2665 = vpack.c.b16 %v2137, %v2125
    %v2666 = vpack.c.b16 %v2138, %v2126
    %v2667 = vpack.c.b16 %v2151, %v2139
    %v2668 = vpack.c.b16 %v2152, %v2140
    %v2669 = vpack.c.b16 %v2153, %v2141
    %v2670 = vpack.c.b16 %v2154, %v2142
    %v2671 = vpack.c.b16 %v2155, %v2143
    %v2672 = vpack.c.b16 %v2156, %v2144
    %v2673 = vpack.c.b16 %v2157, %v2145
    %v2674 = vpack.c.b16 %v2158, %v2146
    %v2675 = vpack.c.b16 %v2159, %v2147
    %v2676 = vpack.c.b16 %v2160, %v2148
    %v2677 = vpack.c.b16 %v2161, %v2149
    %v2678 = vpack.c.b16 %v2162, %v2150
    %v2679 = vpack.c.b16 %v2175, %v2163
    %v2680 = vpack.c.b16 %v2176, %v2164
    %v2681 = vpack.c.b16 %v2177, %v2165
    %v2682 = vpack.c.b16 %v2178, %v2166
    %v2683 = vpack.c.b16 %v2179, %v2167
    %v2684 = vpack.c.b16 %v2180, %v2168
    %v2685 = vpack.c.b16 %v2181, %v2169
    %v2686 = vpack.c.b16 %v2182, %v2170
    %v2687 = vpack.c.b16 %v2183, %v2171
    %v2688 = vpack.c.b16 %v2184, %v2172
    %v2689 = vpack.c.b16 %v2185, %v2173
    %v2690 = vpack.c.b16 %v2186, %v2174
    %v2691 = vpack.c.b16 %v2199, %v2187
    %v2692 = vpack.c.b16 %v2200, %v2188
    %v2693 = vpack.c.b16 %v2201, %v2189
    %v2694 = vpack.c.b16 %v2202, %v2190
    %v2695 = vpack.c.b16 %v2203, %v2191
    %v2696 = vpack.c.b16 %v2204, %v2192
    %v2697 = vpack.c.b16 %v2205, %v2193
    %v2698 = vpack.c.b16 %v2206, %v2194
    %v2699 = vpack.c.b16 %v2207, %v2195
    %v2700 = vpack.c.b16 %v2208, %v2196
    %v2701 = vpack.c.b16 %v2209, %v2197
    %v2702 = vpack.c.b16 %v2210, %v2198
    %v2703 = vpack.c.b16 %v2223, %v2211
    %v2704 = vpack.c.b16 %v2224, %v2212
    %v2705 = vpack.c.b16 %v2225, %v2213
    %v2706 = vpack.c.b16 %v2226, %v2214
    %v2707 = vpack.c.b16 %v2227, %v2215
    %v2708 = vpack.c.b16 %v2228, %v2216
    %v2709 = vpack.c.b16 %v2229, %v2217
    %v2710 = vpack.c.b16 %v2230, %v2218
    %v2711 = vpack.c.b16 %v2231, %v2219
    %v2712 = vpack.c.b16 %v2232, %v2220
    %v2713 = vpack.c.b16 %v2233, %v2221
    %v2714 = vpack.c.b16 %v2234, %v2222
    %3195 = vmatprep.subr.bf16.mxu0 %v2320
    %3196 = vmatpush1.bf16.msra.mxu0 %v2319
    %3197 = vmatprep.subr.bf16.mxu0 %v2308
    %3198 = vmatpush1.bf16.msra.mxu0 %v2307
    %3199 = vmatprep.subr.bf16.mxu0 %v2296
    %3200 = vmatpush1.bf16.msra.mxu0 %v2295
    %3201 = vmatprep.subr.bf16.mxu0 %v2284
    %3202 = vmatpush1.bf16.msra.mxu0 %v2283
    %3203 = vmatprep.subr.bf16.mxu0 %v2272
    %3204 = vmatpush1.bf16.msra.mxu0 %v2271
    %3205 = vmatprep.subr.bf16.mxu0 %v2260
    %3206 = vmatpush1.bf16.msra.mxu0 %v2259
    %3207 = vmatprep.subr.bf16.mxu0 %v2248
    %3208 = vmatpush1.bf16.msra.mxu0 %v2247
    %3209 = vmatprep.subr.bf16.mxu0 %v2236
    %3210 = vmatpush1.bf16.msra.mxu0 %v2235
    %3211 = vmatprep.subr.bf16.mxu0 %v2416
    %3212 = vmatpush2.bf16.msra.mxu0 %v2415
    %3213 = vmatprep.subr.bf16.mxu0 %v2404
    %3214 = vmatpush2.bf16.msra.mxu0 %v2403
    %3215 = vmatprep.subr.bf16.mxu0 %v2392
    %3216 = vmatpush2.bf16.msra.mxu0 %v2391
    %3217 = vmatprep.subr.bf16.mxu0 %v2380
    %3218 = vmatpush2.bf16.msra.mxu0 %v2379
    %3219 = vmatprep.subr.bf16.mxu0 %v2368
    %3220 = vmatpush2.bf16.msra.mxu0 %v2367
    %3221 = vmatprep.subr.bf16.mxu0 %v2356
    %3222 = vmatpush2.bf16.msra.mxu0 %v2355
    %3223 = vmatprep.subr.bf16.mxu0 %v2344
    %3224 = vmatpush2.bf16.msra.mxu0 %v2343
    %3225 = vmatprep.subr.bf16.mxu0 %v2332
    %3226 = vmatpush2.bf16.msra.mxu0 %v2331
    %3227 = vmatprep.mubr.bf16.mxu0 %v756
    %3228 = vmatmul.mubr.bf16.gmra.mxu0 %v755
    %v3229 = vpop.f32.mrf.mxu0
    %v3230 = vadd.f32 %v634, %v3229
    %v3231 = vpop.f32.mrf.mxu0
    %v3232 = vadd.f32 %v638, %v3231
    %v3233 = vpop.f32.mrf.mxu0
    %v3234 = vadd.f32 %v634, %v3233
    %v3235 = vpop.f32.mrf.mxu0
    %v3236 = vadd.f32 %v638, %v3235
    %3237 = vmatprep.mubr.bf16.mxu0 %v761
    %3238 = vmatmul.mubr.bf16.gmra.mxu0 %v760
    %v3239 = vpop.f32.mrf.mxu0
    %v3240 = vadd.f32 %v634, %v3239
    %v3241 = vpop.f32.mrf.mxu0
    %v3242 = vadd.f32 %v638, %v3241
    %v3243 = vpop.f32.mrf.mxu0
    %v3244 = vadd.f32 %v634, %v3243
    %v3245 = vpop.f32.mrf.mxu0
    %v3246 = vadd.f32 %v638, %v3245
    %3247 = vmatprep.mubr.bf16.mxu0 %v766
    %3248 = vmatmul.mubr.bf16.gmra.mxu0 %v765
    %v3249 = vpop.f32.mrf.mxu0
    %v3250 = vadd.f32 %v634, %v3249
    %v3251 = vpop.f32.mrf.mxu0
    %v3252 = vadd.f32 %v638, %v3251
    %v3253 = vpop.f32.mrf.mxu0
    %v3254 = vadd.f32 %v634, %v3253
    %v3255 = vpop.f32.mrf.mxu0
    %v3256 = vadd.f32 %v638, %v3255
    %3257 = vmatprep.mubr.bf16.mxu0 %v771
    %3258 = vmatmul.mubr.bf16.gmra.mxu0 %v770
    %v3259 = vpop.f32.mrf.mxu0
    %v3260 = vadd.f32 %v634, %v3259
    %v3261 = vpop.f32.mrf.mxu0
    %v3262 = vadd.f32 %v638, %v3261
    %v3263 = vpop.f32.mrf.mxu0
    %v3264 = vadd.f32 %v634, %v3263
    %v3265 = vpop.f32.mrf.mxu0
    %v3266 = vadd.f32 %v638, %v3265
    %3267 = vdwg.mxu0
    %3268 = vmatprep.subr.bf16.mxu0 %v2512
    %3269 = vmatpush1.bf16.msra.mxu0 %v2511
    %3270 = vmatprep.subr.bf16.mxu0 %v2500
    %3271 = vmatpush1.bf16.msra.mxu0 %v2499
    %3272 = vmatprep.subr.bf16.mxu0 %v2488
    %3273 = vmatpush1.bf16.msra.mxu0 %v2487
    %3274 = vmatprep.subr.bf16.mxu0 %v2476
    %3275 = vmatpush1.bf16.msra.mxu0 %v2475
    %3276 = vmatprep.subr.bf16.mxu0 %v2464
    %3277 = vmatpush1.bf16.msra.mxu0 %v2463
    %3278 = vmatprep.subr.bf16.mxu0 %v2452
    %3279 = vmatpush1.bf16.msra.mxu0 %v2451
    %3280 = vmatprep.subr.bf16.mxu0 %v2440
    %3281 = vmatpush1.bf16.msra.mxu0 %v2439
    %3282 = vmatprep.subr.bf16.mxu0 %v2428
    %3283 = vmatpush1.bf16.msra.mxu0 %v2427
    %3284 = vmatprep.subr.bf16.mxu0 %v2608
    %3285 = vmatpush2.bf16.msra.mxu0 %v2607
    %3286 = vmatprep.subr.bf16.mxu0 %v2596
    %3287 = vmatpush2.bf16.msra.mxu0 %v2595
    %3288 = vmatprep.subr.bf16.mxu0 %v2584
    %3289 = vmatpush2.bf16.msra.mxu0 %v2583
    %3290 = vmatprep.subr.bf16.mxu0 %v2572
    %3291 = vmatpush2.bf16.msra.mxu0 %v2571
    %3292 = vmatprep.subr.bf16.mxu0 %v2560
    %3293 = vmatpush2.bf16.msra.mxu0 %v2559
    %3294 = vmatprep.subr.bf16.mxu0 %v2548
    %3295 = vmatpush2.bf16.msra.mxu0 %v2547
    %3296 = vmatprep.subr.bf16.mxu0 %v2536
    %3297 = vmatpush2.bf16.msra.mxu0 %v2535
    %3298 = vmatprep.subr.bf16.mxu0 %v2524
    %3299 = vmatpush2.bf16.msra.mxu0 %v2523
    %3300 = vmatprep.mubr.bf16.mxu0 %v758
    %3301 = vmatmul.mubr.bf16.gmra.mxu0 %v757
    %v3302 = vpop.f32.mrf.mxu0
    %v3303 = vadd.f32 %v3230, %v3302
    %v3304 = vpop.f32.mrf.mxu0
    %v3305 = vadd.f32 %v3232, %v3304
    %v3306 = vpop.f32.mrf.mxu0
    %v3307 = vadd.f32 %v3234, %v3306
    %v3308 = vpop.f32.mrf.mxu0
    %v3309 = vadd.f32 %v3236, %v3308
    %3310 = vmatprep.mubr.bf16.mxu0 %v763
    %3311 = vmatmul.mubr.bf16.gmra.mxu0 %v762
    %v3312 = vpop.f32.mrf.mxu0
    %v3313 = vadd.f32 %v3240, %v3312
    %v3314 = vpop.f32.mrf.mxu0
    %v3315 = vadd.f32 %v3242, %v3314
    %v3316 = vpop.f32.mrf.mxu0
    %v3317 = vadd.f32 %v3244, %v3316
    %v3318 = vpop.f32.mrf.mxu0
    %v3319 = vadd.f32 %v3246, %v3318
    %3320 = vmatprep.mubr.bf16.mxu0 %v768
    %3321 = vmatmul.mubr.bf16.gmra.mxu0 %v767
    %v3322 = vpop.f32.mrf.mxu0
    %v3323 = vadd.f32 %v3250, %v3322
    %v3324 = vpop.f32.mrf.mxu0
    %v3325 = vadd.f32 %v3252, %v3324
    %v3326 = vpop.f32.mrf.mxu0
    %v3327 = vadd.f32 %v3254, %v3326
    %v3328 = vpop.f32.mrf.mxu0
    %v3329 = vadd.f32 %v3256, %v3328
    %3330 = vmatprep.mubr.bf16.mxu0 %v773
    %3331 = vmatmul.mubr.bf16.gmra.mxu0 %v772
    %v3332 = vpop.f32.mrf.mxu0
    %v3333 = vadd.f32 %v3260, %v3332
    %v3334 = vpop.f32.mrf.mxu0
    %v3335 = vadd.f32 %v3262, %v3334
    %v3336 = vpop.f32.mrf.mxu0
    %v3337 = vadd.f32 %v3264, %v3336
    %v3338 = vpop.f32.mrf.mxu0
    %v3339 = vadd.f32 %v3266, %v3338
    %3340 = vdwg.mxu0
    %3341 = vmatprep.subr.bf16.mxu0 %v2704
    %3342 = vmatpush1.bf16.msra.mxu0 %v2703
    %3343 = vmatprep.subr.bf16.mxu0 %v2692
    %3344 = vmatpush1.bf16.msra.mxu0 %v2691
    %3345 = vmatprep.subr.bf16.mxu0 %v2680
    %3346 = vmatpush1.bf16.msra.mxu0 %v2679
    %3347 = vmatprep.subr.bf16.mxu0 %v2668
    %3348 = vmatpush1.bf16.msra.mxu0 %v2667
    %3349 = vmatprep.subr.bf16.mxu0 %v2656
    %3350 = vmatpush1.bf16.msra.mxu0 %v2655
    %3351 = vmatprep.subr.bf16.mxu0 %v2644
    %3352 = vmatpush1.bf16.msra.mxu0 %v2643
    %3353 = vmatprep.subr.bf16.mxu0 %v2632
    %3354 = vmatpush1.bf16.msra.mxu0 %v2631
    %3355 = vmatprep.subr.bf16.mxu0 %v2620
    %3356 = vmatpush1.bf16.msra.mxu0 %v2619
    %3357 = vmatprep.subr.bf16.mxu0 0
    %3358 = vmatpush2.bf16.msra.mxu0 0
    %3359 = vmatprep.subr.bf16.mxu0 0
    %3360 = vmatpush2.bf16.msra.mxu0 0
    %3361 = vmatprep.subr.bf16.mxu0 0
    %3362 = vmatpush2.bf16.msra.mxu0 0
    %3363 = vmatprep.subr.bf16.mxu0 0
    %3364 = vmatpush2.bf16.msra.mxu0 0
    %3365 = vmatprep.subr.bf16.mxu0 0
    %3366 = vmatpush2.bf16.msra.mxu0 0
    %3367 = vmatprep.subr.bf16.mxu0 0
    %3368 = vmatpush2.bf16.msra.mxu0 0
    %3369 = vmatprep.subr.bf16.mxu0 0
    %3370 = vmatpush2.bf16.msra.mxu0 0
    %3371 = vmatprep.subr.bf16.mxu0 0
    %3372 = vmatpush2.bf16.msra.mxu0 0
    %3373 = vmatprep.mubr.bf16.mxu0 0
    %3374 = vmatmul.mubr.bf16.gmra.mxu0 %v759
    %v3375 = vpop.f32.mrf.mxu0
    %v3376 = vadd.f32 %v3303, %v3375
    %v3377 = vpop.f32.mrf.mxu0
    %v3378 = vadd.f32 %v3305, %v3377
    %v3379 = vpop.f32.mrf.mxu0
    %v3380 = vadd.f32 %v3307, %v3379
    %v3381 = vpop.f32.mrf.mxu0
    %v3382 = vadd.f32 %v3309, %v3381
    %3383 = vmatprep.mubr.bf16.mxu0 0
    %3384 = vmatmul.mubr.bf16.gmra.mxu0 %v764
    %v3385 = vpop.f32.mrf.mxu0
    %v3386 = vadd.f32 %v3313, %v3385
    %v3387 = vpop.f32.mrf.mxu0
    %v3388 = vadd.f32 %v3315, %v3387
    %v3389 = vpop.f32.mrf.mxu0
    %v3390 = vadd.f32 %v3317, %v3389
    %v3391 = vpop.f32.mrf.mxu0
    %v3392 = vadd.f32 %v3319, %v3391
    %3393 = vmatprep.mubr.bf16.mxu0 0
    %3394 = vmatmul.mubr.bf16.gmra.mxu0 %v769
    %v3395 = vpop.f32.mrf.mxu0
    %v3396 = vadd.f32 %v3323, %v3395
    %v3397 = vpop.f32.mrf.mxu0
    %v3398 = vadd.f32 %v3325, %v3397
    %v3399 = vpop.f32.mrf.mxu0
    %v3400 = vadd.f32 %v3327, %v3399
    %v3401 = vpop.f32.mrf.mxu0
    %v3402 = vadd.f32 %v3329, %v3401
    %3403 = vmatprep.mubr.bf16.mxu0 0
    %3404 = vmatmul.mubr.bf16.gmra.mxu0 %v774
    %v3405 = vpop.f32.mrf.mxu0
    %v3406 = vadd.f32 %v3333, %v3405
    %v3407 = vpop.f32.mrf.mxu0
    %v3408 = vadd.f32 %v3335, %v3407
    %v3409 = vpop.f32.mrf.mxu0
    %v3410 = vadd.f32 %v3337, %v3409
    %v3411 = vpop.f32.mrf.mxu0
    %v3412 = vadd.f32 %v3339, %v3411
    %3413 = vdwg.mxu0
    %3414 = vmatprep.subr.bf16.mxu0 %v2322
    %3415 = vmatpush1.bf16.msra.mxu0 %v2321
    %3416 = vmatprep.subr.bf16.mxu0 %v2310
    %3417 = vmatpush1.bf16.msra.mxu0 %v2309
    %3418 = vmatprep.subr.bf16.mxu0 %v2298
    %3419 = vmatpush1.bf16.msra.mxu0 %v2297
    %3420 = vmatprep.subr.bf16.mxu0 %v2286
    %3421 = vmatpush1.bf16.msra.mxu0 %v2285
    %3422 = vmatprep.subr.bf16.mxu0 %v2274
    %3423 = vmatpush1.bf16.msra.mxu0 %v2273
    %3424 = vmatprep.subr.bf16.mxu0 %v2262
    %3425 = vmatpush1.bf16.msra.mxu0 %v2261
    %3426 = vmatprep.subr.bf16.mxu0 %v2250
    %3427 = vmatpush1.bf16.msra.mxu0 %v2249
    %3428 = vmatprep.subr.bf16.mxu0 %v2238
    %3429 = vmatpush1.bf16.msra.mxu0 %v2237
    %3430 = vmatprep.subr.bf16.mxu0 %v2418
    %3431 = vmatpush2.bf16.msra.mxu0 %v2417
    %3432 = vmatprep.subr.bf16.mxu0 %v2406
    %3433 = vmatpush2.bf16.msra.mxu0 %v2405
    %3434 = vmatprep.subr.bf16.mxu0 %v2394
    %3435 = vmatpush2.bf16.msra.mxu0 %v2393
    %3436 = vmatprep.subr.bf16.mxu0 %v2382
    %3437 = vmatpush2.bf16.msra.mxu0 %v2381
    %3438 = vmatprep.subr.bf16.mxu0 %v2370
    %3439 = vmatpush2.bf16.msra.mxu0 %v2369
    %3440 = vmatprep.subr.bf16.mxu0 %v2358
    %3441 = vmatpush2.bf16.msra.mxu0 %v2357
    %3442 = vmatprep.subr.bf16.mxu0 %v2346
    %3443 = vmatpush2.bf16.msra.mxu0 %v2345
    %3444 = vmatprep.subr.bf16.mxu0 %v2334
    %3445 = vmatpush2.bf16.msra.mxu0 %v2333
    %3446 = vmatprep.mubr.bf16.mxu0 %v756
    %3447 = vmatmul.mubr.bf16.gmra.mxu0 %v755
    %v3448 = vpop.f32.mrf.mxu0
    %v3449 = vadd.f32 %v642, %v3448
    %v3450 = vpop.f32.mrf.mxu0
    %v3451 = vadd.f32 %v646, %v3450
    %v3452 = vpop.f32.mrf.mxu0
    %v3453 = vadd.f32 %v642, %v3452
    %v3454 = vpop.f32.mrf.mxu0
    %v3455 = vadd.f32 %v646, %v3454
    %3456 = vmatprep.mubr.bf16.mxu0 %v761
    %3457 = vmatmul.mubr.bf16.gmra.mxu0 %v760
    %v3458 = vpop.f32.mrf.mxu0
    %v3459 = vadd.f32 %v642, %v3458
    %v3460 = vpop.f32.mrf.mxu0
    %v3461 = vadd.f32 %v646, %v3460
    %v3462 = vpop.f32.mrf.mxu0
    %v3463 = vadd.f32 %v642, %v3462
    %v3464 = vpop.f32.mrf.mxu0
    %v3465 = vadd.f32 %v646, %v3464
    %3466 = vmatprep.mubr.bf16.mxu0 %v766
    %3467 = vmatmul.mubr.bf16.gmra.mxu0 %v765
    %v3468 = vpop.f32.mrf.mxu0
    %v3469 = vadd.f32 %v642, %v3468
    %v3470 = vpop.f32.mrf.mxu0
    %v3471 = vadd.f32 %v646, %v3470
    %v3472 = vpop.f32.mrf.mxu0
    %v3473 = vadd.f32 %v642, %v3472
    %v3474 = vpop.f32.mrf.mxu0
    %v3475 = vadd.f32 %v646, %v3474
    %3476 = vmatprep.mubr.bf16.mxu0 %v771
    %3477 = vmatmul.mubr.bf16.gmra.mxu0 %v770
    %v3478 = vpop.f32.mrf.mxu0
    %v3479 = vadd.f32 %v642, %v3478
    %v3480 = vpop.f32.mrf.mxu0
    %v3481 = vadd.f32 %v646, %v3480
    %v3482 = vpop.f32.mrf.mxu0
    %v3483 = vadd.f32 %v642, %v3482
    %v3484 = vpop.f32.mrf.mxu0
    %v3485 = vadd.f32 %v646, %v3484
    %3486 = vdwg.mxu0
    %3487 = vmatprep.subr.bf16.mxu0 %v2514
    %3488 = vmatpush1.bf16.msra.mxu0 %v2513
    %3489 = vmatprep.subr.bf16.mxu0 %v2502
    %3490 = vmatpush1.bf16.msra.mxu0 %v2501
    %3491 = vmatprep.subr.bf16.mxu0 %v2490
    %3492 = vmatpush1.bf16.msra.mxu0 %v2489
    %3493 = vmatprep.subr.bf16.mxu0 %v2478
    %3494 = vmatpush1.bf16.msra.mxu0 %v2477
    %3495 = vmatprep.subr.bf16.mxu0 %v2466
    %3496 = vmatpush1.bf16.msra.mxu0 %v2465
    %3497 = vmatprep.subr.bf16.mxu0 %v2454
    %3498 = vmatpush1.bf16.msra.mxu0 %v2453
    %3499 = vmatprep.subr.bf16.mxu0 %v2442
    %3500 = vmatpush1.bf16.msra.mxu0 %v2441
    %3501 = vmatprep.subr.bf16.mxu0 %v2430
    %3502 = vmatpush1.bf16.msra.mxu0 %v2429
    %3503 = vmatprep.subr.bf16.mxu0 %v2610
    %3504 = vmatpush2.bf16.msra.mxu0 %v2609
    %3505 = vmatprep.subr.bf16.mxu0 %v2598
    %3506 = vmatpush2.bf16.msra.mxu0 %v2597
    %3507 = vmatprep.subr.bf16.mxu0 %v2586
    %3508 = vmatpush2.bf16.msra.mxu0 %v2585
    %3509 = vmatprep.subr.bf16.mxu0 %v2574
    %3510 = vmatpush2.bf16.msra.mxu0 %v2573
    %3511 = vmatprep.subr.bf16.mxu0 %v2562
    %3512 = vmatpush2.bf16.msra.mxu0 %v2561
    %3513 = vmatprep.subr.bf16.mxu0 %v2550
    %3514 = vmatpush2.bf16.msra.mxu0 %v2549
    %3515 = vmatprep.subr.bf16.mxu0 %v2538
    %3516 = vmatpush2.bf16.msra.mxu0 %v2537
    %3517 = vmatprep.subr.bf16.mxu0 %v2526
    %3518 = vmatpush2.bf16.msra.mxu0 %v2525
    %3519 = vmatprep.mubr.bf16.mxu0 %v758
    %3520 = vmatmul.mubr.bf16.gmra.mxu0 %v757
    %v3521 = vpop.f32.mrf.mxu0
    %v3522 = vadd.f32 %v3449, %v3521
    %v3523 = vpop.f32.mrf.mxu0
    %v3524 = vadd.f32 %v3451, %v3523
    %v3525 = vpop.f32.mrf.mxu0
    %v3526 = vadd.f32 %v3453, %v3525
    %v3527 = vpop.f32.mrf.mxu0
    %v3528 = vadd.f32 %v3455, %v3527
    %3529 = vmatprep.mubr.bf16.mxu0 %v763
    %3530 = vmatmul.mubr.bf16.gmra.mxu0 %v762
    %v3531 = vpop.f32.mrf.mxu0
    %v3532 = vadd.f32 %v3459, %v3531
    %v3533 = vpop.f32.mrf.mxu0
    %v3534 = vadd.f32 %v3461, %v3533
    %v3535 = vpop.f32.mrf.mxu0
    %v3536 = vadd.f32 %v3463, %v3535
    %v3537 = vpop.f32.mrf.mxu0
    %v3538 = vadd.f32 %v3465, %v3537
    %3539 = vmatprep.mubr.bf16.mxu0 %v768
    %3540 = vmatmul.mubr.bf16.gmra.mxu0 %v767
    %v3541 = vpop.f32.mrf.mxu0
    %v3542 = vadd.f32 %v3469, %v3541
    %v3543 = vpop.f32.mrf.mxu0
    %v3544 = vadd.f32 %v3471, %v3543
    %v3545 = vpop.f32.mrf.mxu0
    %v3546 = vadd.f32 %v3473, %v3545
    %v3547 = vpop.f32.mrf.mxu0
    %v3548 = vadd.f32 %v3475, %v3547
    %3549 = vmatprep.mubr.bf16.mxu0 %v773
    %3550 = vmatmul.mubr.bf16.gmra.mxu0 %v772
    %v3551 = vpop.f32.mrf.mxu0
    %v3552 = vadd.f32 %v3479, %v3551
    %v3553 = vpop.f32.mrf.mxu0
    %v3554 = vadd.f32 %v3481, %v3553
    %v3555 = vpop.f32.mrf.mxu0
    %v3556 = vadd.f32 %v3483, %v3555
    %v3557 = vpop.f32.mrf.mxu0
    %v3558 = vadd.f32 %v3485, %v3557
    %3559 = vdwg.mxu0
    %3560 = vmatprep.subr.bf16.mxu0 %v2706
    %3561 = vmatpush1.bf16.msra.mxu0 %v2705
    %3562 = vmatprep.subr.bf16.mxu0 %v2694
    %3563 = vmatpush1.bf16.msra.mxu0 %v2693
    %3564 = vmatprep.subr.bf16.mxu0 %v2682
    %3565 = vmatpush1.bf16.msra.mxu0 %v2681
    %3566 = vmatprep.subr.bf16.mxu0 %v2670
    %3567 = vmatpush1.bf16.msra.mxu0 %v2669
    %3568 = vmatprep.subr.bf16.mxu0 %v2658
    %3569 = vmatpush1.bf16.msra.mxu0 %v2657
    %3570 = vmatprep.subr.bf16.mxu0 %v2646
    %3571 = vmatpush1.bf16.msra.mxu0 %v2645
    %3572 = vmatprep.subr.bf16.mxu0 %v2634
    %3573 = vmatpush1.bf16.msra.mxu0 %v2633
    %3574 = vmatprep.subr.bf16.mxu0 %v2622
    %3575 = vmatpush1.bf16.msra.mxu0 %v2621
    %3576 = vmatprep.subr.bf16.mxu0 0
    %3577 = vmatpush2.bf16.msra.mxu0 0
    %3578 = vmatprep.subr.bf16.mxu0 0
    %3579 = vmatpush2.bf16.msra.mxu0 0
    %3580 = vmatprep.subr.bf16.mxu0 0
    %3581 = vmatpush2.bf16.msra.mxu0 0
    %3582 = vmatprep.subr.bf16.mxu0 0
    %3583 = vmatpush2.bf16.msra.mxu0 0
    %3584 = vmatprep.subr.bf16.mxu0 0
    %3585 = vmatpush2.bf16.msra.mxu0 0
    %3586 = vmatprep.subr.bf16.mxu0 0
    %3587 = vmatpush2.bf16.msra.mxu0 0
    %3588 = vmatprep.subr.bf16.mxu0 0
    %3589 = vmatpush2.bf16.msra.mxu0 0
    %3590 = vmatprep.subr.bf16.mxu0 0
    %3591 = vmatpush2.bf16.msra.mxu0 0
    %3592 = vmatprep.mubr.bf16.mxu0 0
    %3593 = vmatmul.mubr.bf16.gmra.mxu0 %v759
    %v3594 = vpop.f32.mrf.mxu0
    %v3595 = vadd.f32 %v3522, %v3594
    %v3596 = vpop.f32.mrf.mxu0
    %v3597 = vadd.f32 %v3524, %v3596
    %v3598 = vpop.f32.mrf.mxu0
    %v3599 = vadd.f32 %v3526, %v3598
    %v3600 = vpop.f32.mrf.mxu0
    %v3601 = vadd.f32 %v3528, %v3600
    %3602 = vmatprep.mubr.bf16.mxu0 0
    %3603 = vmatmul.mubr.bf16.gmra.mxu0 %v764
    %v3604 = vpop.f32.mrf.mxu0
    %v3605 = vadd.f32 %v3532, %v3604
    %v3606 = vpop.f32.mrf.mxu0
    %v3607 = vadd.f32 %v3534, %v3606
    %v3608 = vpop.f32.mrf.mxu0
    %v3609 = vadd.f32 %v3536, %v3608
    %v3610 = vpop.f32.mrf.mxu0
    %v3611 = vadd.f32 %v3538, %v3610
    %3612 = vmatprep.mubr.bf16.mxu0 0
    %3613 = vmatmul.mubr.bf16.gmra.mxu0 %v769
    %v3614 = vpop.f32.mrf.mxu0
    %v3615 = vadd.f32 %v3542, %v3614
    %v3616 = vpop.f32.mrf.mxu0
    %v3617 = vadd.f32 %v3544, %v3616
    %v3618 = vpop.f32.mrf.mxu0
    %v3619 = vadd.f32 %v3546, %v3618
    %v3620 = vpop.f32.mrf.mxu0
    %v3621 = vadd.f32 %v3548, %v3620
    %3622 = vmatprep.mubr.bf16.mxu0 0
    %3623 = vmatmul.mubr.bf16.gmra.mxu0 %v774
    %v3624 = vpop.f32.mrf.mxu0
    %v3625 = vadd.f32 %v3552, %v3624
    %v3626 = vpop.f32.mrf.mxu0
    %v3627 = vadd.f32 %v3554, %v3626
    %v3628 = vpop.f32.mrf.mxu0
    %v3629 = vadd.f32 %v3556, %v3628
    %v3630 = vpop.f32.mrf.mxu0
    %v3631 = vadd.f32 %v3558, %v3630
    %3632 = vdwg.mxu0
    %3633 = vmatprep.subr.bf16.mxu0 %v2324
    %3634 = vmatpush1.bf16.msra.mxu0 %v2323
    %3635 = vmatprep.subr.bf16.mxu0 %v2312
    %3636 = vmatpush1.bf16.msra.mxu0 %v2311
    %3637 = vmatprep.subr.bf16.mxu0 %v2300
    %3638 = vmatpush1.bf16.msra.mxu0 %v2299
    %3639 = vmatprep.subr.bf16.mxu0 %v2288
    %3640 = vmatpush1.bf16.msra.mxu0 %v2287
    %3641 = vmatprep.subr.bf16.mxu0 %v2276
    %3642 = vmatpush1.bf16.msra.mxu0 %v2275
    %3643 = vmatprep.subr.bf16.mxu0 %v2264
    %3644 = vmatpush1.bf16.msra.mxu0 %v2263
    %3645 = vmatprep.subr.bf16.mxu0 %v2252
    %3646 = vmatpush1.bf16.msra.mxu0 %v2251
    %3647 = vmatprep.subr.bf16.mxu0 %v2240
    %3648 = vmatpush1.bf16.msra.mxu0 %v2239
    %3649 = vmatprep.subr.bf16.mxu0 %v2420
    %3650 = vmatpush2.bf16.msra.mxu0 %v2419
    %3651 = vmatprep.subr.bf16.mxu0 %v2408
    %3652 = vmatpush2.bf16.msra.mxu0 %v2407
    %3653 = vmatprep.subr.bf16.mxu0 %v2396
    %3654 = vmatpush2.bf16.msra.mxu0 %v2395
    %3655 = vmatprep.subr.bf16.mxu0 %v2384
    %3656 = vmatpush2.bf16.msra.mxu0 %v2383
    %3657 = vmatprep.subr.bf16.mxu0 %v2372
    %3658 = vmatpush2.bf16.msra.mxu0 %v2371
    %3659 = vmatprep.subr.bf16.mxu0 %v2360
    %3660 = vmatpush2.bf16.msra.mxu0 %v2359
    %3661 = vmatprep.subr.bf16.mxu0 %v2348
    %3662 = vmatpush2.bf16.msra.mxu0 %v2347
    %3663 = vmatprep.subr.bf16.mxu0 %v2336
    %3664 = vmatpush2.bf16.msra.mxu0 %v2335
    %3665 = vmatprep.mubr.bf16.mxu0 %v756
    %3666 = vmatmul.mubr.bf16.gmra.mxu0 %v755
    %v3667 = vpop.f32.mrf.mxu0
    %v3668 = vadd.f32 %v650, %v3667
    %v3669 = vpop.f32.mrf.mxu0
    %v3670 = vadd.f32 %v654, %v3669
    %v3671 = vpop.f32.mrf.mxu0
    %v3672 = vadd.f32 %v650, %v3671
    %v3673 = vpop.f32.mrf.mxu0
    %v3674 = vadd.f32 %v654, %v3673
    %3675 = vmatprep.mubr.bf16.mxu0 %v761
    %3676 = vmatmul.mubr.bf16.gmra.mxu0 %v760
    %v3677 = vpop.f32.mrf.mxu0
    %v3678 = vadd.f32 %v650, %v3677
    %v3679 = vpop.f32.mrf.mxu0
    %v3680 = vadd.f32 %v654, %v3679
    %v3681 = vpop.f32.mrf.mxu0
    %v3682 = vadd.f32 %v650, %v3681
    %v3683 = vpop.f32.mrf.mxu0
    %v3684 = vadd.f32 %v654, %v3683
    %3685 = vmatprep.mubr.bf16.mxu0 %v766
    %3686 = vmatmul.mubr.bf16.gmra.mxu0 %v765
    %v3687 = vpop.f32.mrf.mxu0
    %v3688 = vadd.f32 %v650, %v3687
    %v3689 = vpop.f32.mrf.mxu0
    %v3690 = vadd.f32 %v654, %v3689
    %v3691 = vpop.f32.mrf.mxu0
    %v3692 = vadd.f32 %v650, %v3691
    %v3693 = vpop.f32.mrf.mxu0
    %v3694 = vadd.f32 %v654, %v3693
    %3695 = vmatprep.mubr.bf16.mxu0 %v771
    %3696 = vmatmul.mubr.bf16.gmra.mxu0 %v770
    %v3697 = vpop.f32.mrf.mxu0
    %v3698 = vadd.f32 %v650, %v3697
    %v3699 = vpop.f32.mrf.mxu0
    %v3700 = vadd.f32 %v654, %v3699
    %v3701 = vpop.f32.mrf.mxu0
    %v3702 = vadd.f32 %v650, %v3701
    %v3703 = vpop.f32.mrf.mxu0
    %v3704 = vadd.f32 %v654, %v3703
    %3705 = vdwg.mxu0
    %3706 = vmatprep.subr.bf16.mxu0 %v2516
    %3707 = vmatpush1.bf16.msra.mxu0 %v2515
    %3708 = vmatprep.subr.bf16.mxu0 %v2504
    %3709 = vmatpush1.bf16.msra.mxu0 %v2503
    %3710 = vmatprep.subr.bf16.mxu0 %v2492
    %3711 = vmatpush1.bf16.msra.mxu0 %v2491
    %3712 = vmatprep.subr.bf16.mxu0 %v2480
    %3713 = vmatpush1.bf16.msra.mxu0 %v2479
    %3714 = vmatprep.subr.bf16.mxu0 %v2468
    %3715 = vmatpush1.bf16.msra.mxu0 %v2467
    %3716 = vmatprep.subr.bf16.mxu0 %v2456
    %3717 = vmatpush1.bf16.msra.mxu0 %v2455
    %3718 = vmatprep.subr.bf16.mxu0 %v2444
    %3719 = vmatpush1.bf16.msra.mxu0 %v2443
    %3720 = vmatprep.subr.bf16.mxu0 %v2432
    %3721 = vmatpush1.bf16.msra.mxu0 %v2431
    %3722 = vmatprep.subr.bf16.mxu0 %v2612
    %3723 = vmatpush2.bf16.msra.mxu0 %v2611
    %3724 = vmatprep.subr.bf16.mxu0 %v2600
    %3725 = vmatpush2.bf16.msra.mxu0 %v2599
    %3726 = vmatprep.subr.bf16.mxu0 %v2588
    %3727 = vmatpush2.bf16.msra.mxu0 %v2587
    %3728 = vmatprep.subr.bf16.mxu0 %v2576
    %3729 = vmatpush2.bf16.msra.mxu0 %v2575
    %3730 = vmatprep.subr.bf16.mxu0 %v2564
    %3731 = vmatpush2.bf16.msra.mxu0 %v2563
    %3732 = vmatprep.subr.bf16.mxu0 %v2552
    %3733 = vmatpush2.bf16.msra.mxu0 %v2551
    %3734 = vmatprep.subr.bf16.mxu0 %v2540
    %3735 = vmatpush2.bf16.msra.mxu0 %v2539
    %3736 = vmatprep.subr.bf16.mxu0 %v2528
    %3737 = vmatpush2.bf16.msra.mxu0 %v2527
    %3738 = vmatprep.mubr.bf16.mxu0 %v758
    %3739 = vmatmul.mubr.bf16.gmra.mxu0 %v757
    %v3740 = vpop.f32.mrf.mxu0
    %v3741 = vadd.f32 %v3668, %v3740
    %v3742 = vpop.f32.mrf.mxu0
    %v3743 = vadd.f32 %v3670, %v3742
    %v3744 = vpop.f32.mrf.mxu0
    %v3745 = vadd.f32 %v3672, %v3744
    %v3746 = vpop.f32.mrf.mxu0
    %v3747 = vadd.f32 %v3674, %v3746
    %3748 = vmatprep.mubr.bf16.mxu0 %v763
    %3749 = vmatmul.mubr.bf16.gmra.mxu0 %v762
    %v3750 = vpop.f32.mrf.mxu0
    %v3751 = vadd.f32 %v3678, %v3750
    %v3752 = vpop.f32.mrf.mxu0
    %v3753 = vadd.f32 %v3680, %v3752
    %v3754 = vpop.f32.mrf.mxu0
    %v3755 = vadd.f32 %v3682, %v3754
    %v3756 = vpop.f32.mrf.mxu0
    %v3757 = vadd.f32 %v3684, %v3756
    %3758 = vmatprep.mubr.bf16.mxu0 %v768
    %3759 = vmatmul.mubr.bf16.gmra.mxu0 %v767
    %v3760 = vpop.f32.mrf.mxu0
    %v3761 = vadd.f32 %v3688, %v3760
    %v3762 = vpop.f32.mrf.mxu0
    %v3763 = vadd.f32 %v3690, %v3762
    %v3764 = vpop.f32.mrf.mxu0
    %v3765 = vadd.f32 %v3692, %v3764
    %v3766 = vpop.f32.mrf.mxu0
    %v3767 = vadd.f32 %v3694, %v3766
    %3768 = vmatprep.mubr.bf16.mxu0 %v773
    %3769 = vmatmul.mubr.bf16.gmra.mxu0 %v772
    %v3770 = vpop.f32.mrf.mxu0
    %v3771 = vadd.f32 %v3698, %v3770
    %v3772 = vpop.f32.mrf.mxu0
    %v3773 = vadd.f32 %v3700, %v3772
    %v3774 = vpop.f32.mrf.mxu0
    %v3775 = vadd.f32 %v3702, %v3774
    %v3776 = vpop.f32.mrf.mxu0
    %v3777 = vadd.f32 %v3704, %v3776
    %3778 = vdwg.mxu0
    %3779 = vmatprep.subr.bf16.mxu0 %v2708
    %3780 = vmatpush1.bf16.msra.mxu0 %v2707
    %3781 = vmatprep.subr.bf16.mxu0 %v2696
    %3782 = vmatpush1.bf16.msra.mxu0 %v2695
    %3783 = vmatprep.subr.bf16.mxu0 %v2684
    %3784 = vmatpush1.bf16.msra.mxu0 %v2683
    %3785 = vmatprep.subr.bf16.mxu0 %v2672
    %3786 = vmatpush1.bf16.msra.mxu0 %v2671
    %3787 = vmatprep.subr.bf16.mxu0 %v2660
    %3788 = vmatpush1.bf16.msra.mxu0 %v2659
    %3789 = vmatprep.subr.bf16.mxu0 %v2648
    %3790 = vmatpush1.bf16.msra.mxu0 %v2647
    %3791 = vmatprep.subr.bf16.mxu0 %v2636
    %3792 = vmatpush1.bf16.msra.mxu0 %v2635
    %3793 = vmatprep.subr.bf16.mxu0 %v2624
    %3794 = vmatpush1.bf16.msra.mxu0 %v2623
    %3795 = vmatprep.subr.bf16.mxu0 0
    %3796 = vmatpush2.bf16.msra.mxu0 0
    %3797 = vmatprep.subr.bf16.mxu0 0
    %3798 = vmatpush2.bf16.msra.mxu0 0
    %3799 = vmatprep.subr.bf16.mxu0 0
    %3800 = vmatpush2.bf16.msra.mxu0 0
    %3801 = vmatprep.subr.bf16.mxu0 0
    %3802 = vmatpush2.bf16.msra.mxu0 0
    %3803 = vmatprep.subr.bf16.mxu0 0
    %3804 = vmatpush2.bf16.msra.mxu0 0
    %3805 = vmatprep.subr.bf16.mxu0 0
    %3806 = vmatpush2.bf16.msra.mxu0 0
    %3807 = vmatprep.subr.bf16.mxu0 0
    %3808 = vmatpush2.bf16.msra.mxu0 0
    %3809 = vmatprep.subr.bf16.mxu0 0
    %3810 = vmatpush2.bf16.msra.mxu0 0
    %3811 = vmatprep.mubr.bf16.mxu0 0
    %3812 = vmatmul.mubr.bf16.gmra.mxu0 %v759
    %v3813 = vpop.f32.mrf.mxu0
    %v3814 = vadd.f32 %v3741, %v3813
    %v3815 = vpop.f32.mrf.mxu0
    %v3816 = vadd.f32 %v3743, %v3815
    %v3817 = vpop.f32.mrf.mxu0
    %v3818 = vadd.f32 %v3745, %v3817
    %v3819 = vpop.f32.mrf.mxu0
    %v3820 = vadd.f32 %v3747, %v3819
    %3821 = vmatprep.mubr.bf16.mxu0 0
    %3822 = vmatmul.mubr.bf16.gmra.mxu0 %v764
    %v3823 = vpop.f32.mrf.mxu0
    %v3824 = vadd.f32 %v3751, %v3823
    %v3825 = vpop.f32.mrf.mxu0
    %v3826 = vadd.f32 %v3753, %v3825
    %v3827 = vpop.f32.mrf.mxu0
    %v3828 = vadd.f32 %v3755, %v3827
    %v3829 = vpop.f32.mrf.mxu0
    %v3830 = vadd.f32 %v3757, %v3829
    %3831 = vmatprep.mubr.bf16.mxu0 0
    %3832 = vmatmul.mubr.bf16.gmra.mxu0 %v769
    %v3833 = vpop.f32.mrf.mxu0
    %v3834 = vadd.f32 %v3761, %v3833
    %v3835 = vpop.f32.mrf.mxu0
    %v3836 = vadd.f32 %v3763, %v3835
    %v3837 = vpop.f32.mrf.mxu0
    %v3838 = vadd.f32 %v3765, %v3837
    %v3839 = vpop.f32.mrf.mxu0
    %v3840 = vadd.f32 %v3767, %v3839
    %3841 = vmatprep.mubr.bf16.mxu0 0
    %3842 = vmatmul.mubr.bf16.gmra.mxu0 %v774
    %v3843 = vpop.f32.mrf.mxu0
    %v3844 = vadd.f32 %v3771, %v3843
    %v3845 = vpop.f32.mrf.mxu0
    %v3846 = vadd.f32 %v3773, %v3845
    %v3847 = vpop.f32.mrf.mxu0
    %v3848 = vadd.f32 %v3775, %v3847
    %v3849 = vpop.f32.mrf.mxu0
    %v3850 = vadd.f32 %v3777, %v3849
    %3851 = vdwg.mxu0
    %3852 = vmatprep.subr.bf16.mxu0 %v2326
    %3853 = vmatpush1.bf16.msra.mxu0 %v2325
    %3854 = vmatprep.subr.bf16.mxu0 %v2314
    %3855 = vmatpush1.bf16.msra.mxu0 %v2313
    %3856 = vmatprep.subr.bf16.mxu0 %v2302
    %3857 = vmatpush1.bf16.msra.mxu0 %v2301
    %3858 = vmatprep.subr.bf16.mxu0 %v2290
    %3859 = vmatpush1.bf16.msra.mxu0 %v2289
    %3860 = vmatprep.subr.bf16.mxu0 %v2278
    %3861 = vmatpush1.bf16.msra.mxu0 %v2277
    %3862 = vmatprep.subr.bf16.mxu0 %v2266
    %3863 = vmatpush1.bf16.msra.mxu0 %v2265
    %3864 = vmatprep.subr.bf16.mxu0 %v2254
    %3865 = vmatpush1.bf16.msra.mxu0 %v2253
    %3866 = vmatprep.subr.bf16.mxu0 %v2242
    %3867 = vmatpush1.bf16.msra.mxu0 %v2241
    %3868 = vmatprep.subr.bf16.mxu0 %v2422
    %3869 = vmatpush2.bf16.msra.mxu0 %v2421
    %3870 = vmatprep.subr.bf16.mxu0 %v2410
    %3871 = vmatpush2.bf16.msra.mxu0 %v2409
    %3872 = vmatprep.subr.bf16.mxu0 %v2398
    %3873 = vmatpush2.bf16.msra.mxu0 %v2397
    %3874 = vmatprep.subr.bf16.mxu0 %v2386
    %3875 = vmatpush2.bf16.msra.mxu0 %v2385
    %3876 = vmatprep.subr.bf16.mxu0 %v2374
    %3877 = vmatpush2.bf16.msra.mxu0 %v2373
    %3878 = vmatprep.subr.bf16.mxu0 %v2362
    %3879 = vmatpush2.bf16.msra.mxu0 %v2361
    %3880 = vmatprep.subr.bf16.mxu0 %v2350
    %3881 = vmatpush2.bf16.msra.mxu0 %v2349
    %3882 = vmatprep.subr.bf16.mxu0 %v2338
    %3883 = vmatpush2.bf16.msra.mxu0 %v2337
    %3884 = vmatprep.mubr.bf16.mxu0 %v756
    %3885 = vmatmul.mubr.bf16.gmra.mxu0 %v755
    %v3886 = vpop.f32.mrf.mxu0
    %v3887 = vadd.f32 %v658, %v3886
    %v3888 = vpop.f32.mrf.mxu0
    %v3889 = vadd.f32 %v662, %v3888
    %v3890 = vpop.f32.mrf.mxu0
    %v3891 = vadd.f32 %v658, %v3890
    %v3892 = vpop.f32.mrf.mxu0
    %v3893 = vadd.f32 %v662, %v3892
    %3894 = vmatprep.mubr.bf16.mxu0 %v761
    %3895 = vmatmul.mubr.bf16.gmra.mxu0 %v760
    %v3896 = vpop.f32.mrf.mxu0
    %v3897 = vadd.f32 %v658, %v3896
    %v3898 = vpop.f32.mrf.mxu0
    %v3899 = vadd.f32 %v662, %v3898
    %v3900 = vpop.f32.mrf.mxu0
    %v3901 = vadd.f32 %v658, %v3900
    %v3902 = vpop.f32.mrf.mxu0
    %v3903 = vadd.f32 %v662, %v3902
    %3904 = vmatprep.mubr.bf16.mxu0 %v766
    %3905 = vmatmul.mubr.bf16.gmra.mxu0 %v765
    %v3906 = vpop.f32.mrf.mxu0
    %v3907 = vadd.f32 %v658, %v3906
    %v3908 = vpop.f32.mrf.mxu0
    %v3909 = vadd.f32 %v662, %v3908
    %v3910 = vpop.f32.mrf.mxu0
    %v3911 = vadd.f32 %v658, %v3910
    %v3912 = vpop.f32.mrf.mxu0
    %v3913 = vadd.f32 %v662, %v3912
    %3914 = vmatprep.mubr.bf16.mxu0 %v771
    %3915 = vmatmul.mubr.bf16.gmra.mxu0 %v770
    %v3916 = vpop.f32.mrf.mxu0
    %v3917 = vadd.f32 %v658, %v3916
    %v3918 = vpop.f32.mrf.mxu0
    %v3919 = vadd.f32 %v662, %v3918
    %v3920 = vpop.f32.mrf.mxu0
    %v3921 = vadd.f32 %v658, %v3920
    %v3922 = vpop.f32.mrf.mxu0
    %v3923 = vadd.f32 %v662, %v3922
    %3924 = vdwg.mxu0
    %3925 = vmatprep.subr.bf16.mxu0 %v2518
    %3926 = vmatpush1.bf16.msra.mxu0 %v2517
    %3927 = vmatprep.subr.bf16.mxu0 %v2506
    %3928 = vmatpush1.bf16.msra.mxu0 %v2505
    %3929 = vmatprep.subr.bf16.mxu0 %v2494
    %3930 = vmatpush1.bf16.msra.mxu0 %v2493
    %3931 = vmatprep.subr.bf16.mxu0 %v2482
    %3932 = vmatpush1.bf16.msra.mxu0 %v2481
    %3933 = vmatprep.subr.bf16.mxu0 %v2470
    %3934 = vmatpush1.bf16.msra.mxu0 %v2469
    %3935 = vmatprep.subr.bf16.mxu0 %v2458
    %3936 = vmatpush1.bf16.msra.mxu0 %v2457
    %3937 = vmatprep.subr.bf16.mxu0 %v2446
    %3938 = vmatpush1.bf16.msra.mxu0 %v2445
    %3939 = vmatprep.subr.bf16.mxu0 %v2434
    %3940 = vmatpush1.bf16.msra.mxu0 %v2433
    %3941 = vmatprep.subr.bf16.mxu0 %v2614
    %3942 = vmatpush2.bf16.msra.mxu0 %v2613
    %3943 = vmatprep.subr.bf16.mxu0 %v2602
    %3944 = vmatpush2.bf16.msra.mxu0 %v2601
    %3945 = vmatprep.subr.bf16.mxu0 %v2590
    %3946 = vmatpush2.bf16.msra.mxu0 %v2589
    %3947 = vmatprep.subr.bf16.mxu0 %v2578
    %3948 = vmatpush2.bf16.msra.mxu0 %v2577
    %3949 = vmatprep.subr.bf16.mxu0 %v2566
    %3950 = vmatpush2.bf16.msra.mxu0 %v2565
    %3951 = vmatprep.subr.bf16.mxu0 %v2554
    %3952 = vmatpush2.bf16.msra.mxu0 %v2553
    %3953 = vmatprep.subr.bf16.mxu0 %v2542
    %3954 = vmatpush2.bf16.msra.mxu0 %v2541
    %3955 = vmatprep.subr.bf16.mxu0 %v2530
    %3956 = vmatpush2.bf16.msra.mxu0 %v2529
    %3957 = vmatprep.mubr.bf16.mxu0 %v758
    %3958 = vmatmul.mubr.bf16.gmra.mxu0 %v757
    %v3959 = vpop.f32.mrf.mxu0
    %v3960 = vadd.f32 %v3887, %v3959
    %v3961 = vpop.f32.mrf.mxu0
    %v3962 = vadd.f32 %v3889, %v3961
    %v3963 = vpop.f32.mrf.mxu0
    %v3964 = vadd.f32 %v3891, %v3963
    %v3965 = vpop.f32.mrf.mxu0
    %v3966 = vadd.f32 %v3893, %v3965
    %3967 = vmatprep.mubr.bf16.mxu0 %v763
    %3968 = vmatmul.mubr.bf16.gmra.mxu0 %v762
    %v3969 = vpop.f32.mrf.mxu0
    %v3970 = vadd.f32 %v3897, %v3969
    %v3971 = vpop.f32.mrf.mxu0
    %v3972 = vadd.f32 %v3899, %v3971
    %v3973 = vpop.f32.mrf.mxu0
    %v3974 = vadd.f32 %v3901, %v3973
    %v3975 = vpop.f32.mrf.mxu0
    %v3976 = vadd.f32 %v3903, %v3975
    %3977 = vmatprep.mubr.bf16.mxu0 %v768
    %3978 = vmatmul.mubr.bf16.gmra.mxu0 %v767
    %v3979 = vpop.f32.mrf.mxu0
    %v3980 = vadd.f32 %v3907, %v3979
    %v3981 = vpop.f32.mrf.mxu0
    %v3982 = vadd.f32 %v3909, %v3981
    %v3983 = vpop.f32.mrf.mxu0
    %v3984 = vadd.f32 %v3911, %v3983
    %v3985 = vpop.f32.mrf.mxu0
    %v3986 = vadd.f32 %v3913, %v3985
    %3987 = vmatprep.mubr.bf16.mxu0 %v773
    %3988 = vmatmul.mubr.bf16.gmra.mxu0 %v772
    %v3989 = vpop.f32.mrf.mxu0
    %v3990 = vadd.f32 %v3917, %v3989
    %v3991 = vpop.f32.mrf.mxu0
    %v3992 = vadd.f32 %v3919, %v3991
    %v3993 = vpop.f32.mrf.mxu0
    %v3994 = vadd.f32 %v3921, %v3993
    %v3995 = vpop.f32.mrf.mxu0
    %v3996 = vadd.f32 %v3923, %v3995
    %3997 = vdwg.mxu0
    %3998 = vmatprep.subr.bf16.mxu0 %v2710
    %3999 = vmatpush1.bf16.msra.mxu0 %v2709
    %4000 = vmatprep.subr.bf16.mxu0 %v2698
    %4001 = vmatpush1.bf16.msra.mxu0 %v2697
    %4002 = vmatprep.subr.bf16.mxu0 %v2686
    %4003 = vmatpush1.bf16.msra.mxu0 %v2685
    %4004 = vmatprep.subr.bf16.mxu0 %v2674
    %4005 = vmatpush1.bf16.msra.mxu0 %v2673
    %4006 = vmatprep.subr.bf16.mxu0 %v2662
    %4007 = vmatpush1.bf16.msra.mxu0 %v2661
    %4008 = vmatprep.subr.bf16.mxu0 %v2650
    %4009 = vmatpush1.bf16.msra.mxu0 %v2649
    %4010 = vmatprep.subr.bf16.mxu0 %v2638
    %4011 = vmatpush1.bf16.msra.mxu0 %v2637
    %4012 = vmatprep.subr.bf16.mxu0 %v2626
    %4013 = vmatpush1.bf16.msra.mxu0 %v2625
    %4014 = vmatprep.subr.bf16.mxu0 0
    %4015 = vmatpush2.bf16.msra.mxu0 0
    %4016 = vmatprep.subr.bf16.mxu0 0
    %4017 = vmatpush2.bf16.msra.mxu0 0
    %4018 = vmatprep.subr.bf16.mxu0 0
    %4019 = vmatpush2.bf16.msra.mxu0 0
    %4020 = vmatprep.subr.bf16.mxu0 0
    %4021 = vmatpush2.bf16.msra.mxu0 0
    %4022 = vmatprep.subr.bf16.mxu0 0
    %4023 = vmatpush2.bf16.msra.mxu0 0
    %4024 = vmatprep.subr.bf16.mxu0 0
    %4025 = vmatpush2.bf16.msra.mxu0 0
    %4026 = vmatprep.subr.bf16.mxu0 0
    %4027 = vmatpush2.bf16.msra.mxu0 0
    %4028 = vmatprep.subr.bf16.mxu0 0
    %4029 = vmatpush2.bf16.msra.mxu0 0
    %4030 = vmatprep.mubr.bf16.mxu0 0
    %4031 = vmatmul.mubr.bf16.gmra.mxu0 %v759
    %v4032 = vpop.f32.mrf.mxu0
    %v4033 = vadd.f32 %v3960, %v4032
    %v4034 = vpop.f32.mrf.mxu0
    %v4035 = vadd.f32 %v3962, %v4034
    %v4036 = vpop.f32.mrf.mxu0
    %v4037 = vadd.f32 %v3964, %v4036
    %v4038 = vpop.f32.mrf.mxu0
    %v4039 = vadd.f32 %v3966, %v4038
    %4040 = vmatprep.mubr.bf16.mxu0 0
    %4041 = vmatmul.mubr.bf16.gmra.mxu0 %v764
    %v4042 = vpop.f32.mrf.mxu0
    %v4043 = vadd.f32 %v3970, %v4042
    %v4044 = vpop.f32.mrf.mxu0
    %v4045 = vadd.f32 %v3972, %v4044
    %v4046 = vpop.f32.mrf.mxu0
    %v4047 = vadd.f32 %v3974, %v4046
    %v4048 = vpop.f32.mrf.mxu0
    %v4049 = vadd.f32 %v3976, %v4048
    %4050 = vmatprep.mubr.bf16.mxu0 0
    %4051 = vmatmul.mubr.bf16.gmra.mxu0 %v769
    %v4052 = vpop.f32.mrf.mxu0
    %v4053 = vadd.f32 %v3980, %v4052
    %v4054 = vpop.f32.mrf.mxu0
    %v4055 = vadd.f32 %v3982, %v4054
    %v4056 = vpop.f32.mrf.mxu0
    %v4057 = vadd.f32 %v3984, %v4056
    %v4058 = vpop.f32.mrf.mxu0
    %v4059 = vadd.f32 %v3986, %v4058
    %4060 = vmatprep.mubr.bf16.mxu0 0
    %4061 = vmatmul.mubr.bf16.gmra.mxu0 %v774
    %v4062 = vpop.f32.mrf.mxu0
    %v4063 = vadd.f32 %v3990, %v4062
    %v4064 = vpop.f32.mrf.mxu0
    %v4065 = vadd.f32 %v3992, %v4064
    %v4066 = vpop.f32.mrf.mxu0
    %v4067 = vadd.f32 %v3994, %v4066
    %v4068 = vpop.f32.mrf.mxu0
    %v4069 = vadd.f32 %v3996, %v4068
    %4070 = vdwg.mxu0
    %4071 = vmatprep.subr.bf16.mxu0 %v2328
    %4072 = vmatpush1.bf16.msra.mxu0 %v2327
    %4073 = vmatprep.subr.bf16.mxu0 %v2316
    %4074 = vmatpush1.bf16.msra.mxu0 %v2315
    %4075 = vmatprep.subr.bf16.mxu0 %v2304
    %4076 = vmatpush1.bf16.msra.mxu0 %v2303
    %4077 = vmatprep.subr.bf16.mxu0 %v2292
    %4078 = vmatpush1.bf16.msra.mxu0 %v2291
    %4079 = vmatprep.subr.bf16.mxu0 %v2280
    %4080 = vmatpush1.bf16.msra.mxu0 %v2279
    %4081 = vmatprep.subr.bf16.mxu0 %v2268
    %4082 = vmatpush1.bf16.msra.mxu0 %v2267
    %4083 = vmatprep.subr.bf16.mxu0 %v2256
    %4084 = vmatpush1.bf16.msra.mxu0 %v2255
    %4085 = vmatprep.subr.bf16.mxu0 %v2244
    %4086 = vmatpush1.bf16.msra.mxu0 %v2243
    %4087 = vmatprep.subr.bf16.mxu0 %v2424
    %4088 = vmatpush2.bf16.msra.mxu0 %v2423
    %4089 = vmatprep.subr.bf16.mxu0 %v2412
    %4090 = vmatpush2.bf16.msra.mxu0 %v2411
    %4091 = vmatprep.subr.bf16.mxu0 %v2400
    %4092 = vmatpush2.bf16.msra.mxu0 %v2399
    %4093 = vmatprep.subr.bf16.mxu0 %v2388
    %4094 = vmatpush2.bf16.msra.mxu0 %v2387
    %4095 = vmatprep.subr.bf16.mxu0 %v2376
    %4096 = vmatpush2.bf16.msra.mxu0 %v2375
    %4097 = vmatprep.subr.bf16.mxu0 %v2364
    %4098 = vmatpush2.bf16.msra.mxu0 %v2363
    %4099 = vmatprep.subr.bf16.mxu0 %v2352
    %4100 = vmatpush2.bf16.msra.mxu0 %v2351
    %4101 = vmatprep.subr.bf16.mxu0 %v2340
    %4102 = vmatpush2.bf16.msra.mxu0 %v2339
    %4103 = vmatprep.mubr.bf16.mxu0 %v756
    %4104 = vmatmul.mubr.bf16.gmra.mxu0 %v755
    %v4105 = vpop.f32.mrf.mxu0
    %v4106 = vadd.f32 %v666, %v4105
    %v4107 = vpop.f32.mrf.mxu0
    %v4108 = vadd.f32 %v670, %v4107
    %v4109 = vpop.f32.mrf.mxu0
    %v4110 = vadd.f32 %v666, %v4109
    %v4111 = vpop.f32.mrf.mxu0
    %v4112 = vadd.f32 %v670, %v4111
    %4113 = vmatprep.mubr.bf16.mxu0 %v761
    %4114 = vmatmul.mubr.bf16.gmra.mxu0 %v760
    %v4115 = vpop.f32.mrf.mxu0
    %v4116 = vadd.f32 %v666, %v4115
    %v4117 = vpop.f32.mrf.mxu0
    %v4118 = vadd.f32 %v670, %v4117
    %v4119 = vpop.f32.mrf.mxu0
    %v4120 = vadd.f32 %v666, %v4119
    %v4121 = vpop.f32.mrf.mxu0
    %v4122 = vadd.f32 %v670, %v4121
    %4123 = vmatprep.mubr.bf16.mxu0 %v766
    %4124 = vmatmul.mubr.bf16.gmra.mxu0 %v765
    %v4125 = vpop.f32.mrf.mxu0
    %v4126 = vadd.f32 %v666, %v4125
    %v4127 = vpop.f32.mrf.mxu0
    %v4128 = vadd.f32 %v670, %v4127
    %v4129 = vpop.f32.mrf.mxu0
    %v4130 = vadd.f32 %v666, %v4129
    %v4131 = vpop.f32.mrf.mxu0
    %v4132 = vadd.f32 %v670, %v4131
    %4133 = vmatprep.mubr.bf16.mxu0 %v771
    %4134 = vmatmul.mubr.bf16.gmra.mxu0 %v770
    %v4135 = vpop.f32.mrf.mxu0
    %v4136 = vadd.f32 %v666, %v4135
    %v4137 = vpop.f32.mrf.mxu0
    %v4138 = vadd.f32 %v670, %v4137
    %v4139 = vpop.f32.mrf.mxu0
    %v4140 = vadd.f32 %v666, %v4139
    %v4141 = vpop.f32.mrf.mxu0
    %v4142 = vadd.f32 %v670, %v4141
    %4143 = vdwg.mxu0
    %4144 = vmatprep.subr.bf16.mxu0 %v2520
    %4145 = vmatpush1.bf16.msra.mxu0 %v2519
    %4146 = vmatprep.subr.bf16.mxu0 %v2508
    %4147 = vmatpush1.bf16.msra.mxu0 %v2507
    %4148 = vmatprep.subr.bf16.mxu0 %v2496
    %4149 = vmatpush1.bf16.msra.mxu0 %v2495
    %4150 = vmatprep.subr.bf16.mxu0 %v2484
    %4151 = vmatpush1.bf16.msra.mxu0 %v2483
    %4152 = vmatprep.subr.bf16.mxu0 %v2472
    %4153 = vmatpush1.bf16.msra.mxu0 %v2471
    %4154 = vmatprep.subr.bf16.mxu0 %v2460
    %4155 = vmatpush1.bf16.msra.mxu0 %v2459
    %4156 = vmatprep.subr.bf16.mxu0 %v2448
    %4157 = vmatpush1.bf16.msra.mxu0 %v2447
    %4158 = vmatprep.subr.bf16.mxu0 %v2436
    %4159 = vmatpush1.bf16.msra.mxu0 %v2435
    %4160 = vmatprep.subr.bf16.mxu0 %v2616
    %4161 = vmatpush2.bf16.msra.mxu0 %v2615
    %4162 = vmatprep.subr.bf16.mxu0 %v2604
    %4163 = vmatpush2.bf16.msra.mxu0 %v2603
    %4164 = vmatprep.subr.bf16.mxu0 %v2592
    %4165 = vmatpush2.bf16.msra.mxu0 %v2591
    %4166 = vmatprep.subr.bf16.mxu0 %v2580
    %4167 = vmatpush2.bf16.msra.mxu0 %v2579
    %4168 = vmatprep.subr.bf16.mxu0 %v2568
    %4169 = vmatpush2.bf16.msra.mxu0 %v2567
    %4170 = vmatprep.subr.bf16.mxu0 %v2556
    %4171 = vmatpush2.bf16.msra.mxu0 %v2555
    %4172 = vmatprep.subr.bf16.mxu0 %v2544
    %4173 = vmatpush2.bf16.msra.mxu0 %v2543
    %4174 = vmatprep.subr.bf16.mxu0 %v2532
    %4175 = vmatpush2.bf16.msra.mxu0 %v2531
    %4176 = vmatprep.mubr.bf16.mxu0 %v758
    %4177 = vmatmul.mubr.bf16.gmra.mxu0 %v757
    %v4178 = vpop.f32.mrf.mxu0
    %v4179 = vadd.f32 %v4106, %v4178
    %v4180 = vpop.f32.mrf.mxu0
    %v4181 = vadd.f32 %v4108, %v4180
    %v4182 = vpop.f32.mrf.mxu0
    %v4183 = vadd.f32 %v4110, %v4182
    %v4184 = vpop.f32.mrf.mxu0
    %v4185 = vadd.f32 %v4112, %v4184
    %4186 = vmatprep.mubr.bf16.mxu0 %v763
    %4187 = vmatmul.mubr.bf16.gmra.mxu0 %v762
    %v4188 = vpop.f32.mrf.mxu0
    %v4189 = vadd.f32 %v4116, %v4188
    %v4190 = vpop.f32.mrf.mxu0
    %v4191 = vadd.f32 %v4118, %v4190
    %v4192 = vpop.f32.mrf.mxu0
    %v4193 = vadd.f32 %v4120, %v4192
    %v4194 = vpop.f32.mrf.mxu0
    %v4195 = vadd.f32 %v4122, %v4194
    %4196 = vmatprep.mubr.bf16.mxu0 %v768
    %4197 = vmatmul.mubr.bf16.gmra.mxu0 %v767
    %v4198 = vpop.f32.mrf.mxu0
    %v4199 = vadd.f32 %v4126, %v4198
    %v4200 = vpop.f32.mrf.mxu0
    %v4201 = vadd.f32 %v4128, %v4200
    %v4202 = vpop.f32.mrf.mxu0
    %v4203 = vadd.f32 %v4130, %v4202
    %v4204 = vpop.f32.mrf.mxu0
    %v4205 = vadd.f32 %v4132, %v4204
    %4206 = vmatprep.mubr.bf16.mxu0 %v773
    %4207 = vmatmul.mubr.bf16.gmra.mxu0 %v772
    %v4208 = vpop.f32.mrf.mxu0
    %v4209 = vadd.f32 %v4136, %v4208
    %v4210 = vpop.f32.mrf.mxu0
    %v4211 = vadd.f32 %v4138, %v4210
    %v4212 = vpop.f32.mrf.mxu0
    %v4213 = vadd.f32 %v4140, %v4212
    %v4214 = vpop.f32.mrf.mxu0
    %v4215 = vadd.f32 %v4142, %v4214
    %4216 = vdwg.mxu0
    %4217 = vmatprep.subr.bf16.mxu0 %v2712
    %4218 = vmatpush1.bf16.msra.mxu0 %v2711
    %4219 = vmatprep.subr.bf16.mxu0 %v2700
    %4220 = vmatpush1.bf16.msra.mxu0 %v2699
    %4221 = vmatprep.subr.bf16.mxu0 %v2688
    %4222 = vmatpush1.bf16.msra.mxu0 %v2687
    %4223 = vmatprep.subr.bf16.mxu0 %v2676
    %4224 = vmatpush1.bf16.msra.mxu0 %v2675
    %4225 = vmatprep.subr.bf16.mxu0 %v2664
    %4226 = vmatpush1.bf16.msra.mxu0 %v2663
    %4227 = vmatprep.subr.bf16.mxu0 %v2652
    %4228 = vmatpush1.bf16.msra.mxu0 %v2651
    %4229 = vmatprep.subr.bf16.mxu0 %v2640
    %4230 = vmatpush1.bf16.msra.mxu0 %v2639
    %4231 = vmatprep.subr.bf16.mxu0 %v2628
    %4232 = vmatpush1.bf16.msra.mxu0 %v2627
    %4233 = vmatprep.subr.bf16.mxu0 0
    %4234 = vmatpush2.bf16.msra.mxu0 0
    %4235 = vmatprep.subr.bf16.mxu0 0
    %4236 = vmatpush2.bf16.msra.mxu0 0
    %4237 = vmatprep.subr.bf16.mxu0 0
    %4238 = vmatpush2.bf16.msra.mxu0 0
    %4239 = vmatprep.subr.bf16.mxu0 0
    %4240 = vmatpush2.bf16.msra.mxu0 0
    %4241 = vmatprep.subr.bf16.mxu0 0
    %4242 = vmatpush2.bf16.msra.mxu0 0
    %4243 = vmatprep.subr.bf16.mxu0 0
    %4244 = vmatpush2.bf16.msra.mxu0 0
    %4245 = vmatprep.subr.bf16.mxu0 0
    %4246 = vmatpush2.bf16.msra.mxu0 0
    %4247 = vmatprep.subr.bf16.mxu0 0
    %4248 = vmatpush2.bf16.msra.mxu0 0
    %4249 = vmatprep.mubr.bf16.mxu0 0
    %4250 = vmatmul.mubr.bf16.gmra.mxu0 %v759
    %v4251 = vpop.f32.mrf.mxu0
    %v4252 = vadd.f32 %v4179, %v4251
    %v4253 = vpop.f32.mrf.mxu0
    %v4254 = vadd.f32 %v4181, %v4253
    %v4255 = vpop.f32.mrf.mxu0
    %v4256 = vadd.f32 %v4183, %v4255
    %v4257 = vpop.f32.mrf.mxu0
    %v4258 = vadd.f32 %v4185, %v4257
    %4259 = vmatprep.mubr.bf16.mxu0 0
    %4260 = vmatmul.mubr.bf16.gmra.mxu0 %v764
    %v4261 = vpop.f32.mrf.mxu0
    %v4262 = vadd.f32 %v4189, %v4261
    %v4263 = vpop.f32.mrf.mxu0
    %v4264 = vadd.f32 %v4191, %v4263
    %v4265 = vpop.f32.mrf.mxu0
    %v4266 = vadd.f32 %v4193, %v4265
    %v4267 = vpop.f32.mrf.mxu0
    %v4268 = vadd.f32 %v4195, %v4267
    %4269 = vmatprep.mubr.bf16.mxu0 0
    %4270 = vmatmul.mubr.bf16.gmra.mxu0 %v769
    %v4271 = vpop.f32.mrf.mxu0
    %v4272 = vadd.f32 %v4199, %v4271
    %v4273 = vpop.f32.mrf.mxu0
    %v4274 = vadd.f32 %v4201, %v4273
    %v4275 = vpop.f32.mrf.mxu0
    %v4276 = vadd.f32 %v4203, %v4275
    %v4277 = vpop.f32.mrf.mxu0
    %v4278 = vadd.f32 %v4205, %v4277
    %4279 = vmatprep.mubr.bf16.mxu0 0
    %4280 = vmatmul.mubr.bf16.gmra.mxu0 %v774
    %v4281 = vpop.f32.mrf.mxu0
    %v4282 = vadd.f32 %v4209, %v4281
    %v4283 = vpop.f32.mrf.mxu0
    %v4284 = vadd.f32 %v4211, %v4283
    %v4285 = vpop.f32.mrf.mxu0
    %v4286 = vadd.f32 %v4213, %v4285
    %v4287 = vpop.f32.mrf.mxu0
    %v4288 = vadd.f32 %v4215, %v4287
    %4289 = vdwg.mxu0
    %4290 = vmatprep.subr.bf16.mxu0 %v2330
    %4291 = vmatpush1.bf16.msra.mxu0 %v2329
    %4292 = vmatprep.subr.bf16.mxu0 %v2318
    %4293 = vmatpush1.bf16.msra.mxu0 %v2317
    %4294 = vmatprep.subr.bf16.mxu0 %v2306
    %4295 = vmatpush1.bf16.msra.mxu0 %v2305
    %4296 = vmatprep.subr.bf16.mxu0 %v2294
    %4297 = vmatpush1.bf16.msra.mxu0 %v2293
    %4298 = vmatprep.subr.bf16.mxu0 %v2282
    %4299 = vmatpush1.bf16.msra.mxu0 %v2281
    %4300 = vmatprep.subr.bf16.mxu0 %v2270
    %4301 = vmatpush1.bf16.msra.mxu0 %v2269
    %4302 = vmatprep.subr.bf16.mxu0 %v2258
    %4303 = vmatpush1.bf16.msra.mxu0 %v2257
    %4304 = vmatprep.subr.bf16.mxu0 %v2246
    %4305 = vmatpush1.bf16.msra.mxu0 %v2245
    %4306 = vmatprep.subr.bf16.mxu0 %v2426
    %4307 = vmatpush2.bf16.msra.mxu0 %v2425
    %4308 = vmatprep.subr.bf16.mxu0 %v2414
    %4309 = vmatpush2.bf16.msra.mxu0 %v2413
    %4310 = vmatprep.subr.bf16.mxu0 %v2402
    %4311 = vmatpush2.bf16.msra.mxu0 %v2401
    %4312 = vmatprep.subr.bf16.mxu0 %v2390
    %4313 = vmatpush2.bf16.msra.mxu0 %v2389
    %4314 = vmatprep.subr.bf16.mxu0 %v2378
    %4315 = vmatpush2.bf16.msra.mxu0 %v2377
    %4316 = vmatprep.subr.bf16.mxu0 %v2366
    %4317 = vmatpush2.bf16.msra.mxu0 %v2365
    %4318 = vmatprep.subr.bf16.mxu0 %v2354
    %4319 = vmatpush2.bf16.msra.mxu0 %v2353
    %4320 = vmatprep.subr.bf16.mxu0 %v2342
    %4321 = vmatpush2.bf16.msra.mxu0 %v2341
    %4322 = vmatprep.mubr.bf16.mxu0 %v756
    %4323 = vmatmul.mubr.bf16.gmra.mxu0 %v755
    %v4324 = vpop.f32.mrf.mxu0
    %v4325 = vadd.f32 %v674, %v4324
    %v4326 = vpop.f32.mrf.mxu0
    %v4327 = vadd.f32 %v678, %v4326
    %v4328 = vpop.f32.mrf.mxu0
    %v4329 = vadd.f32 %v674, %v4328
    %v4330 = vpop.f32.mrf.mxu0
    %v4331 = vadd.f32 %v678, %v4330
    %4332 = vmatprep.mubr.bf16.mxu0 %v761
    %4333 = vmatmul.mubr.bf16.gmra.mxu0 %v760
    %v4334 = vpop.f32.mrf.mxu0
    %v4335 = vadd.f32 %v674, %v4334
    %v4336 = vpop.f32.mrf.mxu0
    %v4337 = vadd.f32 %v678, %v4336
    %v4338 = vpop.f32.mrf.mxu0
    %v4339 = vadd.f32 %v674, %v4338
    %v4340 = vpop.f32.mrf.mxu0
    %v4341 = vadd.f32 %v678, %v4340
    %4342 = vmatprep.mubr.bf16.mxu0 %v766
    %4343 = vmatmul.mubr.bf16.gmra.mxu0 %v765
    %v4344 = vpop.f32.mrf.mxu0
    %v4345 = vadd.f32 %v674, %v4344
    %v4346 = vpop.f32.mrf.mxu0
    %v4347 = vadd.f32 %v678, %v4346
    %v4348 = vpop.f32.mrf.mxu0
    %v4349 = vadd.f32 %v674, %v4348
    %v4350 = vpop.f32.mrf.mxu0
    %v4351 = vadd.f32 %v678, %v4350
    %4352 = vmatprep.mubr.bf16.mxu0 %v771
    %4353 = vmatmul.mubr.bf16.gmra.mxu0 %v770
    %v4354 = vpop.f32.mrf.mxu0
    %v4355 = vadd.f32 %v674, %v4354
    %v4356 = vpop.f32.mrf.mxu0
    %v4357 = vadd.f32 %v678, %v4356
    %v4358 = vpop.f32.mrf.mxu0
    %v4359 = vadd.f32 %v674, %v4358
    %v4360 = vpop.f32.mrf.mxu0
    %v4361 = vadd.f32 %v678, %v4360
    %4362 = vdwg.mxu0
    %4363 = vmatprep.subr.bf16.mxu0 %v2522
    %4364 = vmatpush1.bf16.msra.mxu0 %v2521
    %4365 = vmatprep.subr.bf16.mxu0 %v2510
    %4366 = vmatpush1.bf16.msra.mxu0 %v2509
    %4367 = vmatprep.subr.bf16.mxu0 %v2498
    %4368 = vmatpush1.bf16.msra.mxu0 %v2497
    %4369 = vmatprep.subr.bf16.mxu0 %v2486
    %4370 = vmatpush1.bf16.msra.mxu0 %v2485
    %4371 = vmatprep.subr.bf16.mxu0 %v2474
    %4372 = vmatpush1.bf16.msra.mxu0 %v2473
    %4373 = vmatprep.subr.bf16.mxu0 %v2462
    %4374 = vmatpush1.bf16.msra.mxu0 %v2461
    %4375 = vmatprep.subr.bf16.mxu0 %v2450
    %4376 = vmatpush1.bf16.msra.mxu0 %v2449
    %4377 = vmatprep.subr.bf16.mxu0 %v2438
    %4378 = vmatpush1.bf16.msra.mxu0 %v2437
    %4379 = vmatprep.subr.bf16.mxu0 %v2618
    %4380 = vmatpush2.bf16.msra.mxu0 %v2617
    %4381 = vmatprep.subr.bf16.mxu0 %v2606
    %4382 = vmatpush2.bf16.msra.mxu0 %v2605
    %4383 = vmatprep.subr.bf16.mxu0 %v2594
    %4384 = vmatpush2.bf16.msra.mxu0 %v2593
    %4385 = vmatprep.subr.bf16.mxu0 %v2582
    %4386 = vmatpush2.bf16.msra.mxu0 %v2581
    %4387 = vmatprep.subr.bf16.mxu0 %v2570
    %4388 = vmatpush2.bf16.msra.mxu0 %v2569
    %4389 = vmatprep.subr.bf16.mxu0 %v2558
    %4390 = vmatpush2.bf16.msra.mxu0 %v2557
    %4391 = vmatprep.subr.bf16.mxu0 %v2546
    %4392 = vmatpush2.bf16.msra.mxu0 %v2545
    %4393 = vmatprep.subr.bf16.mxu0 %v2534
    %4394 = vmatpush2.bf16.msra.mxu0 %v2533
    %4395 = vmatprep.mubr.bf16.mxu0 %v758
    %4396 = vmatmul.mubr.bf16.gmra.mxu0 %v757
    %v4397 = vpop.f32.mrf.mxu0
    %v4398 = vadd.f32 %v4325, %v4397
    %v4399 = vpop.f32.mrf.mxu0
    %v4400 = vadd.f32 %v4327, %v4399
    %v4401 = vpop.f32.mrf.mxu0
    %v4402 = vadd.f32 %v4329, %v4401
    %v4403 = vpop.f32.mrf.mxu0
    %v4404 = vadd.f32 %v4331, %v4403
    %4405 = vmatprep.mubr.bf16.mxu0 %v763
    %4406 = vmatmul.mubr.bf16.gmra.mxu0 %v762
    %v4407 = vpop.f32.mrf.mxu0
    %v4408 = vadd.f32 %v4335, %v4407
    %v4409 = vpop.f32.mrf.mxu0
    %v4410 = vadd.f32 %v4337, %v4409
    %v4411 = vpop.f32.mrf.mxu0
    %v4412 = vadd.f32 %v4339, %v4411
    %v4413 = vpop.f32.mrf.mxu0
    %v4414 = vadd.f32 %v4341, %v4413
    %4415 = vmatprep.mubr.bf16.mxu0 %v768
    %4416 = vmatmul.mubr.bf16.gmra.mxu0 %v767
    %v4417 = vpop.f32.mrf.mxu0
    %v4418 = vadd.f32 %v4345, %v4417
    %v4419 = vpop.f32.mrf.mxu0
    %v4420 = vadd.f32 %v4347, %v4419
    %v4421 = vpop.f32.mrf.mxu0
    %v4422 = vadd.f32 %v4349, %v4421
    %v4423 = vpop.f32.mrf.mxu0
    %v4424 = vadd.f32 %v4351, %v4423
    %4425 = vmatprep.mubr.bf16.mxu0 %v773
    %4426 = vmatmul.mubr.bf16.gmra.mxu0 %v772
    %v4427 = vpop.f32.mrf.mxu0
    %v4428 = vadd.f32 %v4355, %v4427
    %v4429 = vpop.f32.mrf.mxu0
    %v4430 = vadd.f32 %v4357, %v4429
    %v4431 = vpop.f32.mrf.mxu0
    %v4432 = vadd.f32 %v4359, %v4431
    %v4433 = vpop.f32.mrf.mxu0
    %v4434 = vadd.f32 %v4361, %v4433
    %4435 = vdwg.mxu0
    %4436 = vmatprep.subr.bf16.mxu0 %v2714
    %4437 = vmatpush1.bf16.msra.mxu0 %v2713
    %4438 = vmatprep.subr.bf16.mxu0 %v2702
    %4439 = vmatpush1.bf16.msra.mxu0 %v2701
    %4440 = vmatprep.subr.bf16.mxu0 %v2690
    %4441 = vmatpush1.bf16.msra.mxu0 %v2689
    %4442 = vmatprep.subr.bf16.mxu0 %v2678
    %4443 = vmatpush1.bf16.msra.mxu0 %v2677
    %4444 = vmatprep.subr.bf16.mxu0 %v2666
    %4445 = vmatpush1.bf16.msra.mxu0 %v2665
    %4446 = vmatprep.subr.bf16.mxu0 %v2654
    %4447 = vmatpush1.bf16.msra.mxu0 %v2653
    %4448 = vmatprep.subr.bf16.mxu0 %v2642
    %4449 = vmatpush1.bf16.msra.mxu0 %v2641
    %4450 = vmatprep.subr.bf16.mxu0 %v2630
    %4451 = vmatpush1.bf16.msra.mxu0 %v2629
    %4452 = vmatprep.subr.bf16.mxu0 0
    %4453 = vmatpush2.bf16.msra.mxu0 0
    %4454 = vmatprep.subr.bf16.mxu0 0
    %4455 = vmatpush2.bf16.msra.mxu0 0
    %4456 = vmatprep.subr.bf16.mxu0 0
    %4457 = vmatpush2.bf16.msra.mxu0 0
    %4458 = vmatprep.subr.bf16.mxu0 0
    %4459 = vmatpush2.bf16.msra.mxu0 0
    %4460 = vmatprep.subr.bf16.mxu0 0
    %4461 = vmatpush2.bf16.msra.mxu0 0
    %4462 = vmatprep.subr.bf16.mxu0 0
    %4463 = vmatpush2.bf16.msra.mxu0 0
    %4464 = vmatprep.subr.bf16.mxu0 0
    %4465 = vmatpush2.bf16.msra.mxu0 0
    %4466 = vmatprep.subr.bf16.mxu0 0
    %4467 = vmatpush2.bf16.msra.mxu0 0
    %4468 = vmatprep.mubr.bf16.mxu0 0
    %4469 = vmatmul.mubr.bf16.gmra.mxu0 %v759
    %v4470 = vpop.f32.mrf.mxu0
    %v4471 = vadd.f32 %v4398, %v4470
    %v4472 = vpop.f32.mrf.mxu0
    %v4473 = vadd.f32 %v4400, %v4472
    %v4474 = vpop.f32.mrf.mxu0
    %v4475 = vadd.f32 %v4402, %v4474
    %v4476 = vpop.f32.mrf.mxu0
    %v4477 = vadd.f32 %v4404, %v4476
    %4478 = vmatprep.mubr.bf16.mxu0 0
    %4479 = vmatmul.mubr.bf16.gmra.mxu0 %v764
    %v4480 = vpop.f32.mrf.mxu0
    %v4481 = vadd.f32 %v4408, %v4480
    %v4482 = vpop.f32.mrf.mxu0
    %v4483 = vadd.f32 %v4410, %v4482
    %v4484 = vpop.f32.mrf.mxu0
    %v4485 = vadd.f32 %v4412, %v4484
    %v4486 = vpop.f32.mrf.mxu0
    %v4487 = vadd.f32 %v4414, %v4486
    %4488 = vmatprep.mubr.bf16.mxu0 0
    %4489 = vmatmul.mubr.bf16.gmra.mxu0 %v769
    %v4490 = vpop.f32.mrf.mxu0
    %v4491 = vadd.f32 %v4418, %v4490
    %v4492 = vpop.f32.mrf.mxu0
    %v4493 = vadd.f32 %v4420, %v4492
    %v4494 = vpop.f32.mrf.mxu0
    %v4495 = vadd.f32 %v4422, %v4494
    %v4496 = vpop.f32.mrf.mxu0
    %v4497 = vadd.f32 %v4424, %v4496
    %4498 = vmatprep.mubr.bf16.mxu0 0
    %4499 = vmatmul.mubr.bf16.gmra.mxu0 %v774
    %v4500 = vpop.f32.mrf.mxu0
    %v4501 = vadd.f32 %v4428, %v4500
    %v4502 = vpop.f32.mrf.mxu0
    %v4503 = vadd.f32 %v4430, %v4502
    %v4504 = vpop.f32.mrf.mxu0
    %v4505 = vadd.f32 %v4432, %v4504
    %v4506 = vpop.f32.mrf.mxu0
    %v4507 = vadd.f32 %v4434, %v4506
    %4508 = vdwg.mxu0
    %4509 = vst [vmem:[#allocation2] sm:$0xff] %v3376
    %4510 = vst [vmem:[#allocation2 + $0x8] sm:$0xff] %v3378
    %4511 = vst [vmem:[#allocation2 + $0x10] sm:$0xff] %v3595
    %4512 = vst [vmem:[#allocation2 + $0x18] sm:$0xff] %v3597
    %4513 = vst [vmem:[#allocation2 + $0x20] sm:$0xff] %v3814
    %4514 = vst [vmem:[#allocation2 + $0x28] sm:$0xff] %v3816
    %4515 = vst [vmem:[#allocation2 + $0x30] sm:$0xff] %v4033
    %4516 = vst [vmem:[#allocation2 + $0x38] sm:$0xff] %v4035
    %4517 = vst [vmem:[#allocation2 + $0x40] sm:$0xff] %v4252
    %4518 = vst [vmem:[#allocation2 + $0x48] sm:$0xff] %v4254
    %4519 = vst [vmem:[#allocation2 + $0x50] sm:$0xff] %v4471
    %4520 = vst [vmem:[#allocation2 + $0x58] sm:$0xff] %v4473
    %4521 = vst [vmem:[#allocation2 + $0x60] sm:$0xff] %v3380
    %4522 = vst [vmem:[#allocation2 + $0x68] sm:$0xff] %v3382
    %4523 = vst [vmem:[#allocation2 + $0x70] sm:$0xff] %v3599
    %4524 = vst [vmem:[#allocation2 + $0x78] sm:$0xff] %v3601
    %4525 = vst [vmem:[#allocation2 + $0x80] sm:$0xff] %v3818
    %4526 = vst [vmem:[#allocation2 + $0x88] sm:$0xff] %v3820
    %4527 = vst [vmem:[#allocation2 + $0x90] sm:$0xff] %v4037
    %4528 = vst [vmem:[#allocation2 + $0x98] sm:$0xff] %v4039
    %4529 = vst [vmem:[#allocation2 + $0xa0] sm:$0xff] %v4256
    %4530 = vst [vmem:[#allocation2 + $0xa8] sm:$0xff] %v4258
    %4531 = vst [vmem:[#allocation2 + $0xb0] sm:$0xff] %v4475
    %4532 = vst [vmem:[#allocation2 + $0xb8] sm:$0xff] %v4477
    %4533 = vst [vmem:[#allocation2 + $0xc0] sm:$0xff] %v3386
    %4534 = vst [vmem:[#allocation2 + $0xc8] sm:$0xff] %v3388
    %4535 = vst [vmem:[#allocation2 + $0xd0] sm:$0xff] %v3605
    %4536 = vst [vmem:[#allocation2 + $0xd8] sm:$0xff] %v3607
    %4537 = vst [vmem:[#allocation2 + $0xe0] sm:$0xff] %v3824
    %4538 = vst [vmem:[#allocation2 + $0xe8] sm:$0xff] %v3826
    %4539 = vst [vmem:[#allocation2 + $0xf0] sm:$0xff] %v4043
    %4540 = vst [vmem:[#allocation2 + $0xf8] sm:$0xff] %v4045
    %4541 = vst [vmem:[#allocation2 + $0x100] sm:$0xff] %v4262
    %4542 = vst [vmem:[#allocation2 + $0x108] sm:$0xff] %v4264
    %4543 = vst [vmem:[#allocation2 + $0x110] sm:$0xff] %v4481
    %4544 = vst [vmem:[#allocation2 + $0x118] sm:$0xff] %v4483
    %4545 = vst [vmem:[#allocation2 + $0x120] sm:$0xff] %v3390
    %4546 = vst [vmem:[#allocation2 + $0x128] sm:$0xff] %v3392
    %4547 = vst [vmem:[#allocation2 + $0x130] sm:$0xff] %v3609
    %4548 = vst [vmem:[#allocation2 + $0x138] sm:$0xff] %v3611
    %4549 = vst [vmem:[#allocation2 + $0x140] sm:$0xff] %v3828
    %4550 = vst [vmem:[#allocation2 + $0x148] sm:$0xff] %v3830
    %4551 = vst [vmem:[#allocation2 + $0x150] sm:$0xff] %v4047
    %4552 = vst [vmem:[#allocation2 + $0x158] sm:$0xff] %v4049
    %4553 = vst [vmem:[#allocation2 + $0x160] sm:$0xff] %v4266
    %4554 = vst [vmem:[#allocation2 + $0x168] sm:$0xff] %v4268
    %4555 = vst [vmem:[#allocation2 + $0x170] sm:$0xff] %v4485
    %4556 = vst [vmem:[#allocation2 + $0x178] sm:$0xff] %v4487
    %4557 = vst [vmem:[#allocation2 + $0x180] sm:$0xff] %v3396
    %4558 = vst [vmem:[#allocation2 + $0x188] sm:$0xff] %v3398
    %4559 = vst [vmem:[#allocation2 + $0x190] sm:$0xff] %v3615
    %4560 = vst [vmem:[#allocation2 + $0x198] sm:$0xff] %v3617
    %4561 = vst [vmem:[#allocation2 + $0x1a0] sm:$0xff] %v3834
    %4562 = vst [vmem:[#allocation2 + $0x1a8] sm:$0xff] %v3836
    %4563 = vst [vmem:[#allocation2 + $0x1b0] sm:$0xff] %v4053
    %4564 = vst [vmem:[#allocation2 + $0x1b8] sm:$0xff] %v4055
    %4565 = vst [vmem:[#allocation2 + $0x1c0] sm:$0xff] %v4272
    %4566 = vst [vmem:[#allocation2 + $0x1c8] sm:$0xff] %v4274
    %4567 = vst [vmem:[#allocation2 + $0x1d0] sm:$0xff] %v4491
    %4568 = vst [vmem:[#allocation2 + $0x1d8] sm:$0xff] %v4493
    %4569 = vst [vmem:[#allocation2 + $0x1e0] sm:$0xff] %v3400
    %4570 = vst [vmem:[#allocation2 + $0x1e8] sm:$0xff] %v3402
    %4571 = vst [vmem:[#allocation2 + $0x1f0] sm:$0xff] %v3619
    %4572 = vst [vmem:[#allocation2 + $0x1f8] sm:$0xff] %v3621
    %4573 = vst [vmem:[#allocation2 + $0x200] sm:$0xff] %v3838
    %4574 = vst [vmem:[#allocation2 + $0x208] sm:$0xff] %v3840
    %4575 = vst [vmem:[#allocation2 + $0x210] sm:$0xff] %v4057
    %4576 = vst [vmem:[#allocation2 + $0x218] sm:$0xff] %v4059
    %4577 = vst [vmem:[#allocation2 + $0x220] sm:$0xff] %v4276
    %4578 = vst [vmem:[#allocation2 + $0x228] sm:$0xff] %v4278
    %4579 = vst [vmem:[#allocation2 + $0x230] sm:$0xff] %v4495
    %4580 = vst [vmem:[#allocation2 + $0x238] sm:$0xff] %v4497
    %4581 = vst [vmem:[#allocation2 + $0x240] sm:$0xff] %v3406
    %4582 = vst [vmem:[#allocation2 + $0x248] sm:$0xff] %v3408
    %4583 = vst [vmem:[#allocation2 + $0x250] sm:$0xff] %v3625
    %4584 = vst [vmem:[#allocation2 + $0x258] sm:$0xff] %v3627
    %4585 = vst [vmem:[#allocation2 + $0x260] sm:$0xff] %v3844
    %4586 = vst [vmem:[#allocation2 + $0x268] sm:$0xff] %v3846
    %4587 = vst [vmem:[#allocation2 + $0x270] sm:$0xff] %v4063
    %4588 = vst [vmem:[#allocation2 + $0x278] sm:$0xff] %v4065
    %4589 = vst [vmem:[#allocation2 + $0x280] sm:$0xff] %v4282
    %4590 = vst [vmem:[#allocation2 + $0x288] sm:$0xff] %v4284
    %4591 = vst [vmem:[#allocation2 + $0x290] sm:$0xff] %v4501
    %4592 = vst [vmem:[#allocation2 + $0x298] sm:$0xff] %v4503
    %4593 = vst [vmem:[#allocation2 + $0x2a0] sm:$0xff] %v3410
    %4594 = vst [vmem:[#allocation2 + $0x2a8] sm:$0xff] %v3412
    %4595 = vst [vmem:[#allocation2 + $0x2b0] sm:$0xff] %v3629
    %4596 = vst [vmem:[#allocation2 + $0x2b8] sm:$0xff] %v3631
    %4597 = vst [vmem:[#allocation2 + $0x2c0] sm:$0xff] %v3848
    %4598 = vst [vmem:[#allocation2 + $0x2c8] sm:$0xff] %v3850
    %4599 = vst [vmem:[#allocation2 + $0x2d0] sm:$0xff] %v4067
    %4600 = vst [vmem:[#allocation2 + $0x2d8] sm:$0xff] %v4069
    %4601 = vst [vmem:[#allocation2 + $0x2e0] sm:$0xff] %v4286
    %4602 = vst [vmem:[#allocation2 + $0x2e8] sm:$0xff] %v4288
    %4603 = vst [vmem:[#allocation2 + $0x2f0] sm:$0xff] %v4505
    %4604 = vst [vmem:[#allocation2 + $0x2f8] sm:$0xff] %v4507
    %s4605 = smul.u32 4, 48
    %s4606 = smul.u32 %s4605, 12
    %s4607 = sshll.u32 %s4606, 4
    %4608 = dma.done [#allocation6], %s4607
    %v4609 = vld [vmem:[#allocation3] sm:$0xff]
    %v4610 = vld [vmem:[#allocation3 + $0x8] sm:$0xff]
    %v4611 = vld [vmem:[#allocation3 + $0x10] sm:$0xff]
    %v4612 = vld [vmem:[#allocation3 + $0x18] sm:$0xff]
    %v4613 = vld [vmem:[#allocation3 + $0x20] sm:$0xff]
    %v4614 = vld [vmem:[#allocation3 + $0x28] sm:$0xff]
    %v4615 = vld [vmem:[#allocation3 + $0x30] sm:$0xff]
    %v4616 = vld [vmem:[#allocation3 + $0x38] sm:$0xff]
    %v4617 = vld [vmem:[#allocation3 + $0x40] sm:$0xff]
    %v4618 = vld [vmem:[#allocation3 + $0x48] sm:$0xff]
    %v4619 = vld [vmem:[#allocation3 + $0x50] sm:$0xff]
    %v4620 = vld [vmem:[#allocation3 + $0x58] sm:$0xff]
    %v4621 = vld [vmem:[#allocation3 + $0x60] sm:$0xff]
    %v4622 = vld [vmem:[#allocation3 + $0x68] sm:$0xff]
    %v4623 = vld [vmem:[#allocation3 + $0x70] sm:$0xff]
    %v4624 = vld [vmem:[#allocation3 + $0x78] sm:$0xff]
    %v4625 = vld [vmem:[#allocation3 + $0x80] sm:$0xff]
    %v4626 = vld [vmem:[#allocation3 + $0x88] sm:$0xff]
    %v4627 = vld [vmem:[#allocation3 + $0x90] sm:$0xff]
    %v4628 = vld [vmem:[#allocation3 + $0x98] sm:$0xff]
    %v4629 = vld [vmem:[#allocation3 + $0xa0] sm:$0xff]
    %v4630 = vld [vmem:[#allocation3 + $0xa8] sm:$0xff]
    %v4631 = vld [vmem:[#allocation3 + $0xb0] sm:$0xff]
    %v4632 = vld [vmem:[#allocation3 + $0xb8] sm:$0xff]
    %v4633 = vld [vmem:[#allocation3 + $0xc0] sm:$0xff]
    %v4634 = vld [vmem:[#allocation3 + $0xc8] sm:$0xff]
    %v4635 = vld [vmem:[#allocation3 + $0xd0] sm:$0xff]
    %v4636 = vld [vmem:[#allocation3 + $0xd8] sm:$0xff]
    %v4637 = vld [vmem:[#allocation3 + $0xe0] sm:$0xff]
    %v4638 = vld [vmem:[#allocation3 + $0xe8] sm:$0xff]
    %v4639 = vld [vmem:[#allocation3 + $0xf0] sm:$0xff]
    %v4640 = vld [vmem:[#allocation3 + $0xf8] sm:$0xff]
    %v4641 = vld [vmem:[#allocation3 + $0x100] sm:$0xff]
    %v4642 = vld [vmem:[#allocation3 + $0x108] sm:$0xff]
    %v4643 = vld [vmem:[#allocation3 + $0x110] sm:$0xff]
    %v4644 = vld [vmem:[#allocation3 + $0x118] sm:$0xff]
    %v4645 = vld [vmem:[#allocation3 + $0x120] sm:$0xff]
    %v4646 = vld [vmem:[#allocation3 + $0x128] sm:$0xff]
    %v4647 = vld [vmem:[#allocation3 + $0x130] sm:$0xff]
    %v4648 = vld [vmem:[#allocation3 + $0x138] sm:$0xff]
    %v4649 = vld [vmem:[#allocation3 + $0x140] sm:$0xff]
    %v4650 = vld [vmem:[#allocation3 + $0x148] sm:$0xff]
    %v4651 = vld [vmem:[#allocation3 + $0x150] sm:$0xff]
    %v4652 = vld [vmem:[#allocation3 + $0x158] sm:$0xff]
    %v4653 = vld [vmem:[#allocation3 + $0x160] sm:$0xff]
    %v4654 = vld [vmem:[#allocation3 + $0x168] sm:$0xff]
    %v4655 = vld [vmem:[#allocation3 + $0x170] sm:$0xff]
    %v4656 = vld [vmem:[#allocation3 + $0x178] sm:$0xff]
    %v4657 = vld [vmem:[#allocation3 + $0x180] sm:$0xff]
    %v4658 = vld [vmem:[#allocation3 + $0x188] sm:$0xff]
    %v4659 = vld [vmem:[#allocation3 + $0x190] sm:$0xff]
    %v4660 = vld [vmem:[#allocation3 + $0x198] sm:$0xff]
    %v4661 = vld [vmem:[#allocation3 + $0x1a0] sm:$0xff]
    %v4662 = vld [vmem:[#allocation3 + $0x1a8] sm:$0xff]
    %v4663 = vld [vmem:[#allocation3 + $0x1b0] sm:$0xff]
    %v4664 = vld [vmem:[#allocation3 + $0x1b8] sm:$0xff]
    %v4665 = vld [vmem:[#allocation3 + $0x1c0] sm:$0xff]
    %v4666 = vld [vmem:[#allocation3 + $0x1c8] sm:$0xff]
    %v4667 = vld [vmem:[#allocation3 + $0x1d0] sm:$0xff]
    %v4668 = vld [vmem:[#allocation3 + $0x1d8] sm:$0xff]
    %v4669 = vld [vmem:[#allocation3 + $0x1e0] sm:$0xff]
    %v4670 = vld [vmem:[#allocation3 + $0x1e8] sm:$0xff]
    %v4671 = vld [vmem:[#allocation3 + $0x1f0] sm:$0xff]
    %v4672 = vld [vmem:[#allocation3 + $0x1f8] sm:$0xff]
    %v4673 = vld [vmem:[#allocation3 + $0x200] sm:$0xff]
    %v4674 = vld [vmem:[#allocation3 + $0x208] sm:$0xff]
    %v4675 = vld [vmem:[#allocation3 + $0x210] sm:$0xff]
    %v4676 = vld [vmem:[#allocation3 + $0x218] sm:$0xff]
    %v4677 = vld [vmem:[#allocation3 + $0x220] sm:$0xff]
    %v4678 = vld [vmem:[#allocation3 + $0x228] sm:$0xff]
    %v4679 = vld [vmem:[#allocation3 + $0x230] sm:$0xff]
    %v4680 = vld [vmem:[#allocation3 + $0x238] sm:$0xff]
    %v4681 = vld [vmem:[#allocation3 + $0x240] sm:$0xff]
    %v4682 = vld [vmem:[#allocation3 + $0x248] sm:$0xff]
    %v4683 = vld [vmem:[#allocation3 + $0x250] sm:$0xff]
    %v4684 = vld [vmem:[#allocation3 + $0x258] sm:$0xff]
    %v4685 = vld [vmem:[#allocation3 + $0x260] sm:$0xff]
    %v4686 = vld [vmem:[#allocation3 + $0x268] sm:$0xff]
    %v4687 = vld [vmem:[#allocation3 + $0x270] sm:$0xff]
    %v4688 = vld [vmem:[#allocation3 + $0x278] sm:$0xff]
    %v4689 = vld [vmem:[#allocation3 + $0x280] sm:$0xff]
    %v4690 = vld [vmem:[#allocation3 + $0x288] sm:$0xff]
    %v4691 = vld [vmem:[#allocation3 + $0x290] sm:$0xff]
    %v4692 = vld [vmem:[#allocation3 + $0x298] sm:$0xff]
    %v4693 = vld [vmem:[#allocation3 + $0x2a0] sm:$0xff]
    %v4694 = vld [vmem:[#allocation3 + $0x2a8] sm:$0xff]
    %v4695 = vld [vmem:[#allocation3 + $0x2b0] sm:$0xff]
    %v4696 = vld [vmem:[#allocation3 + $0x2b8] sm:$0xff]
    %v4697 = vld [vmem:[#allocation3 + $0x2c0] sm:$0xff]
    %v4698 = vld [vmem:[#allocation3 + $0x2c8] sm:$0xff]
    %v4699 = vld [vmem:[#allocation3 + $0x2d0] sm:$0xff]
    %v4700 = vld [vmem:[#allocation3 + $0x2d8] sm:$0xff]
    %v4701 = vld [vmem:[#allocation3 + $0x2e0] sm:$0xff]
    %v4702 = vld [vmem:[#allocation3 + $0x2e8] sm:$0xff]
    %v4703 = vld [vmem:[#allocation3 + $0x2f0] sm:$0xff]
    %v4704 = vld [vmem:[#allocation3 + $0x2f8] sm:$0xff]
    %v4705 = vld [vmem:[#allocation3 + $0x300] sm:$0xff]
    %v4706 = vld [vmem:[#allocation3 + $0x308] sm:$0xff]
    %v4707 = vld [vmem:[#allocation3 + $0x310] sm:$0xff]
    %v4708 = vld [vmem:[#allocation3 + $0x318] sm:$0xff]
    %v4709 = vld [vmem:[#allocation3 + $0x320] sm:$0xff]
    %v4710 = vld [vmem:[#allocation3 + $0x328] sm:$0xff]
    %v4711 = vld [vmem:[#allocation3 + $0x330] sm:$0xff]
    %v4712 = vld [vmem:[#allocation3 + $0x338] sm:$0xff]
    %v4713 = vld [vmem:[#allocation3 + $0x340] sm:$0xff]
    %v4714 = vld [vmem:[#allocation3 + $0x348] sm:$0xff]
    %v4715 = vld [vmem:[#allocation3 + $0x350] sm:$0xff]
    %v4716 = vld [vmem:[#allocation3 + $0x358] sm:$0xff]
    %v4717 = vld [vmem:[#allocation3 + $0x360] sm:$0xff]
    %v4718 = vld [vmem:[#allocation3 + $0x368] sm:$0xff]
    %v4719 = vld [vmem:[#allocation3 + $0x370] sm:$0xff]
    %v4720 = vld [vmem:[#allocation3 + $0x378] sm:$0xff]
    %v4721 = vld [vmem:[#allocation3 + $0x380] sm:$0xff]
    %v4722 = vld [vmem:[#allocation3 + $0x388] sm:$0xff]
    %v4723 = vld [vmem:[#allocation3 + $0x390] sm:$0xff]
    %v4724 = vld [vmem:[#allocation3 + $0x398] sm:$0xff]
    %v4725 = vld [vmem:[#allocation3 + $0x3a0] sm:$0xff]
    %v4726 = vld [vmem:[#allocation3 + $0x3a8] sm:$0xff]
    %v4727 = vld [vmem:[#allocation3 + $0x3b0] sm:$0xff]
    %v4728 = vld [vmem:[#allocation3 + $0x3b8] sm:$0xff]
    %v4729 = vld [vmem:[#allocation3 + $0x3c0] sm:$0xff]
    %v4730 = vld [vmem:[#allocation3 + $0x3c8] sm:$0xff]
    %v4731 = vld [vmem:[#allocation3 + $0x3d0] sm:$0xff]
    %v4732 = vld [vmem:[#allocation3 + $0x3d8] sm:$0xff]
    %v4733 = vld [vmem:[#allocation3 + $0x3e0] sm:$0xff]
    %v4734 = vld [vmem:[#allocation3 + $0x3e8] sm:$0xff]
    %v4735 = vld [vmem:[#allocation3 + $0x3f0] sm:$0xff]
    %v4736 = vld [vmem:[#allocation3 + $0x3f8] sm:$0xff]
    %v4737 = vld [vmem:[#allocation3 + $0x400] sm:$0xff]
    %v4738 = vld [vmem:[#allocation3 + $0x408] sm:$0xff]
    %v4739 = vld [vmem:[#allocation3 + $0x410] sm:$0xff]
    %v4740 = vld [vmem:[#allocation3 + $0x418] sm:$0xff]
    %v4741 = vld [vmem:[#allocation3 + $0x420] sm:$0xff]
    %v4742 = vld [vmem:[#allocation3 + $0x428] sm:$0xff]
    %v4743 = vld [vmem:[#allocation3 + $0x430] sm:$0xff]
    %v4744 = vld [vmem:[#allocation3 + $0x438] sm:$0xff]
    %v4745 = vld [vmem:[#allocation3 + $0x440] sm:$0xff]
    %v4746 = vld [vmem:[#allocation3 + $0x448] sm:$0xff]
    %v4747 = vld [vmem:[#allocation3 + $0x450] sm:$0xff]
    %v4748 = vld [vmem:[#allocation3 + $0x458] sm:$0xff]
    %v4749 = vld [vmem:[#allocation3 + $0x460] sm:$0xff]
    %v4750 = vld [vmem:[#allocation3 + $0x468] sm:$0xff]
    %v4751 = vld [vmem:[#allocation3 + $0x470] sm:$0xff]
    %v4752 = vld [vmem:[#allocation3 + $0x478] sm:$0xff]
    %v4753 = vld [vmem:[#allocation3 + $0x480] sm:$0xff]
    %v4754 = vld [vmem:[#allocation3 + $0x488] sm:$0xff]
    %v4755 = vld [vmem:[#allocation3 + $0x490] sm:$0xff]
    %v4756 = vld [vmem:[#allocation3 + $0x498] sm:$0xff]
    %v4757 = vld [vmem:[#allocation3 + $0x4a0] sm:$0xff]
    %v4758 = vld [vmem:[#allocation3 + $0x4a8] sm:$0xff]
    %v4759 = vld [vmem:[#allocation3 + $0x4b0] sm:$0xff]
    %v4760 = vld [vmem:[#allocation3 + $0x4b8] sm:$0xff]
    %v4761 = vld [vmem:[#allocation3 + $0x4c0] sm:$0xff]
    %v4762 = vld [vmem:[#allocation3 + $0x4c8] sm:$0xff]
    %v4763 = vld [vmem:[#allocation3 + $0x4d0] sm:$0xff]
    %v4764 = vld [vmem:[#allocation3 + $0x4d8] sm:$0xff]
    %v4765 = vld [vmem:[#allocation3 + $0x4e0] sm:$0xff]
    %v4766 = vld [vmem:[#allocation3 + $0x4e8] sm:$0xff]
    %v4767 = vld [vmem:[#allocation3 + $0x4f0] sm:$0xff]
    %v4768 = vld [vmem:[#allocation3 + $0x4f8] sm:$0xff]
    %v4769 = vld [vmem:[#allocation3 + $0x500] sm:$0xff]
    %v4770 = vld [vmem:[#allocation3 + $0x508] sm:$0xff]
    %v4771 = vld [vmem:[#allocation3 + $0x510] sm:$0xff]
    %v4772 = vld [vmem:[#allocation3 + $0x518] sm:$0xff]
    %v4773 = vld [vmem:[#allocation3 + $0x520] sm:$0xff]
    %v4774 = vld [vmem:[#allocation3 + $0x528] sm:$0xff]
    %v4775 = vld [vmem:[#allocation3 + $0x530] sm:$0xff]
    %v4776 = vld [vmem:[#allocation3 + $0x538] sm:$0xff]
    %v4777 = vld [vmem:[#allocation3 + $0x540] sm:$0xff]
    %v4778 = vld [vmem:[#allocation3 + $0x548] sm:$0xff]
    %v4779 = vld [vmem:[#allocation3 + $0x550] sm:$0xff]
    %v4780 = vld [vmem:[#allocation3 + $0x558] sm:$0xff]
    %v4781 = vld [vmem:[#allocation3 + $0x560] sm:$0xff]
    %v4782 = vld [vmem:[#allocation3 + $0x568] sm:$0xff]
    %v4783 = vld [vmem:[#allocation3 + $0x570] sm:$0xff]
    %v4784 = vld [vmem:[#allocation3 + $0x578] sm:$0xff]
    %v4785 = vld [vmem:[#allocation3 + $0x580] sm:$0xff]
    %v4786 = vld [vmem:[#allocation3 + $0x588] sm:$0xff]
    %v4787 = vld [vmem:[#allocation3 + $0x590] sm:$0xff]
    %v4788 = vld [vmem:[#allocation3 + $0x598] sm:$0xff]
    %v4789 = vld [vmem:[#allocation3 + $0x5a0] sm:$0xff]
    %v4790 = vld [vmem:[#allocation3 + $0x5a8] sm:$0xff]
    %v4791 = vld [vmem:[#allocation3 + $0x5b0] sm:$0xff]
    %v4792 = vld [vmem:[#allocation3 + $0x5b8] sm:$0xff]
    %v4793 = vld [vmem:[#allocation3 + $0x5c0] sm:$0xff]
    %v4794 = vld [vmem:[#allocation3 + $0x5c8] sm:$0xff]
    %v4795 = vld [vmem:[#allocation3 + $0x5d0] sm:$0xff]
    %v4796 = vld [vmem:[#allocation3 + $0x5d8] sm:$0xff]
    %v4797 = vld [vmem:[#allocation3 + $0x5e0] sm:$0xff]
    %v4798 = vld [vmem:[#allocation3 + $0x5e8] sm:$0xff]
    %v4799 = vld [vmem:[#allocation3 + $0x5f0] sm:$0xff]
    %v4800 = vld [vmem:[#allocation3 + $0x5f8] sm:$0xff]
    %v4801 = vld [vmem:[#allocation3 + $0x600] sm:$0xff]
    %v4802 = vld [vmem:[#allocation3 + $0x608] sm:$0xff]
    %v4803 = vld [vmem:[#allocation3 + $0x610] sm:$0xff]
    %v4804 = vld [vmem:[#allocation3 + $0x618] sm:$0xff]
    %v4805 = vld [vmem:[#allocation3 + $0x620] sm:$0xff]
    %v4806 = vld [vmem:[#allocation3 + $0x628] sm:$0xff]
    %v4807 = vld [vmem:[#allocation3 + $0x630] sm:$0xff]
    %v4808 = vld [vmem:[#allocation3 + $0x638] sm:$0xff]
    %v4809 = vld [vmem:[#allocation3 + $0x640] sm:$0xff]
    %v4810 = vld [vmem:[#allocation3 + $0x648] sm:$0xff]
    %v4811 = vld [vmem:[#allocation3 + $0x650] sm:$0xff]
    %v4812 = vld [vmem:[#allocation3 + $0x658] sm:$0xff]
    %v4813 = vld [vmem:[#allocation3 + $0x660] sm:$0xff]
    %v4814 = vld [vmem:[#allocation3 + $0x668] sm:$0xff]
    %v4815 = vld [vmem:[#allocation3 + $0x670] sm:$0xff]
    %v4816 = vld [vmem:[#allocation3 + $0x678] sm:$0xff]
    %v4817 = vld [vmem:[#allocation3 + $0x680] sm:$0xff]
    %v4818 = vld [vmem:[#allocation3 + $0x688] sm:$0xff]
    %v4819 = vld [vmem:[#allocation3 + $0x690] sm:$0xff]
    %v4820 = vld [vmem:[#allocation3 + $0x698] sm:$0xff]
    %v4821 = vld [vmem:[#allocation3 + $0x6a0] sm:$0xff]
    %v4822 = vld [vmem:[#allocation3 + $0x6a8] sm:$0xff]
    %v4823 = vld [vmem:[#allocation3 + $0x6b0] sm:$0xff]
    %v4824 = vld [vmem:[#allocation3 + $0x6b8] sm:$0xff]
    %v4825 = vld [vmem:[#allocation3 + $0x6c0] sm:$0xff]
    %v4826 = vld [vmem:[#allocation3 + $0x6c8] sm:$0xff]
    %v4827 = vld [vmem:[#allocation3 + $0x6d0] sm:$0xff]
    %v4828 = vld [vmem:[#allocation3 + $0x6d8] sm:$0xff]
    %v4829 = vld [vmem:[#allocation3 + $0x6e0] sm:$0xff]
    %v4830 = vld [vmem:[#allocation3 + $0x6e8] sm:$0xff]
    %v4831 = vld [vmem:[#allocation3 + $0x6f0] sm:$0xff]
    %v4832 = vld [vmem:[#allocation3 + $0x6f8] sm:$0xff]
    %v4833 = vld [vmem:[#allocation3 + $0x700] sm:$0xff]
    %v4834 = vld [vmem:[#allocation3 + $0x708] sm:$0xff]
    %v4835 = vld [vmem:[#allocation3 + $0x710] sm:$0xff]
    %v4836 = vld [vmem:[#allocation3 + $0x718] sm:$0xff]
    %v4837 = vld [vmem:[#allocation3 + $0x720] sm:$0xff]
    %v4838 = vld [vmem:[#allocation3 + $0x728] sm:$0xff]
    %v4839 = vld [vmem:[#allocation3 + $0x730] sm:$0xff]
    %v4840 = vld [vmem:[#allocation3 + $0x738] sm:$0xff]
    %v4841 = vld [vmem:[#allocation3 + $0x740] sm:$0xff]
    %v4842 = vld [vmem:[#allocation3 + $0x748] sm:$0xff]
    %v4843 = vld [vmem:[#allocation3 + $0x750] sm:$0xff]
    %v4844 = vld [vmem:[#allocation3 + $0x758] sm:$0xff]
    %v4845 = vld [vmem:[#allocation3 + $0x760] sm:$0xff]
    %v4846 = vld [vmem:[#allocation3 + $0x768] sm:$0xff]
    %v4847 = vld [vmem:[#allocation3 + $0x770] sm:$0xff]
    %v4848 = vld [vmem:[#allocation3 + $0x778] sm:$0xff]
    %v4849 = vld [vmem:[#allocation3 + $0x780] sm:$0xff]
    %v4850 = vld [vmem:[#allocation3 + $0x788] sm:$0xff]
    %v4851 = vld [vmem:[#allocation3 + $0x790] sm:$0xff]
    %v4852 = vld [vmem:[#allocation3 + $0x798] sm:$0xff]
    %v4853 = vld [vmem:[#allocation3 + $0x7a0] sm:$0xff]
    %v4854 = vld [vmem:[#allocation3 + $0x7a8] sm:$0xff]
    %v4855 = vld [vmem:[#allocation3 + $0x7b0] sm:$0xff]
    %v4856 = vld [vmem:[#allocation3 + $0x7b8] sm:$0xff]
    %v4857 = vld [vmem:[#allocation3 + $0x7c0] sm:$0xff]
    %v4858 = vld [vmem:[#allocation3 + $0x7c8] sm:$0xff]
    %v4859 = vld [vmem:[#allocation3 + $0x7d0] sm:$0xff]
    %v4860 = vld [vmem:[#allocation3 + $0x7d8] sm:$0xff]
    %v4861 = vld [vmem:[#allocation3 + $0x7e0] sm:$0xff]
    %v4862 = vld [vmem:[#allocation3 + $0x7e8] sm:$0xff]
    %v4863 = vld [vmem:[#allocation3 + $0x7f0] sm:$0xff]
    %v4864 = vld [vmem:[#allocation3 + $0x7f8] sm:$0xff]
    %v4865 = vld [vmem:[#allocation3 + $0x800] sm:$0xff]
    %v4866 = vld [vmem:[#allocation3 + $0x808] sm:$0xff]
    %v4867 = vld [vmem:[#allocation3 + $0x810] sm:$0xff]
    %v4868 = vld [vmem:[#allocation3 + $0x818] sm:$0xff]
    %v4869 = vld [vmem:[#allocation3 + $0x820] sm:$0xff]
    %v4870 = vld [vmem:[#allocation3 + $0x828] sm:$0xff]
    %v4871 = vld [vmem:[#allocation3 + $0x830] sm:$0xff]
    %v4872 = vld [vmem:[#allocation3 + $0x838] sm:$0xff]
    %v4873 = vld [vmem:[#allocation3 + $0x840] sm:$0xff]
    %v4874 = vld [vmem:[#allocation3 + $0x848] sm:$0xff]
    %v4875 = vld [vmem:[#allocation3 + $0x850] sm:$0xff]
    %v4876 = vld [vmem:[#allocation3 + $0x858] sm:$0xff]
    %v4877 = vld [vmem:[#allocation3 + $0x860] sm:$0xff]
    %v4878 = vld [vmem:[#allocation3 + $0x868] sm:$0xff]
    %v4879 = vld [vmem:[#allocation3 + $0x870] sm:$0xff]
    %v4880 = vld [vmem:[#allocation3 + $0x878] sm:$0xff]
    %v4881 = vld [vmem:[#allocation3 + $0x880] sm:$0xff]
    %v4882 = vld [vmem:[#allocation3 + $0x888] sm:$0xff]
    %v4883 = vld [vmem:[#allocation3 + $0x890] sm:$0xff]
    %v4884 = vld [vmem:[#allocation3 + $0x898] sm:$0xff]
    %v4885 = vld [vmem:[#allocation3 + $0x8a0] sm:$0xff]
    %v4886 = vld [vmem:[#allocation3 + $0x8a8] sm:$0xff]
    %v4887 = vld [vmem:[#allocation3 + $0x8b0] sm:$0xff]
    %v4888 = vld [vmem:[#allocation3 + $0x8b8] sm:$0xff]
    %v4889 = vld [vmem:[#allocation3 + $0x8c0] sm:$0xff]
    %v4890 = vld [vmem:[#allocation3 + $0x8c8] sm:$0xff]
    %v4891 = vld [vmem:[#allocation3 + $0x8d0] sm:$0xff]
    %v4892 = vld [vmem:[#allocation3 + $0x8d8] sm:$0xff]
    %v4893 = vld [vmem:[#allocation3 + $0x8e0] sm:$0xff]
    %v4894 = vld [vmem:[#allocation3 + $0x8e8] sm:$0xff]
    %v4895 = vld [vmem:[#allocation3 + $0x8f0] sm:$0xff]
    %v4896 = vld [vmem:[#allocation3 + $0x8f8] sm:$0xff]
    %s4897 = smul.u32 0, 12
    %s4898 = smul.addr %s4897, 8
    %s4899 = scalar_lea.vmem [#allocation2], %s4898
    %v4900 = vld [vmem:[%s4899] sm:$0xff]
    %v4901 = vld [vmem:[%s4899 + $0x8] sm:$0xff]
    %v4902 = vld [vmem:[%s4899 + $0x10] sm:$0xff]
    %v4903 = vld [vmem:[%s4899 + $0x18] sm:$0xff]
    %v4904 = vld [vmem:[%s4899 + $0x20] sm:$0xff]
    %v4905 = vld [vmem:[%s4899 + $0x28] sm:$0xff]
    %v4906 = vld [vmem:[%s4899 + $0x30] sm:$0xff]
    %v4907 = vld [vmem:[%s4899 + $0x38] sm:$0xff]
    %v4908 = vld [vmem:[%s4899 + $0x40] sm:$0xff]
    %v4909 = vld [vmem:[%s4899 + $0x48] sm:$0xff]
    %v4910 = vld [vmem:[%s4899 + $0x50] sm:$0xff]
    %v4911 = vld [vmem:[%s4899 + $0x58] sm:$0xff]
    %v5200 = vunpack.c.l.b16 %v4609
    %v5201 = vunpack.c.h.b16 %v4609
    %v5202 = vunpack.c.l.b16 %v4610
    %v5203 = vunpack.c.h.b16 %v4610
    %v5204 = vunpack.c.l.b16 %v4611
    %v5205 = vunpack.c.h.b16 %v4611
    %v5206 = vunpack.c.l.b16 %v4612
    %v5207 = vunpack.c.h.b16 %v4612
    %v5208 = vunpack.c.l.b16 %v4613
    %v5209 = vunpack.c.h.b16 %v4613
    %v5210 = vunpack.c.l.b16 %v4614
    %v5211 = vunpack.c.h.b16 %v4614
    %v5212 = vunpack.c.l.b16 %v4615
    %v5213 = vunpack.c.h.b16 %v4615
    %v5214 = vunpack.c.l.b16 %v4616
    %v5215 = vunpack.c.h.b16 %v4616
    %v5216 = vunpack.c.l.b16 %v4617
    %v5217 = vunpack.c.h.b16 %v4617
    %v5218 = vunpack.c.l.b16 %v4618
    %v5219 = vunpack.c.h.b16 %v4618
    %v5220 = vunpack.c.l.b16 %v4619
    %v5221 = vunpack.c.h.b16 %v4619
    %v5222 = vunpack.c.l.b16 %v4620
    %v5223 = vunpack.c.h.b16 %v4620
    %v5224 = vunpack.c.l.b16 %v4621
    %v5225 = vunpack.c.h.b16 %v4621
    %v5226 = vunpack.c.l.b16 %v4622
    %v5227 = vunpack.c.h.b16 %v4622
    %v5228 = vunpack.c.l.b16 %v4623
    %v5229 = vunpack.c.h.b16 %v4623
    %v5230 = vunpack.c.l.b16 %v4624
    %v5231 = vunpack.c.h.b16 %v4624
    %v5232 = vunpack.c.l.b16 %v4625
    %v5233 = vunpack.c.h.b16 %v4625
    %v5234 = vunpack.c.l.b16 %v4626
    %v5235 = vunpack.c.h.b16 %v4626
    %v5236 = vunpack.c.l.b16 %v4627
    %v5237 = vunpack.c.h.b16 %v4627
    %v5238 = vunpack.c.l.b16 %v4628
    %v5239 = vunpack.c.h.b16 %v4628
    %v5240 = vunpack.c.l.b16 %v4629
    %v5241 = vunpack.c.h.b16 %v4629
    %v5242 = vunpack.c.l.b16 %v4630
    %v5243 = vunpack.c.h.b16 %v4630
    %v5244 = vunpack.c.l.b16 %v4631
    %v5245 = vunpack.c.h.b16 %v4631
    %v5246 = vunpack.c.l.b16 %v4632
    %v5247 = vunpack.c.h.b16 %v4632
    %v5248 = vunpack.c.l.b16 %v4633
    %v5249 = vunpack.c.h.b16 %v4633
    %v5250 = vunpack.c.l.b16 %v4634
    %v5251 = vunpack.c.h.b16 %v4634
    %v5252 = vunpack.c.l.b16 %v4635
    %v5253 = vunpack.c.h.b16 %v4635
    %v5254 = vunpack.c.l.b16 %v4636
    %v5255 = vunpack.c.h.b16 %v4636
    %v5256 = vunpack.c.l.b16 %v4637
    %v5257 = vunpack.c.h.b16 %v4637
    %v5258 = vunpack.c.l.b16 %v4638
    %v5259 = vunpack.c.h.b16 %v4638
    %v5260 = vunpack.c.l.b16 %v4639
    %v5261 = vunpack.c.h.b16 %v4639
    %v5262 = vunpack.c.l.b16 %v4640
    %v5263 = vunpack.c.h.b16 %v4640
    %v5264 = vunpack.c.l.b16 %v4641
    %v5265 = vunpack.c.h.b16 %v4641
    %v5266 = vunpack.c.l.b16 %v4642
    %v5267 = vunpack.c.h.b16 %v4642
    %v5268 = vunpack.c.l.b16 %v4643
    %v5269 = vunpack.c.h.b16 %v4643
    %v5270 = vunpack.c.l.b16 %v4644
    %v5271 = vunpack.c.h.b16 %v4644
    %v5272 = vunpack.c.l.b16 %v4645
    %v5273 = vunpack.c.h.b16 %v4645
    %v5274 = vunpack.c.l.b16 %v4646
    %v5275 = vunpack.c.h.b16 %v4646
    %v5276 = vunpack.c.l.b16 %v4647
    %v5277 = vunpack.c.h.b16 %v4647
    %v5278 = vunpack.c.l.b16 %v4648
    %v5279 = vunpack.c.h.b16 %v4648
    %v5280 = vunpack.c.l.b16 %v4649
    %v5281 = vunpack.c.h.b16 %v4649
    %v5282 = vunpack.c.l.b16 %v4650
    %v5283 = vunpack.c.h.b16 %v4650
    %v5284 = vunpack.c.l.b16 %v4651
    %v5285 = vunpack.c.h.b16 %v4651
    %v5286 = vunpack.c.l.b16 %v4652
    %v5287 = vunpack.c.h.b16 %v4652
    %v5288 = vunpack.c.l.b16 %v4653
    %v5289 = vunpack.c.h.b16 %v4653
    %v5290 = vunpack.c.l.b16 %v4654
    %v5291 = vunpack.c.h.b16 %v4654
    %v5292 = vunpack.c.l.b16 %v4655
    %v5293 = vunpack.c.h.b16 %v4655
    %v5294 = vunpack.c.l.b16 %v4656
    %v5295 = vunpack.c.h.b16 %v4656
    %v5296 = vunpack.c.l.b16 %v4657
    %v5297 = vunpack.c.h.b16 %v4657
    %v5298 = vunpack.c.l.b16 %v4658
    %v5299 = vunpack.c.h.b16 %v4658
    %v5300 = vunpack.c.l.b16 %v4659
    %v5301 = vunpack.c.h.b16 %v4659
    %v5302 = vunpack.c.l.b16 %v4660
    %v5303 = vunpack.c.h.b16 %v4660
    %v5304 = vunpack.c.l.b16 %v4661
    %v5305 = vunpack.c.h.b16 %v4661
    %v5306 = vunpack.c.l.b16 %v4662
    %v5307 = vunpack.c.h.b16 %v4662
    %v5308 = vunpack.c.l.b16 %v4663
    %v5309 = vunpack.c.h.b16 %v4663
    %v5310 = vunpack.c.l.b16 %v4664
    %v5311 = vunpack.c.h.b16 %v4664
    %v5312 = vunpack.c.l.b16 %v4665
    %v5313 = vunpack.c.h.b16 %v4665
    %v5314 = vunpack.c.l.b16 %v4666
    %v5315 = vunpack.c.h.b16 %v4666
    %v5316 = vunpack.c.l.b16 %v4667
    %v5317 = vunpack.c.h.b16 %v4667
    %v5318 = vunpack.c.l.b16 %v4668
    %v5319 = vunpack.c.h.b16 %v4668
    %v5320 = vunpack.c.l.b16 %v4669
    %v5321 = vunpack.c.h.b16 %v4669
    %v5322 = vunpack.c.l.b16 %v4670
    %v5323 = vunpack.c.h.b16 %v4670
    %v5324 = vunpack.c.l.b16 %v4671
    %v5325 = vunpack.c.h.b16 %v4671
    %v5326 = vunpack.c.l.b16 %v4672
    %v5327 = vunpack.c.h.b16 %v4672
    %v5328 = vunpack.c.l.b16 %v4673
    %v5329 = vunpack.c.h.b16 %v4673
    %v5330 = vunpack.c.l.b16 %v4674
    %v5331 = vunpack.c.h.b16 %v4674
    %v5332 = vunpack.c.l.b16 %v4675
    %v5333 = vunpack.c.h.b16 %v4675
    %v5334 = vunpack.c.l.b16 %v4676
    %v5335 = vunpack.c.h.b16 %v4676
    %v5336 = vunpack.c.l.b16 %v4677
    %v5337 = vunpack.c.h.b16 %v4677
    %v5338 = vunpack.c.l.b16 %v4678
    %v5339 = vunpack.c.h.b16 %v4678
    %v5340 = vunpack.c.l.b16 %v4679
    %v5341 = vunpack.c.h.b16 %v4679
    %v5342 = vunpack.c.l.b16 %v4680
    %v5343 = vunpack.c.h.b16 %v4680
    %v5344 = vunpack.c.l.b16 %v4681
    %v5345 = vunpack.c.h.b16 %v4681
    %v5346 = vunpack.c.l.b16 %v4682
    %v5347 = vunpack.c.h.b16 %v4682
    %v5348 = vunpack.c.l.b16 %v4683
    %v5349 = vunpack.c.h.b16 %v4683
    %v5350 = vunpack.c.l.b16 %v4684
    %v5351 = vunpack.c.h.b16 %v4684
    %v5352 = vunpack.c.l.b16 %v4685
    %v5353 = vunpack.c.h.b16 %v4685
    %v5354 = vunpack.c.l.b16 %v4686
    %v5355 = vunpack.c.h.b16 %v4686
    %v5356 = vunpack.c.l.b16 %v4687
    %v5357 = vunpack.c.h.b16 %v4687
    %v5358 = vunpack.c.l.b16 %v4688
    %v5359 = vunpack.c.h.b16 %v4688
    %v5360 = vunpack.c.l.b16 %v4689
    %v5361 = vunpack.c.h.b16 %v4689
    %v5362 = vunpack.c.l.b16 %v4690
    %v5363 = vunpack.c.h.b16 %v4690
    %v5364 = vunpack.c.l.b16 %v4691
    %v5365 = vunpack.c.h.b16 %v4691
    %v5366 = vunpack.c.l.b16 %v4692
    %v5367 = vunpack.c.h.b16 %v4692
    %v5368 = vunpack.c.l.b16 %v4693
    %v5369 = vunpack.c.h.b16 %v4693
    %v5370 = vunpack.c.l.b16 %v4694
    %v5371 = vunpack.c.h.b16 %v4694
    %v5372 = vunpack.c.l.b16 %v4695
    %v5373 = vunpack.c.h.b16 %v4695
    %v5374 = vunpack.c.l.b16 %v4696
    %v5375 = vunpack.c.h.b16 %v4696
    %v5376 = vunpack.c.l.b16 %v4697
    %v5377 = vunpack.c.h.b16 %v4697
    %v5378 = vunpack.c.l.b16 %v4698
    %v5379 = vunpack.c.h.b16 %v4698
    %v5380 = vunpack.c.l.b16 %v4699
    %v5381 = vunpack.c.h.b16 %v4699
    %v5382 = vunpack.c.l.b16 %v4700
    %v5383 = vunpack.c.h.b16 %v4700
    %v5384 = vunpack.c.l.b16 %v4701
    %v5385 = vunpack.c.h.b16 %v4701
    %v5386 = vunpack.c.l.b16 %v4702
    %v5387 = vunpack.c.h.b16 %v4702
    %v5388 = vunpack.c.l.b16 %v4703
    %v5389 = vunpack.c.h.b16 %v4703
    %v5390 = vunpack.c.l.b16 %v4704
    %v5391 = vunpack.c.h.b16 %v4704
    %v5392 = vunpack.c.l.b16 %v4705
    %v5393 = vunpack.c.h.b16 %v4705
    %v5394 = vunpack.c.l.b16 %v4706
    %v5395 = vunpack.c.h.b16 %v4706
    %v5396 = vunpack.c.l.b16 %v4707
    %v5397 = vunpack.c.h.b16 %v4707
    %v5398 = vunpack.c.l.b16 %v4708
    %v5399 = vunpack.c.h.b16 %v4708
    %v5400 = vunpack.c.l.b16 %v4709
    %v5401 = vunpack.c.h.b16 %v4709
    %v5402 = vunpack.c.l.b16 %v4710
    %v5403 = vunpack.c.h.b16 %v4710
    %v5404 = vunpack.c.l.b16 %v4711
    %v5405 = vunpack.c.h.b16 %v4711
    %v5406 = vunpack.c.l.b16 %v4712
    %v5407 = vunpack.c.h.b16 %v4712
    %v5408 = vunpack.c.l.b16 %v4713
    %v5409 = vunpack.c.h.b16 %v4713
    %v5410 = vunpack.c.l.b16 %v4714
    %v5411 = vunpack.c.h.b16 %v4714
    %v5412 = vunpack.c.l.b16 %v4715
    %v5413 = vunpack.c.h.b16 %v4715
    %v5414 = vunpack.c.l.b16 %v4716
    %v5415 = vunpack.c.h.b16 %v4716
    %v5416 = vunpack.c.l.b16 %v4717
    %v5417 = vunpack.c.h.b16 %v4717
    %v5418 = vunpack.c.l.b16 %v4718
    %v5419 = vunpack.c.h.b16 %v4718
    %v5420 = vunpack.c.l.b16 %v4719
    %v5421 = vunpack.c.h.b16 %v4719
    %v5422 = vunpack.c.l.b16 %v4720
    %v5423 = vunpack.c.h.b16 %v4720
    %v5424 = vunpack.c.l.b16 %v4721
    %v5425 = vunpack.c.h.b16 %v4721
    %v5426 = vunpack.c.l.b16 %v4722
    %v5427 = vunpack.c.h.b16 %v4722
    %v5428 = vunpack.c.l.b16 %v4723
    %v5429 = vunpack.c.h.b16 %v4723
    %v5430 = vunpack.c.l.b16 %v4724
    %v5431 = vunpack.c.h.b16 %v4724
    %v5432 = vunpack.c.l.b16 %v4725
    %v5433 = vunpack.c.h.b16 %v4725
    %v5434 = vunpack.c.l.b16 %v4726
    %v5435 = vunpack.c.h.b16 %v4726
    %v5436 = vunpack.c.l.b16 %v4727
    %v5437 = vunpack.c.h.b16 %v4727
    %v5438 = vunpack.c.l.b16 %v4728
    %v5439 = vunpack.c.h.b16 %v4728
    %v5440 = vunpack.c.l.b16 %v4729
    %v5441 = vunpack.c.h.b16 %v4729
    %v5442 = vunpack.c.l.b16 %v4730
    %v5443 = vunpack.c.h.b16 %v4730
    %v5444 = vunpack.c.l.b16 %v4731
    %v5445 = vunpack.c.h.b16 %v4731
    %v5446 = vunpack.c.l.b16 %v4732
    %v5447 = vunpack.c.h.b16 %v4732
    %v5448 = vunpack.c.l.b16 %v4733
    %v5449 = vunpack.c.h.b16 %v4733
    %v5450 = vunpack.c.l.b16 %v4734
    %v5451 = vunpack.c.h.b16 %v4734
    %v5452 = vunpack.c.l.b16 %v4735
    %v5453 = vunpack.c.h.b16 %v4735
    %v5454 = vunpack.c.l.b16 %v4736
    %v5455 = vunpack.c.h.b16 %v4736
    %v5456 = vunpack.c.l.b16 %v4737
    %v5457 = vunpack.c.h.b16 %v4737
    %v5458 = vunpack.c.l.b16 %v4738
    %v5459 = vunpack.c.h.b16 %v4738
    %v5460 = vunpack.c.l.b16 %v4739
    %v5461 = vunpack.c.h.b16 %v4739
    %v5462 = vunpack.c.l.b16 %v4740
    %v5463 = vunpack.c.h.b16 %v4740
    %v5464 = vunpack.c.l.b16 %v4741
    %v5465 = vunpack.c.h.b16 %v4741
    %v5466 = vunpack.c.l.b16 %v4742
    %v5467 = vunpack.c.h.b16 %v4742
    %v5468 = vunpack.c.l.b16 %v4743
    %v5469 = vunpack.c.h.b16 %v4743
    %v5470 = vunpack.c.l.b16 %v4744
    %v5471 = vunpack.c.h.b16 %v4744
    %v5472 = vunpack.c.l.b16 %v4745
    %v5473 = vunpack.c.h.b16 %v4745
    %v5474 = vunpack.c.l.b16 %v4746
    %v5475 = vunpack.c.h.b16 %v4746
    %v5476 = vunpack.c.l.b16 %v4747
    %v5477 = vunpack.c.h.b16 %v4747
    %v5478 = vunpack.c.l.b16 %v4748
    %v5479 = vunpack.c.h.b16 %v4748
    %v5480 = vunpack.c.l.b16 %v4749
    %v5481 = vunpack.c.h.b16 %v4749
    %v5482 = vunpack.c.l.b16 %v4750
    %v5483 = vunpack.c.h.b16 %v4750
    %v5484 = vunpack.c.l.b16 %v4751
    %v5485 = vunpack.c.h.b16 %v4751
    %v5486 = vunpack.c.l.b16 %v4752
    %v5487 = vunpack.c.h.b16 %v4752
    %v5488 = vunpack.c.l.b16 %v4753
    %v5489 = vunpack.c.h.b16 %v4753
    %v5490 = vunpack.c.l.b16 %v4754
    %v5491 = vunpack.c.h.b16 %v4754
    %v5492 = vunpack.c.l.b16 %v4755
    %v5493 = vunpack.c.h.b16 %v4755
    %v5494 = vunpack.c.l.b16 %v4756
    %v5495 = vunpack.c.h.b16 %v4756
    %v5496 = vunpack.c.l.b16 %v4757
    %v5497 = vunpack.c.h.b16 %v4757
    %v5498 = vunpack.c.l.b16 %v4758
    %v5499 = vunpack.c.h.b16 %v4758
    %v5500 = vunpack.c.l.b16 %v4759
    %v5501 = vunpack.c.h.b16 %v4759
    %v5502 = vunpack.c.l.b16 %v4760
    %v5503 = vunpack.c.h.b16 %v4760
    %v5504 = vunpack.c.l.b16 %v4761
    %v5505 = vunpack.c.h.b16 %v4761
    %v5506 = vunpack.c.l.b16 %v4762
    %v5507 = vunpack.c.h.b16 %v4762
    %v5508 = vunpack.c.l.b16 %v4763
    %v5509 = vunpack.c.h.b16 %v4763
    %v5510 = vunpack.c.l.b16 %v4764
    %v5511 = vunpack.c.h.b16 %v4764
    %v5512 = vunpack.c.l.b16 %v4765
    %v5513 = vunpack.c.h.b16 %v4765
    %v5514 = vunpack.c.l.b16 %v4766
    %v5515 = vunpack.c.h.b16 %v4766
    %v5516 = vunpack.c.l.b16 %v4767
    %v5517 = vunpack.c.h.b16 %v4767
    %v5518 = vunpack.c.l.b16 %v4768
    %v5519 = vunpack.c.h.b16 %v4768
    %v5520 = vunpack.c.l.b16 %v4769
    %v5521 = vunpack.c.h.b16 %v4769
    %v5522 = vunpack.c.l.b16 %v4770
    %v5523 = vunpack.c.h.b16 %v4770
    %v5524 = vunpack.c.l.b16 %v4771
    %v5525 = vunpack.c.h.b16 %v4771
    %v5526 = vunpack.c.l.b16 %v4772
    %v5527 = vunpack.c.h.b16 %v4772
    %v5528 = vunpack.c.l.b16 %v4773
    %v5529 = vunpack.c.h.b16 %v4773
    %v5530 = vunpack.c.l.b16 %v4774
    %v5531 = vunpack.c.h.b16 %v4774
    %v5532 = vunpack.c.l.b16 %v4775
    %v5533 = vunpack.c.h.b16 %v4775
    %v5534 = vunpack.c.l.b16 %v4776
    %v5535 = vunpack.c.h.b16 %v4776
    %v5536 = vunpack.c.l.b16 %v4777
    %v5537 = vunpack.c.h.b16 %v4777
    %v5538 = vunpack.c.l.b16 %v4778
    %v5539 = vunpack.c.h.b16 %v4778
    %v5540 = vunpack.c.l.b16 %v4779
    %v5541 = vunpack.c.h.b16 %v4779
    %v5542 = vunpack.c.l.b16 %v4780
    %v5543 = vunpack.c.h.b16 %v4780
    %v5544 = vunpack.c.l.b16 %v4781
    %v5545 = vunpack.c.h.b16 %v4781
    %v5546 = vunpack.c.l.b16 %v4782
    %v5547 = vunpack.c.h.b16 %v4782
    %v5548 = vunpack.c.l.b16 %v4783
    %v5549 = vunpack.c.h.b16 %v4783
    %v5550 = vunpack.c.l.b16 %v4784
    %v5551 = vunpack.c.h.b16 %v4784
    %v5552 = vunpack.c.l.b16 %v4785
    %v5553 = vunpack.c.h.b16 %v4785
    %v5554 = vunpack.c.l.b16 %v4786
    %v5555 = vunpack.c.h.b16 %v4786
    %v5556 = vunpack.c.l.b16 %v4787
    %v5557 = vunpack.c.h.b16 %v4787
    %v5558 = vunpack.c.l.b16 %v4788
    %v5559 = vunpack.c.h.b16 %v4788
    %v5560 = vunpack.c.l.b16 %v4789
    %v5561 = vunpack.c.h.b16 %v4789
    %v5562 = vunpack.c.l.b16 %v4790
    %v5563 = vunpack.c.h.b16 %v4790
    %v5564 = vunpack.c.l.b16 %v4791
    %v5565 = vunpack.c.h.b16 %v4791
    %v5566 = vunpack.c.l.b16 %v4792
    %v5567 = vunpack.c.h.b16 %v4792
    %v5568 = vunpack.c.l.b16 %v4793
    %v5569 = vunpack.c.h.b16 %v4793
    %v5570 = vunpack.c.l.b16 %v4794
    %v5571 = vunpack.c.h.b16 %v4794
    %v5572 = vunpack.c.l.b16 %v4795
    %v5573 = vunpack.c.h.b16 %v4795
    %v5574 = vunpack.c.l.b16 %v4796
    %v5575 = vunpack.c.h.b16 %v4796
    %v5576 = vunpack.c.l.b16 %v4797
    %v5577 = vunpack.c.h.b16 %v4797
    %v5578 = vunpack.c.l.b16 %v4798
    %v5579 = vunpack.c.h.b16 %v4798
    %v5580 = vunpack.c.l.b16 %v4799
    %v5581 = vunpack.c.h.b16 %v4799
    %v5582 = vunpack.c.l.b16 %v4800
    %v5583 = vunpack.c.h.b16 %v4800
    %v5584 = vunpack.c.l.b16 %v4801
    %v5585 = vunpack.c.h.b16 %v4801
    %v5586 = vunpack.c.l.b16 %v4802
    %v5587 = vunpack.c.h.b16 %v4802
    %v5588 = vunpack.c.l.b16 %v4803
    %v5589 = vunpack.c.h.b16 %v4803
    %v5590 = vunpack.c.l.b16 %v4804
    %v5591 = vunpack.c.h.b16 %v4804
    %v5592 = vunpack.c.l.b16 %v4805
    %v5593 = vunpack.c.h.b16 %v4805
    %v5594 = vunpack.c.l.b16 %v4806
    %v5595 = vunpack.c.h.b16 %v4806
    %v5596 = vunpack.c.l.b16 %v4807
    %v5597 = vunpack.c.h.b16 %v4807
    %v5598 = vunpack.c.l.b16 %v4808
    %v5599 = vunpack.c.h.b16 %v4808
    %v5600 = vunpack.c.l.b16 %v4809
    %v5601 = vunpack.c.h.b16 %v4809
    %v5602 = vunpack.c.l.b16 %v4810
    %v5603 = vunpack.c.h.b16 %v4810
    %v5604 = vunpack.c.l.b16 %v4811
    %v5605 = vunpack.c.h.b16 %v4811
    %v5606 = vunpack.c.l.b16 %v4812
    %v5607 = vunpack.c.h.b16 %v4812
    %v5608 = vunpack.c.l.b16 %v4813
    %v5609 = vunpack.c.h.b16 %v4813
    %v5610 = vunpack.c.l.b16 %v4814
    %v5611 = vunpack.c.h.b16 %v4814
    %v5612 = vunpack.c.l.b16 %v4815
    %v5613 = vunpack.c.h.b16 %v4815
    %v5614 = vunpack.c.l.b16 %v4816
    %v5615 = vunpack.c.h.b16 %v4816
    %v5616 = vunpack.c.l.b16 %v4817
    %v5617 = vunpack.c.h.b16 %v4817
    %v5618 = vunpack.c.l.b16 %v4818
    %v5619 = vunpack.c.h.b16 %v4818
    %v5620 = vunpack.c.l.b16 %v4819
    %v5621 = vunpack.c.h.b16 %v4819
    %v5622 = vunpack.c.l.b16 %v4820
    %v5623 = vunpack.c.h.b16 %v4820
    %v5624 = vunpack.c.l.b16 %v4821
    %v5625 = vunpack.c.h.b16 %v4821
    %v5626 = vunpack.c.l.b16 %v4822
    %v5627 = vunpack.c.h.b16 %v4822
    %v5628 = vunpack.c.l.b16 %v4823
    %v5629 = vunpack.c.h.b16 %v4823
    %v5630 = vunpack.c.l.b16 %v4824
    %v5631 = vunpack.c.h.b16 %v4824
    %v5632 = vunpack.c.l.b16 %v4825
    %v5633 = vunpack.c.h.b16 %v4825
    %v5634 = vunpack.c.l.b16 %v4826
    %v5635 = vunpack.c.h.b16 %v4826
    %v5636 = vunpack.c.l.b16 %v4827
    %v5637 = vunpack.c.h.b16 %v4827
    %v5638 = vunpack.c.l.b16 %v4828
    %v5639 = vunpack.c.h.b16 %v4828
    %v5640 = vunpack.c.l.b16 %v4829
    %v5641 = vunpack.c.h.b16 %v4829
    %v5642 = vunpack.c.l.b16 %v4830
    %v5643 = vunpack.c.h.b16 %v4830
    %v5644 = vunpack.c.l.b16 %v4831
    %v5645 = vunpack.c.h.b16 %v4831
    %v5646 = vunpack.c.l.b16 %v4832
    %v5647 = vunpack.c.h.b16 %v4832
    %v5648 = vunpack.c.l.b16 %v4833
    %v5649 = vunpack.c.h.b16 %v4833
    %v5650 = vunpack.c.l.b16 %v4834
    %v5651 = vunpack.c.h.b16 %v4834
    %v5652 = vunpack.c.l.b16 %v4835
    %v5653 = vunpack.c.h.b16 %v4835
    %v5654 = vunpack.c.l.b16 %v4836
    %v5655 = vunpack.c.h.b16 %v4836
    %v5656 = vunpack.c.l.b16 %v4837
    %v5657 = vunpack.c.h.b16 %v4837
    %v5658 = vunpack.c.l.b16 %v4838
    %v5659 = vunpack.c.h.b16 %v4838
    %v5660 = vunpack.c.l.b16 %v4839
    %v5661 = vunpack.c.h.b16 %v4839
    %v5662 = vunpack.c.l.b16 %v4840
    %v5663 = vunpack.c.h.b16 %v4840
    %v5664 = vunpack.c.l.b16 %v4841
    %v5665 = vunpack.c.h.b16 %v4841
    %v5666 = vunpack.c.l.b16 %v4842
    %v5667 = vunpack.c.h.b16 %v4842
    %v5668 = vunpack.c.l.b16 %v4843
    %v5669 = vunpack.c.h.b16 %v4843
    %v5670 = vunpack.c.l.b16 %v4844
    %v5671 = vunpack.c.h.b16 %v4844
    %v5672 = vunpack.c.l.b16 %v4845
    %v5673 = vunpack.c.h.b16 %v4845
    %v5674 = vunpack.c.l.b16 %v4846
    %v5675 = vunpack.c.h.b16 %v4846
    %v5676 = vunpack.c.l.b16 %v4847
    %v5677 = vunpack.c.h.b16 %v4847
    %v5678 = vunpack.c.l.b16 %v4848
    %v5679 = vunpack.c.h.b16 %v4848
    %v5680 = vunpack.c.l.b16 %v4849
    %v5681 = vunpack.c.h.b16 %v4849
    %v5682 = vunpack.c.l.b16 %v4850
    %v5683 = vunpack.c.h.b16 %v4850
    %v5684 = vunpack.c.l.b16 %v4851
    %v5685 = vunpack.c.h.b16 %v4851
    %v5686 = vunpack.c.l.b16 %v4852
    %v5687 = vunpack.c.h.b16 %v4852
    %v5688 = vunpack.c.l.b16 %v4853
    %v5689 = vunpack.c.h.b16 %v4853
    %v5690 = vunpack.c.l.b16 %v4854
    %v5691 = vunpack.c.h.b16 %v4854
    %v5692 = vunpack.c.l.b16 %v4855
    %v5693 = vunpack.c.h.b16 %v4855
    %v5694 = vunpack.c.l.b16 %v4856
    %v5695 = vunpack.c.h.b16 %v4856
    %v5696 = vunpack.c.l.b16 %v4857
    %v5697 = vunpack.c.h.b16 %v4857
    %v5698 = vunpack.c.l.b16 %v4858
    %v5699 = vunpack.c.h.b16 %v4858
    %v5700 = vunpack.c.l.b16 %v4859
    %v5701 = vunpack.c.h.b16 %v4859
    %v5702 = vunpack.c.l.b16 %v4860
    %v5703 = vunpack.c.h.b16 %v4860
    %v5704 = vunpack.c.l.b16 %v4861
    %v5705 = vunpack.c.h.b16 %v4861
    %v5706 = vunpack.c.l.b16 %v4862
    %v5707 = vunpack.c.h.b16 %v4862
    %v5708 = vunpack.c.l.b16 %v4863
    %v5709 = vunpack.c.h.b16 %v4863
    %v5710 = vunpack.c.l.b16 %v4864
    %v5711 = vunpack.c.h.b16 %v4864
    %v5712 = vunpack.c.l.b16 %v4865
    %v5713 = vunpack.c.h.b16 %v4865
    %v5714 = vunpack.c.l.b16 %v4866
    %v5715 = vunpack.c.h.b16 %v4866
    %v5716 = vunpack.c.l.b16 %v4867
    %v5717 = vunpack.c.h.b16 %v4867
    %v5718 = vunpack.c.l.b16 %v4868
    %v5719 = vunpack.c.h.b16 %v4868
    %v5720 = vunpack.c.l.b16 %v4869
    %v5721 = vunpack.c.h.b16 %v4869
    %v5722 = vunpack.c.l.b16 %v4870
    %v5723 = vunpack.c.h.b16 %v4870
    %v5724 = vunpack.c.l.b16 %v4871
    %v5725 = vunpack.c.h.b16 %v4871
    %v5726 = vunpack.c.l.b16 %v4872
    %v5727 = vunpack.c.h.b16 %v4872
    %v5728 = vunpack.c.l.b16 %v4873
    %v5729 = vunpack.c.h.b16 %v4873
    %v5730 = vunpack.c.l.b16 %v4874
    %v5731 = vunpack.c.h.b16 %v4874
    %v5732 = vunpack.c.l.b16 %v4875
    %v5733 = vunpack.c.h.b16 %v4875
    %v5734 = vunpack.c.l.b16 %v4876
    %v5735 = vunpack.c.h.b16 %v4876
    %v5736 = vunpack.c.l.b16 %v4877
    %v5737 = vunpack.c.h.b16 %v4877
    %v5738 = vunpack.c.l.b16 %v4878
    %v5739 = vunpack.c.h.b16 %v4878
    %v5740 = vunpack.c.l.b16 %v4879
    %v5741 = vunpack.c.h.b16 %v4879
    %v5742 = vunpack.c.l.b16 %v4880
    %v5743 = vunpack.c.h.b16 %v4880
    %v5744 = vunpack.c.l.b16 %v4881
    %v5745 = vunpack.c.h.b16 %v4881
    %v5746 = vunpack.c.l.b16 %v4882
    %v5747 = vunpack.c.h.b16 %v4882
    %v5748 = vunpack.c.l.b16 %v4883
    %v5749 = vunpack.c.h.b16 %v4883
    %v5750 = vunpack.c.l.b16 %v4884
    %v5751 = vunpack.c.h.b16 %v4884
    %v5752 = vunpack.c.l.b16 %v4885
    %v5753 = vunpack.c.h.b16 %v4885
    %v5754 = vunpack.c.l.b16 %v4886
    %v5755 = vunpack.c.h.b16 %v4886
    %v5756 = vunpack.c.l.b16 %v4887
    %v5757 = vunpack.c.h.b16 %v4887
    %v5758 = vunpack.c.l.b16 %v4888
    %v5759 = vunpack.c.h.b16 %v4888
    %v5760 = vunpack.c.l.b16 %v4889
    %v5761 = vunpack.c.h.b16 %v4889
    %v5762 = vunpack.c.l.b16 %v4890
    %v5763 = vunpack.c.h.b16 %v4890
    %v5764 = vunpack.c.l.b16 %v4891
    %v5765 = vunpack.c.h.b16 %v4891
    %v5766 = vunpack.c.l.b16 %v4892
    %v5767 = vunpack.c.h.b16 %v4892
    %v5768 = vunpack.c.l.b16 %v4893
    %v5769 = vunpack.c.h.b16 %v4893
    %v5770 = vunpack.c.l.b16 %v4894
    %v5771 = vunpack.c.h.b16 %v4894
    %v5772 = vunpack.c.l.b16 %v4895
    %v5773 = vunpack.c.h.b16 %v4895
    %v5774 = vunpack.c.l.b16 %v4896
    %v5775 = vunpack.c.h.b16 %v4896
    %v5776 = vpack.c.b16 %v5212, %v5200
    %v5777 = vpack.c.b16 %v5213, %v5201
    %v5778 = vpack.c.b16 %v5214, %v5202
    %v5779 = vpack.c.b16 %v5215, %v5203
    %v5780 = vpack.c.b16 %v5216, %v5204
    %v5781 = vpack.c.b16 %v5217, %v5205
    %v5782 = vpack.c.b16 %v5218, %v5206
    %v5783 = vpack.c.b16 %v5219, %v5207
    %v5784 = vpack.c.b16 %v5220, %v5208
    %v5785 = vpack.c.b16 %v5221, %v5209
    %v5786 = vpack.c.b16 %v5222, %v5210
    %v5787 = vpack.c.b16 %v5223, %v5211
    %v5788 = vpack.c.b16 %v5236, %v5224
    %v5789 = vpack.c.b16 %v5237, %v5225
    %v5790 = vpack.c.b16 %v5238, %v5226
    %v5791 = vpack.c.b16 %v5239, %v5227
    %v5792 = vpack.c.b16 %v5240, %v5228
    %v5793 = vpack.c.b16 %v5241, %v5229
    %v5794 = vpack.c.b16 %v5242, %v5230
    %v5795 = vpack.c.b16 %v5243, %v5231
    %v5796 = vpack.c.b16 %v5244, %v5232
    %v5797 = vpack.c.b16 %v5245, %v5233
    %v5798 = vpack.c.b16 %v5246, %v5234
    %v5799 = vpack.c.b16 %v5247, %v5235
    %v5800 = vpack.c.b16 %v5260, %v5248
    %v5801 = vpack.c.b16 %v5261, %v5249
    %v5802 = vpack.c.b16 %v5262, %v5250
    %v5803 = vpack.c.b16 %v5263, %v5251
    %v5804 = vpack.c.b16 %v5264, %v5252
    %v5805 = vpack.c.b16 %v5265, %v5253
    %v5806 = vpack.c.b16 %v5266, %v5254
    %v5807 = vpack.c.b16 %v5267, %v5255
    %v5808 = vpack.c.b16 %v5268, %v5256
    %v5809 = vpack.c.b16 %v5269, %v5257
    %v5810 = vpack.c.b16 %v5270, %v5258
    %v5811 = vpack.c.b16 %v5271, %v5259
    %v5812 = vpack.c.b16 %v5284, %v5272
    %v5813 = vpack.c.b16 %v5285, %v5273
    %v5814 = vpack.c.b16 %v5286, %v5274
    %v5815 = vpack.c.b16 %v5287, %v5275
    %v5816 = vpack.c.b16 %v5288, %v5276
    %v5817 = vpack.c.b16 %v5289, %v5277
    %v5818 = vpack.c.b16 %v5290, %v5278
    %v5819 = vpack.c.b16 %v5291, %v5279
    %v5820 = vpack.c.b16 %v5292, %v5280
    %v5821 = vpack.c.b16 %v5293, %v5281
    %v5822 = vpack.c.b16 %v5294, %v5282
    %v5823 = vpack.c.b16 %v5295, %v5283
    %v5824 = vpack.c.b16 %v5308, %v5296
    %v5825 = vpack.c.b16 %v5309, %v5297
    %v5826 = vpack.c.b16 %v5310, %v5298
    %v5827 = vpack.c.b16 %v5311, %v5299
    %v5828 = vpack.c.b16 %v5312, %v5300
    %v5829 = vpack.c.b16 %v5313, %v5301
    %v5830 = vpack.c.b16 %v5314, %v5302
    %v5831 = vpack.c.b16 %v5315, %v5303
    %v5832 = vpack.c.b16 %v5316, %v5304
    %v5833 = vpack.c.b16 %v5317, %v5305
    %v5834 = vpack.c.b16 %v5318, %v5306
    %v5835 = vpack.c.b16 %v5319, %v5307
    %v5836 = vpack.c.b16 %v5332, %v5320
    %v5837 = vpack.c.b16 %v5333, %v5321
    %v5838 = vpack.c.b16 %v5334, %v5322
    %v5839 = vpack.c.b16 %v5335, %v5323
    %v5840 = vpack.c.b16 %v5336, %v5324
    %v5841 = vpack.c.b16 %v5337, %v5325
    %v5842 = vpack.c.b16 %v5338, %v5326
    %v5843 = vpack.c.b16 %v5339, %v5327
    %v5844 = vpack.c.b16 %v5340, %v5328
    %v5845 = vpack.c.b16 %v5341, %v5329
    %v5846 = vpack.c.b16 %v5342, %v5330
    %v5847 = vpack.c.b16 %v5343, %v5331
    %v5848 = vpack.c.b16 %v5356, %v5344
    %v5849 = vpack.c.b16 %v5357, %v5345
    %v5850 = vpack.c.b16 %v5358, %v5346
    %v5851 = vpack.c.b16 %v5359, %v5347
    %v5852 = vpack.c.b16 %v5360, %v5348
    %v5853 = vpack.c.b16 %v5361, %v5349
    %v5854 = vpack.c.b16 %v5362, %v5350
    %v5855 = vpack.c.b16 %v5363, %v5351
    %v5856 = vpack.c.b16 %v5364, %v5352
    %v5857 = vpack.c.b16 %v5365, %v5353
    %v5858 = vpack.c.b16 %v5366, %v5354
    %v5859 = vpack.c.b16 %v5367, %v5355
    %v5860 = vpack.c.b16 %v5380, %v5368
    %v5861 = vpack.c.b16 %v5381, %v5369
    %v5862 = vpack.c.b16 %v5382, %v5370
    %v5863 = vpack.c.b16 %v5383, %v5371
    %v5864 = vpack.c.b16 %v5384, %v5372
    %v5865 = vpack.c.b16 %v5385, %v5373
    %v5866 = vpack.c.b16 %v5386, %v5374
    %v5867 = vpack.c.b16 %v5387, %v5375
    %v5868 = vpack.c.b16 %v5388, %v5376
    %v5869 = vpack.c.b16 %v5389, %v5377
    %v5870 = vpack.c.b16 %v5390, %v5378
    %v5871 = vpack.c.b16 %v5391, %v5379
    %v5872 = vpack.c.b16 %v5404, %v5392
    %v5873 = vpack.c.b16 %v5405, %v5393
    %v5874 = vpack.c.b16 %v5406, %v5394
    %v5875 = vpack.c.b16 %v5407, %v5395
    %v5876 = vpack.c.b16 %v5408, %v5396
    %v5877 = vpack.c.b16 %v5409, %v5397
    %v5878 = vpack.c.b16 %v5410, %v5398
    %v5879 = vpack.c.b16 %v5411, %v5399
    %v5880 = vpack.c.b16 %v5412, %v5400
    %v5881 = vpack.c.b16 %v5413, %v5401
    %v5882 = vpack.c.b16 %v5414, %v5402
    %v5883 = vpack.c.b16 %v5415, %v5403
    %v5884 = vpack.c.b16 %v5428, %v5416
    %v5885 = vpack.c.b16 %v5429, %v5417
    %v5886 = vpack.c.b16 %v5430, %v5418
    %v5887 = vpack.c.b16 %v5431, %v5419
    %v5888 = vpack.c.b16 %v5432, %v5420
    %v5889 = vpack.c.b16 %v5433, %v5421
    %v5890 = vpack.c.b16 %v5434, %v5422
    %v5891 = vpack.c.b16 %v5435, %v5423
    %v5892 = vpack.c.b16 %v5436, %v5424
    %v5893 = vpack.c.b16 %v5437, %v5425
    %v5894 = vpack.c.b16 %v5438, %v5426
    %v5895 = vpack.c.b16 %v5439, %v5427
    %v5896 = vpack.c.b16 %v5452, %v5440
    %v5897 = vpack.c.b16 %v5453, %v5441
    %v5898 = vpack.c.b16 %v5454, %v5442
    %v5899 = vpack.c.b16 %v5455, %v5443
    %v5900 = vpack.c.b16 %v5456, %v5444
    %v5901 = vpack.c.b16 %v5457, %v5445
    %v5902 = vpack.c.b16 %v5458, %v5446
    %v5903 = vpack.c.b16 %v5459, %v5447
    %v5904 = vpack.c.b16 %v5460, %v5448
    %v5905 = vpack.c.b16 %v5461, %v5449
    %v5906 = vpack.c.b16 %v5462, %v5450
    %v5907 = vpack.c.b16 %v5463, %v5451
    %v5908 = vpack.c.b16 %v5476, %v5464
    %v5909 = vpack.c.b16 %v5477, %v5465
    %v5910 = vpack.c.b16 %v5478, %v5466
    %v5911 = vpack.c.b16 %v5479, %v5467
    %v5912 = vpack.c.b16 %v5480, %v5468
    %v5913 = vpack.c.b16 %v5481, %v5469
    %v5914 = vpack.c.b16 %v5482, %v5470
    %v5915 = vpack.c.b16 %v5483, %v5471
    %v5916 = vpack.c.b16 %v5484, %v5472
    %v5917 = vpack.c.b16 %v5485, %v5473
    %v5918 = vpack.c.b16 %v5486, %v5474
    %v5919 = vpack.c.b16 %v5487, %v5475
    %v5920 = vpack.c.b16 %v5500, %v5488
    %v5921 = vpack.c.b16 %v5501, %v5489
    %v5922 = vpack.c.b16 %v5502, %v5490
    %v5923 = vpack.c.b16 %v5503, %v5491
    %v5924 = vpack.c.b16 %v5504, %v5492
    %v5925 = vpack.c.b16 %v5505, %v5493
    %v5926 = vpack.c.b16 %v5506, %v5494
    %v5927 = vpack.c.b16 %v5507, %v5495
    %v5928 = vpack.c.b16 %v5508, %v5496
    %v5929 = vpack.c.b16 %v5509, %v5497
    %v5930 = vpack.c.b16 %v5510, %v5498
    %v5931 = vpack.c.b16 %v5511, %v5499
    %v5932 = vpack.c.b16 %v5524, %v5512
    %v5933 = vpack.c.b16 %v5525, %v5513
    %v5934 = vpack.c.b16 %v5526, %v5514
    %v5935 = vpack.c.b16 %v5527, %v5515
    %v5936 = vpack.c.b16 %v5528, %v5516
    %v5937 = vpack.c.b16 %v5529, %v5517
    %v5938 = vpack.c.b16 %v5530, %v5518
    %v5939 = vpack.c.b16 %v5531, %v5519
    %v5940 = vpack.c.b16 %v5532, %v5520
    %v5941 = vpack.c.b16 %v5533, %v5521
    %v5942 = vpack.c.b16 %v5534, %v5522
    %v5943 = vpack.c.b16 %v5535, %v5523
    %v5944 = vpack.c.b16 %v5548, %v5536
    %v5945 = vpack.c.b16 %v5549, %v5537
    %v5946 = vpack.c.b16 %v5550, %v5538
    %v5947 = vpack.c.b16 %v5551, %v5539
    %v5948 = vpack.c.b16 %v5552, %v5540
    %v5949 = vpack.c.b16 %v5553, %v5541
    %v5950 = vpack.c.b16 %v5554, %v5542
    %v5951 = vpack.c.b16 %v5555, %v5543
    %v5952 = vpack.c.b16 %v5556, %v5544
    %v5953 = vpack.c.b16 %v5557, %v5545
    %v5954 = vpack.c.b16 %v5558, %v5546
    %v5955 = vpack.c.b16 %v5559, %v5547
    %v5956 = vpack.c.b16 %v5572, %v5560
    %v5957 = vpack.c.b16 %v5573, %v5561
    %v5958 = vpack.c.b16 %v5574, %v5562
    %v5959 = vpack.c.b16 %v5575, %v5563
    %v5960 = vpack.c.b16 %v5576, %v5564
    %v5961 = vpack.c.b16 %v5577, %v5565
    %v5962 = vpack.c.b16 %v5578, %v5566
    %v5963 = vpack.c.b16 %v5579, %v5567
    %v5964 = vpack.c.b16 %v5580, %v5568
    %v5965 = vpack.c.b16 %v5581, %v5569
    %v5966 = vpack.c.b16 %v5582, %v5570
    %v5967 = vpack.c.b16 %v5583, %v5571
    %v5968 = vpack.c.b16 %v5596, %v5584
    %v5969 = vpack.c.b16 %v5597, %v5585
    %v5970 = vpack.c.b16 %v5598, %v5586
    %v5971 = vpack.c.b16 %v5599, %v5587
    %v5972 = vpack.c.b16 %v5600, %v5588
    %v5973 = vpack.c.b16 %v5601, %v5589
    %v5974 = vpack.c.b16 %v5602, %v5590
    %v5975 = vpack.c.b16 %v5603, %v5591
    %v5976 = vpack.c.b16 %v5604, %v5592
    %v5977 = vpack.c.b16 %v5605, %v5593
    %v5978 = vpack.c.b16 %v5606, %v5594
    %v5979 = vpack.c.b16 %v5607, %v5595
    %v5980 = vpack.c.b16 %v5620, %v5608
    %v5981 = vpack.c.b16 %v5621, %v5609
    %v5982 = vpack.c.b16 %v5622, %v5610
    %v5983 = vpack.c.b16 %v5623, %v5611
    %v5984 = vpack.c.b16 %v5624, %v5612
    %v5985 = vpack.c.b16 %v5625, %v5613
    %v5986 = vpack.c.b16 %v5626, %v5614
    %v5987 = vpack.c.b16 %v5627, %v5615
    %v5988 = vpack.c.b16 %v5628, %v5616
    %v5989 = vpack.c.b16 %v5629, %v5617
    %v5990 = vpack.c.b16 %v5630, %v5618
    %v5991 = vpack.c.b16 %v5631, %v5619
    %v5992 = vpack.c.b16 %v5644, %v5632
    %v5993 = vpack.c.b16 %v5645, %v5633
    %v5994 = vpack.c.b16 %v5646, %v5634
    %v5995 = vpack.c.b16 %v5647, %v5635
    %v5996 = vpack.c.b16 %v5648, %v5636
    %v5997 = vpack.c.b16 %v5649, %v5637
    %v5998 = vpack.c.b16 %v5650, %v5638
    %v5999 = vpack.c.b16 %v5651, %v5639
    %v6000 = vpack.c.b16 %v5652, %v5640
    %v6001 = vpack.c.b16 %v5653, %v5641
    %v6002 = vpack.c.b16 %v5654, %v5642
    %v6003 = vpack.c.b16 %v5655, %v5643
    %v6004 = vpack.c.b16 %v5668, %v5656
    %v6005 = vpack.c.b16 %v5669, %v5657
    %v6006 = vpack.c.b16 %v5670, %v5658
    %v6007 = vpack.c.b16 %v5671, %v5659
    %v6008 = vpack.c.b16 %v5672, %v5660
    %v6009 = vpack.c.b16 %v5673, %v5661
    %v6010 = vpack.c.b16 %v5674, %v5662
    %v6011 = vpack.c.b16 %v5675, %v5663
    %v6012 = vpack.c.b16 %v5676, %v5664
    %v6013 = vpack.c.b16 %v5677, %v5665
    %v6014 = vpack.c.b16 %v5678, %v5666
    %v6015 = vpack.c.b16 %v5679, %v5667
    %v6016 = vpack.c.b16 %v5692, %v5680
    %v6017 = vpack.c.b16 %v5693, %v5681
    %v6018 = vpack.c.b16 %v5694, %v5682
    %v6019 = vpack.c.b16 %v5695, %v5683
    %v6020 = vpack.c.b16 %v5696, %v5684
    %v6021 = vpack.c.b16 %v5697, %v5685
    %v6022 = vpack.c.b16 %v5698, %v5686
    %v6023 = vpack.c.b16 %v5699, %v5687
    %v6024 = vpack.c.b16 %v5700, %v5688
    %v6025 = vpack.c.b16 %v5701, %v5689
    %v6026 = vpack.c.b16 %v5702, %v5690
    %v6027 = vpack.c.b16 %v5703, %v5691
    %v6028 = vpack.c.b16 %v5716, %v5704
    %v6029 = vpack.c.b16 %v5717, %v5705
    %v6030 = vpack.c.b16 %v5718, %v5706
    %v6031 = vpack.c.b16 %v5719, %v5707
    %v6032 = vpack.c.b16 %v5720, %v5708
    %v6033 = vpack.c.b16 %v5721, %v5709
    %v6034 = vpack.c.b16 %v5722, %v5710
    %v6035 = vpack.c.b16 %v5723, %v5711
    %v6036 = vpack.c.b16 %v5724, %v5712
    %v6037 = vpack.c.b16 %v5725, %v5713
    %v6038 = vpack.c.b16 %v5726, %v5714
    %v6039 = vpack.c.b16 %v5727, %v5715
    %v6040 = vpack.c.b16 %v5740, %v5728
    %v6041 = vpack.c.b16 %v5741, %v5729
    %v6042 = vpack.c.b16 %v5742, %v5730
    %v6043 = vpack.c.b16 %v5743, %v5731
    %v6044 = vpack.c.b16 %v5744, %v5732
    %v6045 = vpack.c.b16 %v5745, %v5733
    %v6046 = vpack.c.b16 %v5746, %v5734
    %v6047 = vpack.c.b16 %v5747, %v5735
    %v6048 = vpack.c.b16 %v5748, %v5736
    %v6049 = vpack.c.b16 %v5749, %v5737
    %v6050 = vpack.c.b16 %v5750, %v5738
    %v6051 = vpack.c.b16 %v5751, %v5739
    %v6052 = vpack.c.b16 %v5764, %v5752
    %v6053 = vpack.c.b16 %v5765, %v5753
    %v6054 = vpack.c.b16 %v5766, %v5754
    %v6055 = vpack.c.b16 %v5767, %v5755
    %v6056 = vpack.c.b16 %v5768, %v5756
    %v6057 = vpack.c.b16 %v5769, %v5757
    %v6058 = vpack.c.b16 %v5770, %v5758
    %v6059 = vpack.c.b16 %v5771, %v5759
    %v6060 = vpack.c.b16 %v5772, %v5760
    %v6061 = vpack.c.b16 %v5773, %v5761
    %v6062 = vpack.c.b16 %v5774, %v5762
    %v6063 = vpack.c.b16 %v5775, %v5763
    %6352 = vmatprep.subr.bf16.mxu0 %v5861
    %6353 = vmatpush1.bf16.msra.mxu0 %v5860
    %6354 = vmatprep.subr.bf16.mxu0 %v5849
    %6355 = vmatpush1.bf16.msra.mxu0 %v5848
    %6356 = vmatprep.subr.bf16.mxu0 %v5837
    %6357 = vmatpush1.bf16.msra.mxu0 %v5836
    %6358 = vmatprep.subr.bf16.mxu0 %v5825
    %6359 = vmatpush1.bf16.msra.mxu0 %v5824
    %6360 = vmatprep.subr.bf16.mxu0 %v5813
    %6361 = vmatpush1.bf16.msra.mxu0 %v5812
    %6362 = vmatprep.subr.bf16.mxu0 %v5801
    %6363 = vmatpush1.bf16.msra.mxu0 %v5800
    %6364 = vmatprep.subr.bf16.mxu0 %v5789
    %6365 = vmatpush1.bf16.msra.mxu0 %v5788
    %6366 = vmatprep.subr.bf16.mxu0 %v5777
    %6367 = vmatpush1.bf16.msra.mxu0 %v5776
    %6368 = vmatprep.subr.bf16.mxu0 %v5957
    %6369 = vmatpush2.bf16.msra.mxu0 %v5956
    %6370 = vmatprep.subr.bf16.mxu0 %v5945
    %6371 = vmatpush2.bf16.msra.mxu0 %v5944
    %6372 = vmatprep.subr.bf16.mxu0 %v5933
    %6373 = vmatpush2.bf16.msra.mxu0 %v5932
    %6374 = vmatprep.subr.bf16.mxu0 %v5921
    %6375 = vmatpush2.bf16.msra.mxu0 %v5920
    %6376 = vmatprep.subr.bf16.mxu0 %v5909
    %6377 = vmatpush2.bf16.msra.mxu0 %v5908
    %6378 = vmatprep.subr.bf16.mxu0 %v5897
    %6379 = vmatpush2.bf16.msra.mxu0 %v5896
    %6380 = vmatprep.subr.bf16.mxu0 %v5885
    %6381 = vmatpush2.bf16.msra.mxu0 %v5884
    %6382 = vmatprep.subr.bf16.mxu0 %v5873
    %6383 = vmatpush2.bf16.msra.mxu0 %v5872
    %6384 = vmatprep.mubr.bf16.mxu0 0
    %6385 = vmatmul.mubr.bf16.gmra.mxu0 0
    %v6386 = vpop.f32.mrf.mxu0
    %v6387 = vadd.f32 0.0, %v6386
    %v6388 = vpop.f32.mrf.mxu0
    %v6389 = vadd.f32 0.0, %v6388
    %v6390 = vpop.f32.mrf.mxu0
    %v6391 = vpop.f32.mrf.mxu0
    %6392 = vdwg.mxu0
    %6393 = vmatprep.subr.bf16.mxu0 %v6053
    %6394 = vmatpush1.bf16.msra.mxu0 %v6052
    %6395 = vmatprep.subr.bf16.mxu0 %v6041
    %6396 = vmatpush1.bf16.msra.mxu0 %v6040
    %6397 = vmatprep.subr.bf16.mxu0 %v6029
    %6398 = vmatpush1.bf16.msra.mxu0 %v6028
    %6399 = vmatprep.subr.bf16.mxu0 %v6017
    %6400 = vmatpush1.bf16.msra.mxu0 %v6016
    %6401 = vmatprep.subr.bf16.mxu0 %v6005
    %6402 = vmatpush1.bf16.msra.mxu0 %v6004
    %6403 = vmatprep.subr.bf16.mxu0 %v5993
    %6404 = vmatpush1.bf16.msra.mxu0 %v5992
    %6405 = vmatprep.subr.bf16.mxu0 %v5981
    %6406 = vmatpush1.bf16.msra.mxu0 %v5980
    %6407 = vmatprep.subr.bf16.mxu0 %v5969
    %6408 = vmatpush1.bf16.msra.mxu0 %v5968
    %6409 = vmatprep.subr.bf16.mxu0 0
    %6410 = vmatpush2.bf16.msra.mxu0 0
    %6411 = vmatprep.subr.bf16.mxu0 0
    %6412 = vmatpush2.bf16.msra.mxu0 0
    %6413 = vmatprep.subr.bf16.mxu0 0
    %6414 = vmatpush2.bf16.msra.mxu0 0
    %6415 = vmatprep.subr.bf16.mxu0 0
    %6416 = vmatpush2.bf16.msra.mxu0 0
    %6417 = vmatprep.subr.bf16.mxu0 0
    %6418 = vmatpush2.bf16.msra.mxu0 0
    %6419 = vmatprep.subr.bf16.mxu0 0
    %6420 = vmatpush2.bf16.msra.mxu0 0
    %6421 = vmatprep.subr.bf16.mxu0 0
    %6422 = vmatpush2.bf16.msra.mxu0 0
    %6423 = vmatprep.subr.bf16.mxu0 0
    %6424 = vmatpush2.bf16.msra.mxu0 0
    %6425 = vmatprep.mubr.bf16.mxu0 0
    %6426 = vmatmul.mubr.bf16.gmra.mxu0 0
    %v6427 = vpop.f32.mrf.mxu0
    %v6428 = vadd.f32 %v6387, %v6427
    %v6429 = vpop.f32.mrf.mxu0
    %v6430 = vadd.f32 %v6389, %v6429
    %v6431 = vpop.f32.mrf.mxu0
    %v6432 = vpop.f32.mrf.mxu0
    %6433 = vdwg.mxu0
    %6434 = vmatprep.subr.bf16.mxu0 %v5863
    %6435 = vmatpush1.bf16.msra.mxu0 %v5862
    %6436 = vmatprep.subr.bf16.mxu0 %v5851
    %6437 = vmatpush1.bf16.msra.mxu0 %v5850
    %6438 = vmatprep.subr.bf16.mxu0 %v5839
    %6439 = vmatpush1.bf16.msra.mxu0 %v5838
    %6440 = vmatprep.subr.bf16.mxu0 %v5827
    %6441 = vmatpush1.bf16.msra.mxu0 %v5826
    %6442 = vmatprep.subr.bf16.mxu0 %v5815
    %6443 = vmatpush1.bf16.msra.mxu0 %v5814
    %6444 = vmatprep.subr.bf16.mxu0 %v5803
    %6445 = vmatpush1.bf16.msra.mxu0 %v5802
    %6446 = vmatprep.subr.bf16.mxu0 %v5791
    %6447 = vmatpush1.bf16.msra.mxu0 %v5790
    %6448 = vmatprep.subr.bf16.mxu0 %v5779
    %6449 = vmatpush1.bf16.msra.mxu0 %v5778
    %6450 = vmatprep.subr.bf16.mxu0 %v5959
    %6451 = vmatpush2.bf16.msra.mxu0 %v5958
    %6452 = vmatprep.subr.bf16.mxu0 %v5947
    %6453 = vmatpush2.bf16.msra.mxu0 %v5946
    %6454 = vmatprep.subr.bf16.mxu0 %v5935
    %6455 = vmatpush2.bf16.msra.mxu0 %v5934
    %6456 = vmatprep.subr.bf16.mxu0 %v5923
    %6457 = vmatpush2.bf16.msra.mxu0 %v5922
    %6458 = vmatprep.subr.bf16.mxu0 %v5911
    %6459 = vmatpush2.bf16.msra.mxu0 %v5910
    %6460 = vmatprep.subr.bf16.mxu0 %v5899
    %6461 = vmatpush2.bf16.msra.mxu0 %v5898
    %6462 = vmatprep.subr.bf16.mxu0 %v5887
    %6463 = vmatpush2.bf16.msra.mxu0 %v5886
    %6464 = vmatprep.subr.bf16.mxu0 %v5875
    %6465 = vmatpush2.bf16.msra.mxu0 %v5874
    %6466 = vmatprep.mubr.bf16.mxu0 0
    %6467 = vmatmul.mubr.bf16.gmra.mxu0 0
    %v6468 = vpop.f32.mrf.mxu0
    %v6469 = vadd.f32 0.0, %v6468
    %v6470 = vpop.f32.mrf.mxu0
    %v6471 = vadd.f32 0.0, %v6470
    %v6472 = vpop.f32.mrf.mxu0
    %v6473 = vpop.f32.mrf.mxu0
    %6474 = vdwg.mxu0
    %6475 = vmatprep.subr.bf16.mxu0 %v6055
    %6476 = vmatpush1.bf16.msra.mxu0 %v6054
    %6477 = vmatprep.subr.bf16.mxu0 %v6043
    %6478 = vmatpush1.bf16.msra.mxu0 %v6042
    %6479 = vmatprep.subr.bf16.mxu0 %v6031
    %6480 = vmatpush1.bf16.msra.mxu0 %v6030
    %6481 = vmatprep.subr.bf16.mxu0 %v6019
    %6482 = vmatpush1.bf16.msra.mxu0 %v6018
    %6483 = vmatprep.subr.bf16.mxu0 %v6007
    %6484 = vmatpush1.bf16.msra.mxu0 %v6006
    %6485 = vmatprep.subr.bf16.mxu0 %v5995
    %6486 = vmatpush1.bf16.msra.mxu0 %v5994
    %6487 = vmatprep.subr.bf16.mxu0 %v5983
    %6488 = vmatpush1.bf16.msra.mxu0 %v5982
    %6489 = vmatprep.subr.bf16.mxu0 %v5971
    %6490 = vmatpush1.bf16.msra.mxu0 %v5970
    %6491 = vmatprep.subr.bf16.mxu0 0
    %6492 = vmatpush2.bf16.msra.mxu0 0
    %6493 = vmatprep.subr.bf16.mxu0 0
    %6494 = vmatpush2.bf16.msra.mxu0 0
    %6495 = vmatprep.subr.bf16.mxu0 0
    %6496 = vmatpush2.bf16.msra.mxu0 0
    %6497 = vmatprep.subr.bf16.mxu0 0
    %6498 = vmatpush2.bf16.msra.mxu0 0
    %6499 = vmatprep.subr.bf16.mxu0 0
    %6500 = vmatpush2.bf16.msra.mxu0 0
    %6501 = vmatprep.subr.bf16.mxu0 0
    %6502 = vmatpush2.bf16.msra.mxu0 0
    %6503 = vmatprep.subr.bf16.mxu0 0
    %6504 = vmatpush2.bf16.msra.mxu0 0
    %6505 = vmatprep.subr.bf16.mxu0 0
    %6506 = vmatpush2.bf16.msra.mxu0 0
    %6507 = vmatprep.mubr.bf16.mxu0 0
    %6508 = vmatmul.mubr.bf16.gmra.mxu0 0
    %v6509 = vpop.f32.mrf.mxu0
    %v6510 = vadd.f32 %v6469, %v6509
    %v6511 = vpop.f32.mrf.mxu0
    %v6512 = vadd.f32 %v6471, %v6511
    %v6513 = vpop.f32.mrf.mxu0
    %v6514 = vpop.f32.mrf.mxu0
    %6515 = vdwg.mxu0
    %6516 = vmatprep.subr.bf16.mxu0 %v5865
    %6517 = vmatpush1.bf16.msra.mxu0 %v5864
    %6518 = vmatprep.subr.bf16.mxu0 %v5853
    %6519 = vmatpush1.bf16.msra.mxu0 %v5852
    %6520 = vmatprep.subr.bf16.mxu0 %v5841
    %6521 = vmatpush1.bf16.msra.mxu0 %v5840
    %6522 = vmatprep.subr.bf16.mxu0 %v5829
    %6523 = vmatpush1.bf16.msra.mxu0 %v5828
    %6524 = vmatprep.subr.bf16.mxu0 %v5817
    %6525 = vmatpush1.bf16.msra.mxu0 %v5816
    %6526 = vmatprep.subr.bf16.mxu0 %v5805
    %6527 = vmatpush1.bf16.msra.mxu0 %v5804
    %6528 = vmatprep.subr.bf16.mxu0 %v5793
    %6529 = vmatpush1.bf16.msra.mxu0 %v5792
    %6530 = vmatprep.subr.bf16.mxu0 %v5781
    %6531 = vmatpush1.bf16.msra.mxu0 %v5780
    %6532 = vmatprep.subr.bf16.mxu0 %v5961
    %6533 = vmatpush2.bf16.msra.mxu0 %v5960
    %6534 = vmatprep.subr.bf16.mxu0 %v5949
    %6535 = vmatpush2.bf16.msra.mxu0 %v5948
    %6536 = vmatprep.subr.bf16.mxu0 %v5937
    %6537 = vmatpush2.bf16.msra.mxu0 %v5936
    %6538 = vmatprep.subr.bf16.mxu0 %v5925
    %6539 = vmatpush2.bf16.msra.mxu0 %v5924
    %6540 = vmatprep.subr.bf16.mxu0 %v5913
    %6541 = vmatpush2.bf16.msra.mxu0 %v5912
    %6542 = vmatprep.subr.bf16.mxu0 %v5901
    %6543 = vmatpush2.bf16.msra.mxu0 %v5900
    %6544 = vmatprep.subr.bf16.mxu0 %v5889
    %6545 = vmatpush2.bf16.msra.mxu0 %v5888
    %6546 = vmatprep.subr.bf16.mxu0 %v5877
    %6547 = vmatpush2.bf16.msra.mxu0 %v5876
    %6548 = vmatprep.mubr.bf16.mxu0 0
    %6549 = vmatmul.mubr.bf16.gmra.mxu0 0
    %v6550 = vpop.f32.mrf.mxu0
    %v6551 = vadd.f32 0.0, %v6550
    %v6552 = vpop.f32.mrf.mxu0
    %v6553 = vadd.f32 0.0, %v6552
    %v6554 = vpop.f32.mrf.mxu0
    %v6555 = vpop.f32.mrf.mxu0
    %6556 = vdwg.mxu0
    %6557 = vmatprep.subr.bf16.mxu0 %v6057
    %6558 = vmatpush1.bf16.msra.mxu0 %v6056
    %6559 = vmatprep.subr.bf16.mxu0 %v6045
    %6560 = vmatpush1.bf16.msra.mxu0 %v6044
    %6561 = vmatprep.subr.bf16.mxu0 %v6033
    %6562 = vmatpush1.bf16.msra.mxu0 %v6032
    %6563 = vmatprep.subr.bf16.mxu0 %v6021
    %6564 = vmatpush1.bf16.msra.mxu0 %v6020
    %6565 = vmatprep.subr.bf16.mxu0 %v6009
    %6566 = vmatpush1.bf16.msra.mxu0 %v6008
    %6567 = vmatprep.subr.bf16.mxu0 %v5997
    %6568 = vmatpush1.bf16.msra.mxu0 %v5996
    %6569 = vmatprep.subr.bf16.mxu0 %v5985
    %6570 = vmatpush1.bf16.msra.mxu0 %v5984
    %6571 = vmatprep.subr.bf16.mxu0 %v5973
    %6572 = vmatpush1.bf16.msra.mxu0 %v5972
    %6573 = vmatprep.subr.bf16.mxu0 0
    %6574 = vmatpush2.bf16.msra.mxu0 0
    %6575 = vmatprep.subr.bf16.mxu0 0
    %6576 = vmatpush2.bf16.msra.mxu0 0
    %6577 = vmatprep.subr.bf16.mxu0 0
    %6578 = vmatpush2.bf16.msra.mxu0 0
    %6579 = vmatprep.subr.bf16.mxu0 0
    %6580 = vmatpush2.bf16.msra.mxu0 0
    %6581 = vmatprep.subr.bf16.mxu0 0
    %6582 = vmatpush2.bf16.msra.mxu0 0
    %6583 = vmatprep.subr.bf16.mxu0 0
    %6584 = vmatpush2.bf16.msra.mxu0 0
    %6585 = vmatprep.subr.bf16.mxu0 0
    %6586 = vmatpush2.bf16.msra.mxu0 0
    %6587 = vmatprep.subr.bf16.mxu0 0
    %6588 = vmatpush2.bf16.msra.mxu0 0
    %6589 = vmatprep.mubr.bf16.mxu0 0
    %6590 = vmatmul.mubr.bf16.gmra.mxu0 0
    %v6591 = vpop.f32.mrf.mxu0
    %v6592 = vadd.f32 %v6551, %v6591
    %v6593 = vpop.f32.mrf.mxu0
    %v6594 = vadd.f32 %v6553, %v6593
    %v6595 = vpop.f32.mrf.mxu0
    %v6596 = vpop.f32.mrf.mxu0
    %6597 = vdwg.mxu0
    %6598 = vmatprep.subr.bf16.mxu0 %v5867
    %6599 = vmatpush1.bf16.msra.mxu0 %v5866
    %6600 = vmatprep.subr.bf16.mxu0 %v5855
    %6601 = vmatpush1.bf16.msra.mxu0 %v5854
    %6602 = vmatprep.subr.bf16.mxu0 %v5843
    %6603 = vmatpush1.bf16.msra.mxu0 %v5842
    %6604 = vmatprep.subr.bf16.mxu0 %v5831
    %6605 = vmatpush1.bf16.msra.mxu0 %v5830
    %6606 = vmatprep.subr.bf16.mxu0 %v5819
    %6607 = vmatpush1.bf16.msra.mxu0 %v5818
    %6608 = vmatprep.subr.bf16.mxu0 %v5807
    %6609 = vmatpush1.bf16.msra.mxu0 %v5806
    %6610 = vmatprep.subr.bf16.mxu0 %v5795
    %6611 = vmatpush1.bf16.msra.mxu0 %v5794
    %6612 = vmatprep.subr.bf16.mxu0 %v5783
    %6613 = vmatpush1.bf16.msra.mxu0 %v5782
    %6614 = vmatprep.subr.bf16.mxu0 %v5963
    %6615 = vmatpush2.bf16.msra.mxu0 %v5962
    %6616 = vmatprep.subr.bf16.mxu0 %v5951
    %6617 = vmatpush2.bf16.msra.mxu0 %v5950
    %6618 = vmatprep.subr.bf16.mxu0 %v5939
    %6619 = vmatpush2.bf16.msra.mxu0 %v5938
    %6620 = vmatprep.subr.bf16.mxu0 %v5927
    %6621 = vmatpush2.bf16.msra.mxu0 %v5926
    %6622 = vmatprep.subr.bf16.mxu0 %v5915
    %6623 = vmatpush2.bf16.msra.mxu0 %v5914
    %6624 = vmatprep.subr.bf16.mxu0 %v5903
    %6625 = vmatpush2.bf16.msra.mxu0 %v5902
    %6626 = vmatprep.subr.bf16.mxu0 %v5891
    %6627 = vmatpush2.bf16.msra.mxu0 %v5890
    %6628 = vmatprep.subr.bf16.mxu0 %v5879
    %6629 = vmatpush2.bf16.msra.mxu0 %v5878
    %6630 = vmatprep.mubr.bf16.mxu0 0
    %6631 = vmatmul.mubr.bf16.gmra.mxu0 0
    %v6632 = vpop.f32.mrf.mxu0
    %v6633 = vadd.f32 0.0, %v6632
    %v6634 = vpop.f32.mrf.mxu0
    %v6635 = vadd.f32 0.0, %v6634
    %v6636 = vpop.f32.mrf.mxu0
    %v6637 = vpop.f32.mrf.mxu0
    %6638 = vdwg.mxu0
    %6639 = vmatprep.subr.bf16.mxu0 %v6059
    %6640 = vmatpush1.bf16.msra.mxu0 %v6058
    %6641 = vmatprep.subr.bf16.mxu0 %v6047
    %6642 = vmatpush1.bf16.msra.mxu0 %v6046
    %6643 = vmatprep.subr.bf16.mxu0 %v6035
    %6644 = vmatpush1.bf16.msra.mxu0 %v6034
    %6645 = vmatprep.subr.bf16.mxu0 %v6023
    %6646 = vmatpush1.bf16.msra.mxu0 %v6022
    %6647 = vmatprep.subr.bf16.mxu0 %v6011
    %6648 = vmatpush1.bf16.msra.mxu0 %v6010
    %6649 = vmatprep.subr.bf16.mxu0 %v5999
    %6650 = vmatpush1.bf16.msra.mxu0 %v5998
    %6651 = vmatprep.subr.bf16.mxu0 %v5987
    %6652 = vmatpush1.bf16.msra.mxu0 %v5986
    %6653 = vmatprep.subr.bf16.mxu0 %v5975
    %6654 = vmatpush1.bf16.msra.mxu0 %v5974
    %6655 = vmatprep.subr.bf16.mxu0 0
    %6656 = vmatpush2.bf16.msra.mxu0 0
    %6657 = vmatprep.subr.bf16.mxu0 0
    %6658 = vmatpush2.bf16.msra.mxu0 0
    %6659 = vmatprep.subr.bf16.mxu0 0
    %6660 = vmatpush2.bf16.msra.mxu0 0
    %6661 = vmatprep.subr.bf16.mxu0 0
    %6662 = vmatpush2.bf16.msra.mxu0 0
    %6663 = vmatprep.subr.bf16.mxu0 0
    %6664 = vmatpush2.bf16.msra.mxu0 0
    %6665 = vmatprep.subr.bf16.mxu0 0
    %6666 = vmatpush2.bf16.msra.mxu0 0
    %6667 = vmatprep.subr.bf16.mxu0 0
    %6668 = vmatpush2.bf16.msra.mxu0 0
    %6669 = vmatprep.subr.bf16.mxu0 0
    %6670 = vmatpush2.bf16.msra.mxu0 0
    %6671 = vmatprep.mubr.bf16.mxu0 0
    %6672 = vmatmul.mubr.bf16.gmra.mxu0 0
    %v6673 = vpop.f32.mrf.mxu0
    %v6674 = vadd.f32 %v6633, %v6673
    %v6675 = vpop.f32.mrf.mxu0
    %v6676 = vadd.f32 %v6635, %v6675
    %v6677 = vpop.f32.mrf.mxu0
    %v6678 = vpop.f32.mrf.mxu0
    %6679 = vdwg.mxu0
    %6680 = vmatprep.subr.bf16.mxu0 %v5869
    %6681 = vmatpush1.bf16.msra.mxu0 %v5868
    %6682 = vmatprep.subr.bf16.mxu0 %v5857
    %6683 = vmatpush1.bf16.msra.mxu0 %v5856
    %6684 = vmatprep.subr.bf16.mxu0 %v5845
    %6685 = vmatpush1.bf16.msra.mxu0 %v5844
    %6686 = vmatprep.subr.bf16.mxu0 %v5833
    %6687 = vmatpush1.bf16.msra.mxu0 %v5832
    %6688 = vmatprep.subr.bf16.mxu0 %v5821
    %6689 = vmatpush1.bf16.msra.mxu0 %v5820
    %6690 = vmatprep.subr.bf16.mxu0 %v5809
    %6691 = vmatpush1.bf16.msra.mxu0 %v5808
    %6692 = vmatprep.subr.bf16.mxu0 %v5797
    %6693 = vmatpush1.bf16.msra.mxu0 %v5796
    %6694 = vmatprep.subr.bf16.mxu0 %v5785
    %6695 = vmatpush1.bf16.msra.mxu0 %v5784
    %6696 = vmatprep.subr.bf16.mxu0 %v5965
    %6697 = vmatpush2.bf16.msra.mxu0 %v5964
    %6698 = vmatprep.subr.bf16.mxu0 %v5953
    %6699 = vmatpush2.bf16.msra.mxu0 %v5952
    %6700 = vmatprep.subr.bf16.mxu0 %v5941
    %6701 = vmatpush2.bf16.msra.mxu0 %v5940
    %6702 = vmatprep.subr.bf16.mxu0 %v5929
    %6703 = vmatpush2.bf16.msra.mxu0 %v5928
    %6704 = vmatprep.subr.bf16.mxu0 %v5917
    %6705 = vmatpush2.bf16.msra.mxu0 %v5916
    %6706 = vmatprep.subr.bf16.mxu0 %v5905
    %6707 = vmatpush2.bf16.msra.mxu0 %v5904
    %6708 = vmatprep.subr.bf16.mxu0 %v5893
    %6709 = vmatpush2.bf16.msra.mxu0 %v5892
    %6710 = vmatprep.subr.bf16.mxu0 %v5881
    %6711 = vmatpush2.bf16.msra.mxu0 %v5880
    %6712 = vmatprep.mubr.bf16.mxu0 0
    %6713 = vmatmul.mubr.bf16.gmra.mxu0 0
    %v6714 = vpop.f32.mrf.mxu0
    %v6715 = vadd.f32 0.0, %v6714
    %v6716 = vpop.f32.mrf.mxu0
    %v6717 = vadd.f32 0.0, %v6716
    %v6718 = vpop.f32.mrf.mxu0
    %v6719 = vpop.f32.mrf.mxu0
    %6720 = vdwg.mxu0
    %6721 = vmatprep.subr.bf16.mxu0 %v6061
    %6722 = vmatpush1.bf16.msra.mxu0 %v6060
    %6723 = vmatprep.subr.bf16.mxu0 %v6049
    %6724 = vmatpush1.bf16.msra.mxu0 %v6048
    %6725 = vmatprep.subr.bf16.mxu0 %v6037
    %6726 = vmatpush1.bf16.msra.mxu0 %v6036
    %6727 = vmatprep.subr.bf16.mxu0 %v6025
    %6728 = vmatpush1.bf16.msra.mxu0 %v6024
    %6729 = vmatprep.subr.bf16.mxu0 %v6013
    %6730 = vmatpush1.bf16.msra.mxu0 %v6012
    %6731 = vmatprep.subr.bf16.mxu0 %v6001
    %6732 = vmatpush1.bf16.msra.mxu0 %v6000
    %6733 = vmatprep.subr.bf16.mxu0 %v5989
    %6734 = vmatpush1.bf16.msra.mxu0 %v5988
    %6735 = vmatprep.subr.bf16.mxu0 %v5977
    %6736 = vmatpush1.bf16.msra.mxu0 %v5976
    %6737 = vmatprep.subr.bf16.mxu0 0
    %6738 = vmatpush2.bf16.msra.mxu0 0
    %6739 = vmatprep.subr.bf16.mxu0 0
    %6740 = vmatpush2.bf16.msra.mxu0 0
    %6741 = vmatprep.subr.bf16.mxu0 0
    %6742 = vmatpush2.bf16.msra.mxu0 0
    %6743 = vmatprep.subr.bf16.mxu0 0
    %6744 = vmatpush2.bf16.msra.mxu0 0
    %6745 = vmatprep.subr.bf16.mxu0 0
    %6746 = vmatpush2.bf16.msra.mxu0 0
    %6747 = vmatprep.subr.bf16.mxu0 0
    %6748 = vmatpush2.bf16.msra.mxu0 0
    %6749 = vmatprep.subr.bf16.mxu0 0
    %6750 = vmatpush2.bf16.msra.mxu0 0
    %6751 = vmatprep.subr.bf16.mxu0 0
    %6752 = vmatpush2.bf16.msra.mxu0 0
    %6753 = vmatprep.mubr.bf16.mxu0 0
    %6754 = vmatmul.mubr.bf16.gmra.mxu0 0
    %v6755 = vpop.f32.mrf.mxu0
    %v6756 = vadd.f32 %v6715, %v6755
    %v6757 = vpop.f32.mrf.mxu0
    %v6758 = vadd.f32 %v6717, %v6757
    %v6759 = vpop.f32.mrf.mxu0
    %v6760 = vpop.f32.mrf.mxu0
    %6761 = vdwg.mxu0
    %6762 = vmatprep.subr.bf16.mxu0 %v5871
    %6763 = vmatpush1.bf16.msra.mxu0 %v5870
    %6764 = vmatprep.subr.bf16.mxu0 %v5859
    %6765 = vmatpush1.bf16.msra.mxu0 %v5858
    %6766 = vmatprep.subr.bf16.mxu0 %v5847
    %6767 = vmatpush1.bf16.msra.mxu0 %v5846
    %6768 = vmatprep.subr.bf16.mxu0 %v5835
    %6769 = vmatpush1.bf16.msra.mxu0 %v5834
    %6770 = vmatprep.subr.bf16.mxu0 %v5823
    %6771 = vmatpush1.bf16.msra.mxu0 %v5822
    %6772 = vmatprep.subr.bf16.mxu0 %v5811
    %6773 = vmatpush1.bf16.msra.mxu0 %v5810
    %6774 = vmatprep.subr.bf16.mxu0 %v5799
    %6775 = vmatpush1.bf16.msra.mxu0 %v5798
    %6776 = vmatprep.subr.bf16.mxu0 %v5787
    %6777 = vmatpush1.bf16.msra.mxu0 %v5786
    %6778 = vmatprep.subr.bf16.mxu0 %v5967
    %6779 = vmatpush2.bf16.msra.mxu0 %v5966
    %6780 = vmatprep.subr.bf16.mxu0 %v5955
    %6781 = vmatpush2.bf16.msra.mxu0 %v5954
    %6782 = vmatprep.subr.bf16.mxu0 %v5943
    %6783 = vmatpush2.bf16.msra.mxu0 %v5942
    %6784 = vmatprep.subr.bf16.mxu0 %v5931
    %6785 = vmatpush2.bf16.msra.mxu0 %v5930
    %6786 = vmatprep.subr.bf16.mxu0 %v5919
    %6787 = vmatpush2.bf16.msra.mxu0 %v5918
    %6788 = vmatprep.subr.bf16.mxu0 %v5907
    %6789 = vmatpush2.bf16.msra.mxu0 %v5906
    %6790 = vmatprep.subr.bf16.mxu0 %v5895
    %6791 = vmatpush2.bf16.msra.mxu0 %v5894
    %6792 = vmatprep.subr.bf16.mxu0 %v5883
    %6793 = vmatpush2.bf16.msra.mxu0 %v5882
    %6794 = vmatprep.mubr.bf16.mxu0 0
    %6795 = vmatmul.mubr.bf16.gmra.mxu0 0
    %v6796 = vpop.f32.mrf.mxu0
    %v6797 = vadd.f32 0.0, %v6796
    %v6798 = vpop.f32.mrf.mxu0
    %v6799 = vadd.f32 0.0, %v6798
    %v6800 = vpop.f32.mrf.mxu0
    %v6801 = vpop.f32.mrf.mxu0
    %6802 = vdwg.mxu0
    %6803 = vmatprep.subr.bf16.mxu0 %v6063
    %6804 = vmatpush1.bf16.msra.mxu0 %v6062
    %6805 = vmatprep.subr.bf16.mxu0 %v6051
    %6806 = vmatpush1.bf16.msra.mxu0 %v6050
    %6807 = vmatprep.subr.bf16.mxu0 %v6039
    %6808 = vmatpush1.bf16.msra.mxu0 %v6038
    %6809 = vmatprep.subr.bf16.mxu0 %v6027
    %6810 = vmatpush1.bf16.msra.mxu0 %v6026
    %6811 = vmatprep.subr.bf16.mxu0 %v6015
    %6812 = vmatpush1.bf16.msra.mxu0 %v6014
    %6813 = vmatprep.subr.bf16.mxu0 %v6003
    %6814 = vmatpush1.bf16.msra.mxu0 %v6002
    %6815 = vmatprep.subr.bf16.mxu0 %v5991
    %6816 = vmatpush1.bf16.msra.mxu0 %v5990
    %6817 = vmatprep.subr.bf16.mxu0 %v5979
    %6818 = vmatpush1.bf16.msra.mxu0 %v5978
    %6819 = vmatprep.subr.bf16.mxu0 0
    %6820 = vmatpush2.bf16.msra.mxu0 0
    %6821 = vmatprep.subr.bf16.mxu0 0
    %6822 = vmatpush2.bf16.msra.mxu0 0
    %6823 = vmatprep.subr.bf16.mxu0 0
    %6824 = vmatpush2.bf16.msra.mxu0 0
    %6825 = vmatprep.subr.bf16.mxu0 0
    %6826 = vmatpush2.bf16.msra.mxu0 0
    %6827 = vmatprep.subr.bf16.mxu0 0
    %6828 = vmatpush2.bf16.msra.mxu0 0
    %6829 = vmatprep.subr.bf16.mxu0 0
    %6830 = vmatpush2.bf16.msra.mxu0 0
    %6831 = vmatprep.subr.bf16.mxu0 0
    %6832 = vmatpush2.bf16.msra.mxu0 0
    %6833 = vmatprep.subr.bf16.mxu0 0
    %6834 = vmatpush2.bf16.msra.mxu0 0
    %6835 = vmatprep.mubr.bf16.mxu0 0
    %6836 = vmatmul.mubr.bf16.gmra.mxu0 0
    %v6837 = vpop.f32.mrf.mxu0
    %v6838 = vadd.f32 %v6797, %v6837
    %v6839 = vpop.f32.mrf.mxu0
    %v6840 = vadd.f32 %v6799, %v6839
    %v6841 = vpop.f32.mrf.mxu0
    %v6842 = vpop.f32.mrf.mxu0
    %6843 = vdwg.mxu0
    %v6844 = vadd.f32 %v4900, %v6428
    %v6845 = vadd.f32 %v4901, %v6430
    %v6846 = vadd.f32 %v4902, %v6510
    %v6847 = vadd.f32 %v4903, %v6512
    %v6848 = vadd.f32 %v4904, %v6592
    %v6849 = vadd.f32 %v4905, %v6594
    %v6850 = vadd.f32 %v4906, %v6674
    %v6851 = vadd.f32 %v4907, %v6676
    %v6852 = vadd.f32 %v4908, %v6756
    %v6853 = vadd.f32 %v4909, %v6758
    %v6854 = vadd.f32 %v4910, %v6838
    %v6855 = vadd.f32 %v4911, %v6840
    %v6856 = vpack.c.bf16 %v6844, %v6844
    %v6857 = vpack.c.bf16 %v6845, %v6845
    %v6858 = vpack.c.bf16 %v6846, %v6846
    %v6859 = vpack.c.bf16 %v6847, %v6847
    %v6860 = vpack.c.bf16 %v6848, %v6848
    %v6861 = vpack.c.bf16 %v6849, %v6849
    %v6862 = vpack.c.bf16 %v6850, %v6850
    %v6863 = vpack.c.bf16 %v6851, %v6851
    %v6864 = vpack.c.bf16 %v6852, %v6852
    %v6865 = vpack.c.bf16 %v6853, %v6853
    %v6866 = vpack.c.bf16 %v6854, %v6854
    %v6867 = vpack.c.bf16 %v6855, %v6855
    %v6868 = vxor.u32 %v6856, 2147516416
    %v6869 = vxor.u32 %v6857, 2147516416
    %v6870 = vxor.u32 %v6858, 2147516416
    %v6872 = vmul.bf16 %v6868, 1069105081
    %v6873 = vpow.bf16.pop %v6872
    %v6875 = vmul.bf16 %v6869, 1069105081
    %v6876 = vpow.bf16.pop %v6875
    %v6878 = vmul.bf16 %v6870, 1069105081
    %v6879 = vpow.bf16.pop %v6878
    %v6880 = vadd.bf16 %v6873, 1065369472
    %v6881 = vadd.bf16 %v6876, 1065369472
    %v6882 = vadd.bf16 %v6879, 1065369472
    %v6883 = vrcp.bf16.pop %v6880
    %v6884 = vmul.bf16 1065369472, %v6883
    %v6885 = vrcp.bf16.pop %v6881
    %v6886 = vmul.bf16 1065369472, %v6885
    %v6887 = vrcp.bf16.pop %v6882
    %v6888 = vmul.bf16 1065369472, %v6887
    %v6889 = vunpack.c.l.bf16 %v6884
    %v6890 = vunpack.c.l.bf16 %v6886
    %v6891 = vunpack.c.l.bf16 %v6888
    %v6892 = vxor.u32 %v6859, 2147516416
    %v6893 = vxor.u32 %v6860, 2147516416
    %v6894 = vxor.u32 %v6861, 2147516416
    %v6896 = vmul.bf16 %v6892, 1069105081
    %v6897 = vpow.bf16.pop %v6896
    %v6899 = vmul.bf16 %v6893, 1069105081
    %v6900 = vpow.bf16.pop %v6899
    %v6902 = vmul.bf16 %v6894, 1069105081
    %v6903 = vpow.bf16.pop %v6902
    %v6904 = vadd.bf16 %v6897, 1065369472
    %v6905 = vadd.bf16 %v6900, 1065369472
    %v6906 = vadd.bf16 %v6903, 1065369472
    %v6907 = vrcp.bf16.pop %v6904
    %v6908 = vmul.bf16 1065369472, %v6907
    %v6909 = vrcp.bf16.pop %v6905
    %v6910 = vmul.bf16 1065369472, %v6909
    %v6911 = vrcp.bf16.pop %v6906
    %v6912 = vmul.bf16 1065369472, %v6911
    %v6913 = vunpack.c.l.bf16 %v6908
    %v6914 = vunpack.c.l.bf16 %v6910
    %v6915 = vunpack.c.l.bf16 %v6912
    %v6916 = vtanh.bf16.pop %v6862
    %v6917 = vtanh.bf16.pop %v6863
    %v6918 = vtanh.bf16.pop %v6864
    %v6919 = vunpack.c.l.bf16 %v6916
    %v6920 = vunpack.c.l.bf16 %v6917
    %v6921 = vunpack.c.l.bf16 %v6918
    %v6922 = vxor.u32 %v6865, 2147516416
    %v6923 = vxor.u32 %v6866, 2147516416
    %v6924 = vxor.u32 %v6867, 2147516416
    %v6926 = vmul.bf16 %v6922, 1069105081
    %v6927 = vpow.bf16.pop %v6926
    %v6929 = vmul.bf16 %v6923, 1069105081
    %v6930 = vpow.bf16.pop %v6929
    %v6932 = vmul.bf16 %v6924, 1069105081
    %v6933 = vpow.bf16.pop %v6932
    %v6934 = vadd.bf16 %v6927, 1065369472
    %v6935 = vadd.bf16 %v6930, 1065369472
    %v6936 = vadd.bf16 %v6933, 1065369472
    %v6937 = vrcp.bf16.pop %v6934
    %v6938 = vmul.bf16 1065369472, %v6937
    %v6939 = vrcp.bf16.pop %v6935
    %v6940 = vmul.bf16 1065369472, %v6939
    %v6941 = vrcp.bf16.pop %v6936
    %v6942 = vmul.bf16 1065369472, %v6941
    %v6943 = vunpack.c.l.bf16 %v6938
    %v6944 = vunpack.c.l.bf16 %v6940
    %v6945 = vunpack.c.l.bf16 %v6942
    %v6946 = vmul.f32 %v6913, 0.0
    %v6947 = vmul.f32 %v6914, 0.0
    %v6948 = vmul.f32 %v6915, 0.0
    %v6949 = vmul.f32 %v6889, %v6919
    %v6950 = vmul.f32 %v6890, %v6920
    %v6951 = vmul.f32 %v6891, %v6921
    %v6952 = vadd.f32 %v6946, %v6949
    %v6953 = vadd.f32 %v6947, %v6950
    %v6954 = vadd.f32 %v6948, %v6951
    %v6955 = vpack.c.bf16 %v6952, %v6952
    %v6956 = vpack.c.bf16 %v6953, %v6953
    %v6957 = vpack.c.bf16 %v6954, %v6954
    %v6958 = vtanh.bf16.pop %v6955
    %v6959 = vtanh.bf16.pop %v6956
    %v6960 = vtanh.bf16.pop %v6957
    %v6961 = vunpack.c.l.bf16 %v6958
    %v6962 = vunpack.c.l.bf16 %v6959
    %v6963 = vunpack.c.l.bf16 %v6960
    %v6964 = vmul.f32 %v6943, %v6961
    %v6965 = vmul.f32 %v6944, %v6962
    %v6966 = vmul.f32 %v6945, %v6963
    %v6967 = vadd.f32 %v6964, 0.0
    %v6968 = vadd.f32 %v6965, 0.0
    %v6969 = vadd.f32 %v6966, 0.0
    %s6970 = smul.u32 1, 12
    %s6971 = smul.addr %s6970, 8
    %s6972 = scalar_lea.vmem [#allocation2], %s6971
    %v6973 = vld [vmem:[%s6972] sm:$0xff]
    %v6974 = vld [vmem:[%s6972 + $0x8] sm:$0xff]
    %v6975 = vld [vmem:[%s6972 + $0x10] sm:$0xff]
    %v6976 = vld [vmem:[%s6972 + $0x18] sm:$0xff]
    %v6977 = vld [vmem:[%s6972 + $0x20] sm:$0xff]
    %v6978 = vld [vmem:[%s6972 + $0x28] sm:$0xff]
    %v6979 = vld [vmem:[%s6972 + $0x30] sm:$0xff]
    %v6980 = vld [vmem:[%s6972 + $0x38] sm:$0xff]
    %v6981 = vld [vmem:[%s6972 + $0x40] sm:$0xff]
    %v6982 = vld [vmem:[%s6972 + $0x48] sm:$0xff]
    %v6983 = vld [vmem:[%s6972 + $0x50] sm:$0xff]
    %v6984 = vld [vmem:[%s6972 + $0x58] sm:$0xff]
    %v6985 = vpack.c.bf16 %v6964, %v6964
    %v6986 = vpack.c.bf16 %v6965, %v6965
    %v6987 = vpack.c.bf16 %v6966, %v6966
    %6988 = vmatprep.subr.bf16.mxu0 %v5861
    %6989 = vmatpush1.bf16.msra.mxu0 %v5860
    %6990 = vmatprep.subr.bf16.mxu0 %v5849
    %6991 = vmatpush1.bf16.msra.mxu0 %v5848
    %6992 = vmatprep.subr.bf16.mxu0 %v5837
    %6993 = vmatpush1.bf16.msra.mxu0 %v5836
    %6994 = vmatprep.subr.bf16.mxu0 %v5825
    %6995 = vmatpush1.bf16.msra.mxu0 %v5824
    %6996 = vmatprep.subr.bf16.mxu0 %v5813
    %6997 = vmatpush1.bf16.msra.mxu0 %v5812
    %6998 = vmatprep.subr.bf16.mxu0 %v5801
    %6999 = vmatpush1.bf16.msra.mxu0 %v5800
    %7000 = vmatprep.subr.bf16.mxu0 %v5789
    %7001 = vmatpush1.bf16.msra.mxu0 %v5788
    %7002 = vmatprep.subr.bf16.mxu0 %v5777
    %7003 = vmatpush1.bf16.msra.mxu0 %v5776
    %7004 = vmatprep.subr.bf16.mxu0 %v5957
    %7005 = vmatpush2.bf16.msra.mxu0 %v5956
    %7006 = vmatprep.subr.bf16.mxu0 %v5945
    %7007 = vmatpush2.bf16.msra.mxu0 %v5944
    %7008 = vmatprep.subr.bf16.mxu0 %v5933
    %7009 = vmatpush2.bf16.msra.mxu0 %v5932
    %7010 = vmatprep.subr.bf16.mxu0 %v5921
    %7011 = vmatpush2.bf16.msra.mxu0 %v5920
    %7012 = vmatprep.subr.bf16.mxu0 %v5909
    %7013 = vmatpush2.bf16.msra.mxu0 %v5908
    %7014 = vmatprep.subr.bf16.mxu0 %v5897
    %7015 = vmatpush2.bf16.msra.mxu0 %v5896
    %7016 = vmatprep.subr.bf16.mxu0 %v5885
    %7017 = vmatpush2.bf16.msra.mxu0 %v5884
    %7018 = vmatprep.subr.bf16.mxu0 %v5873
    %7019 = vmatpush2.bf16.msra.mxu0 %v5872
    %7020 = vmatprep.mubr.bf16.mxu0 %v6986
    %7021 = vmatmul.mubr.bf16.gmra.mxu0 %v6985
    %v7022 = vpop.f32.mrf.mxu0
    %v7023 = vadd.f32 0.0, %v7022
    %v7024 = vpop.f32.mrf.mxu0
    %v7025 = vadd.f32 0.0, %v7024
    %v7026 = vpop.f32.mrf.mxu0
    %v7027 = vpop.f32.mrf.mxu0
    %7028 = vdwg.mxu0
    %7029 = vmatprep.subr.bf16.mxu0 %v6053
    %7030 = vmatpush1.bf16.msra.mxu0 %v6052
    %7031 = vmatprep.subr.bf16.mxu0 %v6041
    %7032 = vmatpush1.bf16.msra.mxu0 %v6040
    %7033 = vmatprep.subr.bf16.mxu0 %v6029
    %7034 = vmatpush1.bf16.msra.mxu0 %v6028
    %7035 = vmatprep.subr.bf16.mxu0 %v6017
    %7036 = vmatpush1.bf16.msra.mxu0 %v6016
    %7037 = vmatprep.subr.bf16.mxu0 %v6005
    %7038 = vmatpush1.bf16.msra.mxu0 %v6004
    %7039 = vmatprep.subr.bf16.mxu0 %v5993
    %7040 = vmatpush1.bf16.msra.mxu0 %v5992
    %7041 = vmatprep.subr.bf16.mxu0 %v5981
    %7042 = vmatpush1.bf16.msra.mxu0 %v5980
    %7043 = vmatprep.subr.bf16.mxu0 %v5969
    %7044 = vmatpush1.bf16.msra.mxu0 %v5968
    %7045 = vmatprep.subr.bf16.mxu0 0
    %7046 = vmatpush2.bf16.msra.mxu0 0
    %7047 = vmatprep.subr.bf16.mxu0 0
    %7048 = vmatpush2.bf16.msra.mxu0 0
    %7049 = vmatprep.subr.bf16.mxu0 0
    %7050 = vmatpush2.bf16.msra.mxu0 0
    %7051 = vmatprep.subr.bf16.mxu0 0
    %7052 = vmatpush2.bf16.msra.mxu0 0
    %7053 = vmatprep.subr.bf16.mxu0 0
    %7054 = vmatpush2.bf16.msra.mxu0 0
    %7055 = vmatprep.subr.bf16.mxu0 0
    %7056 = vmatpush2.bf16.msra.mxu0 0
    %7057 = vmatprep.subr.bf16.mxu0 0
    %7058 = vmatpush2.bf16.msra.mxu0 0
    %7059 = vmatprep.subr.bf16.mxu0 0
    %7060 = vmatpush2.bf16.msra.mxu0 0
    %7061 = vmatprep.mubr.bf16.mxu0 0
    %7062 = vmatmul.mubr.bf16.gmra.mxu0 %v6987
    %v7063 = vpop.f32.mrf.mxu0
    %v7064 = vadd.f32 %v7023, %v7063
    %v7065 = vpop.f32.mrf.mxu0
    %v7066 = vadd.f32 %v7025, %v7065
    %v7067 = vpop.f32.mrf.mxu0
    %v7068 = vpop.f32.mrf.mxu0
    %7069 = vdwg.mxu0
    %7070 = vmatprep.subr.bf16.mxu0 %v5863
    %7071 = vmatpush1.bf16.msra.mxu0 %v5862
    %7072 = vmatprep.subr.bf16.mxu0 %v5851
    %7073 = vmatpush1.bf16.msra.mxu0 %v5850
    %7074 = vmatprep.subr.bf16.mxu0 %v5839
    %7075 = vmatpush1.bf16.msra.mxu0 %v5838
    %7076 = vmatprep.subr.bf16.mxu0 %v5827
    %7077 = vmatpush1.bf16.msra.mxu0 %v5826
    %7078 = vmatprep.subr.bf16.mxu0 %v5815
    %7079 = vmatpush1.bf16.msra.mxu0 %v5814
    %7080 = vmatprep.subr.bf16.mxu0 %v5803
    %7081 = vmatpush1.bf16.msra.mxu0 %v5802
    %7082 = vmatprep.subr.bf16.mxu0 %v5791
    %7083 = vmatpush1.bf16.msra.mxu0 %v5790
    %7084 = vmatprep.subr.bf16.mxu0 %v5779
    %7085 = vmatpush1.bf16.msra.mxu0 %v5778
    %7086 = vmatprep.subr.bf16.mxu0 %v5959
    %7087 = vmatpush2.bf16.msra.mxu0 %v5958
    %7088 = vmatprep.subr.bf16.mxu0 %v5947
    %7089 = vmatpush2.bf16.msra.mxu0 %v5946
    %7090 = vmatprep.subr.bf16.mxu0 %v5935
    %7091 = vmatpush2.bf16.msra.mxu0 %v5934
    %7092 = vmatprep.subr.bf16.mxu0 %v5923
    %7093 = vmatpush2.bf16.msra.mxu0 %v5922
    %7094 = vmatprep.subr.bf16.mxu0 %v5911
    %7095 = vmatpush2.bf16.msra.mxu0 %v5910
    %7096 = vmatprep.subr.bf16.mxu0 %v5899
    %7097 = vmatpush2.bf16.msra.mxu0 %v5898
    %7098 = vmatprep.subr.bf16.mxu0 %v5887
    %7099 = vmatpush2.bf16.msra.mxu0 %v5886
    %7100 = vmatprep.subr.bf16.mxu0 %v5875
    %7101 = vmatpush2.bf16.msra.mxu0 %v5874
    %7102 = vmatprep.mubr.bf16.mxu0 %v6986
    %7103 = vmatmul.mubr.bf16.gmra.mxu0 %v6985
    %v7104 = vpop.f32.mrf.mxu0
    %v7105 = vadd.f32 0.0, %v7104
    %v7106 = vpop.f32.mrf.mxu0
    %v7107 = vadd.f32 0.0, %v7106
    %v7108 = vpop.f32.mrf.mxu0
    %v7109 = vpop.f32.mrf.mxu0
    %7110 = vdwg.mxu0
    %7111 = vmatprep.subr.bf16.mxu0 %v6055
    %7112 = vmatpush1.bf16.msra.mxu0 %v6054
    %7113 = vmatprep.subr.bf16.mxu0 %v6043
    %7114 = vmatpush1.bf16.msra.mxu0 %v6042
    %7115 = vmatprep.subr.bf16.mxu0 %v6031
    %7116 = vmatpush1.bf16.msra.mxu0 %v6030
    %7117 = vmatprep.subr.bf16.mxu0 %v6019
    %7118 = vmatpush1.bf16.msra.mxu0 %v6018
    %7119 = vmatprep.subr.bf16.mxu0 %v6007
    %7120 = vmatpush1.bf16.msra.mxu0 %v6006
    %7121 = vmatprep.subr.bf16.mxu0 %v5995
    %7122 = vmatpush1.bf16.msra.mxu0 %v5994
    %7123 = vmatprep.subr.bf16.mxu0 %v5983
    %7124 = vmatpush1.bf16.msra.mxu0 %v5982
    %7125 = vmatprep.subr.bf16.mxu0 %v5971
    %7126 = vmatpush1.bf16.msra.mxu0 %v5970
    %7127 = vmatprep.subr.bf16.mxu0 0
    %7128 = vmatpush2.bf16.msra.mxu0 0
    %7129 = vmatprep.subr.bf16.mxu0 0
    %7130 = vmatpush2.bf16.msra.mxu0 0
    %7131 = vmatprep.subr.bf16.mxu0 0
    %7132 = vmatpush2.bf16.msra.mxu0 0
    %7133 = vmatprep.subr.bf16.mxu0 0
    %7134 = vmatpush2.bf16.msra.mxu0 0
    %7135 = vmatprep.subr.bf16.mxu0 0
    %7136 = vmatpush2.bf16.msra.mxu0 0
    %7137 = vmatprep.subr.bf16.mxu0 0
    %7138 = vmatpush2.bf16.msra.mxu0 0
    %7139 = vmatprep.subr.bf16.mxu0 0
    %7140 = vmatpush2.bf16.msra.mxu0 0
    %7141 = vmatprep.subr.bf16.mxu0 0
    %7142 = vmatpush2.bf16.msra.mxu0 0
    %7143 = vmatprep.mubr.bf16.mxu0 0
    %7144 = vmatmul.mubr.bf16.gmra.mxu0 %v6987
    %v7145 = vpop.f32.mrf.mxu0
    %v7146 = vadd.f32 %v7105, %v7145
    %v7147 = vpop.f32.mrf.mxu0
    %v7148 = vadd.f32 %v7107, %v7147
    %v7149 = vpop.f32.mrf.mxu0
    %v7150 = vpop.f32.mrf.mxu0
    %7151 = vdwg.mxu0
    %7152 = vmatprep.subr.bf16.mxu0 %v5865
    %7153 = vmatpush1.bf16.msra.mxu0 %v5864
    %7154 = vmatprep.subr.bf16.mxu0 %v5853
    %7155 = vmatpush1.bf16.msra.mxu0 %v5852
    %7156 = vmatprep.subr.bf16.mxu0 %v5841
    %7157 = vmatpush1.bf16.msra.mxu0 %v5840
    %7158 = vmatprep.subr.bf16.mxu0 %v5829
    %7159 = vmatpush1.bf16.msra.mxu0 %v5828
    %7160 = vmatprep.subr.bf16.mxu0 %v5817
    %7161 = vmatpush1.bf16.msra.mxu0 %v5816
    %7162 = vmatprep.subr.bf16.mxu0 %v5805
    %7163 = vmatpush1.bf16.msra.mxu0 %v5804
    %7164 = vmatprep.subr.bf16.mxu0 %v5793
    %7165 = vmatpush1.bf16.msra.mxu0 %v5792
    %7166 = vmatprep.subr.bf16.mxu0 %v5781
    %7167 = vmatpush1.bf16.msra.mxu0 %v5780
    %7168 = vmatprep.subr.bf16.mxu0 %v5961
    %7169 = vmatpush2.bf16.msra.mxu0 %v5960
    %7170 = vmatprep.subr.bf16.mxu0 %v5949
    %7171 = vmatpush2.bf16.msra.mxu0 %v5948
    %7172 = vmatprep.subr.bf16.mxu0 %v5937
    %7173 = vmatpush2.bf16.msra.mxu0 %v5936
    %7174 = vmatprep.subr.bf16.mxu0 %v5925
    %7175 = vmatpush2.bf16.msra.mxu0 %v5924
    %7176 = vmatprep.subr.bf16.mxu0 %v5913
    %7177 = vmatpush2.bf16.msra.mxu0 %v5912
    %7178 = vmatprep.subr.bf16.mxu0 %v5901
    %7179 = vmatpush2.bf16.msra.mxu0 %v5900
    %7180 = vmatprep.subr.bf16.mxu0 %v5889
    %7181 = vmatpush2.bf16.msra.mxu0 %v5888
    %7182 = vmatprep.subr.bf16.mxu0 %v5877
    %7183 = vmatpush2.bf16.msra.mxu0 %v5876
    %7184 = vmatprep.mubr.bf16.mxu0 %v6986
    %7185 = vmatmul.mubr.bf16.gmra.mxu0 %v6985
    %v7186 = vpop.f32.mrf.mxu0
    %v7187 = vadd.f32 0.0, %v7186
    %v7188 = vpop.f32.mrf.mxu0
    %v7189 = vadd.f32 0.0, %v7188
    %v7190 = vpop.f32.mrf.mxu0
    %v7191 = vpop.f32.mrf.mxu0
    %7192 = vdwg.mxu0
    %7193 = vmatprep.subr.bf16.mxu0 %v6057
    %7194 = vmatpush1.bf16.msra.mxu0 %v6056
    %7195 = vmatprep.subr.bf16.mxu0 %v6045
    %7196 = vmatpush1.bf16.msra.mxu0 %v6044
    %7197 = vmatprep.subr.bf16.mxu0 %v6033
    %7198 = vmatpush1.bf16.msra.mxu0 %v6032
    %7199 = vmatprep.subr.bf16.mxu0 %v6021
    %7200 = vmatpush1.bf16.msra.mxu0 %v6020
    %7201 = vmatprep.subr.bf16.mxu0 %v6009
    %7202 = vmatpush1.bf16.msra.mxu0 %v6008
    %7203 = vmatprep.subr.bf16.mxu0 %v5997
    %7204 = vmatpush1.bf16.msra.mxu0 %v5996
    %7205 = vmatprep.subr.bf16.mxu0 %v5985
    %7206 = vmatpush1.bf16.msra.mxu0 %v5984
    %7207 = vmatprep.subr.bf16.mxu0 %v5973
    %7208 = vmatpush1.bf16.msra.mxu0 %v5972
    %7209 = vmatprep.subr.bf16.mxu0 0
    %7210 = vmatpush2.bf16.msra.mxu0 0
    %7211 = vmatprep.subr.bf16.mxu0 0
    %7212 = vmatpush2.bf16.msra.mxu0 0
    %7213 = vmatprep.subr.bf16.mxu0 0
    %7214 = vmatpush2.bf16.msra.mxu0 0
    %7215 = vmatprep.subr.bf16.mxu0 0
    %7216 = vmatpush2.bf16.msra.mxu0 0
    %7217 = vmatprep.subr.bf16.mxu0 0
    %7218 = vmatpush2.bf16.msra.mxu0 0
    %7219 = vmatprep.subr.bf16.mxu0 0
    %7220 = vmatpush2.bf16.msra.mxu0 0
    %7221 = vmatprep.subr.bf16.mxu0 0
    %7222 = vmatpush2.bf16.msra.mxu0 0
    %7223 = vmatprep.subr.bf16.mxu0 0
    %7224 = vmatpush2.bf16.msra.mxu0 0
    %7225 = vmatprep.mubr.bf16.mxu0 0
    %7226 = vmatmul.mubr.bf16.gmra.mxu0 %v6987
    %v7227 = vpop.f32.mrf.mxu0
    %v7228 = vadd.f32 %v7187, %v7227
    %v7229 = vpop.f32.mrf.mxu0
    %v7230 = vadd.f32 %v7189, %v7229
    %v7231 = vpop.f32.mrf.mxu0
    %v7232 = vpop.f32.mrf.mxu0
    %7233 = vdwg.mxu0
    %7234 = vmatprep.subr.bf16.mxu0 %v5867
    %7235 = vmatpush1.bf16.msra.mxu0 %v5866
    %7236 = vmatprep.subr.bf16.mxu0 %v5855
    %7237 = vmatpush1.bf16.msra.mxu0 %v5854
    %7238 = vmatprep.subr.bf16.mxu0 %v5843
    %7239 = vmatpush1.bf16.msra.mxu0 %v5842
    %7240 = vmatprep.subr.bf16.mxu0 %v5831
    %7241 = vmatpush1.bf16.msra.mxu0 %v5830
    %7242 = vmatprep.subr.bf16.mxu0 %v5819
    %7243 = vmatpush1.bf16.msra.mxu0 %v5818
    %7244 = vmatprep.subr.bf16.mxu0 %v5807
    %7245 = vmatpush1.bf16.msra.mxu0 %v5806
    %7246 = vmatprep.subr.bf16.mxu0 %v5795
    %7247 = vmatpush1.bf16.msra.mxu0 %v5794
    %7248 = vmatprep.subr.bf16.mxu0 %v5783
    %7249 = vmatpush1.bf16.msra.mxu0 %v5782
    %7250 = vmatprep.subr.bf16.mxu0 %v5963
    %7251 = vmatpush2.bf16.msra.mxu0 %v5962
    %7252 = vmatprep.subr.bf16.mxu0 %v5951
    %7253 = vmatpush2.bf16.msra.mxu0 %v5950
    %7254 = vmatprep.subr.bf16.mxu0 %v5939
    %7255 = vmatpush2.bf16.msra.mxu0 %v5938
    %7256 = vmatprep.subr.bf16.mxu0 %v5927
    %7257 = vmatpush2.bf16.msra.mxu0 %v5926
    %7258 = vmatprep.subr.bf16.mxu0 %v5915
    %7259 = vmatpush2.bf16.msra.mxu0 %v5914
    %7260 = vmatprep.subr.bf16.mxu0 %v5903
    %7261 = vmatpush2.bf16.msra.mxu0 %v5902
    %7262 = vmatprep.subr.bf16.mxu0 %v5891
    %7263 = vmatpush2.bf16.msra.mxu0 %v5890
    %7264 = vmatprep.subr.bf16.mxu0 %v5879
    %7265 = vmatpush2.bf16.msra.mxu0 %v5878
    %7266 = vmatprep.mubr.bf16.mxu0 %v6986
    %7267 = vmatmul.mubr.bf16.gmra.mxu0 %v6985
    %v7268 = vpop.f32.mrf.mxu0
    %v7269 = vadd.f32 0.0, %v7268
    %v7270 = vpop.f32.mrf.mxu0
    %v7271 = vadd.f32 0.0, %v7270
    %v7272 = vpop.f32.mrf.mxu0
    %v7273 = vpop.f32.mrf.mxu0
    %7274 = vdwg.mxu0
    %7275 = vmatprep.subr.bf16.mxu0 %v6059
    %7276 = vmatpush1.bf16.msra.mxu0 %v6058
    %7277 = vmatprep.subr.bf16.mxu0 %v6047
    %7278 = vmatpush1.bf16.msra.mxu0 %v6046
    %7279 = vmatprep.subr.bf16.mxu0 %v6035
    %7280 = vmatpush1.bf16.msra.mxu0 %v6034
    %7281 = vmatprep.subr.bf16.mxu0 %v6023
    %7282 = vmatpush1.bf16.msra.mxu0 %v6022
    %7283 = vmatprep.subr.bf16.mxu0 %v6011
    %7284 = vmatpush1.bf16.msra.mxu0 %v6010
    %7285 = vmatprep.subr.bf16.mxu0 %v5999
    %7286 = vmatpush1.bf16.msra.mxu0 %v5998
    %7287 = vmatprep.subr.bf16.mxu0 %v5987
    %7288 = vmatpush1.bf16.msra.mxu0 %v5986
    %7289 = vmatprep.subr.bf16.mxu0 %v5975
    %7290 = vmatpush1.bf16.msra.mxu0 %v5974
    %7291 = vmatprep.subr.bf16.mxu0 0
    %7292 = vmatpush2.bf16.msra.mxu0 0
    %7293 = vmatprep.subr.bf16.mxu0 0
    %7294 = vmatpush2.bf16.msra.mxu0 0
    %7295 = vmatprep.subr.bf16.mxu0 0
    %7296 = vmatpush2.bf16.msra.mxu0 0
    %7297 = vmatprep.subr.bf16.mxu0 0
    %7298 = vmatpush2.bf16.msra.mxu0 0
    %7299 = vmatprep.subr.bf16.mxu0 0
    %7300 = vmatpush2.bf16.msra.mxu0 0
    %7301 = vmatprep.subr.bf16.mxu0 0
    %7302 = vmatpush2.bf16.msra.mxu0 0
    %7303 = vmatprep.subr.bf16.mxu0 0
    %7304 = vmatpush2.bf16.msra.mxu0 0
    %7305 = vmatprep.subr.bf16.mxu0 0
    %7306 = vmatpush2.bf16.msra.mxu0 0
    %7307 = vmatprep.mubr.bf16.mxu0 0
    %7308 = vmatmul.mubr.bf16.gmra.mxu0 %v6987
    %v7309 = vpop.f32.mrf.mxu0
    %v7310 = vadd.f32 %v7269, %v7309
    %v7311 = vpop.f32.mrf.mxu0
    %v7312 = vadd.f32 %v7271, %v7311
    %v7313 = vpop.f32.mrf.mxu0
    %v7314 = vpop.f32.mrf.mxu0
    %7315 = vdwg.mxu0
    %7316 = vmatprep.subr.bf16.mxu0 %v5869
    %7317 = vmatpush1.bf16.msra.mxu0 %v5868
    %7318 = vmatprep.subr.bf16.mxu0 %v5857
    %7319 = vmatpush1.bf16.msra.mxu0 %v5856
    %7320 = vmatprep.subr.bf16.mxu0 %v5845
    %7321 = vmatpush1.bf16.msra.mxu0 %v5844
    %7322 = vmatprep.subr.bf16.mxu0 %v5833
    %7323 = vmatpush1.bf16.msra.mxu0 %v5832
    %7324 = vmatprep.subr.bf16.mxu0 %v5821
    %7325 = vmatpush1.bf16.msra.mxu0 %v5820
    %7326 = vmatprep.subr.bf16.mxu0 %v5809
    %7327 = vmatpush1.bf16.msra.mxu0 %v5808
    %7328 = vmatprep.subr.bf16.mxu0 %v5797
    %7329 = vmatpush1.bf16.msra.mxu0 %v5796
    %7330 = vmatprep.subr.bf16.mxu0 %v5785
    %7331 = vmatpush1.bf16.msra.mxu0 %v5784
    %7332 = vmatprep.subr.bf16.mxu0 %v5965
    %7333 = vmatpush2.bf16.msra.mxu0 %v5964
    %7334 = vmatprep.subr.bf16.mxu0 %v5953
    %7335 = vmatpush2.bf16.msra.mxu0 %v5952
    %7336 = vmatprep.subr.bf16.mxu0 %v5941
    %7337 = vmatpush2.bf16.msra.mxu0 %v5940
    %7338 = vmatprep.subr.bf16.mxu0 %v5929
    %7339 = vmatpush2.bf16.msra.mxu0 %v5928
    %7340 = vmatprep.subr.bf16.mxu0 %v5917
    %7341 = vmatpush2.bf16.msra.mxu0 %v5916
    %7342 = vmatprep.subr.bf16.mxu0 %v5905
    %7343 = vmatpush2.bf16.msra.mxu0 %v5904
    %7344 = vmatprep.subr.bf16.mxu0 %v5893
    %7345 = vmatpush2.bf16.msra.mxu0 %v5892
    %7346 = vmatprep.subr.bf16.mxu0 %v5881
    %7347 = vmatpush2.bf16.msra.mxu0 %v5880
    %7348 = vmatprep.mubr.bf16.mxu0 %v6986
    %7349 = vmatmul.mubr.bf16.gmra.mxu0 %v6985
    %v7350 = vpop.f32.mrf.mxu0
    %v7351 = vadd.f32 0.0, %v7350
    %v7352 = vpop.f32.mrf.mxu0
    %v7353 = vadd.f32 0.0, %v7352
    %v7354 = vpop.f32.mrf.mxu0
    %v7355 = vpop.f32.mrf.mxu0
    %7356 = vdwg.mxu0
    %7357 = vmatprep.subr.bf16.mxu0 %v6061
    %7358 = vmatpush1.bf16.msra.mxu0 %v6060
    %7359 = vmatprep.subr.bf16.mxu0 %v6049
    %7360 = vmatpush1.bf16.msra.mxu0 %v6048
    %7361 = vmatprep.subr.bf16.mxu0 %v6037
    %7362 = vmatpush1.bf16.msra.mxu0 %v6036
    %7363 = vmatprep.subr.bf16.mxu0 %v6025
    %7364 = vmatpush1.bf16.msra.mxu0 %v6024
    %7365 = vmatprep.subr.bf16.mxu0 %v6013
    %7366 = vmatpush1.bf16.msra.mxu0 %v6012
    %7367 = vmatprep.subr.bf16.mxu0 %v6001
    %7368 = vmatpush1.bf16.msra.mxu0 %v6000
    %7369 = vmatprep.subr.bf16.mxu0 %v5989
    %7370 = vmatpush1.bf16.msra.mxu0 %v5988
    %7371 = vmatprep.subr.bf16.mxu0 %v5977
    %7372 = vmatpush1.bf16.msra.mxu0 %v5976
    %7373 = vmatprep.subr.bf16.mxu0 0
    %7374 = vmatpush2.bf16.msra.mxu0 0
    %7375 = vmatprep.subr.bf16.mxu0 0
    %7376 = vmatpush2.bf16.msra.mxu0 0
    %7377 = vmatprep.subr.bf16.mxu0 0
    %7378 = vmatpush2.bf16.msra.mxu0 0
    %7379 = vmatprep.subr.bf16.mxu0 0
    %7380 = vmatpush2.bf16.msra.mxu0 0
    %7381 = vmatprep.subr.bf16.mxu0 0
    %7382 = vmatpush2.bf16.msra.mxu0 0
    %7383 = vmatprep.subr.bf16.mxu0 0
    %7384 = vmatpush2.bf16.msra.mxu0 0
    %7385 = vmatprep.subr.bf16.mxu0 0
    %7386 = vmatpush2.bf16.msra.mxu0 0
    %7387 = vmatprep.subr.bf16.mxu0 0
    %7388 = vmatpush2.bf16.msra.mxu0 0
    %7389 = vmatprep.mubr.bf16.mxu0 0
    %7390 = vmatmul.mubr.bf16.gmra.mxu0 %v6987
    %v7391 = vpop.f32.mrf.mxu0
    %v7392 = vadd.f32 %v7351, %v7391
    %v7393 = vpop.f32.mrf.mxu0
    %v7394 = vadd.f32 %v7353, %v7393
    %v7395 = vpop.f32.mrf.mxu0
    %v7396 = vpop.f32.mrf.mxu0
    %7397 = vdwg.mxu0
    %7398 = vmatprep.subr.bf16.mxu0 %v5871
    %7399 = vmatpush1.bf16.msra.mxu0 %v5870
    %7400 = vmatprep.subr.bf16.mxu0 %v5859
    %7401 = vmatpush1.bf16.msra.mxu0 %v5858
    %7402 = vmatprep.subr.bf16.mxu0 %v5847
    %7403 = vmatpush1.bf16.msra.mxu0 %v5846
    %7404 = vmatprep.subr.bf16.mxu0 %v5835
    %7405 = vmatpush1.bf16.msra.mxu0 %v5834
    %7406 = vmatprep.subr.bf16.mxu0 %v5823
    %7407 = vmatpush1.bf16.msra.mxu0 %v5822
    %7408 = vmatprep.subr.bf16.mxu0 %v5811
    %7409 = vmatpush1.bf16.msra.mxu0 %v5810
    %7410 = vmatprep.subr.bf16.mxu0 %v5799
    %7411 = vmatpush1.bf16.msra.mxu0 %v5798
    %7412 = vmatprep.subr.bf16.mxu0 %v5787
    %7413 = vmatpush1.bf16.msra.mxu0 %v5786
    %7414 = vmatprep.subr.bf16.mxu0 %v5967
    %7415 = vmatpush2.bf16.msra.mxu0 %v5966
    %7416 = vmatprep.subr.bf16.mxu0 %v5955
    %7417 = vmatpush2.bf16.msra.mxu0 %v5954
    %7418 = vmatprep.subr.bf16.mxu0 %v5943
    %7419 = vmatpush2.bf16.msra.mxu0 %v5942
    %7420 = vmatprep.subr.bf16.mxu0 %v5931
    %7421 = vmatpush2.bf16.msra.mxu0 %v5930
    %7422 = vmatprep.subr.bf16.mxu0 %v5919
    %7423 = vmatpush2.bf16.msra.mxu0 %v5918
    %7424 = vmatprep.subr.bf16.mxu0 %v5907
    %7425 = vmatpush2.bf16.msra.mxu0 %v5906
    %7426 = vmatprep.subr.bf16.mxu0 %v5895
    %7427 = vmatpush2.bf16.msra.mxu0 %v5894
    %7428 = vmatprep.subr.bf16.mxu0 %v5883
    %7429 = vmatpush2.bf16.msra.mxu0 %v5882
    %7430 = vmatprep.mubr.bf16.mxu0 %v6986
    %7431 = vmatmul.mubr.bf16.gmra.mxu0 %v6985
    %v7432 = vpop.f32.mrf.mxu0
    %v7433 = vadd.f32 0.0, %v7432
    %v7434 = vpop.f32.mrf.mxu0
    %v7435 = vadd.f32 0.0, %v7434
    %v7436 = vpop.f32.mrf.mxu0
    %v7437 = vpop.f32.mrf.mxu0
    %7438 = vdwg.mxu0
    %7439 = vmatprep.subr.bf16.mxu0 %v6063
    %7440 = vmatpush1.bf16.msra.mxu0 %v6062
    %7441 = vmatprep.subr.bf16.mxu0 %v6051
    %7442 = vmatpush1.bf16.msra.mxu0 %v6050
    %7443 = vmatprep.subr.bf16.mxu0 %v6039
    %7444 = vmatpush1.bf16.msra.mxu0 %v6038
    %7445 = vmatprep.subr.bf16.mxu0 %v6027
    %7446 = vmatpush1.bf16.msra.mxu0 %v6026
    %7447 = vmatprep.subr.bf16.mxu0 %v6015
    %7448 = vmatpush1.bf16.msra.mxu0 %v6014
    %7449 = vmatprep.subr.bf16.mxu0 %v6003
    %7450 = vmatpush1.bf16.msra.mxu0 %v6002
    %7451 = vmatprep.subr.bf16.mxu0 %v5991
    %7452 = vmatpush1.bf16.msra.mxu0 %v5990
    %7453 = vmatprep.subr.bf16.mxu0 %v5979
    %7454 = vmatpush1.bf16.msra.mxu0 %v5978
    %7455 = vmatprep.subr.bf16.mxu0 0
    %7456 = vmatpush2.bf16.msra.mxu0 0
    %7457 = vmatprep.subr.bf16.mxu0 0
    %7458 = vmatpush2.bf16.msra.mxu0 0
    %7459 = vmatprep.subr.bf16.mxu0 0
    %7460 = vmatpush2.bf16.msra.mxu0 0
    %7461 = vmatprep.subr.bf16.mxu0 0
    %7462 = vmatpush2.bf16.msra.mxu0 0
    %7463 = vmatprep.subr.bf16.mxu0 0
    %7464 = vmatpush2.bf16.msra.mxu0 0
    %7465 = vmatprep.subr.bf16.mxu0 0
    %7466 = vmatpush2.bf16.msra.mxu0 0
    %7467 = vmatprep.subr.bf16.mxu0 0
    %7468 = vmatpush2.bf16.msra.mxu0 0
    %7469 = vmatprep.subr.bf16.mxu0 0
    %7470 = vmatpush2.bf16.msra.mxu0 0
    %7471 = vmatprep.mubr.bf16.mxu0 0
    %7472 = vmatmul.mubr.bf16.gmra.mxu0 %v6987
    %v7473 = vpop.f32.mrf.mxu0
    %v7474 = vadd.f32 %v7433, %v7473
    %v7475 = vpop.f32.mrf.mxu0
    %v7476 = vadd.f32 %v7435, %v7475
    %v7477 = vpop.f32.mrf.mxu0
    %v7478 = vpop.f32.mrf.mxu0
    %7479 = vdwg.mxu0
    %v7480 = vadd.f32 %v6973, %v7064
    %v7481 = vadd.f32 %v6974, %v7066
    %v7482 = vadd.f32 %v6975, %v7146
    %v7483 = vadd.f32 %v6976, %v7148
    %v7484 = vadd.f32 %v6977, %v7228
    %v7485 = vadd.f32 %v6978, %v7230
    %v7486 = vadd.f32 %v6979, %v7310
    %v7487 = vadd.f32 %v6980, %v7312
    %v7488 = vadd.f32 %v6981, %v7392
    %v7489 = vadd.f32 %v6982, %v7394
    %v7490 = vadd.f32 %v6983, %v7474
    %v7491 = vadd.f32 %v6984, %v7476
    %v7492 = vpack.c.bf16 %v7480, %v7480
    %v7493 = vpack.c.bf16 %v7481, %v7481
    %v7494 = vpack.c.bf16 %v7482, %v7482
    %v7495 = vpack.c.bf16 %v7483, %v7483
    %v7496 = vpack.c.bf16 %v7484, %v7484
    %v7497 = vpack.c.bf16 %v7485, %v7485
    %v7498 = vpack.c.bf16 %v7486, %v7486
    %v7499 = vpack.c.bf16 %v7487, %v7487
    %v7500 = vpack.c.bf16 %v7488, %v7488
    %v7501 = vpack.c.bf16 %v7489, %v7489
    %v7502 = vpack.c.bf16 %v7490, %v7490
    %v7503 = vpack.c.bf16 %v7491, %v7491
    %v7504 = vxor.u32 %v7492, 2147516416
    %v7505 = vxor.u32 %v7493, 2147516416
    %v7506 = vxor.u32 %v7494, 2147516416
    %v7508 = vmul.bf16 %v7504, 1069105081
    %v7509 = vpow.bf16.pop %v7508
    %v7511 = vmul.bf16 %v7505, 1069105081
    %v7512 = vpow.bf16.pop %v7511
    %v7514 = vmul.bf16 %v7506, 1069105081
    %v7515 = vpow.bf16.pop %v7514
    %v7516 = vadd.bf16 %v7509, 1065369472
    %v7517 = vadd.bf16 %v7512, 1065369472
    %v7518 = vadd.bf16 %v7515, 1065369472
    %v7519 = vrcp.bf16.pop %v7516
    %v7520 = vmul.bf16 1065369472, %v7519
    %v7521 = vrcp.bf16.pop %v7517
    %v7522 = vmul.bf16 1065369472, %v7521
    %v7523 = vrcp.bf16.pop %v7518
    %v7524 = vmul.bf16 1065369472, %v7523
    %v7525 = vunpack.c.l.bf16 %v7520
    %v7526 = vunpack.c.l.bf16 %v7522
    %v7527 = vunpack.c.l.bf16 %v7524
    %v7528 = vxor.u32 %v7495, 2147516416
    %v7529 = vxor.u32 %v7496, 2147516416
    %v7530 = vxor.u32 %v7497, 2147516416
    %v7532 = vmul.bf16 %v7528, 1069105081
    %v7533 = vpow.bf16.pop %v7532
    %v7535 = vmul.bf16 %v7529, 1069105081
    %v7536 = vpow.bf16.pop %v7535
    %v7538 = vmul.bf16 %v7530, 1069105081
    %v7539 = vpow.bf16.pop %v7538
    %v7540 = vadd.bf16 %v7533, 1065369472
    %v7541 = vadd.bf16 %v7536, 1065369472
    %v7542 = vadd.bf16 %v7539, 1065369472
    %v7543 = vrcp.bf16.pop %v7540
    %v7544 = vmul.bf16 1065369472, %v7543
    %v7545 = vrcp.bf16.pop %v7541
    %v7546 = vmul.bf16 1065369472, %v7545
    %v7547 = vrcp.bf16.pop %v7542
    %v7548 = vmul.bf16 1065369472, %v7547
    %v7549 = vunpack.c.l.bf16 %v7544
    %v7550 = vunpack.c.l.bf16 %v7546
    %v7551 = vunpack.c.l.bf16 %v7548
    %v7552 = vtanh.bf16.pop %v7498
    %v7553 = vtanh.bf16.pop %v7499
    %v7554 = vtanh.bf16.pop %v7500
    %v7555 = vunpack.c.l.bf16 %v7552
    %v7556 = vunpack.c.l.bf16 %v7553
    %v7557 = vunpack.c.l.bf16 %v7554
    %v7558 = vxor.u32 %v7501, 2147516416
    %v7559 = vxor.u32 %v7502, 2147516416
    %v7560 = vxor.u32 %v7503, 2147516416
    %v7562 = vmul.bf16 %v7558, 1069105081
    %v7563 = vpow.bf16.pop %v7562
    %v7565 = vmul.bf16 %v7559, 1069105081
    %v7566 = vpow.bf16.pop %v7565
    %v7568 = vmul.bf16 %v7560, 1069105081
    %v7569 = vpow.bf16.pop %v7568
    %v7570 = vadd.bf16 %v7563, 1065369472
    %v7571 = vadd.bf16 %v7566, 1065369472
    %v7572 = vadd.bf16 %v7569, 1065369472
    %v7573 = vrcp.bf16.pop %v7570
    %v7574 = vmul.bf16 1065369472, %v7573
    %v7575 = vrcp.bf16.pop %v7571
    %v7576 = vmul.bf16 1065369472, %v7575
    %v7577 = vrcp.bf16.pop %v7572
    %v7578 = vmul.bf16 1065369472, %v7577
    %v7579 = vunpack.c.l.bf16 %v7574
    %v7580 = vunpack.c.l.bf16 %v7576
    %v7581 = vunpack.c.l.bf16 %v7578
    %v7582 = vmul.f32 %v7549, %v6952
    %v7583 = vmul.f32 %v7550, %v6953
    %v7584 = vmul.f32 %v7551, %v6954
    %v7585 = vmul.f32 %v7525, %v7555
    %v7586 = vmul.f32 %v7526, %v7556
    %v7587 = vmul.f32 %v7527, %v7557
    %v7588 = vadd.f32 %v7582, %v7585
    %v7589 = vadd.f32 %v7583, %v7586
    %v7590 = vadd.f32 %v7584, %v7587
    %v7591 = vpack.c.bf16 %v7588, %v7588
    %v7592 = vpack.c.bf16 %v7589, %v7589
    %v7593 = vpack.c.bf16 %v7590, %v7590
    %v7594 = vtanh.bf16.pop %v7591
    %v7595 = vtanh.bf16.pop %v7592
    %v7596 = vtanh.bf16.pop %v7593
    %v7597 = vunpack.c.l.bf16 %v7594
    %v7598 = vunpack.c.l.bf16 %v7595
    %v7599 = vunpack.c.l.bf16 %v7596
    %v7600 = vmul.f32 %v7579, %v7597
    %v7601 = vmul.f32 %v7580, %v7598
    %v7602 = vmul.f32 %v7581, %v7599
    %v7603 = vadd.f32 %v6967, %v7600
    %v7604 = vadd.f32 %v6968, %v7601
    %v7605 = vadd.f32 %v6969, %v7602
    %s7606 = smul.u32 2, 12
    %s7607 = smul.addr %s7606, 8
    %s7608 = scalar_lea.vmem [#allocation2], %s7607
    %v7609 = vld [vmem:[%s7608] sm:$0xff]
    %v7610 = vld [vmem:[%s7608 + $0x8] sm:$0xff]
    %v7611 = vld [vmem:[%s7608 + $0x10] sm:$0xff]
    %v7612 = vld [vmem:[%s7608 + $0x18] sm:$0xff]
    %v7613 = vld [vmem:[%s7608 + $0x20] sm:$0xff]
    %v7614 = vld [vmem:[%s7608 + $0x28] sm:$0xff]
    %v7615 = vld [vmem:[%s7608 + $0x30] sm:$0xff]
    %v7616 = vld [vmem:[%s7608 + $0x38] sm:$0xff]
    %v7617 = vld [vmem:[%s7608 + $0x40] sm:$0xff]
    %v7618 = vld [vmem:[%s7608 + $0x48] sm:$0xff]
    %v7619 = vld [vmem:[%s7608 + $0x50] sm:$0xff]
    %v7620 = vld [vmem:[%s7608 + $0x58] sm:$0xff]
    %v7621 = vpack.c.bf16 %v7600, %v7600
    %v7622 = vpack.c.bf16 %v7601, %v7601
    %v7623 = vpack.c.bf16 %v7602, %v7602
    %7624 = vmatprep.subr.bf16.mxu0 %v5861
    %7625 = vmatpush1.bf16.msra.mxu0 %v5860
    %7626 = vmatprep.subr.bf16.mxu0 %v5849
    %7627 = vmatpush1.bf16.msra.mxu0 %v5848
    %7628 = vmatprep.subr.bf16.mxu0 %v5837
    %7629 = vmatpush1.bf16.msra.mxu0 %v5836
    %7630 = vmatprep.subr.bf16.mxu0 %v5825
    %7631 = vmatpush1.bf16.msra.mxu0 %v5824
    %7632 = vmatprep.subr.bf16.mxu0 %v5813
    %7633 = vmatpush1.bf16.msra.mxu0 %v5812
    %7634 = vmatprep.subr.bf16.mxu0 %v5801
    %7635 = vmatpush1.bf16.msra.mxu0 %v5800
    %7636 = vmatprep.subr.bf16.mxu0 %v5789
    %7637 = vmatpush1.bf16.msra.mxu0 %v5788
    %7638 = vmatprep.subr.bf16.mxu0 %v5777
    %7639 = vmatpush1.bf16.msra.mxu0 %v5776
    %7640 = vmatprep.subr.bf16.mxu0 %v5957
    %7641 = vmatpush2.bf16.msra.mxu0 %v5956
    %7642 = vmatprep.subr.bf16.mxu0 %v5945
    %7643 = vmatpush2.bf16.msra.mxu0 %v5944
    %7644 = vmatprep.subr.bf16.mxu0 %v5933
    %7645 = vmatpush2.bf16.msra.mxu0 %v5932
    %7646 = vmatprep.subr.bf16.mxu0 %v5921
    %7647 = vmatpush2.bf16.msra.mxu0 %v5920
    %7648 = vmatprep.subr.bf16.mxu0 %v5909
    %7649 = vmatpush2.bf16.msra.mxu0 %v5908
    %7650 = vmatprep.subr.bf16.mxu0 %v5897
    %7651 = vmatpush2.bf16.msra.mxu0 %v5896
    %7652 = vmatprep.subr.bf16.mxu0 %v5885
    %7653 = vmatpush2.bf16.msra.mxu0 %v5884
    %7654 = vmatprep.subr.bf16.mxu0 %v5873
    %7655 = vmatpush2.bf16.msra.mxu0 %v5872
    %7656 = vmatprep.mubr.bf16.mxu0 %v7622
    %7657 = vmatmul.mubr.bf16.gmra.mxu0 %v7621
    %v7658 = vpop.f32.mrf.mxu0
    %v7659 = vadd.f32 0.0, %v7658
    %v7660 = vpop.f32.mrf.mxu0
    %v7661 = vadd.f32 0.0, %v7660
    %v7662 = vpop.f32.mrf.mxu0
    %v7663 = vpop.f32.mrf.mxu0
    %7664 = vdwg.mxu0
    %7665 = vmatprep.subr.bf16.mxu0 %v6053
    %7666 = vmatpush1.bf16.msra.mxu0 %v6052
    %7667 = vmatprep.subr.bf16.mxu0 %v6041
    %7668 = vmatpush1.bf16.msra.mxu0 %v6040
    %7669 = vmatprep.subr.bf16.mxu0 %v6029
    %7670 = vmatpush1.bf16.msra.mxu0 %v6028
    %7671 = vmatprep.subr.bf16.mxu0 %v6017
    %7672 = vmatpush1.bf16.msra.mxu0 %v6016
    %7673 = vmatprep.subr.bf16.mxu0 %v6005
    %7674 = vmatpush1.bf16.msra.mxu0 %v6004
    %7675 = vmatprep.subr.bf16.mxu0 %v5993
    %7676 = vmatpush1.bf16.msra.mxu0 %v5992
    %7677 = vmatprep.subr.bf16.mxu0 %v5981
    %7678 = vmatpush1.bf16.msra.mxu0 %v5980
    %7679 = vmatprep.subr.bf16.mxu0 %v5969
    %7680 = vmatpush1.bf16.msra.mxu0 %v5968
    %7681 = vmatprep.subr.bf16.mxu0 0
    %7682 = vmatpush2.bf16.msra.mxu0 0
    %7683 = vmatprep.subr.bf16.mxu0 0
    %7684 = vmatpush2.bf16.msra.mxu0 0
    %7685 = vmatprep.subr.bf16.mxu0 0
    %7686 = vmatpush2.bf16.msra.mxu0 0
    %7687 = vmatprep.subr.bf16.mxu0 0
    %7688 = vmatpush2.bf16.msra.mxu0 0
    %7689 = vmatprep.subr.bf16.mxu0 0
    %7690 = vmatpush2.bf16.msra.mxu0 0
    %7691 = vmatprep.subr.bf16.mxu0 0
    %7692 = vmatpush2.bf16.msra.mxu0 0
    %7693 = vmatprep.subr.bf16.mxu0 0
    %7694 = vmatpush2.bf16.msra.mxu0 0
    %7695 = vmatprep.subr.bf16.mxu0 0
    %7696 = vmatpush2.bf16.msra.mxu0 0
    %7697 = vmatprep.mubr.bf16.mxu0 0
    %7698 = vmatmul.mubr.bf16.gmra.mxu0 %v7623
    %v7699 = vpop.f32.mrf.mxu0
    %v7700 = vadd.f32 %v7659, %v7699
    %v7701 = vpop.f32.mrf.mxu0
    %v7702 = vadd.f32 %v7661, %v7701
    %v7703 = vpop.f32.mrf.mxu0
    %v7704 = vpop.f32.mrf.mxu0
    %7705 = vdwg.mxu0
    %7706 = vmatprep.subr.bf16.mxu0 %v5863
    %7707 = vmatpush1.bf16.msra.mxu0 %v5862
    %7708 = vmatprep.subr.bf16.mxu0 %v5851
    %7709 = vmatpush1.bf16.msra.mxu0 %v5850
    %7710 = vmatprep.subr.bf16.mxu0 %v5839
    %7711 = vmatpush1.bf16.msra.mxu0 %v5838
    %7712 = vmatprep.subr.bf16.mxu0 %v5827
    %7713 = vmatpush1.bf16.msra.mxu0 %v5826
    %7714 = vmatprep.subr.bf16.mxu0 %v5815
    %7715 = vmatpush1.bf16.msra.mxu0 %v5814
    %7716 = vmatprep.subr.bf16.mxu0 %v5803
    %7717 = vmatpush1.bf16.msra.mxu0 %v5802
    %7718 = vmatprep.subr.bf16.mxu0 %v5791
    %7719 = vmatpush1.bf16.msra.mxu0 %v5790
    %7720 = vmatprep.subr.bf16.mxu0 %v5779
    %7721 = vmatpush1.bf16.msra.mxu0 %v5778
    %7722 = vmatprep.subr.bf16.mxu0 %v5959
    %7723 = vmatpush2.bf16.msra.mxu0 %v5958
    %7724 = vmatprep.subr.bf16.mxu0 %v5947
    %7725 = vmatpush2.bf16.msra.mxu0 %v5946
    %7726 = vmatprep.subr.bf16.mxu0 %v5935
    %7727 = vmatpush2.bf16.msra.mxu0 %v5934
    %7728 = vmatprep.subr.bf16.mxu0 %v5923
    %7729 = vmatpush2.bf16.msra.mxu0 %v5922
    %7730 = vmatprep.subr.bf16.mxu0 %v5911
    %7731 = vmatpush2.bf16.msra.mxu0 %v5910
    %7732 = vmatprep.subr.bf16.mxu0 %v5899
    %7733 = vmatpush2.bf16.msra.mxu0 %v5898
    %7734 = vmatprep.subr.bf16.mxu0 %v5887
    %7735 = vmatpush2.bf16.msra.mxu0 %v5886
    %7736 = vmatprep.subr.bf16.mxu0 %v5875
    %7737 = vmatpush2.bf16.msra.mxu0 %v5874
    %7738 = vmatprep.mubr.bf16.mxu0 %v7622
    %7739 = vmatmul.mubr.bf16.gmra.mxu0 %v7621
    %v7740 = vpop.f32.mrf.mxu0
    %v7741 = vadd.f32 0.0, %v7740
    %v7742 = vpop.f32.mrf.mxu0
    %v7743 = vadd.f32 0.0, %v7742
    %v7744 = vpop.f32.mrf.mxu0
    %v7745 = vpop.f32.mrf.mxu0
    %7746 = vdwg.mxu0
    %7747 = vmatprep.subr.bf16.mxu0 %v6055
    %7748 = vmatpush1.bf16.msra.mxu0 %v6054
    %7749 = vmatprep.subr.bf16.mxu0 %v6043
    %7750 = vmatpush1.bf16.msra.mxu0 %v6042
    %7751 = vmatprep.subr.bf16.mxu0 %v6031
    %7752 = vmatpush1.bf16.msra.mxu0 %v6030
    %7753 = vmatprep.subr.bf16.mxu0 %v6019
    %7754 = vmatpush1.bf16.msra.mxu0 %v6018
    %7755 = vmatprep.subr.bf16.mxu0 %v6007
    %7756 = vmatpush1.bf16.msra.mxu0 %v6006
    %7757 = vmatprep.subr.bf16.mxu0 %v5995
    %7758 = vmatpush1.bf16.msra.mxu0 %v5994
    %7759 = vmatprep.subr.bf16.mxu0 %v5983
    %7760 = vmatpush1.bf16.msra.mxu0 %v5982
    %7761 = vmatprep.subr.bf16.mxu0 %v5971
    %7762 = vmatpush1.bf16.msra.mxu0 %v5970
    %7763 = vmatprep.subr.bf16.mxu0 0
    %7764 = vmatpush2.bf16.msra.mxu0 0
    %7765 = vmatprep.subr.bf16.mxu0 0
    %7766 = vmatpush2.bf16.msra.mxu0 0
    %7767 = vmatprep.subr.bf16.mxu0 0
    %7768 = vmatpush2.bf16.msra.mxu0 0
    %7769 = vmatprep.subr.bf16.mxu0 0
    %7770 = vmatpush2.bf16.msra.mxu0 0
    %7771 = vmatprep.subr.bf16.mxu0 0
    %7772 = vmatpush2.bf16.msra.mxu0 0
    %7773 = vmatprep.subr.bf16.mxu0 0
    %7774 = vmatpush2.bf16.msra.mxu0 0
    %7775 = vmatprep.subr.bf16.mxu0 0
    %7776 = vmatpush2.bf16.msra.mxu0 0
    %7777 = vmatprep.subr.bf16.mxu0 0
    %7778 = vmatpush2.bf16.msra.mxu0 0
    %7779 = vmatprep.mubr.bf16.mxu0 0
    %7780 = vmatmul.mubr.bf16.gmra.mxu0 %v7623
    %v7781 = vpop.f32.mrf.mxu0
    %v7782 = vadd.f32 %v7741, %v7781
    %v7783 = vpop.f32.mrf.mxu0
    %v7784 = vadd.f32 %v7743, %v7783
    %v7785 = vpop.f32.mrf.mxu0
    %v7786 = vpop.f32.mrf.mxu0
    %7787 = vdwg.mxu0
    %7788 = vmatprep.subr.bf16.mxu0 %v5865
    %7789 = vmatpush1.bf16.msra.mxu0 %v5864
    %7790 = vmatprep.subr.bf16.mxu0 %v5853
    %7791 = vmatpush1.bf16.msra.mxu0 %v5852
    %7792 = vmatprep.subr.bf16.mxu0 %v5841
    %7793 = vmatpush1.bf16.msra.mxu0 %v5840
    %7794 = vmatprep.subr.bf16.mxu0 %v5829
    %7795 = vmatpush1.bf16.msra.mxu0 %v5828
    %7796 = vmatprep.subr.bf16.mxu0 %v5817
    %7797 = vmatpush1.bf16.msra.mxu0 %v5816
    %7798 = vmatprep.subr.bf16.mxu0 %v5805
    %7799 = vmatpush1.bf16.msra.mxu0 %v5804
    %7800 = vmatprep.subr.bf16.mxu0 %v5793
    %7801 = vmatpush1.bf16.msra.mxu0 %v5792
    %7802 = vmatprep.subr.bf16.mxu0 %v5781
    %7803 = vmatpush1.bf16.msra.mxu0 %v5780
    %7804 = vmatprep.subr.bf16.mxu0 %v5961
    %7805 = vmatpush2.bf16.msra.mxu0 %v5960
    %7806 = vmatprep.subr.bf16.mxu0 %v5949
    %7807 = vmatpush2.bf16.msra.mxu0 %v5948
    %7808 = vmatprep.subr.bf16.mxu0 %v5937
    %7809 = vmatpush2.bf16.msra.mxu0 %v5936
    %7810 = vmatprep.subr.bf16.mxu0 %v5925
    %7811 = vmatpush2.bf16.msra.mxu0 %v5924
    %7812 = vmatprep.subr.bf16.mxu0 %v5913
    %7813 = vmatpush2.bf16.msra.mxu0 %v5912
    %7814 = vmatprep.subr.bf16.mxu0 %v5901
    %7815 = vmatpush2.bf16.msra.mxu0 %v5900
    %7816 = vmatprep.subr.bf16.mxu0 %v5889
    %7817 = vmatpush2.bf16.msra.mxu0 %v5888
    %7818 = vmatprep.subr.bf16.mxu0 %v5877
    %7819 = vmatpush2.bf16.msra.mxu0 %v5876
    %7820 = vmatprep.mubr.bf16.mxu0 %v7622
    %7821 = vmatmul.mubr.bf16.gmra.mxu0 %v7621
    %v7822 = vpop.f32.mrf.mxu0
    %v7823 = vadd.f32 0.0, %v7822
    %v7824 = vpop.f32.mrf.mxu0
    %v7825 = vadd.f32 0.0, %v7824
    %v7826 = vpop.f32.mrf.mxu0
    %v7827 = vpop.f32.mrf.mxu0
    %7828 = vdwg.mxu0
    %7829 = vmatprep.subr.bf16.mxu0 %v6057
    %7830 = vmatpush1.bf16.msra.mxu0 %v6056
    %7831 = vmatprep.subr.bf16.mxu0 %v6045
    %7832 = vmatpush1.bf16.msra.mxu0 %v6044
    %7833 = vmatprep.subr.bf16.mxu0 %v6033
    %7834 = vmatpush1.bf16.msra.mxu0 %v6032
    %7835 = vmatprep.subr.bf16.mxu0 %v6021
    %7836 = vmatpush1.bf16.msra.mxu0 %v6020
    %7837 = vmatprep.subr.bf16.mxu0 %v6009
    %7838 = vmatpush1.bf16.msra.mxu0 %v6008
    %7839 = vmatprep.subr.bf16.mxu0 %v5997
    %7840 = vmatpush1.bf16.msra.mxu0 %v5996
    %7841 = vmatprep.subr.bf16.mxu0 %v5985
    %7842 = vmatpush1.bf16.msra.mxu0 %v5984
    %7843 = vmatprep.subr.bf16.mxu0 %v5973
    %7844 = vmatpush1.bf16.msra.mxu0 %v5972
    %7845 = vmatprep.subr.bf16.mxu0 0
    %7846 = vmatpush2.bf16.msra.mxu0 0
    %7847 = vmatprep.subr.bf16.mxu0 0
    %7848 = vmatpush2.bf16.msra.mxu0 0
    %7849 = vmatprep.subr.bf16.mxu0 0
    %7850 = vmatpush2.bf16.msra.mxu0 0
    %7851 = vmatprep.subr.bf16.mxu0 0
    %7852 = vmatpush2.bf16.msra.mxu0 0
    %7853 = vmatprep.subr.bf16.mxu0 0
    %7854 = vmatpush2.bf16.msra.mxu0 0
    %7855 = vmatprep.subr.bf16.mxu0 0
    %7856 = vmatpush2.bf16.msra.mxu0 0
    %7857 = vmatprep.subr.bf16.mxu0 0
    %7858 = vmatpush2.bf16.msra.mxu0 0
    %7859 = vmatprep.subr.bf16.mxu0 0
    %7860 = vmatpush2.bf16.msra.mxu0 0
    %7861 = vmatprep.mubr.bf16.mxu0 0
    %7862 = vmatmul.mubr.bf16.gmra.mxu0 %v7623
    %v7863 = vpop.f32.mrf.mxu0
    %v7864 = vadd.f32 %v7823, %v7863
    %v7865 = vpop.f32.mrf.mxu0
    %v7866 = vadd.f32 %v7825, %v7865
    %v7867 = vpop.f32.mrf.mxu0
    %v7868 = vpop.f32.mrf.mxu0
    %7869 = vdwg.mxu0
    %7870 = vmatprep.subr.bf16.mxu0 %v5867
    %7871 = vmatpush1.bf16.msra.mxu0 %v5866
    %7872 = vmatprep.subr.bf16.mxu0 %v5855
    %7873 = vmatpush1.bf16.msra.mxu0 %v5854
    %7874 = vmatprep.subr.bf16.mxu0 %v5843
    %7875 = vmatpush1.bf16.msra.mxu0 %v5842
    %7876 = vmatprep.subr.bf16.mxu0 %v5831
    %7877 = vmatpush1.bf16.msra.mxu0 %v5830
    %7878 = vmatprep.subr.bf16.mxu0 %v5819
    %7879 = vmatpush1.bf16.msra.mxu0 %v5818
    %7880 = vmatprep.subr.bf16.mxu0 %v5807
    %7881 = vmatpush1.bf16.msra.mxu0 %v5806
    %7882 = vmatprep.subr.bf16.mxu0 %v5795
    %7883 = vmatpush1.bf16.msra.mxu0 %v5794
    %7884 = vmatprep.subr.bf16.mxu0 %v5783
    %7885 = vmatpush1.bf16.msra.mxu0 %v5782
    %7886 = vmatprep.subr.bf16.mxu0 %v5963
    %7887 = vmatpush2.bf16.msra.mxu0 %v5962
    %7888 = vmatprep.subr.bf16.mxu0 %v5951
    %7889 = vmatpush2.bf16.msra.mxu0 %v5950
    %7890 = vmatprep.subr.bf16.mxu0 %v5939
    %7891 = vmatpush2.bf16.msra.mxu0 %v5938
    %7892 = vmatprep.subr.bf16.mxu0 %v5927
    %7893 = vmatpush2.bf16.msra.mxu0 %v5926
    %7894 = vmatprep.subr.bf16.mxu0 %v5915
    %7895 = vmatpush2.bf16.msra.mxu0 %v5914
    %7896 = vmatprep.subr.bf16.mxu0 %v5903
    %7897 = vmatpush2.bf16.msra.mxu0 %v5902
    %7898 = vmatprep.subr.bf16.mxu0 %v5891
    %7899 = vmatpush2.bf16.msra.mxu0 %v5890
    %7900 = vmatprep.subr.bf16.mxu0 %v5879
    %7901 = vmatpush2.bf16.msra.mxu0 %v5878
    %7902 = vmatprep.mubr.bf16.mxu0 %v7622
    %7903 = vmatmul.mubr.bf16.gmra.mxu0 %v7621
    %v7904 = vpop.f32.mrf.mxu0
    %v7905 = vadd.f32 0.0, %v7904
    %v7906 = vpop.f32.mrf.mxu0
    %v7907 = vadd.f32 0.0, %v7906
    %v7908 = vpop.f32.mrf.mxu0
    %v7909 = vpop.f32.mrf.mxu0
    %7910 = vdwg.mxu0
    %7911 = vmatprep.subr.bf16.mxu0 %v6059
    %7912 = vmatpush1.bf16.msra.mxu0 %v6058
    %7913 = vmatprep.subr.bf16.mxu0 %v6047
    %7914 = vmatpush1.bf16.msra.mxu0 %v6046
    %7915 = vmatprep.subr.bf16.mxu0 %v6035
    %7916 = vmatpush1.bf16.msra.mxu0 %v6034
    %7917 = vmatprep.subr.bf16.mxu0 %v6023
    %7918 = vmatpush1.bf16.msra.mxu0 %v6022
    %7919 = vmatprep.subr.bf16.mxu0 %v6011
    %7920 = vmatpush1.bf16.msra.mxu0 %v6010
    %7921 = vmatprep.subr.bf16.mxu0 %v5999
    %7922 = vmatpush1.bf16.msra.mxu0 %v5998
    %7923 = vmatprep.subr.bf16.mxu0 %v5987
    %7924 = vmatpush1.bf16.msra.mxu0 %v5986
    %7925 = vmatprep.subr.bf16.mxu0 %v5975
    %7926 = vmatpush1.bf16.msra.mxu0 %v5974
    %7927 = vmatprep.subr.bf16.mxu0 0
    %7928 = vmatpush2.bf16.msra.mxu0 0
    %7929 = vmatprep.subr.bf16.mxu0 0
    %7930 = vmatpush2.bf16.msra.mxu0 0
    %7931 = vmatprep.subr.bf16.mxu0 0
    %7932 = vmatpush2.bf16.msra.mxu0 0
    %7933 = vmatprep.subr.bf16.mxu0 0
    %7934 = vmatpush2.bf16.msra.mxu0 0
    %7935 = vmatprep.subr.bf16.mxu0 0
    %7936 = vmatpush2.bf16.msra.mxu0 0
    %7937 = vmatprep.subr.bf16.mxu0 0
    %7938 = vmatpush2.bf16.msra.mxu0 0
    %7939 = vmatprep.subr.bf16.mxu0 0
    %7940 = vmatpush2.bf16.msra.mxu0 0
    %7941 = vmatprep.subr.bf16.mxu0 0
    %7942 = vmatpush2.bf16.msra.mxu0 0
    %7943 = vmatprep.mubr.bf16.mxu0 0
    %7944 = vmatmul.mubr.bf16.gmra.mxu0 %v7623
    %v7945 = vpop.f32.mrf.mxu0
    %v7946 = vadd.f32 %v7905, %v7945
    %v7947 = vpop.f32.mrf.mxu0
    %v7948 = vadd.f32 %v7907, %v7947
    %v7949 = vpop.f32.mrf.mxu0
    %v7950 = vpop.f32.mrf.mxu0
    %7951 = vdwg.mxu0
    %7952 = vmatprep.subr.bf16.mxu0 %v5869
    %7953 = vmatpush1.bf16.msra.mxu0 %v5868
    %7954 = vmatprep.subr.bf16.mxu0 %v5857
    %7955 = vmatpush1.bf16.msra.mxu0 %v5856
    %7956 = vmatprep.subr.bf16.mxu0 %v5845
    %7957 = vmatpush1.bf16.msra.mxu0 %v5844
    %7958 = vmatprep.subr.bf16.mxu0 %v5833
    %7959 = vmatpush1.bf16.msra.mxu0 %v5832
    %7960 = vmatprep.subr.bf16.mxu0 %v5821
    %7961 = vmatpush1.bf16.msra.mxu0 %v5820
    %7962 = vmatprep.subr.bf16.mxu0 %v5809
    %7963 = vmatpush1.bf16.msra.mxu0 %v5808
    %7964 = vmatprep.subr.bf16.mxu0 %v5797
    %7965 = vmatpush1.bf16.msra.mxu0 %v5796
    %7966 = vmatprep.subr.bf16.mxu0 %v5785
    %7967 = vmatpush1.bf16.msra.mxu0 %v5784
    %7968 = vmatprep.subr.bf16.mxu0 %v5965
    %7969 = vmatpush2.bf16.msra.mxu0 %v5964
    %7970 = vmatprep.subr.bf16.mxu0 %v5953
    %7971 = vmatpush2.bf16.msra.mxu0 %v5952
    %7972 = vmatprep.subr.bf16.mxu0 %v5941
    %7973 = vmatpush2.bf16.msra.mxu0 %v5940
    %7974 = vmatprep.subr.bf16.mxu0 %v5929
    %7975 = vmatpush2.bf16.msra.mxu0 %v5928
    %7976 = vmatprep.subr.bf16.mxu0 %v5917
    %7977 = vmatpush2.bf16.msra.mxu0 %v5916
    %7978 = vmatprep.subr.bf16.mxu0 %v5905
    %7979 = vmatpush2.bf16.msra.mxu0 %v5904
    %7980 = vmatprep.subr.bf16.mxu0 %v5893
    %7981 = vmatpush2.bf16.msra.mxu0 %v5892
    %7982 = vmatprep.subr.bf16.mxu0 %v5881
    %7983 = vmatpush2.bf16.msra.mxu0 %v5880
    %7984 = vmatprep.mubr.bf16.mxu0 %v7622
    %7985 = vmatmul.mubr.bf16.gmra.mxu0 %v7621
    %v7986 = vpop.f32.mrf.mxu0
    %v7987 = vadd.f32 0.0, %v7986
    %v7988 = vpop.f32.mrf.mxu0
    %v7989 = vadd.f32 0.0, %v7988
    %v7990 = vpop.f32.mrf.mxu0
    %v7991 = vpop.f32.mrf.mxu0
    %7992 = vdwg.mxu0
    %7993 = vmatprep.subr.bf16.mxu0 %v6061
    %7994 = vmatpush1.bf16.msra.mxu0 %v6060
    %7995 = vmatprep.subr.bf16.mxu0 %v6049
    %7996 = vmatpush1.bf16.msra.mxu0 %v6048
    %7997 = vmatprep.subr.bf16.mxu0 %v6037
    %7998 = vmatpush1.bf16.msra.mxu0 %v6036
    %7999 = vmatprep.subr.bf16.mxu0 %v6025
    %8000 = vmatpush1.bf16.msra.mxu0 %v6024
    %8001 = vmatprep.subr.bf16.mxu0 %v6013
    %8002 = vmatpush1.bf16.msra.mxu0 %v6012
    %8003 = vmatprep.subr.bf16.mxu0 %v6001
    %8004 = vmatpush1.bf16.msra.mxu0 %v6000
    %8005 = vmatprep.subr.bf16.mxu0 %v5989
    %8006 = vmatpush1.bf16.msra.mxu0 %v5988
    %8007 = vmatprep.subr.bf16.mxu0 %v5977
    %8008 = vmatpush1.bf16.msra.mxu0 %v5976
    %8009 = vmatprep.subr.bf16.mxu0 0
    %8010 = vmatpush2.bf16.msra.mxu0 0
    %8011 = vmatprep.subr.bf16.mxu0 0
    %8012 = vmatpush2.bf16.msra.mxu0 0
    %8013 = vmatprep.subr.bf16.mxu0 0
    %8014 = vmatpush2.bf16.msra.mxu0 0
    %8015 = vmatprep.subr.bf16.mxu0 0
    %8016 = vmatpush2.bf16.msra.mxu0 0
    %8017 = vmatprep.subr.bf16.mxu0 0
    %8018 = vmatpush2.bf16.msra.mxu0 0
    %8019 = vmatprep.subr.bf16.mxu0 0
    %8020 = vmatpush2.bf16.msra.mxu0 0
    %8021 = vmatprep.subr.bf16.mxu0 0
    %8022 = vmatpush2.bf16.msra.mxu0 0
    %8023 = vmatprep.subr.bf16.mxu0 0
    %8024 = vmatpush2.bf16.msra.mxu0 0
    %8025 = vmatprep.mubr.bf16.mxu0 0
    %8026 = vmatmul.mubr.bf16.gmra.mxu0 %v7623
    %v8027 = vpop.f32.mrf.mxu0
    %v8028 = vadd.f32 %v7987, %v8027
    %v8029 = vpop.f32.mrf.mxu0
    %v8030 = vadd.f32 %v7989, %v8029
    %v8031 = vpop.f32.mrf.mxu0
    %v8032 = vpop.f32.mrf.mxu0
    %8033 = vdwg.mxu0
    %8034 = vmatprep.subr.bf16.mxu0 %v5871
    %8035 = vmatpush1.bf16.msra.mxu0 %v5870
    %8036 = vmatprep.subr.bf16.mxu0 %v5859
    %8037 = vmatpush1.bf16.msra.mxu0 %v5858
    %8038 = vmatprep.subr.bf16.mxu0 %v5847
    %8039 = vmatpush1.bf16.msra.mxu0 %v5846
    %8040 = vmatprep.subr.bf16.mxu0 %v5835
    %8041 = vmatpush1.bf16.msra.mxu0 %v5834
    %8042 = vmatprep.subr.bf16.mxu0 %v5823
    %8043 = vmatpush1.bf16.msra.mxu0 %v5822
    %8044 = vmatprep.subr.bf16.mxu0 %v5811
    %8045 = vmatpush1.bf16.msra.mxu0 %v5810
    %8046 = vmatprep.subr.bf16.mxu0 %v5799
    %8047 = vmatpush1.bf16.msra.mxu0 %v5798
    %8048 = vmatprep.subr.bf16.mxu0 %v5787
    %8049 = vmatpush1.bf16.msra.mxu0 %v5786
    %8050 = vmatprep.subr.bf16.mxu0 %v5967
    %8051 = vmatpush2.bf16.msra.mxu0 %v5966
    %8052 = vmatprep.subr.bf16.mxu0 %v5955
    %8053 = vmatpush2.bf16.msra.mxu0 %v5954
    %8054 = vmatprep.subr.bf16.mxu0 %v5943
    %8055 = vmatpush2.bf16.msra.mxu0 %v5942
    %8056 = vmatprep.subr.bf16.mxu0 %v5931
    %8057 = vmatpush2.bf16.msra.mxu0 %v5930
    %8058 = vmatprep.subr.bf16.mxu0 %v5919
    %8059 = vmatpush2.bf16.msra.mxu0 %v5918
    %8060 = vmatprep.subr.bf16.mxu0 %v5907
    %8061 = vmatpush2.bf16.msra.mxu0 %v5906
    %8062 = vmatprep.subr.bf16.mxu0 %v5895
    %8063 = vmatpush2.bf16.msra.mxu0 %v5894
    %8064 = vmatprep.subr.bf16.mxu0 %v5883
    %8065 = vmatpush2.bf16.msra.mxu0 %v5882
    %8066 = vmatprep.mubr.bf16.mxu0 %v7622
    %8067 = vmatmul.mubr.bf16.gmra.mxu0 %v7621
    %v8068 = vpop.f32.mrf.mxu0
    %v8069 = vadd.f32 0.0, %v8068
    %v8070 = vpop.f32.mrf.mxu0
    %v8071 = vadd.f32 0.0, %v8070
    %v8072 = vpop.f32.mrf.mxu0
    %v8073 = vpop.f32.mrf.mxu0
    %8074 = vdwg.mxu0
    %8075 = vmatprep.subr.bf16.mxu0 %v6063
    %8076 = vmatpush1.bf16.msra.mxu0 %v6062
    %8077 = vmatprep.subr.bf16.mxu0 %v6051
    %8078 = vmatpush1.bf16.msra.mxu0 %v6050
    %8079 = vmatprep.subr.bf16.mxu0 %v6039
    %8080 = vmatpush1.bf16.msra.mxu0 %v6038
    %8081 = vmatprep.subr.bf16.mxu0 %v6027
    %8082 = vmatpush1.bf16.msra.mxu0 %v6026
    %8083 = vmatprep.subr.bf16.mxu0 %v6015
    %8084 = vmatpush1.bf16.msra.mxu0 %v6014
    %8085 = vmatprep.subr.bf16.mxu0 %v6003
    %8086 = vmatpush1.bf16.msra.mxu0 %v6002
    %8087 = vmatprep.subr.bf16.mxu0 %v5991
    %8088 = vmatpush1.bf16.msra.mxu0 %v5990
    %8089 = vmatprep.subr.bf16.mxu0 %v5979
    %8090 = vmatpush1.bf16.msra.mxu0 %v5978
    %8091 = vmatprep.subr.bf16.mxu0 0
    %8092 = vmatpush2.bf16.msra.mxu0 0
    %8093 = vmatprep.subr.bf16.mxu0 0
    %8094 = vmatpush2.bf16.msra.mxu0 0
    %8095 = vmatprep.subr.bf16.mxu0 0
    %8096 = vmatpush2.bf16.msra.mxu0 0
    %8097 = vmatprep.subr.bf16.mxu0 0
    %8098 = vmatpush2.bf16.msra.mxu0 0
    %8099 = vmatprep.subr.bf16.mxu0 0
    %8100 = vmatpush2.bf16.msra.mxu0 0
    %8101 = vmatprep.subr.bf16.mxu0 0
    %8102 = vmatpush2.bf16.msra.mxu0 0
    %8103 = vmatprep.subr.bf16.mxu0 0
    %8104 = vmatpush2.bf16.msra.mxu0 0
    %8105 = vmatprep.subr.bf16.mxu0 0
    %8106 = vmatpush2.bf16.msra.mxu0 0
    %8107 = vmatprep.mubr.bf16.mxu0 0
    %8108 = vmatmul.mubr.bf16.gmra.mxu0 %v7623
    %v8109 = vpop.f32.mrf.mxu0
    %v8110 = vadd.f32 %v8069, %v8109
    %v8111 = vpop.f32.mrf.mxu0
    %v8112 = vadd.f32 %v8071, %v8111
    %v8113 = vpop.f32.mrf.mxu0
    %v8114 = vpop.f32.mrf.mxu0
    %8115 = vdwg.mxu0
    %v8116 = vadd.f32 %v7609, %v7700
    %v8117 = vadd.f32 %v7610, %v7702
    %v8118 = vadd.f32 %v7611, %v7782
    %v8119 = vadd.f32 %v7612, %v7784
    %v8120 = vadd.f32 %v7613, %v7864
    %v8121 = vadd.f32 %v7614, %v7866
    %v8122 = vadd.f32 %v7615, %v7946
    %v8123 = vadd.f32 %v7616, %v7948
    %v8124 = vadd.f32 %v7617, %v8028
    %v8125 = vadd.f32 %v7618, %v8030
    %v8126 = vadd.f32 %v7619, %v8110
    %v8127 = vadd.f32 %v7620, %v8112
    %v8128 = vpack.c.bf16 %v8116, %v8116
    %v8129 = vpack.c.bf16 %v8117, %v8117
    %v8130 = vpack.c.bf16 %v8118, %v8118
    %v8131 = vpack.c.bf16 %v8119, %v8119
    %v8132 = vpack.c.bf16 %v8120, %v8120
    %v8133 = vpack.c.bf16 %v8121, %v8121
    %v8134 = vpack.c.bf16 %v8122, %v8122
    %v8135 = vpack.c.bf16 %v8123, %v8123
    %v8136 = vpack.c.bf16 %v8124, %v8124
    %v8137 = vpack.c.bf16 %v8125, %v8125
    %v8138 = vpack.c.bf16 %v8126, %v8126
    %v8139 = vpack.c.bf16 %v8127, %v8127
    %v8140 = vxor.u32 %v8128, 2147516416
    %v8141 = vxor.u32 %v8129, 2147516416
    %v8142 = vxor.u32 %v8130, 2147516416
    %v8144 = vmul.bf16 %v8140, 1069105081
    %v8145 = vpow.bf16.pop %v8144
    %v8147 = vmul.bf16 %v8141, 1069105081
    %v8148 = vpow.bf16.pop %v8147
    %v8150 = vmul.bf16 %v8142, 1069105081
    %v8151 = vpow.bf16.pop %v8150
    %v8152 = vadd.bf16 %v8145, 1065369472
    %v8153 = vadd.bf16 %v8148, 1065369472
    %v8154 = vadd.bf16 %v8151, 1065369472
    %v8155 = vrcp.bf16.pop %v8152
    %v8156 = vmul.bf16 1065369472, %v8155
    %v8157 = vrcp.bf16.pop %v8153
    %v8158 = vmul.bf16 1065369472, %v8157
    %v8159 = vrcp.bf16.pop %v8154
    %v8160 = vmul.bf16 1065369472, %v8159
    %v8161 = vunpack.c.l.bf16 %v8156
    %v8162 = vunpack.c.l.bf16 %v8158
    %v8163 = vunpack.c.l.bf16 %v8160
    %v8164 = vxor.u32 %v8131, 2147516416
    %v8165 = vxor.u32 %v8132, 2147516416
    %v8166 = vxor.u32 %v8133, 2147516416
    %v8168 = vmul.bf16 %v8164, 1069105081
    %v8169 = vpow.bf16.pop %v8168
    %v8171 = vmul.bf16 %v8165, 1069105081
    %v8172 = vpow.bf16.pop %v8171
    %v8174 = vmul.bf16 %v8166, 1069105081
    %v8175 = vpow.bf16.pop %v8174
    %v8176 = vadd.bf16 %v8169, 1065369472
    %v8177 = vadd.bf16 %v8172, 1065369472
    %v8178 = vadd.bf16 %v8175, 1065369472
    %v8179 = vrcp.bf16.pop %v8176
    %v8180 = vmul.bf16 1065369472, %v8179
    %v8181 = vrcp.bf16.pop %v8177
    %v8182 = vmul.bf16 1065369472, %v8181
    %v8183 = vrcp.bf16.pop %v8178
    %v8184 = vmul.bf16 1065369472, %v8183
    %v8185 = vunpack.c.l.bf16 %v8180
    %v8186 = vunpack.c.l.bf16 %v8182
    %v8187 = vunpack.c.l.bf16 %v8184
    %v8188 = vtanh.bf16.pop %v8134
    %v8189 = vtanh.bf16.pop %v8135
    %v8190 = vtanh.bf16.pop %v8136
    %v8191 = vunpack.c.l.bf16 %v8188
    %v8192 = vunpack.c.l.bf16 %v8189
    %v8193 = vunpack.c.l.bf16 %v8190
    %v8194 = vxor.u32 %v8137, 2147516416
    %v8195 = vxor.u32 %v8138, 2147516416
    %v8196 = vxor.u32 %v8139, 2147516416
    %v8198 = vmul.bf16 %v8194, 1069105081
    %v8199 = vpow.bf16.pop %v8198
    %v8201 = vmul.bf16 %v8195, 1069105081
    %v8202 = vpow.bf16.pop %v8201
    %v8204 = vmul.bf16 %v8196, 1069105081
    %v8205 = vpow.bf16.pop %v8204
    %v8206 = vadd.bf16 %v8199, 1065369472
    %v8207 = vadd.bf16 %v8202, 1065369472
    %v8208 = vadd.bf16 %v8205, 1065369472
    %v8209 = vrcp.bf16.pop %v8206
    %v8210 = vmul.bf16 1065369472, %v8209
    %v8211 = vrcp.bf16.pop %v8207
    %v8212 = vmul.bf16 1065369472, %v8211
    %v8213 = vrcp.bf16.pop %v8208
    %v8214 = vmul.bf16 1065369472, %v8213
    %v8215 = vunpack.c.l.bf16 %v8210
    %v8216 = vunpack.c.l.bf16 %v8212
    %v8217 = vunpack.c.l.bf16 %v8214
    %v8218 = vmul.f32 %v8185, %v7588
    %v8219 = vmul.f32 %v8186, %v7589
    %v8220 = vmul.f32 %v8187, %v7590
    %v8221 = vmul.f32 %v8161, %v8191
    %v8222 = vmul.f32 %v8162, %v8192
    %v8223 = vmul.f32 %v8163, %v8193
    %v8224 = vadd.f32 %v8218, %v8221
    %v8225 = vadd.f32 %v8219, %v8222
    %v8226 = vadd.f32 %v8220, %v8223
    %v8227 = vpack.c.bf16 %v8224, %v8224
    %v8228 = vpack.c.bf16 %v8225, %v8225
    %v8229 = vpack.c.bf16 %v8226, %v8226
    %v8230 = vtanh.bf16.pop %v8227
    %v8231 = vtanh.bf16.pop %v8228
    %v8232 = vtanh.bf16.pop %v8229
    %v8233 = vunpack.c.l.bf16 %v8230
    %v8234 = vunpack.c.l.bf16 %v8231
    %v8235 = vunpack.c.l.bf16 %v8232
    %v8236 = vmul.f32 %v8215, %v8233
    %v8237 = vmul.f32 %v8216, %v8234
    %v8238 = vmul.f32 %v8217, %v8235
    %v8239 = vadd.f32 %v7603, %v8236
    %v8240 = vadd.f32 %v7604, %v8237
    %v8241 = vadd.f32 %v7605, %v8238
    %s8242 = smul.u32 3, 12
    %s8243 = smul.addr %s8242, 8
    %s8244 = scalar_lea.vmem [#allocation2], %s8243
    %v8245 = vld [vmem:[%s8244] sm:$0xff]
    %v8246 = vld [vmem:[%s8244 + $0x8] sm:$0xff]
    %v8247 = vld [vmem:[%s8244 + $0x10] sm:$0xff]
    %v8248 = vld [vmem:[%s8244 + $0x18] sm:$0xff]
    %v8249 = vld [vmem:[%s8244 + $0x20] sm:$0xff]
    %v8250 = vld [vmem:[%s8244 + $0x28] sm:$0xff]
    %v8251 = vld [vmem:[%s8244 + $0x30] sm:$0xff]
    %v8252 = vld [vmem:[%s8244 + $0x38] sm:$0xff]
    %v8253 = vld [vmem:[%s8244 + $0x40] sm:$0xff]
    %v8254 = vld [vmem:[%s8244 + $0x48] sm:$0xff]
    %v8255 = vld [vmem:[%s8244 + $0x50] sm:$0xff]
    %v8256 = vld [vmem:[%s8244 + $0x58] sm:$0xff]
    %v8257 = vpack.c.bf16 %v8236, %v8236
    %v8258 = vpack.c.bf16 %v8237, %v8237
    %v8259 = vpack.c.bf16 %v8238, %v8238
    %8260 = vmatprep.subr.bf16.mxu0 %v5861
    %8261 = vmatpush1.bf16.msra.mxu0 %v5860
    %8262 = vmatprep.subr.bf16.mxu0 %v5849
    %8263 = vmatpush1.bf16.msra.mxu0 %v5848
    %8264 = vmatprep.subr.bf16.mxu0 %v5837
    %8265 = vmatpush1.bf16.msra.mxu0 %v5836
    %8266 = vmatprep.subr.bf16.mxu0 %v5825
    %8267 = vmatpush1.bf16.msra.mxu0 %v5824
    %8268 = vmatprep.subr.bf16.mxu0 %v5813
    %8269 = vmatpush1.bf16.msra.mxu0 %v5812
    %8270 = vmatprep.subr.bf16.mxu0 %v5801
    %8271 = vmatpush1.bf16.msra.mxu0 %v5800
    %8272 = vmatprep.subr.bf16.mxu0 %v5789
    %8273 = vmatpush1.bf16.msra.mxu0 %v5788
    %8274 = vmatprep.subr.bf16.mxu0 %v5777
    %8275 = vmatpush1.bf16.msra.mxu0 %v5776
    %8276 = vmatprep.subr.bf16.mxu0 %v5957
    %8277 = vmatpush2.bf16.msra.mxu0 %v5956
    %8278 = vmatprep.subr.bf16.mxu0 %v5945
    %8279 = vmatpush2.bf16.msra.mxu0 %v5944
    %8280 = vmatprep.subr.bf16.mxu0 %v5933
    %8281 = vmatpush2.bf16.msra.mxu0 %v5932
    %8282 = vmatprep.subr.bf16.mxu0 %v5921
    %8283 = vmatpush2.bf16.msra.mxu0 %v5920
    %8284 = vmatprep.subr.bf16.mxu0 %v5909
    %8285 = vmatpush2.bf16.msra.mxu0 %v5908
    %8286 = vmatprep.subr.bf16.mxu0 %v5897
    %8287 = vmatpush2.bf16.msra.mxu0 %v5896
    %8288 = vmatprep.subr.bf16.mxu0 %v5885
    %8289 = vmatpush2.bf16.msra.mxu0 %v5884
    %8290 = vmatprep.subr.bf16.mxu0 %v5873
    %8291 = vmatpush2.bf16.msra.mxu0 %v5872
    %8292 = vmatprep.mubr.bf16.mxu0 %v8258
    %8293 = vmatmul.mubr.bf16.gmra.mxu0 %v8257
    %v8294 = vpop.f32.mrf.mxu0
    %v8295 = vadd.f32 0.0, %v8294
    %v8296 = vpop.f32.mrf.mxu0
    %v8297 = vadd.f32 0.0, %v8296
    %v8298 = vpop.f32.mrf.mxu0
    %v8299 = vpop.f32.mrf.mxu0
    %8300 = vdwg.mxu0
    %8301 = vmatprep.subr.bf16.mxu0 %v6053
    %8302 = vmatpush1.bf16.msra.mxu0 %v6052
    %8303 = vmatprep.subr.bf16.mxu0 %v6041
    %8304 = vmatpush1.bf16.msra.mxu0 %v6040
    %8305 = vmatprep.subr.bf16.mxu0 %v6029
    %8306 = vmatpush1.bf16.msra.mxu0 %v6028
    %8307 = vmatprep.subr.bf16.mxu0 %v6017
    %8308 = vmatpush1.bf16.msra.mxu0 %v6016
    %8309 = vmatprep.subr.bf16.mxu0 %v6005
    %8310 = vmatpush1.bf16.msra.mxu0 %v6004
    %8311 = vmatprep.subr.bf16.mxu0 %v5993
    %8312 = vmatpush1.bf16.msra.mxu0 %v5992
    %8313 = vmatprep.subr.bf16.mxu0 %v5981
    %8314 = vmatpush1.bf16.msra.mxu0 %v5980
    %8315 = vmatprep.subr.bf16.mxu0 %v5969
    %8316 = vmatpush1.bf16.msra.mxu0 %v5968
    %8317 = vmatprep.subr.bf16.mxu0 0
    %8318 = vmatpush2.bf16.msra.mxu0 0
    %8319 = vmatprep.subr.bf16.mxu0 0
    %8320 = vmatpush2.bf16.msra.mxu0 0
    %8321 = vmatprep.subr.bf16.mxu0 0
    %8322 = vmatpush2.bf16.msra.mxu0 0
    %8323 = vmatprep.subr.bf16.mxu0 0
    %8324 = vmatpush2.bf16.msra.mxu0 0
    %8325 = vmatprep.subr.bf16.mxu0 0
    %8326 = vmatpush2.bf16.msra.mxu0 0
    %8327 = vmatprep.subr.bf16.mxu0 0
    %8328 = vmatpush2.bf16.msra.mxu0 0
    %8329 = vmatprep.subr.bf16.mxu0 0
    %8330 = vmatpush2.bf16.msra.mxu0 0
    %8331 = vmatprep.subr.bf16.mxu0 0
    %8332 = vmatpush2.bf16.msra.mxu0 0
    %8333 = vmatprep.mubr.bf16.mxu0 0
    %8334 = vmatmul.mubr.bf16.gmra.mxu0 %v8259
    %v8335 = vpop.f32.mrf.mxu0
    %v8336 = vadd.f32 %v8295, %v8335
    %v8337 = vpop.f32.mrf.mxu0
    %v8338 = vadd.f32 %v8297, %v8337
    %v8339 = vpop.f32.mrf.mxu0
    %v8340 = vpop.f32.mrf.mxu0
    %8341 = vdwg.mxu0
    %8342 = vmatprep.subr.bf16.mxu0 %v5863
    %8343 = vmatpush1.bf16.msra.mxu0 %v5862
    %8344 = vmatprep.subr.bf16.mxu0 %v5851
    %8345 = vmatpush1.bf16.msra.mxu0 %v5850
    %8346 = vmatprep.subr.bf16.mxu0 %v5839
    %8347 = vmatpush1.bf16.msra.mxu0 %v5838
    %8348 = vmatprep.subr.bf16.mxu0 %v5827
    %8349 = vmatpush1.bf16.msra.mxu0 %v5826
    %8350 = vmatprep.subr.bf16.mxu0 %v5815
    %8351 = vmatpush1.bf16.msra.mxu0 %v5814
    %8352 = vmatprep.subr.bf16.mxu0 %v5803
    %8353 = vmatpush1.bf16.msra.mxu0 %v5802
    %8354 = vmatprep.subr.bf16.mxu0 %v5791
    %8355 = vmatpush1.bf16.msra.mxu0 %v5790
    %8356 = vmatprep.subr.bf16.mxu0 %v5779
    %8357 = vmatpush1.bf16.msra.mxu0 %v5778
    %8358 = vmatprep.subr.bf16.mxu0 %v5959
    %8359 = vmatpush2.bf16.msra.mxu0 %v5958
    %8360 = vmatprep.subr.bf16.mxu0 %v5947
    %8361 = vmatpush2.bf16.msra.mxu0 %v5946
    %8362 = vmatprep.subr.bf16.mxu0 %v5935
    %8363 = vmatpush2.bf16.msra.mxu0 %v5934
    %8364 = vmatprep.subr.bf16.mxu0 %v5923
    %8365 = vmatpush2.bf16.msra.mxu0 %v5922
    %8366 = vmatprep.subr.bf16.mxu0 %v5911
    %8367 = vmatpush2.bf16.msra.mxu0 %v5910
    %8368 = vmatprep.subr.bf16.mxu0 %v5899
    %8369 = vmatpush2.bf16.msra.mxu0 %v5898
    %8370 = vmatprep.subr.bf16.mxu0 %v5887
    %8371 = vmatpush2.bf16.msra.mxu0 %v5886
    %8372 = vmatprep.subr.bf16.mxu0 %v5875
    %8373 = vmatpush2.bf16.msra.mxu0 %v5874
    %8374 = vmatprep.mubr.bf16.mxu0 %v8258
    %8375 = vmatmul.mubr.bf16.gmra.mxu0 %v8257
    %v8376 = vpop.f32.mrf.mxu0
    %v8377 = vadd.f32 0.0, %v8376
    %v8378 = vpop.f32.mrf.mxu0
    %v8379 = vadd.f32 0.0, %v8378
    %v8380 = vpop.f32.mrf.mxu0
    %v8381 = vpop.f32.mrf.mxu0
    %8382 = vdwg.mxu0
    %8383 = vmatprep.subr.bf16.mxu0 %v6055
    %8384 = vmatpush1.bf16.msra.mxu0 %v6054
    %8385 = vmatprep.subr.bf16.mxu0 %v6043
    %8386 = vmatpush1.bf16.msra.mxu0 %v6042
    %8387 = vmatprep.subr.bf16.mxu0 %v6031
    %8388 = vmatpush1.bf16.msra.mxu0 %v6030
    %8389 = vmatprep.subr.bf16.mxu0 %v6019
    %8390 = vmatpush1.bf16.msra.mxu0 %v6018
    %8391 = vmatprep.subr.bf16.mxu0 %v6007
    %8392 = vmatpush1.bf16.msra.mxu0 %v6006
    %8393 = vmatprep.subr.bf16.mxu0 %v5995
    %8394 = vmatpush1.bf16.msra.mxu0 %v5994
    %8395 = vmatprep.subr.bf16.mxu0 %v5983
    %8396 = vmatpush1.bf16.msra.mxu0 %v5982
    %8397 = vmatprep.subr.bf16.mxu0 %v5971
    %8398 = vmatpush1.bf16.msra.mxu0 %v5970
    %8399 = vmatprep.subr.bf16.mxu0 0
    %8400 = vmatpush2.bf16.msra.mxu0 0
    %8401 = vmatprep.subr.bf16.mxu0 0
    %8402 = vmatpush2.bf16.msra.mxu0 0
    %8403 = vmatprep.subr.bf16.mxu0 0
    %8404 = vmatpush2.bf16.msra.mxu0 0
    %8405 = vmatprep.subr.bf16.mxu0 0
    %8406 = vmatpush2.bf16.msra.mxu0 0
    %8407 = vmatprep.subr.bf16.mxu0 0
    %8408 = vmatpush2.bf16.msra.mxu0 0
    %8409 = vmatprep.subr.bf16.mxu0 0
    %8410 = vmatpush2.bf16.msra.mxu0 0
    %8411 = vmatprep.subr.bf16.mxu0 0
    %8412 = vmatpush2.bf16.msra.mxu0 0
    %8413 = vmatprep.subr.bf16.mxu0 0
    %8414 = vmatpush2.bf16.msra.mxu0 0
    %8415 = vmatprep.mubr.bf16.mxu0 0
    %8416 = vmatmul.mubr.bf16.gmra.mxu0 %v8259
    %v8417 = vpop.f32.mrf.mxu0
    %v8418 = vadd.f32 %v8377, %v8417
    %v8419 = vpop.f32.mrf.mxu0
    %v8420 = vadd.f32 %v8379, %v8419
    %v8421 = vpop.f32.mrf.mxu0
    %v8422 = vpop.f32.mrf.mxu0
    %8423 = vdwg.mxu0
    %8424 = vmatprep.subr.bf16.mxu0 %v5865
    %8425 = vmatpush1.bf16.msra.mxu0 %v5864
    %8426 = vmatprep.subr.bf16.mxu0 %v5853
    %8427 = vmatpush1.bf16.msra.mxu0 %v5852
    %8428 = vmatprep.subr.bf16.mxu0 %v5841
    %8429 = vmatpush1.bf16.msra.mxu0 %v5840
    %8430 = vmatprep.subr.bf16.mxu0 %v5829
    %8431 = vmatpush1.bf16.msra.mxu0 %v5828
    %8432 = vmatprep.subr.bf16.mxu0 %v5817
    %8433 = vmatpush1.bf16.msra.mxu0 %v5816
    %8434 = vmatprep.subr.bf16.mxu0 %v5805
    %8435 = vmatpush1.bf16.msra.mxu0 %v5804
    %8436 = vmatprep.subr.bf16.mxu0 %v5793
    %8437 = vmatpush1.bf16.msra.mxu0 %v5792
    %8438 = vmatprep.subr.bf16.mxu0 %v5781
    %8439 = vmatpush1.bf16.msra.mxu0 %v5780
    %8440 = vmatprep.subr.bf16.mxu0 %v5961
    %8441 = vmatpush2.bf16.msra.mxu0 %v5960
    %8442 = vmatprep.subr.bf16.mxu0 %v5949
    %8443 = vmatpush2.bf16.msra.mxu0 %v5948
    %8444 = vmatprep.subr.bf16.mxu0 %v5937
    %8445 = vmatpush2.bf16.msra.mxu0 %v5936
    %8446 = vmatprep.subr.bf16.mxu0 %v5925
    %8447 = vmatpush2.bf16.msra.mxu0 %v5924
    %8448 = vmatprep.subr.bf16.mxu0 %v5913
    %8449 = vmatpush2.bf16.msra.mxu0 %v5912
    %8450 = vmatprep.subr.bf16.mxu0 %v5901
    %8451 = vmatpush2.bf16.msra.mxu0 %v5900
    %8452 = vmatprep.subr.bf16.mxu0 %v5889
    %8453 = vmatpush2.bf16.msra.mxu0 %v5888
    %8454 = vmatprep.subr.bf16.mxu0 %v5877
    %8455 = vmatpush2.bf16.msra.mxu0 %v5876
    %8456 = vmatprep.mubr.bf16.mxu0 %v8258
    %8457 = vmatmul.mubr.bf16.gmra.mxu0 %v8257
    %v8458 = vpop.f32.mrf.mxu0
    %v8459 = vadd.f32 0.0, %v8458
    %v8460 = vpop.f32.mrf.mxu0
    %v8461 = vadd.f32 0.0, %v8460
    %v8462 = vpop.f32.mrf.mxu0
    %v8463 = vpop.f32.mrf.mxu0
    %8464 = vdwg.mxu0
    %8465 = vmatprep.subr.bf16.mxu0 %v6057
    %8466 = vmatpush1.bf16.msra.mxu0 %v6056
    %8467 = vmatprep.subr.bf16.mxu0 %v6045
    %8468 = vmatpush1.bf16.msra.mxu0 %v6044
    %8469 = vmatprep.subr.bf16.mxu0 %v6033
    %8470 = vmatpush1.bf16.msra.mxu0 %v6032
    %8471 = vmatprep.subr.bf16.mxu0 %v6021
    %8472 = vmatpush1.bf16.msra.mxu0 %v6020
    %8473 = vmatprep.subr.bf16.mxu0 %v6009
    %8474 = vmatpush1.bf16.msra.mxu0 %v6008
    %8475 = vmatprep.subr.bf16.mxu0 %v5997
    %8476 = vmatpush1.bf16.msra.mxu0 %v5996
    %8477 = vmatprep.subr.bf16.mxu0 %v5985
    %8478 = vmatpush1.bf16.msra.mxu0 %v5984
    %8479 = vmatprep.subr.bf16.mxu0 %v5973
    %8480 = vmatpush1.bf16.msra.mxu0 %v5972
    %8481 = vmatprep.subr.bf16.mxu0 0
    %8482 = vmatpush2.bf16.msra.mxu0 0
    %8483 = vmatprep.subr.bf16.mxu0 0
    %8484 = vmatpush2.bf16.msra.mxu0 0
    %8485 = vmatprep.subr.bf16.mxu0 0
    %8486 = vmatpush2.bf16.msra.mxu0 0
    %8487 = vmatprep.subr.bf16.mxu0 0
    %8488 = vmatpush2.bf16.msra.mxu0 0
    %8489 = vmatprep.subr.bf16.mxu0 0
    %8490 = vmatpush2.bf16.msra.mxu0 0
    %8491 = vmatprep.subr.bf16.mxu0 0
    %8492 = vmatpush2.bf16.msra.mxu0 0
    %8493 = vmatprep.subr.bf16.mxu0 0
    %8494 = vmatpush2.bf16.msra.mxu0 0
    %8495 = vmatprep.subr.bf16.mxu0 0
    %8496 = vmatpush2.bf16.msra.mxu0 0
    %8497 = vmatprep.mubr.bf16.mxu0 0
    %8498 = vmatmul.mubr.bf16.gmra.mxu0 %v8259
    %v8499 = vpop.f32.mrf.mxu0
    %v8500 = vadd.f32 %v8459, %v8499
    %v8501 = vpop.f32.mrf.mxu0
    %v8502 = vadd.f32 %v8461, %v8501
    %v8503 = vpop.f32.mrf.mxu0
    %v8504 = vpop.f32.mrf.mxu0
    %8505 = vdwg.mxu0
    %8506 = vmatprep.subr.bf16.mxu0 %v5867
    %8507 = vmatpush1.bf16.msra.mxu0 %v5866
    %8508 = vmatprep.subr.bf16.mxu0 %v5855
    %8509 = vmatpush1.bf16.msra.mxu0 %v5854
    %8510 = vmatprep.subr.bf16.mxu0 %v5843
    %8511 = vmatpush1.bf16.msra.mxu0 %v5842
    %8512 = vmatprep.subr.bf16.mxu0 %v5831
    %8513 = vmatpush1.bf16.msra.mxu0 %v5830
    %8514 = vmatprep.subr.bf16.mxu0 %v5819
    %8515 = vmatpush1.bf16.msra.mxu0 %v5818
    %8516 = vmatprep.subr.bf16.mxu0 %v5807
    %8517 = vmatpush1.bf16.msra.mxu0 %v5806
    %8518 = vmatprep.subr.bf16.mxu0 %v5795
    %8519 = vmatpush1.bf16.msra.mxu0 %v5794
    %8520 = vmatprep.subr.bf16.mxu0 %v5783
    %8521 = vmatpush1.bf16.msra.mxu0 %v5782
    %8522 = vmatprep.subr.bf16.mxu0 %v5963
    %8523 = vmatpush2.bf16.msra.mxu0 %v5962
    %8524 = vmatprep.subr.bf16.mxu0 %v5951
    %8525 = vmatpush2.bf16.msra.mxu0 %v5950
    %8526 = vmatprep.subr.bf16.mxu0 %v5939
    %8527 = vmatpush2.bf16.msra.mxu0 %v5938
    %8528 = vmatprep.subr.bf16.mxu0 %v5927
    %8529 = vmatpush2.bf16.msra.mxu0 %v5926
    %8530 = vmatprep.subr.bf16.mxu0 %v5915
    %8531 = vmatpush2.bf16.msra.mxu0 %v5914
    %8532 = vmatprep.subr.bf16.mxu0 %v5903
    %8533 = vmatpush2.bf16.msra.mxu0 %v5902
    %8534 = vmatprep.subr.bf16.mxu0 %v5891
    %8535 = vmatpush2.bf16.msra.mxu0 %v5890
    %8536 = vmatprep.subr.bf16.mxu0 %v5879
    %8537 = vmatpush2.bf16.msra.mxu0 %v5878
    %8538 = vmatprep.mubr.bf16.mxu0 %v8258
    %8539 = vmatmul.mubr.bf16.gmra.mxu0 %v8257
    %v8540 = vpop.f32.mrf.mxu0
    %v8541 = vadd.f32 0.0, %v8540
    %v8542 = vpop.f32.mrf.mxu0
    %v8543 = vadd.f32 0.0, %v8542
    %v8544 = vpop.f32.mrf.mxu0
    %v8545 = vpop.f32.mrf.mxu0
    %8546 = vdwg.mxu0
    %8547 = vmatprep.subr.bf16.mxu0 %v6059
    %8548 = vmatpush1.bf16.msra.mxu0 %v6058
    %8549 = vmatprep.subr.bf16.mxu0 %v6047
    %8550 = vmatpush1.bf16.msra.mxu0 %v6046
    %8551 = vmatprep.subr.bf16.mxu0 %v6035
    %8552 = vmatpush1.bf16.msra.mxu0 %v6034
    %8553 = vmatprep.subr.bf16.mxu0 %v6023
    %8554 = vmatpush1.bf16.msra.mxu0 %v6022
    %8555 = vmatprep.subr.bf16.mxu0 %v6011
    %8556 = vmatpush1.bf16.msra.mxu0 %v6010
    %8557 = vmatprep.subr.bf16.mxu0 %v5999
    %8558 = vmatpush1.bf16.msra.mxu0 %v5998
    %8559 = vmatprep.subr.bf16.mxu0 %v5987
    %8560 = vmatpush1.bf16.msra.mxu0 %v5986
    %8561 = vmatprep.subr.bf16.mxu0 %v5975
    %8562 = vmatpush1.bf16.msra.mxu0 %v5974
    %8563 = vmatprep.subr.bf16.mxu0 0
    %8564 = vmatpush2.bf16.msra.mxu0 0
    %8565 = vmatprep.subr.bf16.mxu0 0
    %8566 = vmatpush2.bf16.msra.mxu0 0
    %8567 = vmatprep.subr.bf16.mxu0 0
    %8568 = vmatpush2.bf16.msra.mxu0 0
    %8569 = vmatprep.subr.bf16.mxu0 0
    %8570 = vmatpush2.bf16.msra.mxu0 0
    %8571 = vmatprep.subr.bf16.mxu0 0
    %8572 = vmatpush2.bf16.msra.mxu0 0
    %8573 = vmatprep.subr.bf16.mxu0 0
    %8574 = vmatpush2.bf16.msra.mxu0 0
    %8575 = vmatprep.subr.bf16.mxu0 0
    %8576 = vmatpush2.bf16.msra.mxu0 0
    %8577 = vmatprep.subr.bf16.mxu0 0
    %8578 = vmatpush2.bf16.msra.mxu0 0
    %8579 = vmatprep.mubr.bf16.mxu0 0
    %8580 = vmatmul.mubr.bf16.gmra.mxu0 %v8259
    %v8581 = vpop.f32.mrf.mxu0
    %v8582 = vadd.f32 %v8541, %v8581
    %v8583 = vpop.f32.mrf.mxu0
    %v8584 = vadd.f32 %v8543, %v8583
    %v8585 = vpop.f32.mrf.mxu0
    %v8586 = vpop.f32.mrf.mxu0
    %8587 = vdwg.mxu0
    %8588 = vmatprep.subr.bf16.mxu0 %v5869
    %8589 = vmatpush1.bf16.msra.mxu0 %v5868
    %8590 = vmatprep.subr.bf16.mxu0 %v5857
    %8591 = vmatpush1.bf16.msra.mxu0 %v5856
    %8592 = vmatprep.subr.bf16.mxu0 %v5845
    %8593 = vmatpush1.bf16.msra.mxu0 %v5844
    %8594 = vmatprep.subr.bf16.mxu0 %v5833
    %8595 = vmatpush1.bf16.msra.mxu0 %v5832
    %8596 = vmatprep.subr.bf16.mxu0 %v5821
    %8597 = vmatpush1.bf16.msra.mxu0 %v5820
    %8598 = vmatprep.subr.bf16.mxu0 %v5809
    %8599 = vmatpush1.bf16.msra.mxu0 %v5808
    %8600 = vmatprep.subr.bf16.mxu0 %v5797
    %8601 = vmatpush1.bf16.msra.mxu0 %v5796
    %8602 = vmatprep.subr.bf16.mxu0 %v5785
    %8603 = vmatpush1.bf16.msra.mxu0 %v5784
    %8604 = vmatprep.subr.bf16.mxu0 %v5965
    %8605 = vmatpush2.bf16.msra.mxu0 %v5964
    %8606 = vmatprep.subr.bf16.mxu0 %v5953
    %8607 = vmatpush2.bf16.msra.mxu0 %v5952
    %8608 = vmatprep.subr.bf16.mxu0 %v5941
    %8609 = vmatpush2.bf16.msra.mxu0 %v5940
    %8610 = vmatprep.subr.bf16.mxu0 %v5929
    %8611 = vmatpush2.bf16.msra.mxu0 %v5928
    %8612 = vmatprep.subr.bf16.mxu0 %v5917
    %8613 = vmatpush2.bf16.msra.mxu0 %v5916
    %8614 = vmatprep.subr.bf16.mxu0 %v5905
    %8615 = vmatpush2.bf16.msra.mxu0 %v5904
    %8616 = vmatprep.subr.bf16.mxu0 %v5893
    %8617 = vmatpush2.bf16.msra.mxu0 %v5892
    %8618 = vmatprep.subr.bf16.mxu0 %v5881
    %8619 = vmatpush2.bf16.msra.mxu0 %v5880
    %8620 = vmatprep.mubr.bf16.mxu0 %v8258
    %8621 = vmatmul.mubr.bf16.gmra.mxu0 %v8257
    %v8622 = vpop.f32.mrf.mxu0
    %v8623 = vadd.f32 0.0, %v8622
    %v8624 = vpop.f32.mrf.mxu0
    %v8625 = vadd.f32 0.0, %v8624
    %v8626 = vpop.f32.mrf.mxu0
    %v8627 = vpop.f32.mrf.mxu0
    %8628 = vdwg.mxu0
    %8629 = vmatprep.subr.bf16.mxu0 %v6061
    %8630 = vmatpush1.bf16.msra.mxu0 %v6060
    %8631 = vmatprep.subr.bf16.mxu0 %v6049
    %8632 = vmatpush1.bf16.msra.mxu0 %v6048
    %8633 = vmatprep.subr.bf16.mxu0 %v6037
    %8634 = vmatpush1.bf16.msra.mxu0 %v6036
    %8635 = vmatprep.subr.bf16.mxu0 %v6025
    %8636 = vmatpush1.bf16.msra.mxu0 %v6024
    %8637 = vmatprep.subr.bf16.mxu0 %v6013
    %8638 = vmatpush1.bf16.msra.mxu0 %v6012
    %8639 = vmatprep.subr.bf16.mxu0 %v6001
    %8640 = vmatpush1.bf16.msra.mxu0 %v6000
    %8641 = vmatprep.subr.bf16.mxu0 %v5989
    %8642 = vmatpush1.bf16.msra.mxu0 %v5988
    %8643 = vmatprep.subr.bf16.mxu0 %v5977
    %8644 = vmatpush1.bf16.msra.mxu0 %v5976
    %8645 = vmatprep.subr.bf16.mxu0 0
    %8646 = vmatpush2.bf16.msra.mxu0 0
    %8647 = vmatprep.subr.bf16.mxu0 0
    %8648 = vmatpush2.bf16.msra.mxu0 0
    %8649 = vmatprep.subr.bf16.mxu0 0
    %8650 = vmatpush2.bf16.msra.mxu0 0
    %8651 = vmatprep.subr.bf16.mxu0 0
    %8652 = vmatpush2.bf16.msra.mxu0 0
    %8653 = vmatprep.subr.bf16.mxu0 0
    %8654 = vmatpush2.bf16.msra.mxu0 0
    %8655 = vmatprep.subr.bf16.mxu0 0
    %8656 = vmatpush2.bf16.msra.mxu0 0
    %8657 = vmatprep.subr.bf16.mxu0 0
    %8658 = vmatpush2.bf16.msra.mxu0 0
    %8659 = vmatprep.subr.bf16.mxu0 0
    %8660 = vmatpush2.bf16.msra.mxu0 0
    %8661 = vmatprep.mubr.bf16.mxu0 0
    %8662 = vmatmul.mubr.bf16.gmra.mxu0 %v8259
    %v8663 = vpop.f32.mrf.mxu0
    %v8664 = vadd.f32 %v8623, %v8663
    %v8665 = vpop.f32.mrf.mxu0
    %v8666 = vadd.f32 %v8625, %v8665
    %v8667 = vpop.f32.mrf.mxu0
    %v8668 = vpop.f32.mrf.mxu0
    %8669 = vdwg.mxu0
    %8670 = vmatprep.subr.bf16.mxu0 %v5871
    %8671 = vmatpush1.bf16.msra.mxu0 %v5870
    %8672 = vmatprep.subr.bf16.mxu0 %v5859
    %8673 = vmatpush1.bf16.msra.mxu0 %v5858
    %8674 = vmatprep.subr.bf16.mxu0 %v5847
    %8675 = vmatpush1.bf16.msra.mxu0 %v5846
    %8676 = vmatprep.subr.bf16.mxu0 %v5835
    %8677 = vmatpush1.bf16.msra.mxu0 %v5834
    %8678 = vmatprep.subr.bf16.mxu0 %v5823
    %8679 = vmatpush1.bf16.msra.mxu0 %v5822
    %8680 = vmatprep.subr.bf16.mxu0 %v5811
    %8681 = vmatpush1.bf16.msra.mxu0 %v5810
    %8682 = vmatprep.subr.bf16.mxu0 %v5799
    %8683 = vmatpush1.bf16.msra.mxu0 %v5798
    %8684 = vmatprep.subr.bf16.mxu0 %v5787
    %8685 = vmatpush1.bf16.msra.mxu0 %v5786
    %8686 = vmatprep.subr.bf16.mxu0 %v5967
    %8687 = vmatpush2.bf16.msra.mxu0 %v5966
    %8688 = vmatprep.subr.bf16.mxu0 %v5955
    %8689 = vmatpush2.bf16.msra.mxu0 %v5954
    %8690 = vmatprep.subr.bf16.mxu0 %v5943
    %8691 = vmatpush2.bf16.msra.mxu0 %v5942
    %8692 = vmatprep.subr.bf16.mxu0 %v5931
    %8693 = vmatpush2.bf16.msra.mxu0 %v5930
    %8694 = vmatprep.subr.bf16.mxu0 %v5919
    %8695 = vmatpush2.bf16.msra.mxu0 %v5918
    %8696 = vmatprep.subr.bf16.mxu0 %v5907
    %8697 = vmatpush2.bf16.msra.mxu0 %v5906
    %8698 = vmatprep.subr.bf16.mxu0 %v5895
    %8699 = vmatpush2.bf16.msra.mxu0 %v5894
    %8700 = vmatprep.subr.bf16.mxu0 %v5883
    %8701 = vmatpush2.bf16.msra.mxu0 %v5882
    %8702 = vmatprep.mubr.bf16.mxu0 %v8258
    %8703 = vmatmul.mubr.bf16.gmra.mxu0 %v8257
    %v8704 = vpop.f32.mrf.mxu0
    %v8705 = vadd.f32 0.0, %v8704
    %v8706 = vpop.f32.mrf.mxu0
    %v8707 = vadd.f32 0.0, %v8706
    %v8708 = vpop.f32.mrf.mxu0
    %v8709 = vpop.f32.mrf.mxu0
    %8710 = vdwg.mxu0
    %8711 = vmatprep.subr.bf16.mxu0 %v6063
    %8712 = vmatpush1.bf16.msra.mxu0 %v6062
    %8713 = vmatprep.subr.bf16.mxu0 %v6051
    %8714 = vmatpush1.bf16.msra.mxu0 %v6050
    %8715 = vmatprep.subr.bf16.mxu0 %v6039
    %8716 = vmatpush1.bf16.msra.mxu0 %v6038
    %8717 = vmatprep.subr.bf16.mxu0 %v6027
    %8718 = vmatpush1.bf16.msra.mxu0 %v6026
    %8719 = vmatprep.subr.bf16.mxu0 %v6015
    %8720 = vmatpush1.bf16.msra.mxu0 %v6014
    %8721 = vmatprep.subr.bf16.mxu0 %v6003
    %8722 = vmatpush1.bf16.msra.mxu0 %v6002
    %8723 = vmatprep.subr.bf16.mxu0 %v5991
    %8724 = vmatpush1.bf16.msra.mxu0 %v5990
    %8725 = vmatprep.subr.bf16.mxu0 %v5979
    %8726 = vmatpush1.bf16.msra.mxu0 %v5978
    %8727 = vmatprep.subr.bf16.mxu0 0
    %8728 = vmatpush2.bf16.msra.mxu0 0
    %8729 = vmatprep.subr.bf16.mxu0 0
    %8730 = vmatpush2.bf16.msra.mxu0 0
    %8731 = vmatprep.subr.bf16.mxu0 0
    %8732 = vmatpush2.bf16.msra.mxu0 0
    %8733 = vmatprep.subr.bf16.mxu0 0
    %8734 = vmatpush2.bf16.msra.mxu0 0
    %8735 = vmatprep.subr.bf16.mxu0 0
    %8736 = vmatpush2.bf16.msra.mxu0 0
    %8737 = vmatprep.subr.bf16.mxu0 0
    %8738 = vmatpush2.bf16.msra.mxu0 0
    %8739 = vmatprep.subr.bf16.mxu0 0
    %8740 = vmatpush2.bf16.msra.mxu0 0
    %8741 = vmatprep.subr.bf16.mxu0 0
    %8742 = vmatpush2.bf16.msra.mxu0 0
    %8743 = vmatprep.mubr.bf16.mxu0 0
    %8744 = vmatmul.mubr.bf16.gmra.mxu0 %v8259
    %v8745 = vpop.f32.mrf.mxu0
    %v8746 = vadd.f32 %v8705, %v8745
    %v8747 = vpop.f32.mrf.mxu0
    %v8748 = vadd.f32 %v8707, %v8747
    %v8749 = vpop.f32.mrf.mxu0
    %v8750 = vpop.f32.mrf.mxu0
    %8751 = vdwg.mxu0
    %v8752 = vadd.f32 %v8245, %v8336
    %v8753 = vadd.f32 %v8246, %v8338
    %v8754 = vadd.f32 %v8247, %v8418
    %v8755 = vadd.f32 %v8248, %v8420
    %v8756 = vadd.f32 %v8249, %v8500
    %v8757 = vadd.f32 %v8250, %v8502
    %v8758 = vadd.f32 %v8251, %v8582
    %v8759 = vadd.f32 %v8252, %v8584
    %v8760 = vadd.f32 %v8253, %v8664
    %v8761 = vadd.f32 %v8254, %v8666
    %v8762 = vadd.f32 %v8255, %v8746
    %v8763 = vadd.f32 %v8256, %v8748
    %v8764 = vpack.c.bf16 %v8752, %v8752
    %v8765 = vpack.c.bf16 %v8753, %v8753
    %v8766 = vpack.c.bf16 %v8754, %v8754
    %v8767 = vpack.c.bf16 %v8755, %v8755
    %v8768 = vpack.c.bf16 %v8756, %v8756
    %v8769 = vpack.c.bf16 %v8757, %v8757
    %v8770 = vpack.c.bf16 %v8758, %v8758
    %v8771 = vpack.c.bf16 %v8759, %v8759
    %v8772 = vpack.c.bf16 %v8760, %v8760
    %v8773 = vpack.c.bf16 %v8761, %v8761
    %v8774 = vpack.c.bf16 %v8762, %v8762
    %v8775 = vpack.c.bf16 %v8763, %v8763
    %v8776 = vxor.u32 %v8764, 2147516416
    %v8777 = vxor.u32 %v8765, 2147516416
    %v8778 = vxor.u32 %v8766, 2147516416
    %v8780 = vmul.bf16 %v8776, 1069105081
    %v8781 = vpow.bf16.pop %v8780
    %v8783 = vmul.bf16 %v8777, 1069105081
    %v8784 = vpow.bf16.pop %v8783
    %v8786 = vmul.bf16 %v8778, 1069105081
    %v8787 = vpow.bf16.pop %v8786
    %v8788 = vadd.bf16 %v8781, 1065369472
    %v8789 = vadd.bf16 %v8784, 1065369472
    %v8790 = vadd.bf16 %v8787, 1065369472
    %v8791 = vrcp.bf16.pop %v8788
    %v8792 = vmul.bf16 1065369472, %v8791
    %v8793 = vrcp.bf16.pop %v8789
    %v8794 = vmul.bf16 1065369472, %v8793
    %v8795 = vrcp.bf16.pop %v8790
    %v8796 = vmul.bf16 1065369472, %v8795
    %v8797 = vunpack.c.l.bf16 %v8792
    %v8798 = vunpack.c.l.bf16 %v8794
    %v8799 = vunpack.c.l.bf16 %v8796
    %v8800 = vxor.u32 %v8767, 2147516416
    %v8801 = vxor.u32 %v8768, 2147516416
    %v8802 = vxor.u32 %v8769, 2147516416
    %v8804 = vmul.bf16 %v8800, 1069105081
    %v8805 = vpow.bf16.pop %v8804
    %v8807 = vmul.bf16 %v8801, 1069105081
    %v8808 = vpow.bf16.pop %v8807
    %v8810 = vmul.bf16 %v8802, 1069105081
    %v8811 = vpow.bf16.pop %v8810
    %v8812 = vadd.bf16 %v8805, 1065369472
    %v8813 = vadd.bf16 %v8808, 1065369472
    %v8814 = vadd.bf16 %v8811, 1065369472
    %v8815 = vrcp.bf16.pop %v8812
    %v8816 = vmul.bf16 1065369472, %v8815
    %v8817 = vrcp.bf16.pop %v8813
    %v8818 = vmul.bf16 1065369472, %v8817
    %v8819 = vrcp.bf16.pop %v8814
    %v8820 = vmul.bf16 1065369472, %v8819
    %v8821 = vunpack.c.l.bf16 %v8816
    %v8822 = vunpack.c.l.bf16 %v8818
    %v8823 = vunpack.c.l.bf16 %v8820
    %v8824 = vtanh.bf16.pop %v8770
    %v8825 = vtanh.bf16.pop %v8771
    %v8826 = vtanh.bf16.pop %v8772
    %v8827 = vunpack.c.l.bf16 %v8824
    %v8828 = vunpack.c.l.bf16 %v8825
    %v8829 = vunpack.c.l.bf16 %v8826
    %v8830 = vxor.u32 %v8773, 2147516416
    %v8831 = vxor.u32 %v8774, 2147516416
    %v8832 = vxor.u32 %v8775, 2147516416
    %v8834 = vmul.bf16 %v8830, 1069105081
    %v8835 = vpow.bf16.pop %v8834
    %v8837 = vmul.bf16 %v8831, 1069105081
    %v8838 = vpow.bf16.pop %v8837
    %v8840 = vmul.bf16 %v8832, 1069105081
    %v8841 = vpow.bf16.pop %v8840
    %v8842 = vadd.bf16 %v8835, 1065369472
    %v8843 = vadd.bf16 %v8838, 1065369472
    %v8844 = vadd.bf16 %v8841, 1065369472
    %v8845 = vrcp.bf16.pop %v8842
    %v8846 = vmul.bf16 1065369472, %v8845
    %v8847 = vrcp.bf16.pop %v8843
    %v8848 = vmul.bf16 1065369472, %v8847
    %v8849 = vrcp.bf16.pop %v8844
    %v8850 = vmul.bf16 1065369472, %v8849
    %v8851 = vunpack.c.l.bf16 %v8846
    %v8852 = vunpack.c.l.bf16 %v8848
    %v8853 = vunpack.c.l.bf16 %v8850
    %v8854 = vmul.f32 %v8821, %v8224
    %v8855 = vmul.f32 %v8822, %v8225
    %v8856 = vmul.f32 %v8823, %v8226
    %v8857 = vmul.f32 %v8797, %v8827
    %v8858 = vmul.f32 %v8798, %v8828
    %v8859 = vmul.f32 %v8799, %v8829
    %v8860 = vadd.f32 %v8854, %v8857
    %v8861 = vadd.f32 %v8855, %v8858
    %v8862 = vadd.f32 %v8856, %v8859
    %v8863 = vpack.c.bf16 %v8860, %v8860
    %v8864 = vpack.c.bf16 %v8861, %v8861
    %v8865 = vpack.c.bf16 %v8862, %v8862
    %v8866 = vtanh.bf16.pop %v8863
    %v8867 = vtanh.bf16.pop %v8864
    %v8868 = vtanh.bf16.pop %v8865
    %v8869 = vunpack.c.l.bf16 %v8866
    %v8870 = vunpack.c.l.bf16 %v8867
    %v8871 = vunpack.c.l.bf16 %v8868
    %v8872 = vmul.f32 %v8851, %v8869
    %v8873 = vmul.f32 %v8852, %v8870
    %v8874 = vmul.f32 %v8853, %v8871
    %v8875 = vadd.f32 %v8239, %v8872
    %v8876 = vadd.f32 %v8240, %v8873
    %v8877 = vadd.f32 %v8241, %v8874
    %s8878 = smul.u32 4, 12
    %s8879 = smul.addr %s8878, 8
    %s8880 = scalar_lea.vmem [#allocation2], %s8879
    %v8881 = vld [vmem:[%s8880] sm:$0xff]
    %v8882 = vld [vmem:[%s8880 + $0x8] sm:$0xff]
    %v8883 = vld [vmem:[%s8880 + $0x10] sm:$0xff]
    %v8884 = vld [vmem:[%s8880 + $0x18] sm:$0xff]
    %v8885 = vld [vmem:[%s8880 + $0x20] sm:$0xff]
    %v8886 = vld [vmem:[%s8880 + $0x28] sm:$0xff]
    %v8887 = vld [vmem:[%s8880 + $0x30] sm:$0xff]
    %v8888 = vld [vmem:[%s8880 + $0x38] sm:$0xff]
    %v8889 = vld [vmem:[%s8880 + $0x40] sm:$0xff]
    %v8890 = vld [vmem:[%s8880 + $0x48] sm:$0xff]
    %v8891 = vld [vmem:[%s8880 + $0x50] sm:$0xff]
    %v8892 = vld [vmem:[%s8880 + $0x58] sm:$0xff]
    %v8893 = vpack.c.bf16 %v8872, %v8872
    %v8894 = vpack.c.bf16 %v8873, %v8873
    %v8895 = vpack.c.bf16 %v8874, %v8874
    %8896 = vmatprep.subr.bf16.mxu0 %v5861
    %8897 = vmatpush1.bf16.msra.mxu0 %v5860
    %8898 = vmatprep.subr.bf16.mxu0 %v5849
    %8899 = vmatpush1.bf16.msra.mxu0 %v5848
    %8900 = vmatprep.subr.bf16.mxu0 %v5837
    %8901 = vmatpush1.bf16.msra.mxu0 %v5836
    %8902 = vmatprep.subr.bf16.mxu0 %v5825
    %8903 = vmatpush1.bf16.msra.mxu0 %v5824
    %8904 = vmatprep.subr.bf16.mxu0 %v5813
    %8905 = vmatpush1.bf16.msra.mxu0 %v5812
    %8906 = vmatprep.subr.bf16.mxu0 %v5801
    %8907 = vmatpush1.bf16.msra.mxu0 %v5800
    %8908 = vmatprep.subr.bf16.mxu0 %v5789
    %8909 = vmatpush1.bf16.msra.mxu0 %v5788
    %8910 = vmatprep.subr.bf16.mxu0 %v5777
    %8911 = vmatpush1.bf16.msra.mxu0 %v5776
    %8912 = vmatprep.subr.bf16.mxu0 %v5957
    %8913 = vmatpush2.bf16.msra.mxu0 %v5956
    %8914 = vmatprep.subr.bf16.mxu0 %v5945
    %8915 = vmatpush2.bf16.msra.mxu0 %v5944
    %8916 = vmatprep.subr.bf16.mxu0 %v5933
    %8917 = vmatpush2.bf16.msra.mxu0 %v5932
    %8918 = vmatprep.subr.bf16.mxu0 %v5921
    %8919 = vmatpush2.bf16.msra.mxu0 %v5920
    %8920 = vmatprep.subr.bf16.mxu0 %v5909
    %8921 = vmatpush2.bf16.msra.mxu0 %v5908
    %8922 = vmatprep.subr.bf16.mxu0 %v5897
    %8923 = vmatpush2.bf16.msra.mxu0 %v5896
    %8924 = vmatprep.subr.bf16.mxu0 %v5885
    %8925 = vmatpush2.bf16.msra.mxu0 %v5884
    %8926 = vmatprep.subr.bf16.mxu0 %v5873
    %8927 = vmatpush2.bf16.msra.mxu0 %v5872
    %8928 = vmatprep.mubr.bf16.mxu0 %v8894
    %8929 = vmatmul.mubr.bf16.gmra.mxu0 %v8893
    %v8930 = vpop.f32.mrf.mxu0
    %v8931 = vadd.f32 0.0, %v8930
    %v8932 = vpop.f32.mrf.mxu0
    %v8933 = vadd.f32 0.0, %v8932
    %v8934 = vpop.f32.mrf.mxu0
    %v8935 = vpop.f32.mrf.mxu0
    %8936 = vdwg.mxu0
    %8937 = vmatprep.subr.bf16.mxu0 %v6053
    %8938 = vmatpush1.bf16.msra.mxu0 %v6052
    %8939 = vmatprep.subr.bf16.mxu0 %v6041
    %8940 = vmatpush1.bf16.msra.mxu0 %v6040
    %8941 = vmatprep.subr.bf16.mxu0 %v6029
    %8942 = vmatpush1.bf16.msra.mxu0 %v6028
    %8943 = vmatprep.subr.bf16.mxu0 %v6017
    %8944 = vmatpush1.bf16.msra.mxu0 %v6016
    %8945 = vmatprep.subr.bf16.mxu0 %v6005
    %8946 = vmatpush1.bf16.msra.mxu0 %v6004
    %8947 = vmatprep.subr.bf16.mxu0 %v5993
    %8948 = vmatpush1.bf16.msra.mxu0 %v5992
    %8949 = vmatprep.subr.bf16.mxu0 %v5981
    %8950 = vmatpush1.bf16.msra.mxu0 %v5980
    %8951 = vmatprep.subr.bf16.mxu0 %v5969
    %8952 = vmatpush1.bf16.msra.mxu0 %v5968
    %8953 = vmatprep.subr.bf16.mxu0 0
    %8954 = vmatpush2.bf16.msra.mxu0 0
    %8955 = vmatprep.subr.bf16.mxu0 0
    %8956 = vmatpush2.bf16.msra.mxu0 0
    %8957 = vmatprep.subr.bf16.mxu0 0
    %8958 = vmatpush2.bf16.msra.mxu0 0
    %8959 = vmatprep.subr.bf16.mxu0 0
    %8960 = vmatpush2.bf16.msra.mxu0 0
    %8961 = vmatprep.subr.bf16.mxu0 0
    %8962 = vmatpush2.bf16.msra.mxu0 0
    %8963 = vmatprep.subr.bf16.mxu0 0
    %8964 = vmatpush2.bf16.msra.mxu0 0
    %8965 = vmatprep.subr.bf16.mxu0 0
    %8966 = vmatpush2.bf16.msra.mxu0 0
    %8967 = vmatprep.subr.bf16.mxu0 0
    %8968 = vmatpush2.bf16.msra.mxu0 0
    %8969 = vmatprep.mubr.bf16.mxu0 0
    %8970 = vmatmul.mubr.bf16.gmra.mxu0 %v8895
    %v8971 = vpop.f32.mrf.mxu0
    %v8972 = vadd.f32 %v8931, %v8971
    %v8973 = vpop.f32.mrf.mxu0
    %v8974 = vadd.f32 %v8933, %v8973
    %v8975 = vpop.f32.mrf.mxu0
    %v8976 = vpop.f32.mrf.mxu0
    %8977 = vdwg.mxu0
    %8978 = vmatprep.subr.bf16.mxu0 %v5863
    %8979 = vmatpush1.bf16.msra.mxu0 %v5862
    %8980 = vmatprep.subr.bf16.mxu0 %v5851
    %8981 = vmatpush1.bf16.msra.mxu0 %v5850
    %8982 = vmatprep.subr.bf16.mxu0 %v5839
    %8983 = vmatpush1.bf16.msra.mxu0 %v5838
    %8984 = vmatprep.subr.bf16.mxu0 %v5827
    %8985 = vmatpush1.bf16.msra.mxu0 %v5826
    %8986 = vmatprep.subr.bf16.mxu0 %v5815
    %8987 = vmatpush1.bf16.msra.mxu0 %v5814
    %8988 = vmatprep.subr.bf16.mxu0 %v5803
    %8989 = vmatpush1.bf16.msra.mxu0 %v5802
    %8990 = vmatprep.subr.bf16.mxu0 %v5791
    %8991 = vmatpush1.bf16.msra.mxu0 %v5790
    %8992 = vmatprep.subr.bf16.mxu0 %v5779
    %8993 = vmatpush1.bf16.msra.mxu0 %v5778
    %8994 = vmatprep.subr.bf16.mxu0 %v5959
    %8995 = vmatpush2.bf16.msra.mxu0 %v5958
    %8996 = vmatprep.subr.bf16.mxu0 %v5947
    %8997 = vmatpush2.bf16.msra.mxu0 %v5946
    %8998 = vmatprep.subr.bf16.mxu0 %v5935
    %8999 = vmatpush2.bf16.msra.mxu0 %v5934
    %9000 = vmatprep.subr.bf16.mxu0 %v5923
    %9001 = vmatpush2.bf16.msra.mxu0 %v5922
    %9002 = vmatprep.subr.bf16.mxu0 %v5911
    %9003 = vmatpush2.bf16.msra.mxu0 %v5910
    %9004 = vmatprep.subr.bf16.mxu0 %v5899
    %9005 = vmatpush2.bf16.msra.mxu0 %v5898
    %9006 = vmatprep.subr.bf16.mxu0 %v5887
    %9007 = vmatpush2.bf16.msra.mxu0 %v5886
    %9008 = vmatprep.subr.bf16.mxu0 %v5875
    %9009 = vmatpush2.bf16.msra.mxu0 %v5874
    %9010 = vmatprep.mubr.bf16.mxu0 %v8894
    %9011 = vmatmul.mubr.bf16.gmra.mxu0 %v8893
    %v9012 = vpop.f32.mrf.mxu0
    %v9013 = vadd.f32 0.0, %v9012
    %v9014 = vpop.f32.mrf.mxu0
    %v9015 = vadd.f32 0.0, %v9014
    %v9016 = vpop.f32.mrf.mxu0
    %v9017 = vpop.f32.mrf.mxu0
    %9018 = vdwg.mxu0
    %9019 = vmatprep.subr.bf16.mxu0 %v6055
    %9020 = vmatpush1.bf16.msra.mxu0 %v6054
    %9021 = vmatprep.subr.bf16.mxu0 %v6043
    %9022 = vmatpush1.bf16.msra.mxu0 %v6042
    %9023 = vmatprep.subr.bf16.mxu0 %v6031
    %9024 = vmatpush1.bf16.msra.mxu0 %v6030
    %9025 = vmatprep.subr.bf16.mxu0 %v6019
    %9026 = vmatpush1.bf16.msra.mxu0 %v6018
    %9027 = vmatprep.subr.bf16.mxu0 %v6007
    %9028 = vmatpush1.bf16.msra.mxu0 %v6006
    %9029 = vmatprep.subr.bf16.mxu0 %v5995
    %9030 = vmatpush1.bf16.msra.mxu0 %v5994
    %9031 = vmatprep.subr.bf16.mxu0 %v5983
    %9032 = vmatpush1.bf16.msra.mxu0 %v5982
    %9033 = vmatprep.subr.bf16.mxu0 %v5971
    %9034 = vmatpush1.bf16.msra.mxu0 %v5970
    %9035 = vmatprep.subr.bf16.mxu0 0
    %9036 = vmatpush2.bf16.msra.mxu0 0
    %9037 = vmatprep.subr.bf16.mxu0 0
    %9038 = vmatpush2.bf16.msra.mxu0 0
    %9039 = vmatprep.subr.bf16.mxu0 0
    %9040 = vmatpush2.bf16.msra.mxu0 0
    %9041 = vmatprep.subr.bf16.mxu0 0
    %9042 = vmatpush2.bf16.msra.mxu0 0
    %9043 = vmatprep.subr.bf16.mxu0 0
    %9044 = vmatpush2.bf16.msra.mxu0 0
    %9045 = vmatprep.subr.bf16.mxu0 0
    %9046 = vmatpush2.bf16.msra.mxu0 0
    %9047 = vmatprep.subr.bf16.mxu0 0
    %9048 = vmatpush2.bf16.msra.mxu0 0
    %9049 = vmatprep.subr.bf16.mxu0 0
    %9050 = vmatpush2.bf16.msra.mxu0 0
    %9051 = vmatprep.mubr.bf16.mxu0 0
    %9052 = vmatmul.mubr.bf16.gmra.mxu0 %v8895
    %v9053 = vpop.f32.mrf.mxu0
    %v9054 = vadd.f32 %v9013, %v9053
    %v9055 = vpop.f32.mrf.mxu0
    %v9056 = vadd.f32 %v9015, %v9055
    %v9057 = vpop.f32.mrf.mxu0
    %v9058 = vpop.f32.mrf.mxu0
    %9059 = vdwg.mxu0
    %9060 = vmatprep.subr.bf16.mxu0 %v5865
    %9061 = vmatpush1.bf16.msra.mxu0 %v5864
    %9062 = vmatprep.subr.bf16.mxu0 %v5853
    %9063 = vmatpush1.bf16.msra.mxu0 %v5852
    %9064 = vmatprep.subr.bf16.mxu0 %v5841
    %9065 = vmatpush1.bf16.msra.mxu0 %v5840
    %9066 = vmatprep.subr.bf16.mxu0 %v5829
    %9067 = vmatpush1.bf16.msra.mxu0 %v5828
    %9068 = vmatprep.subr.bf16.mxu0 %v5817
    %9069 = vmatpush1.bf16.msra.mxu0 %v5816
    %9070 = vmatprep.subr.bf16.mxu0 %v5805
    %9071 = vmatpush1.bf16.msra.mxu0 %v5804
    %9072 = vmatprep.subr.bf16.mxu0 %v5793
    %9073 = vmatpush1.bf16.msra.mxu0 %v5792
    %9074 = vmatprep.subr.bf16.mxu0 %v5781
    %9075 = vmatpush1.bf16.msra.mxu0 %v5780
    %9076 = vmatprep.subr.bf16.mxu0 %v5961
    %9077 = vmatpush2.bf16.msra.mxu0 %v5960
    %9078 = vmatprep.subr.bf16.mxu0 %v5949
    %9079 = vmatpush2.bf16.msra.mxu0 %v5948
    %9080 = vmatprep.subr.bf16.mxu0 %v5937
    %9081 = vmatpush2.bf16.msra.mxu0 %v5936
    %9082 = vmatprep.subr.bf16.mxu0 %v5925
    %9083 = vmatpush2.bf16.msra.mxu0 %v5924
    %9084 = vmatprep.subr.bf16.mxu0 %v5913
    %9085 = vmatpush2.bf16.msra.mxu0 %v5912
    %9086 = vmatprep.subr.bf16.mxu0 %v5901
    %9087 = vmatpush2.bf16.msra.mxu0 %v5900
    %9088 = vmatprep.subr.bf16.mxu0 %v5889
    %9089 = vmatpush2.bf16.msra.mxu0 %v5888
    %9090 = vmatprep.subr.bf16.mxu0 %v5877
    %9091 = vmatpush2.bf16.msra.mxu0 %v5876
    %9092 = vmatprep.mubr.bf16.mxu0 %v8894
    %9093 = vmatmul.mubr.bf16.gmra.mxu0 %v8893
    %v9094 = vpop.f32.mrf.mxu0
    %v9095 = vadd.f32 0.0, %v9094
    %v9096 = vpop.f32.mrf.mxu0
    %v9097 = vadd.f32 0.0, %v9096
    %v9098 = vpop.f32.mrf.mxu0
    %v9099 = vpop.f32.mrf.mxu0
    %9100 = vdwg.mxu0
    %9101 = vmatprep.subr.bf16.mxu0 %v6057
    %9102 = vmatpush1.bf16.msra.mxu0 %v6056
    %9103 = vmatprep.subr.bf16.mxu0 %v6045
    %9104 = vmatpush1.bf16.msra.mxu0 %v6044
    %9105 = vmatprep.subr.bf16.mxu0 %v6033
    %9106 = vmatpush1.bf16.msra.mxu0 %v6032
    %9107 = vmatprep.subr.bf16.mxu0 %v6021
    %9108 = vmatpush1.bf16.msra.mxu0 %v6020
    %9109 = vmatprep.subr.bf16.mxu0 %v6009
    %9110 = vmatpush1.bf16.msra.mxu0 %v6008
    %9111 = vmatprep.subr.bf16.mxu0 %v5997
    %9112 = vmatpush1.bf16.msra.mxu0 %v5996
    %9113 = vmatprep.subr.bf16.mxu0 %v5985
    %9114 = vmatpush1.bf16.msra.mxu0 %v5984
    %9115 = vmatprep.subr.bf16.mxu0 %v5973
    %9116 = vmatpush1.bf16.msra.mxu0 %v5972
    %9117 = vmatprep.subr.bf16.mxu0 0
    %9118 = vmatpush2.bf16.msra.mxu0 0
    %9119 = vmatprep.subr.bf16.mxu0 0
    %9120 = vmatpush2.bf16.msra.mxu0 0
    %9121 = vmatprep.subr.bf16.mxu0 0
    %9122 = vmatpush2.bf16.msra.mxu0 0
    %9123 = vmatprep.subr.bf16.mxu0 0
    %9124 = vmatpush2.bf16.msra.mxu0 0
    %9125 = vmatprep.subr.bf16.mxu0 0
    %9126 = vmatpush2.bf16.msra.mxu0 0
    %9127 = vmatprep.subr.bf16.mxu0 0
    %9128 = vmatpush2.bf16.msra.mxu0 0
    %9129 = vmatprep.subr.bf16.mxu0 0
    %9130 = vmatpush2.bf16.msra.mxu0 0
    %9131 = vmatprep.subr.bf16.mxu0 0
    %9132 = vmatpush2.bf16.msra.mxu0 0
    %9133 = vmatprep.mubr.bf16.mxu0 0
    %9134 = vmatmul.mubr.bf16.gmra.mxu0 %v8895
    %v9135 = vpop.f32.mrf.mxu0
    %v9136 = vadd.f32 %v9095, %v9135
    %v9137 = vpop.f32.mrf.mxu0
    %v9138 = vadd.f32 %v9097, %v9137
    %v9139 = vpop.f32.mrf.mxu0
    %v9140 = vpop.f32.mrf.mxu0
    %9141 = vdwg.mxu0
    %9142 = vmatprep.subr.bf16.mxu0 %v5867
    %9143 = vmatpush1.bf16.msra.mxu0 %v5866
    %9144 = vmatprep.subr.bf16.mxu0 %v5855
    %9145 = vmatpush1.bf16.msra.mxu0 %v5854
    %9146 = vmatprep.subr.bf16.mxu0 %v5843
    %9147 = vmatpush1.bf16.msra.mxu0 %v5842
    %9148 = vmatprep.subr.bf16.mxu0 %v5831
    %9149 = vmatpush1.bf16.msra.mxu0 %v5830
    %9150 = vmatprep.subr.bf16.mxu0 %v5819
    %9151 = vmatpush1.bf16.msra.mxu0 %v5818
    %9152 = vmatprep.subr.bf16.mxu0 %v5807
    %9153 = vmatpush1.bf16.msra.mxu0 %v5806
    %9154 = vmatprep.subr.bf16.mxu0 %v5795
    %9155 = vmatpush1.bf16.msra.mxu0 %v5794
    %9156 = vmatprep.subr.bf16.mxu0 %v5783
    %9157 = vmatpush1.bf16.msra.mxu0 %v5782
    %9158 = vmatprep.subr.bf16.mxu0 %v5963
    %9159 = vmatpush2.bf16.msra.mxu0 %v5962
    %9160 = vmatprep.subr.bf16.mxu0 %v5951
    %9161 = vmatpush2.bf16.msra.mxu0 %v5950
    %9162 = vmatprep.subr.bf16.mxu0 %v5939
    %9163 = vmatpush2.bf16.msra.mxu0 %v5938
    %9164 = vmatprep.subr.bf16.mxu0 %v5927
    %9165 = vmatpush2.bf16.msra.mxu0 %v5926
    %9166 = vmatprep.subr.bf16.mxu0 %v5915
    %9167 = vmatpush2.bf16.msra.mxu0 %v5914
    %9168 = vmatprep.subr.bf16.mxu0 %v5903
    %9169 = vmatpush2.bf16.msra.mxu0 %v5902
    %9170 = vmatprep.subr.bf16.mxu0 %v5891
    %9171 = vmatpush2.bf16.msra.mxu0 %v5890
    %9172 = vmatprep.subr.bf16.mxu0 %v5879
    %9173 = vmatpush2.bf16.msra.mxu0 %v5878
    %9174 = vmatprep.mubr.bf16.mxu0 %v8894
    %9175 = vmatmul.mubr.bf16.gmra.mxu0 %v8893
    %v9176 = vpop.f32.mrf.mxu0
    %v9177 = vadd.f32 0.0, %v9176
    %v9178 = vpop.f32.mrf.mxu0
    %v9179 = vadd.f32 0.0, %v9178
    %v9180 = vpop.f32.mrf.mxu0
    %v9181 = vpop.f32.mrf.mxu0
    %9182 = vdwg.mxu0
    %9183 = vmatprep.subr.bf16.mxu0 %v6059
    %9184 = vmatpush1.bf16.msra.mxu0 %v6058
    %9185 = vmatprep.subr.bf16.mxu0 %v6047
    %9186 = vmatpush1.bf16.msra.mxu0 %v6046
    %9187 = vmatprep.subr.bf16.mxu0 %v6035
    %9188 = vmatpush1.bf16.msra.mxu0 %v6034
    %9189 = vmatprep.subr.bf16.mxu0 %v6023
    %9190 = vmatpush1.bf16.msra.mxu0 %v6022
    %9191 = vmatprep.subr.bf16.mxu0 %v6011
    %9192 = vmatpush1.bf16.msra.mxu0 %v6010
    %9193 = vmatprep.subr.bf16.mxu0 %v5999
    %9194 = vmatpush1.bf16.msra.mxu0 %v5998
    %9195 = vmatprep.subr.bf16.mxu0 %v5987
    %9196 = vmatpush1.bf16.msra.mxu0 %v5986
    %9197 = vmatprep.subr.bf16.mxu0 %v5975
    %9198 = vmatpush1.bf16.msra.mxu0 %v5974
    %9199 = vmatprep.subr.bf16.mxu0 0
    %9200 = vmatpush2.bf16.msra.mxu0 0
    %9201 = vmatprep.subr.bf16.mxu0 0
    %9202 = vmatpush2.bf16.msra.mxu0 0
    %9203 = vmatprep.subr.bf16.mxu0 0
    %9204 = vmatpush2.bf16.msra.mxu0 0
    %9205 = vmatprep.subr.bf16.mxu0 0
    %9206 = vmatpush2.bf16.msra.mxu0 0
    %9207 = vmatprep.subr.bf16.mxu0 0
    %9208 = vmatpush2.bf16.msra.mxu0 0
    %9209 = vmatprep.subr.bf16.mxu0 0
    %9210 = vmatpush2.bf16.msra.mxu0 0
    %9211 = vmatprep.subr.bf16.mxu0 0
    %9212 = vmatpush2.bf16.msra.mxu0 0
    %9213 = vmatprep.subr.bf16.mxu0 0
    %9214 = vmatpush2.bf16.msra.mxu0 0
    %9215 = vmatprep.mubr.bf16.mxu0 0
    %9216 = vmatmul.mubr.bf16.gmra.mxu0 %v8895
    %v9217 = vpop.f32.mrf.mxu0
    %v9218 = vadd.f32 %v9177, %v9217
    %v9219 = vpop.f32.mrf.mxu0
    %v9220 = vadd.f32 %v9179, %v9219
    %v9221 = vpop.f32.mrf.mxu0
    %v9222 = vpop.f32.mrf.mxu0
    %9223 = vdwg.mxu0
    %9224 = vmatprep.subr.bf16.mxu0 %v5869
    %9225 = vmatpush1.bf16.msra.mxu0 %v5868
    %9226 = vmatprep.subr.bf16.mxu0 %v5857
    %9227 = vmatpush1.bf16.msra.mxu0 %v5856
    %9228 = vmatprep.subr.bf16.mxu0 %v5845
    %9229 = vmatpush1.bf16.msra.mxu0 %v5844
    %9230 = vmatprep.subr.bf16.mxu0 %v5833
    %9231 = vmatpush1.bf16.msra.mxu0 %v5832
    %9232 = vmatprep.subr.bf16.mxu0 %v5821
    %9233 = vmatpush1.bf16.msra.mxu0 %v5820
    %9234 = vmatprep.subr.bf16.mxu0 %v5809
    %9235 = vmatpush1.bf16.msra.mxu0 %v5808
    %9236 = vmatprep.subr.bf16.mxu0 %v5797
    %9237 = vmatpush1.bf16.msra.mxu0 %v5796
    %9238 = vmatprep.subr.bf16.mxu0 %v5785
    %9239 = vmatpush1.bf16.msra.mxu0 %v5784
    %9240 = vmatprep.subr.bf16.mxu0 %v5965
    %9241 = vmatpush2.bf16.msra.mxu0 %v5964
    %9242 = vmatprep.subr.bf16.mxu0 %v5953
    %9243 = vmatpush2.bf16.msra.mxu0 %v5952
    %9244 = vmatprep.subr.bf16.mxu0 %v5941
    %9245 = vmatpush2.bf16.msra.mxu0 %v5940
    %9246 = vmatprep.subr.bf16.mxu0 %v5929
    %9247 = vmatpush2.bf16.msra.mxu0 %v5928
    %9248 = vmatprep.subr.bf16.mxu0 %v5917
    %9249 = vmatpush2.bf16.msra.mxu0 %v5916
    %9250 = vmatprep.subr.bf16.mxu0 %v5905
    %9251 = vmatpush2.bf16.msra.mxu0 %v5904
    %9252 = vmatprep.subr.bf16.mxu0 %v5893
    %9253 = vmatpush2.bf16.msra.mxu0 %v5892
    %9254 = vmatprep.subr.bf16.mxu0 %v5881
    %9255 = vmatpush2.bf16.msra.mxu0 %v5880
    %9256 = vmatprep.mubr.bf16.mxu0 %v8894
    %9257 = vmatmul.mubr.bf16.gmra.mxu0 %v8893
    %v9258 = vpop.f32.mrf.mxu0
    %v9259 = vadd.f32 0.0, %v9258
    %v9260 = vpop.f32.mrf.mxu0
    %v9261 = vadd.f32 0.0, %v9260
    %v9262 = vpop.f32.mrf.mxu0
    %v9263 = vpop.f32.mrf.mxu0
    %9264 = vdwg.mxu0
    %9265 = vmatprep.subr.bf16.mxu0 %v6061
    %9266 = vmatpush1.bf16.msra.mxu0 %v6060
    %9267 = vmatprep.subr.bf16.mxu0 %v6049
    %9268 = vmatpush1.bf16.msra.mxu0 %v6048
    %9269 = vmatprep.subr.bf16.mxu0 %v6037
    %9270 = vmatpush1.bf16.msra.mxu0 %v6036
    %9271 = vmatprep.subr.bf16.mxu0 %v6025
    %9272 = vmatpush1.bf16.msra.mxu0 %v6024
    %9273 = vmatprep.subr.bf16.mxu0 %v6013
    %9274 = vmatpush1.bf16.msra.mxu0 %v6012
    %9275 = vmatprep.subr.bf16.mxu0 %v6001
    %9276 = vmatpush1.bf16.msra.mxu0 %v6000
    %9277 = vmatprep.subr.bf16.mxu0 %v5989
    %9278 = vmatpush1.bf16.msra.mxu0 %v5988
    %9279 = vmatprep.subr.bf16.mxu0 %v5977
    %9280 = vmatpush1.bf16.msra.mxu0 %v5976
    %9281 = vmatprep.subr.bf16.mxu0 0
    %9282 = vmatpush2.bf16.msra.mxu0 0
    %9283 = vmatprep.subr.bf16.mxu0 0
    %9284 = vmatpush2.bf16.msra.mxu0 0
    %9285 = vmatprep.subr.bf16.mxu0 0
    %9286 = vmatpush2.bf16.msra.mxu0 0
    %9287 = vmatprep.subr.bf16.mxu0 0
    %9288 = vmatpush2.bf16.msra.mxu0 0
    %9289 = vmatprep.subr.bf16.mxu0 0
    %9290 = vmatpush2.bf16.msra.mxu0 0
    %9291 = vmatprep.subr.bf16.mxu0 0
    %9292 = vmatpush2.bf16.msra.mxu0 0
    %9293 = vmatprep.subr.bf16.mxu0 0
    %9294 = vmatpush2.bf16.msra.mxu0 0
    %9295 = vmatprep.subr.bf16.mxu0 0
    %9296 = vmatpush2.bf16.msra.mxu0 0
    %9297 = vmatprep.mubr.bf16.mxu0 0
    %9298 = vmatmul.mubr.bf16.gmra.mxu0 %v8895
    %v9299 = vpop.f32.mrf.mxu0
    %v9300 = vadd.f32 %v9259, %v9299
    %v9301 = vpop.f32.mrf.mxu0
    %v9302 = vadd.f32 %v9261, %v9301
    %v9303 = vpop.f32.mrf.mxu0
    %v9304 = vpop.f32.mrf.mxu0
    %9305 = vdwg.mxu0
    %9306 = vmatprep.subr.bf16.mxu0 %v5871
    %9307 = vmatpush1.bf16.msra.mxu0 %v5870
    %9308 = vmatprep.subr.bf16.mxu0 %v5859
    %9309 = vmatpush1.bf16.msra.mxu0 %v5858
    %9310 = vmatprep.subr.bf16.mxu0 %v5847
    %9311 = vmatpush1.bf16.msra.mxu0 %v5846
    %9312 = vmatprep.subr.bf16.mxu0 %v5835
    %9313 = vmatpush1.bf16.msra.mxu0 %v5834
    %9314 = vmatprep.subr.bf16.mxu0 %v5823
    %9315 = vmatpush1.bf16.msra.mxu0 %v5822
    %9316 = vmatprep.subr.bf16.mxu0 %v5811
    %9317 = vmatpush1.bf16.msra.mxu0 %v5810
    %9318 = vmatprep.subr.bf16.mxu0 %v5799
    %9319 = vmatpush1.bf16.msra.mxu0 %v5798
    %9320 = vmatprep.subr.bf16.mxu0 %v5787
    %9321 = vmatpush1.bf16.msra.mxu0 %v5786
    %9322 = vmatprep.subr.bf16.mxu0 %v5967
    %9323 = vmatpush2.bf16.msra.mxu0 %v5966
    %9324 = vmatprep.subr.bf16.mxu0 %v5955
    %9325 = vmatpush2.bf16.msra.mxu0 %v5954
    %9326 = vmatprep.subr.bf16.mxu0 %v5943
    %9327 = vmatpush2.bf16.msra.mxu0 %v5942
    %9328 = vmatprep.subr.bf16.mxu0 %v5931
    %9329 = vmatpush2.bf16.msra.mxu0 %v5930
    %9330 = vmatprep.subr.bf16.mxu0 %v5919
    %9331 = vmatpush2.bf16.msra.mxu0 %v5918
    %9332 = vmatprep.subr.bf16.mxu0 %v5907
    %9333 = vmatpush2.bf16.msra.mxu0 %v5906
    %9334 = vmatprep.subr.bf16.mxu0 %v5895
    %9335 = vmatpush2.bf16.msra.mxu0 %v5894
    %9336 = vmatprep.subr.bf16.mxu0 %v5883
    %9337 = vmatpush2.bf16.msra.mxu0 %v5882
    %9338 = vmatprep.mubr.bf16.mxu0 %v8894
    %9339 = vmatmul.mubr.bf16.gmra.mxu0 %v8893
    %v9340 = vpop.f32.mrf.mxu0
    %v9341 = vadd.f32 0.0, %v9340
    %v9342 = vpop.f32.mrf.mxu0
    %v9343 = vadd.f32 0.0, %v9342
    %v9344 = vpop.f32.mrf.mxu0
    %v9345 = vpop.f32.mrf.mxu0
    %9346 = vdwg.mxu0
    %9347 = vmatprep.subr.bf16.mxu0 %v6063
    %9348 = vmatpush1.bf16.msra.mxu0 %v6062
    %9349 = vmatprep.subr.bf16.mxu0 %v6051
    %9350 = vmatpush1.bf16.msra.mxu0 %v6050
    %9351 = vmatprep.subr.bf16.mxu0 %v6039
    %9352 = vmatpush1.bf16.msra.mxu0 %v6038
    %9353 = vmatprep.subr.bf16.mxu0 %v6027
    %9354 = vmatpush1.bf16.msra.mxu0 %v6026
    %9355 = vmatprep.subr.bf16.mxu0 %v6015
    %9356 = vmatpush1.bf16.msra.mxu0 %v6014
    %9357 = vmatprep.subr.bf16.mxu0 %v6003
    %9358 = vmatpush1.bf16.msra.mxu0 %v6002
    %9359 = vmatprep.subr.bf16.mxu0 %v5991
    %9360 = vmatpush1.bf16.msra.mxu0 %v5990
    %9361 = vmatprep.subr.bf16.mxu0 %v5979
    %9362 = vmatpush1.bf16.msra.mxu0 %v5978
    %9363 = vmatprep.subr.bf16.mxu0 0
    %9364 = vmatpush2.bf16.msra.mxu0 0
    %9365 = vmatprep.subr.bf16.mxu0 0
    %9366 = vmatpush2.bf16.msra.mxu0 0
    %9367 = vmatprep.subr.bf16.mxu0 0
    %9368 = vmatpush2.bf16.msra.mxu0 0
    %9369 = vmatprep.subr.bf16.mxu0 0
    %9370 = vmatpush2.bf16.msra.mxu0 0
    %9371 = vmatprep.subr.bf16.mxu0 0
    %9372 = vmatpush2.bf16.msra.mxu0 0
    %9373 = vmatprep.subr.bf16.mxu0 0
    %9374 = vmatpush2.bf16.msra.mxu0 0
    %9375 = vmatprep.subr.bf16.mxu0 0
    %9376 = vmatpush2.bf16.msra.mxu0 0
    %9377 = vmatprep.subr.bf16.mxu0 0
    %9378 = vmatpush2.bf16.msra.mxu0 0
    %9379 = vmatprep.mubr.bf16.mxu0 0
    %9380 = vmatmul.mubr.bf16.gmra.mxu0 %v8895
    %v9381 = vpop.f32.mrf.mxu0
    %v9382 = vadd.f32 %v9341, %v9381
    %v9383 = vpop.f32.mrf.mxu0
    %v9384 = vadd.f32 %v9343, %v9383
    %v9385 = vpop.f32.mrf.mxu0
    %v9386 = vpop.f32.mrf.mxu0
    %9387 = vdwg.mxu0
    %v9388 = vadd.f32 %v8881, %v8972
    %v9389 = vadd.f32 %v8882, %v8974
    %v9390 = vadd.f32 %v8883, %v9054
    %v9391 = vadd.f32 %v8884, %v9056
    %v9392 = vadd.f32 %v8885, %v9136
    %v9393 = vadd.f32 %v8886, %v9138
    %v9394 = vadd.f32 %v8887, %v9218
    %v9395 = vadd.f32 %v8888, %v9220
    %v9396 = vadd.f32 %v8889, %v9300
    %v9397 = vadd.f32 %v8890, %v9302
    %v9398 = vadd.f32 %v8891, %v9382
    %v9399 = vadd.f32 %v8892, %v9384
    %v9400 = vpack.c.bf16 %v9388, %v9388
    %v9401 = vpack.c.bf16 %v9389, %v9389
    %v9402 = vpack.c.bf16 %v9390, %v9390
    %v9403 = vpack.c.bf16 %v9391, %v9391
    %v9404 = vpack.c.bf16 %v9392, %v9392
    %v9405 = vpack.c.bf16 %v9393, %v9393
    %v9406 = vpack.c.bf16 %v9394, %v9394
    %v9407 = vpack.c.bf16 %v9395, %v9395
    %v9408 = vpack.c.bf16 %v9396, %v9396
    %v9409 = vpack.c.bf16 %v9397, %v9397
    %v9410 = vpack.c.bf16 %v9398, %v9398
    %v9411 = vpack.c.bf16 %v9399, %v9399
    %v9412 = vxor.u32 %v9400, 2147516416
    %v9413 = vxor.u32 %v9401, 2147516416
    %v9414 = vxor.u32 %v9402, 2147516416
    %v9416 = vmul.bf16 %v9412, 1069105081
    %v9417 = vpow.bf16.pop %v9416
    %v9419 = vmul.bf16 %v9413, 1069105081
    %v9420 = vpow.bf16.pop %v9419
    %v9422 = vmul.bf16 %v9414, 1069105081
    %v9423 = vpow.bf16.pop %v9422
    %v9424 = vadd.bf16 %v9417, 1065369472
    %v9425 = vadd.bf16 %v9420, 1065369472
    %v9426 = vadd.bf16 %v9423, 1065369472
    %v9427 = vrcp.bf16.pop %v9424
    %v9428 = vmul.bf16 1065369472, %v9427
    %v9429 = vrcp.bf16.pop %v9425
    %v9430 = vmul.bf16 1065369472, %v9429
    %v9431 = vrcp.bf16.pop %v9426
    %v9432 = vmul.bf16 1065369472, %v9431
    %v9433 = vunpack.c.l.bf16 %v9428
    %v9434 = vunpack.c.l.bf16 %v9430
    %v9435 = vunpack.c.l.bf16 %v9432
    %v9436 = vxor.u32 %v9403, 2147516416
    %v9437 = vxor.u32 %v9404, 2147516416
    %v9438 = vxor.u32 %v9405, 2147516416
    %v9440 = vmul.bf16 %v9436, 1069105081
    %v9441 = vpow.bf16.pop %v9440
    %v9443 = vmul.bf16 %v9437, 1069105081
    %v9444 = vpow.bf16.pop %v9443
    %v9446 = vmul.bf16 %v9438, 1069105081
    %v9447 = vpow.bf16.pop %v9446
    %v9448 = vadd.bf16 %v9441, 1065369472
    %v9449 = vadd.bf16 %v9444, 1065369472
    %v9450 = vadd.bf16 %v9447, 1065369472
    %v9451 = vrcp.bf16.pop %v9448
    %v9452 = vmul.bf16 1065369472, %v9451
    %v9453 = vrcp.bf16.pop %v9449
    %v9454 = vmul.bf16 1065369472, %v9453
    %v9455 = vrcp.bf16.pop %v9450
    %v9456 = vmul.bf16 1065369472, %v9455
    %v9457 = vunpack.c.l.bf16 %v9452
    %v9458 = vunpack.c.l.bf16 %v9454
    %v9459 = vunpack.c.l.bf16 %v9456
    %v9460 = vtanh.bf16.pop %v9406
    %v9461 = vtanh.bf16.pop %v9407
    %v9462 = vtanh.bf16.pop %v9408
    %v9463 = vunpack.c.l.bf16 %v9460
    %v9464 = vunpack.c.l.bf16 %v9461
    %v9465 = vunpack.c.l.bf16 %v9462
    %v9466 = vxor.u32 %v9409, 2147516416
    %v9467 = vxor.u32 %v9410, 2147516416
    %v9468 = vxor.u32 %v9411, 2147516416
    %v9470 = vmul.bf16 %v9466, 1069105081
    %v9471 = vpow.bf16.pop %v9470
    %v9473 = vmul.bf16 %v9467, 1069105081
    %v9474 = vpow.bf16.pop %v9473
    %v9476 = vmul.bf16 %v9468, 1069105081
    %v9477 = vpow.bf16.pop %v9476
    %v9478 = vadd.bf16 %v9471, 1065369472
    %v9479 = vadd.bf16 %v9474, 1065369472
    %v9480 = vadd.bf16 %v9477, 1065369472
    %v9481 = vrcp.bf16.pop %v9478
    %v9482 = vmul.bf16 1065369472, %v9481
    %v9483 = vrcp.bf16.pop %v9479
    %v9484 = vmul.bf16 1065369472, %v9483
    %v9485 = vrcp.bf16.pop %v9480
    %v9486 = vmul.bf16 1065369472, %v9485
    %v9487 = vunpack.c.l.bf16 %v9482
    %v9488 = vunpack.c.l.bf16 %v9484
    %v9489 = vunpack.c.l.bf16 %v9486
    %v9490 = vmul.f32 %v9457, %v8860
    %v9491 = vmul.f32 %v9458, %v8861
    %v9492 = vmul.f32 %v9459, %v8862
    %v9493 = vmul.f32 %v9433, %v9463
    %v9494 = vmul.f32 %v9434, %v9464
    %v9495 = vmul.f32 %v9435, %v9465
    %v9496 = vadd.f32 %v9490, %v9493
    %v9497 = vadd.f32 %v9491, %v9494
    %v9498 = vadd.f32 %v9492, %v9495
    %v9499 = vpack.c.bf16 %v9496, %v9496
    %v9500 = vpack.c.bf16 %v9497, %v9497
    %v9501 = vpack.c.bf16 %v9498, %v9498
    %v9502 = vtanh.bf16.pop %v9499
    %v9503 = vtanh.bf16.pop %v9500
    %v9504 = vtanh.bf16.pop %v9501
    %v9505 = vunpack.c.l.bf16 %v9502
    %v9506 = vunpack.c.l.bf16 %v9503
    %v9507 = vunpack.c.l.bf16 %v9504
    %v9508 = vmul.f32 %v9487, %v9505
    %v9509 = vmul.f32 %v9488, %v9506
    %v9510 = vmul.f32 %v9489, %v9507
    %v9511 = vadd.f32 %v8875, %v9508
    %v9512 = vadd.f32 %v8876, %v9509
    %v9513 = vadd.f32 %v8877, %v9510
    %s9514 = smul.u32 5, 12
    %s9515 = smul.addr %s9514, 8
    %s9516 = scalar_lea.vmem [#allocation2], %s9515
    %v9517 = vld [vmem:[%s9516] sm:$0xff]
    %v9518 = vld [vmem:[%s9516 + $0x8] sm:$0xff]
    %v9519 = vld [vmem:[%s9516 + $0x10] sm:$0xff]
    %v9520 = vld [vmem:[%s9516 + $0x18] sm:$0xff]
    %v9521 = vld [vmem:[%s9516 + $0x20] sm:$0xff]
    %v9522 = vld [vmem:[%s9516 + $0x28] sm:$0xff]
    %v9523 = vld [vmem:[%s9516 + $0x30] sm:$0xff]
    %v9524 = vld [vmem:[%s9516 + $0x38] sm:$0xff]
    %v9525 = vld [vmem:[%s9516 + $0x40] sm:$0xff]
    %v9526 = vld [vmem:[%s9516 + $0x48] sm:$0xff]
    %v9527 = vld [vmem:[%s9516 + $0x50] sm:$0xff]
    %v9528 = vld [vmem:[%s9516 + $0x58] sm:$0xff]
    %v9529 = vpack.c.bf16 %v9508, %v9508
    %v9530 = vpack.c.bf16 %v9509, %v9509
    %v9531 = vpack.c.bf16 %v9510, %v9510
    %9532 = vmatprep.subr.bf16.mxu0 %v5861
    %9533 = vmatpush1.bf16.msra.mxu0 %v5860
    %9534 = vmatprep.subr.bf16.mxu0 %v5849
    %9535 = vmatpush1.bf16.msra.mxu0 %v5848
    %9536 = vmatprep.subr.bf16.mxu0 %v5837
    %9537 = vmatpush1.bf16.msra.mxu0 %v5836
    %9538 = vmatprep.subr.bf16.mxu0 %v5825
    %9539 = vmatpush1.bf16.msra.mxu0 %v5824
    %9540 = vmatprep.subr.bf16.mxu0 %v5813
    %9541 = vmatpush1.bf16.msra.mxu0 %v5812
    %9542 = vmatprep.subr.bf16.mxu0 %v5801
    %9543 = vmatpush1.bf16.msra.mxu0 %v5800
    %9544 = vmatprep.subr.bf16.mxu0 %v5789
    %9545 = vmatpush1.bf16.msra.mxu0 %v5788
    %9546 = vmatprep.subr.bf16.mxu0 %v5777
    %9547 = vmatpush1.bf16.msra.mxu0 %v5776
    %9548 = vmatprep.subr.bf16.mxu0 %v5957
    %9549 = vmatpush2.bf16.msra.mxu0 %v5956
    %9550 = vmatprep.subr.bf16.mxu0 %v5945
    %9551 = vmatpush2.bf16.msra.mxu0 %v5944
    %9552 = vmatprep.subr.bf16.mxu0 %v5933
    %9553 = vmatpush2.bf16.msra.mxu0 %v5932
    %9554 = vmatprep.subr.bf16.mxu0 %v5921
    %9555 = vmatpush2.bf16.msra.mxu0 %v5920
    %9556 = vmatprep.subr.bf16.mxu0 %v5909
    %9557 = vmatpush2.bf16.msra.mxu0 %v5908
    %9558 = vmatprep.subr.bf16.mxu0 %v5897
    %9559 = vmatpush2.bf16.msra.mxu0 %v5896
    %9560 = vmatprep.subr.bf16.mxu0 %v5885
    %9561 = vmatpush2.bf16.msra.mxu0 %v5884
    %9562 = vmatprep.subr.bf16.mxu0 %v5873
    %9563 = vmatpush2.bf16.msra.mxu0 %v5872
    %9564 = vmatprep.mubr.bf16.mxu0 %v9530
    %9565 = vmatmul.mubr.bf16.gmra.mxu0 %v9529
    %v9566 = vpop.f32.mrf.mxu0
    %v9567 = vadd.f32 0.0, %v9566
    %v9568 = vpop.f32.mrf.mxu0
    %v9569 = vadd.f32 0.0, %v9568
    %v9570 = vpop.f32.mrf.mxu0
    %v9571 = vpop.f32.mrf.mxu0
    %9572 = vdwg.mxu0
    %9573 = vmatprep.subr.bf16.mxu0 %v6053
    %9574 = vmatpush1.bf16.msra.mxu0 %v6052
    %9575 = vmatprep.subr.bf16.mxu0 %v6041
    %9576 = vmatpush1.bf16.msra.mxu0 %v6040
    %9577 = vmatprep.subr.bf16.mxu0 %v6029
    %9578 = vmatpush1.bf16.msra.mxu0 %v6028
    %9579 = vmatprep.subr.bf16.mxu0 %v6017
    %9580 = vmatpush1.bf16.msra.mxu0 %v6016
    %9581 = vmatprep.subr.bf16.mxu0 %v6005
    %9582 = vmatpush1.bf16.msra.mxu0 %v6004
    %9583 = vmatprep.subr.bf16.mxu0 %v5993
    %9584 = vmatpush1.bf16.msra.mxu0 %v5992
    %9585 = vmatprep.subr.bf16.mxu0 %v5981
    %9586 = vmatpush1.bf16.msra.mxu0 %v5980
    %9587 = vmatprep.subr.bf16.mxu0 %v5969
    %9588 = vmatpush1.bf16.msra.mxu0 %v5968
    %9589 = vmatprep.subr.bf16.mxu0 0
    %9590 = vmatpush2.bf16.msra.mxu0 0
    %9591 = vmatprep.subr.bf16.mxu0 0
    %9592 = vmatpush2.bf16.msra.mxu0 0
    %9593 = vmatprep.subr.bf16.mxu0 0
    %9594 = vmatpush2.bf16.msra.mxu0 0
    %9595 = vmatprep.subr.bf16.mxu0 0
    %9596 = vmatpush2.bf16.msra.mxu0 0
    %9597 = vmatprep.subr.bf16.mxu0 0
    %9598 = vmatpush2.bf16.msra.mxu0 0
    %9599 = vmatprep.subr.bf16.mxu0 0
    %9600 = vmatpush2.bf16.msra.mxu0 0
    %9601 = vmatprep.subr.bf16.mxu0 0
    %9602 = vmatpush2.bf16.msra.mxu0 0
    %9603 = vmatprep.subr.bf16.mxu0 0
    %9604 = vmatpush2.bf16.msra.mxu0 0
    %9605 = vmatprep.mubr.bf16.mxu0 0
    %9606 = vmatmul.mubr.bf16.gmra.mxu0 %v9531
    %v9607 = vpop.f32.mrf.mxu0
    %v9608 = vadd.f32 %v9567, %v9607
    %v9609 = vpop.f32.mrf.mxu0
    %v9610 = vadd.f32 %v9569, %v9609
    %v9611 = vpop.f32.mrf.mxu0
    %v9612 = vpop.f32.mrf.mxu0
    %9613 = vdwg.mxu0
    %9614 = vmatprep.subr.bf16.mxu0 %v5863
    %9615 = vmatpush1.bf16.msra.mxu0 %v5862
    %9616 = vmatprep.subr.bf16.mxu0 %v5851
    %9617 = vmatpush1.bf16.msra.mxu0 %v5850
    %9618 = vmatprep.subr.bf16.mxu0 %v5839
    %9619 = vmatpush1.bf16.msra.mxu0 %v5838
    %9620 = vmatprep.subr.bf16.mxu0 %v5827
    %9621 = vmatpush1.bf16.msra.mxu0 %v5826
    %9622 = vmatprep.subr.bf16.mxu0 %v5815
    %9623 = vmatpush1.bf16.msra.mxu0 %v5814
    %9624 = vmatprep.subr.bf16.mxu0 %v5803
    %9625 = vmatpush1.bf16.msra.mxu0 %v5802
    %9626 = vmatprep.subr.bf16.mxu0 %v5791
    %9627 = vmatpush1.bf16.msra.mxu0 %v5790
    %9628 = vmatprep.subr.bf16.mxu0 %v5779
    %9629 = vmatpush1.bf16.msra.mxu0 %v5778
    %9630 = vmatprep.subr.bf16.mxu0 %v5959
    %9631 = vmatpush2.bf16.msra.mxu0 %v5958
    %9632 = vmatprep.subr.bf16.mxu0 %v5947
    %9633 = vmatpush2.bf16.msra.mxu0 %v5946
    %9634 = vmatprep.subr.bf16.mxu0 %v5935
    %9635 = vmatpush2.bf16.msra.mxu0 %v5934
    %9636 = vmatprep.subr.bf16.mxu0 %v5923
    %9637 = vmatpush2.bf16.msra.mxu0 %v5922
    %9638 = vmatprep.subr.bf16.mxu0 %v5911
    %9639 = vmatpush2.bf16.msra.mxu0 %v5910
    %9640 = vmatprep.subr.bf16.mxu0 %v5899
    %9641 = vmatpush2.bf16.msra.mxu0 %v5898
    %9642 = vmatprep.subr.bf16.mxu0 %v5887
    %9643 = vmatpush2.bf16.msra.mxu0 %v5886
    %9644 = vmatprep.subr.bf16.mxu0 %v5875
    %9645 = vmatpush2.bf16.msra.mxu0 %v5874
    %9646 = vmatprep.mubr.bf16.mxu0 %v9530
    %9647 = vmatmul.mubr.bf16.gmra.mxu0 %v9529
    %v9648 = vpop.f32.mrf.mxu0
    %v9649 = vadd.f32 0.0, %v9648
    %v9650 = vpop.f32.mrf.mxu0
    %v9651 = vadd.f32 0.0, %v9650
    %v9652 = vpop.f32.mrf.mxu0
    %v9653 = vpop.f32.mrf.mxu0
    %9654 = vdwg.mxu0
    %9655 = vmatprep.subr.bf16.mxu0 %v6055
    %9656 = vmatpush1.bf16.msra.mxu0 %v6054
    %9657 = vmatprep.subr.bf16.mxu0 %v6043
    %9658 = vmatpush1.bf16.msra.mxu0 %v6042
    %9659 = vmatprep.subr.bf16.mxu0 %v6031
    %9660 = vmatpush1.bf16.msra.mxu0 %v6030
    %9661 = vmatprep.subr.bf16.mxu0 %v6019
    %9662 = vmatpush1.bf16.msra.mxu0 %v6018
    %9663 = vmatprep.subr.bf16.mxu0 %v6007
    %9664 = vmatpush1.bf16.msra.mxu0 %v6006
    %9665 = vmatprep.subr.bf16.mxu0 %v5995
    %9666 = vmatpush1.bf16.msra.mxu0 %v5994
    %9667 = vmatprep.subr.bf16.mxu0 %v5983
    %9668 = vmatpush1.bf16.msra.mxu0 %v5982
    %9669 = vmatprep.subr.bf16.mxu0 %v5971
    %9670 = vmatpush1.bf16.msra.mxu0 %v5970
    %9671 = vmatprep.subr.bf16.mxu0 0
    %9672 = vmatpush2.bf16.msra.mxu0 0
    %9673 = vmatprep.subr.bf16.mxu0 0
    %9674 = vmatpush2.bf16.msra.mxu0 0
    %9675 = vmatprep.subr.bf16.mxu0 0
    %9676 = vmatpush2.bf16.msra.mxu0 0
    %9677 = vmatprep.subr.bf16.mxu0 0
    %9678 = vmatpush2.bf16.msra.mxu0 0
    %9679 = vmatprep.subr.bf16.mxu0 0
    %9680 = vmatpush2.bf16.msra.mxu0 0
    %9681 = vmatprep.subr.bf16.mxu0 0
    %9682 = vmatpush2.bf16.msra.mxu0 0
    %9683 = vmatprep.subr.bf16.mxu0 0
    %9684 = vmatpush2.bf16.msra.mxu0 0
    %9685 = vmatprep.subr.bf16.mxu0 0
    %9686 = vmatpush2.bf16.msra.mxu0 0
    %9687 = vmatprep.mubr.bf16.mxu0 0
    %9688 = vmatmul.mubr.bf16.gmra.mxu0 %v9531
    %v9689 = vpop.f32.mrf.mxu0
    %v9690 = vadd.f32 %v9649, %v9689
    %v9691 = vpop.f32.mrf.mxu0
    %v9692 = vadd.f32 %v9651, %v9691
    %v9693 = vpop.f32.mrf.mxu0
    %v9694 = vpop.f32.mrf.mxu0
    %9695 = vdwg.mxu0
    %9696 = vmatprep.subr.bf16.mxu0 %v5865
    %9697 = vmatpush1.bf16.msra.mxu0 %v5864
    %9698 = vmatprep.subr.bf16.mxu0 %v5853
    %9699 = vmatpush1.bf16.msra.mxu0 %v5852
    %9700 = vmatprep.subr.bf16.mxu0 %v5841
    %9701 = vmatpush1.bf16.msra.mxu0 %v5840
    %9702 = vmatprep.subr.bf16.mxu0 %v5829
    %9703 = vmatpush1.bf16.msra.mxu0 %v5828
    %9704 = vmatprep.subr.bf16.mxu0 %v5817
    %9705 = vmatpush1.bf16.msra.mxu0 %v5816
    %9706 = vmatprep.subr.bf16.mxu0 %v5805
    %9707 = vmatpush1.bf16.msra.mxu0 %v5804
    %9708 = vmatprep.subr.bf16.mxu0 %v5793
    %9709 = vmatpush1.bf16.msra.mxu0 %v5792
    %9710 = vmatprep.subr.bf16.mxu0 %v5781
    %9711 = vmatpush1.bf16.msra.mxu0 %v5780
    %9712 = vmatprep.subr.bf16.mxu0 %v5961
    %9713 = vmatpush2.bf16.msra.mxu0 %v5960
    %9714 = vmatprep.subr.bf16.mxu0 %v5949
    %9715 = vmatpush2.bf16.msra.mxu0 %v5948
    %9716 = vmatprep.subr.bf16.mxu0 %v5937
    %9717 = vmatpush2.bf16.msra.mxu0 %v5936
    %9718 = vmatprep.subr.bf16.mxu0 %v5925
    %9719 = vmatpush2.bf16.msra.mxu0 %v5924
    %9720 = vmatprep.subr.bf16.mxu0 %v5913
    %9721 = vmatpush2.bf16.msra.mxu0 %v5912
    %9722 = vmatprep.subr.bf16.mxu0 %v5901
    %9723 = vmatpush2.bf16.msra.mxu0 %v5900
    %9724 = vmatprep.subr.bf16.mxu0 %v5889
    %9725 = vmatpush2.bf16.msra.mxu0 %v5888
    %9726 = vmatprep.subr.bf16.mxu0 %v5877
    %9727 = vmatpush2.bf16.msra.mxu0 %v5876
    %9728 = vmatprep.mubr.bf16.mxu0 %v9530
    %9729 = vmatmul.mubr.bf16.gmra.mxu0 %v9529
    %v9730 = vpop.f32.mrf.mxu0
    %v9731 = vadd.f32 0.0, %v9730
    %v9732 = vpop.f32.mrf.mxu0
    %v9733 = vadd.f32 0.0, %v9732
    %v9734 = vpop.f32.mrf.mxu0
    %v9735 = vpop.f32.mrf.mxu0
    %9736 = vdwg.mxu0
    %9737 = vmatprep.subr.bf16.mxu0 %v6057
    %9738 = vmatpush1.bf16.msra.mxu0 %v6056
    %9739 = vmatprep.subr.bf16.mxu0 %v6045
    %9740 = vmatpush1.bf16.msra.mxu0 %v6044
    %9741 = vmatprep.subr.bf16.mxu0 %v6033
    %9742 = vmatpush1.bf16.msra.mxu0 %v6032
    %9743 = vmatprep.subr.bf16.mxu0 %v6021
    %9744 = vmatpush1.bf16.msra.mxu0 %v6020
    %9745 = vmatprep.subr.bf16.mxu0 %v6009
    %9746 = vmatpush1.bf16.msra.mxu0 %v6008
    %9747 = vmatprep.subr.bf16.mxu0 %v5997
    %9748 = vmatpush1.bf16.msra.mxu0 %v5996
    %9749 = vmatprep.subr.bf16.mxu0 %v5985
    %9750 = vmatpush1.bf16.msra.mxu0 %v5984
    %9751 = vmatprep.subr.bf16.mxu0 %v5973
    %9752 = vmatpush1.bf16.msra.mxu0 %v5972
    %9753 = vmatprep.subr.bf16.mxu0 0
    %9754 = vmatpush2.bf16.msra.mxu0 0
    %9755 = vmatprep.subr.bf16.mxu0 0
    %9756 = vmatpush2.bf16.msra.mxu0 0
    %9757 = vmatprep.subr.bf16.mxu0 0
    %9758 = vmatpush2.bf16.msra.mxu0 0
    %9759 = vmatprep.subr.bf16.mxu0 0
    %9760 = vmatpush2.bf16.msra.mxu0 0
    %9761 = vmatprep.subr.bf16.mxu0 0
    %9762 = vmatpush2.bf16.msra.mxu0 0
    %9763 = vmatprep.subr.bf16.mxu0 0
    %9764 = vmatpush2.bf16.msra.mxu0 0
    %9765 = vmatprep.subr.bf16.mxu0 0
    %9766 = vmatpush2.bf16.msra.mxu0 0
    %9767 = vmatprep.subr.bf16.mxu0 0
    %9768 = vmatpush2.bf16.msra.mxu0 0
    %9769 = vmatprep.mubr.bf16.mxu0 0
    %9770 = vmatmul.mubr.bf16.gmra.mxu0 %v9531
    %v9771 = vpop.f32.mrf.mxu0
    %v9772 = vadd.f32 %v9731, %v9771
    %v9773 = vpop.f32.mrf.mxu0
    %v9774 = vadd.f32 %v9733, %v9773
    %v9775 = vpop.f32.mrf.mxu0
    %v9776 = vpop.f32.mrf.mxu0
    %9777 = vdwg.mxu0
    %9778 = vmatprep.subr.bf16.mxu0 %v5867
    %9779 = vmatpush1.bf16.msra.mxu0 %v5866
    %9780 = vmatprep.subr.bf16.mxu0 %v5855
    %9781 = vmatpush1.bf16.msra.mxu0 %v5854
    %9782 = vmatprep.subr.bf16.mxu0 %v5843
    %9783 = vmatpush1.bf16.msra.mxu0 %v5842
    %9784 = vmatprep.subr.bf16.mxu0 %v5831
    %9785 = vmatpush1.bf16.msra.mxu0 %v5830
    %9786 = vmatprep.subr.bf16.mxu0 %v5819
    %9787 = vmatpush1.bf16.msra.mxu0 %v5818
    %9788 = vmatprep.subr.bf16.mxu0 %v5807
    %9789 = vmatpush1.bf16.msra.mxu0 %v5806
    %9790 = vmatprep.subr.bf16.mxu0 %v5795
    %9791 = vmatpush1.bf16.msra.mxu0 %v5794
    %9792 = vmatprep.subr.bf16.mxu0 %v5783
    %9793 = vmatpush1.bf16.msra.mxu0 %v5782
    %9794 = vmatprep.subr.bf16.mxu0 %v5963
    %9795 = vmatpush2.bf16.msra.mxu0 %v5962
    %9796 = vmatprep.subr.bf16.mxu0 %v5951
    %9797 = vmatpush2.bf16.msra.mxu0 %v5950
    %9798 = vmatprep.subr.bf16.mxu0 %v5939
    %9799 = vmatpush2.bf16.msra.mxu0 %v5938
    %9800 = vmatprep.subr.bf16.mxu0 %v5927
    %9801 = vmatpush2.bf16.msra.mxu0 %v5926
    %9802 = vmatprep.subr.bf16.mxu0 %v5915
    %9803 = vmatpush2.bf16.msra.mxu0 %v5914
    %9804 = vmatprep.subr.bf16.mxu0 %v5903
    %9805 = vmatpush2.bf16.msra.mxu0 %v5902
    %9806 = vmatprep.subr.bf16.mxu0 %v5891
    %9807 = vmatpush2.bf16.msra.mxu0 %v5890
    %9808 = vmatprep.subr.bf16.mxu0 %v5879
    %9809 = vmatpush2.bf16.msra.mxu0 %v5878
    %9810 = vmatprep.mubr.bf16.mxu0 %v9530
    %9811 = vmatmul.mubr.bf16.gmra.mxu0 %v9529
    %v9812 = vpop.f32.mrf.mxu0
    %v9813 = vadd.f32 0.0, %v9812
    %v9814 = vpop.f32.mrf.mxu0
    %v9815 = vadd.f32 0.0, %v9814
    %v9816 = vpop.f32.mrf.mxu0
    %v9817 = vpop.f32.mrf.mxu0
    %9818 = vdwg.mxu0
    %9819 = vmatprep.subr.bf16.mxu0 %v6059
    %9820 = vmatpush1.bf16.msra.mxu0 %v6058
    %9821 = vmatprep.subr.bf16.mxu0 %v6047
    %9822 = vmatpush1.bf16.msra.mxu0 %v6046
    %9823 = vmatprep.subr.bf16.mxu0 %v6035
    %9824 = vmatpush1.bf16.msra.mxu0 %v6034
    %9825 = vmatprep.subr.bf16.mxu0 %v6023
    %9826 = vmatpush1.bf16.msra.mxu0 %v6022
    %9827 = vmatprep.subr.bf16.mxu0 %v6011
    %9828 = vmatpush1.bf16.msra.mxu0 %v6010
    %9829 = vmatprep.subr.bf16.mxu0 %v5999
    %9830 = vmatpush1.bf16.msra.mxu0 %v5998
    %9831 = vmatprep.subr.bf16.mxu0 %v5987
    %9832 = vmatpush1.bf16.msra.mxu0 %v5986
    %9833 = vmatprep.subr.bf16.mxu0 %v5975
    %9834 = vmatpush1.bf16.msra.mxu0 %v5974
    %9835 = vmatprep.subr.bf16.mxu0 0
    %9836 = vmatpush2.bf16.msra.mxu0 0
    %9837 = vmatprep.subr.bf16.mxu0 0
    %9838 = vmatpush2.bf16.msra.mxu0 0
    %9839 = vmatprep.subr.bf16.mxu0 0
    %9840 = vmatpush2.bf16.msra.mxu0 0
    %9841 = vmatprep.subr.bf16.mxu0 0
    %9842 = vmatpush2.bf16.msra.mxu0 0
    %9843 = vmatprep.subr.bf16.mxu0 0
    %9844 = vmatpush2.bf16.msra.mxu0 0
    %9845 = vmatprep.subr.bf16.mxu0 0
    %9846 = vmatpush2.bf16.msra.mxu0 0
    %9847 = vmatprep.subr.bf16.mxu0 0
    %9848 = vmatpush2.bf16.msra.mxu0 0
    %9849 = vmatprep.subr.bf16.mxu0 0
    %9850 = vmatpush2.bf16.msra.mxu0 0
    %9851 = vmatprep.mubr.bf16.mxu0 0
    %9852 = vmatmul.mubr.bf16.gmra.mxu0 %v9531
    %v9853 = vpop.f32.mrf.mxu0
    %v9854 = vadd.f32 %v9813, %v9853
    %v9855 = vpop.f32.mrf.mxu0
    %v9856 = vadd.f32 %v9815, %v9855
    %v9857 = vpop.f32.mrf.mxu0
    %v9858 = vpop.f32.mrf.mxu0
    %9859 = vdwg.mxu0
    %9860 = vmatprep.subr.bf16.mxu0 %v5869
    %9861 = vmatpush1.bf16.msra.mxu0 %v5868
    %9862 = vmatprep.subr.bf16.mxu0 %v5857
    %9863 = vmatpush1.bf16.msra.mxu0 %v5856
    %9864 = vmatprep.subr.bf16.mxu0 %v5845
    %9865 = vmatpush1.bf16.msra.mxu0 %v5844
    %9866 = vmatprep.subr.bf16.mxu0 %v5833
    %9867 = vmatpush1.bf16.msra.mxu0 %v5832
    %9868 = vmatprep.subr.bf16.mxu0 %v5821
    %9869 = vmatpush1.bf16.msra.mxu0 %v5820
    %9870 = vmatprep.subr.bf16.mxu0 %v5809
    %9871 = vmatpush1.bf16.msra.mxu0 %v5808
    %9872 = vmatprep.subr.bf16.mxu0 %v5797
    %9873 = vmatpush1.bf16.msra.mxu0 %v5796
    %9874 = vmatprep.subr.bf16.mxu0 %v5785
    %9875 = vmatpush1.bf16.msra.mxu0 %v5784
    %9876 = vmatprep.subr.bf16.mxu0 %v5965
    %9877 = vmatpush2.bf16.msra.mxu0 %v5964
    %9878 = vmatprep.subr.bf16.mxu0 %v5953
    %9879 = vmatpush2.bf16.msra.mxu0 %v5952
    %9880 = vmatprep.subr.bf16.mxu0 %v5941
    %9881 = vmatpush2.bf16.msra.mxu0 %v5940
    %9882 = vmatprep.subr.bf16.mxu0 %v5929
    %9883 = vmatpush2.bf16.msra.mxu0 %v5928
    %9884 = vmatprep.subr.bf16.mxu0 %v5917
    %9885 = vmatpush2.bf16.msra.mxu0 %v5916
    %9886 = vmatprep.subr.bf16.mxu0 %v5905
    %9887 = vmatpush2.bf16.msra.mxu0 %v5904
    %9888 = vmatprep.subr.bf16.mxu0 %v5893
    %9889 = vmatpush2.bf16.msra.mxu0 %v5892
    %9890 = vmatprep.subr.bf16.mxu0 %v5881
    %9891 = vmatpush2.bf16.msra.mxu0 %v5880
    %9892 = vmatprep.mubr.bf16.mxu0 %v9530
    %9893 = vmatmul.mubr.bf16.gmra.mxu0 %v9529
    %v9894 = vpop.f32.mrf.mxu0
    %v9895 = vadd.f32 0.0, %v9894
    %v9896 = vpop.f32.mrf.mxu0
    %v9897 = vadd.f32 0.0, %v9896
    %v9898 = vpop.f32.mrf.mxu0
    %v9899 = vpop.f32.mrf.mxu0
    %9900 = vdwg.mxu0
    %9901 = vmatprep.subr.bf16.mxu0 %v6061
    %9902 = vmatpush1.bf16.msra.mxu0 %v6060
    %9903 = vmatprep.subr.bf16.mxu0 %v6049
    %9904 = vmatpush1.bf16.msra.mxu0 %v6048
    %9905 = vmatprep.subr.bf16.mxu0 %v6037
    %9906 = vmatpush1.bf16.msra.mxu0 %v6036
    %9907 = vmatprep.subr.bf16.mxu0 %v6025
    %9908 = vmatpush1.bf16.msra.mxu0 %v6024
    %9909 = vmatprep.subr.bf16.mxu0 %v6013
    %9910 = vmatpush1.bf16.msra.mxu0 %v6012
    %9911 = vmatprep.subr.bf16.mxu0 %v6001
    %9912 = vmatpush1.bf16.msra.mxu0 %v6000
    %9913 = vmatprep.subr.bf16.mxu0 %v5989
    %9914 = vmatpush1.bf16.msra.mxu0 %v5988
    %9915 = vmatprep.subr.bf16.mxu0 %v5977
    %9916 = vmatpush1.bf16.msra.mxu0 %v5976
    %9917 = vmatprep.subr.bf16.mxu0 0
    %9918 = vmatpush2.bf16.msra.mxu0 0
    %9919 = vmatprep.subr.bf16.mxu0 0
    %9920 = vmatpush2.bf16.msra.mxu0 0
    %9921 = vmatprep.subr.bf16.mxu0 0
    %9922 = vmatpush2.bf16.msra.mxu0 0
    %9923 = vmatprep.subr.bf16.mxu0 0
    %9924 = vmatpush2.bf16.msra.mxu0 0
    %9925 = vmatprep.subr.bf16.mxu0 0
    %9926 = vmatpush2.bf16.msra.mxu0 0
    %9927 = vmatprep.subr.bf16.mxu0 0
    %9928 = vmatpush2.bf16.msra.mxu0 0
    %9929 = vmatprep.subr.bf16.mxu0 0
    %9930 = vmatpush2.bf16.msra.mxu0 0
    %9931 = vmatprep.subr.bf16.mxu0 0
    %9932 = vmatpush2.bf16.msra.mxu0 0
    %9933 = vmatprep.mubr.bf16.mxu0 0
    %9934 = vmatmul.mubr.bf16.gmra.mxu0 %v9531
    %v9935 = vpop.f32.mrf.mxu0
    %v9936 = vadd.f32 %v9895, %v9935
    %v9937 = vpop.f32.mrf.mxu0
    %v9938 = vadd.f32 %v9897, %v9937
    %v9939 = vpop.f32.mrf.mxu0
    %v9940 = vpop.f32.mrf.mxu0
    %9941 = vdwg.mxu0
    %9942 = vmatprep.subr.bf16.mxu0 %v5871
    %9943 = vmatpush1.bf16.msra.mxu0 %v5870
    %9944 = vmatprep.subr.bf16.mxu0 %v5859
    %9945 = vmatpush1.bf16.msra.mxu0 %v5858
    %9946 = vmatprep.subr.bf16.mxu0 %v5847
    %9947 = vmatpush1.bf16.msra.mxu0 %v5846
    %9948 = vmatprep.subr.bf16.mxu0 %v5835
    %9949 = vmatpush1.bf16.msra.mxu0 %v5834
    %9950 = vmatprep.subr.bf16.mxu0 %v5823
    %9951 = vmatpush1.bf16.msra.mxu0 %v5822
    %9952 = vmatprep.subr.bf16.mxu0 %v5811
    %9953 = vmatpush1.bf16.msra.mxu0 %v5810
    %9954 = vmatprep.subr.bf16.mxu0 %v5799
    %9955 = vmatpush1.bf16.msra.mxu0 %v5798
    %9956 = vmatprep.subr.bf16.mxu0 %v5787
    %9957 = vmatpush1.bf16.msra.mxu0 %v5786
    %9958 = vmatprep.subr.bf16.mxu0 %v5967
    %9959 = vmatpush2.bf16.msra.mxu0 %v5966
    %9960 = vmatprep.subr.bf16.mxu0 %v5955
    %9961 = vmatpush2.bf16.msra.mxu0 %v5954
    %9962 = vmatprep.subr.bf16.mxu0 %v5943
    %9963 = vmatpush2.bf16.msra.mxu0 %v5942
    %9964 = vmatprep.subr.bf16.mxu0 %v5931
    %9965 = vmatpush2.bf16.msra.mxu0 %v5930
    %9966 = vmatprep.subr.bf16.mxu0 %v5919
    %9967 = vmatpush2.bf16.msra.mxu0 %v5918
    %9968 = vmatprep.subr.bf16.mxu0 %v5907
    %9969 = vmatpush2.bf16.msra.mxu0 %v5906
    %9970 = vmatprep.subr.bf16.mxu0 %v5895
    %9971 = vmatpush2.bf16.msra.mxu0 %v5894
    %9972 = vmatprep.subr.bf16.mxu0 %v5883
    %9973 = vmatpush2.bf16.msra.mxu0 %v5882
    %9974 = vmatprep.mubr.bf16.mxu0 %v9530
    %9975 = vmatmul.mubr.bf16.gmra.mxu0 %v9529
    %v9976 = vpop.f32.mrf.mxu0
    %v9977 = vadd.f32 0.0, %v9976
    %v9978 = vpop.f32.mrf.mxu0
    %v9979 = vadd.f32 0.0, %v9978
    %v9980 = vpop.f32.mrf.mxu0
    %v9981 = vpop.f32.mrf.mxu0
    %9982 = vdwg.mxu0
    %9983 = vmatprep.subr.bf16.mxu0 %v6063
    %9984 = vmatpush1.bf16.msra.mxu0 %v6062
    %9985 = vmatprep.subr.bf16.mxu0 %v6051
    %9986 = vmatpush1.bf16.msra.mxu0 %v6050
    %9987 = vmatprep.subr.bf16.mxu0 %v6039
    %9988 = vmatpush1.bf16.msra.mxu0 %v6038
    %9989 = vmatprep.subr.bf16.mxu0 %v6027
    %9990 = vmatpush1.bf16.msra.mxu0 %v6026
    %9991 = vmatprep.subr.bf16.mxu0 %v6015
    %9992 = vmatpush1.bf16.msra.mxu0 %v6014
    %9993 = vmatprep.subr.bf16.mxu0 %v6003
    %9994 = vmatpush1.bf16.msra.mxu0 %v6002
    %9995 = vmatprep.subr.bf16.mxu0 %v5991
    %9996 = vmatpush1.bf16.msra.mxu0 %v5990
    %9997 = vmatprep.subr.bf16.mxu0 %v5979
    %9998 = vmatpush1.bf16.msra.mxu0 %v5978
    %9999 = vmatprep.subr.bf16.mxu0 0
    %10000 = vmatpush2.bf16.msra.mxu0 0
    %10001 = vmatprep.subr.bf16.mxu0 0
    %10002 = vmatpush2.bf16.msra.mxu0 0
    %10003 = vmatprep.subr.bf16.mxu0 0
    %10004 = vmatpush2.bf16.msra.mxu0 0
    %10005 = vmatprep.subr.bf16.mxu0 0
    %10006 = vmatpush2.bf16.msra.mxu0 0
    %10007 = vmatprep.subr.bf16.mxu0 0
    %10008 = vmatpush2.bf16.msra.mxu0 0
    %10009 = vmatprep.subr.bf16.mxu0 0
    %10010 = vmatpush2.bf16.msra.mxu0 0
    %10011 = vmatprep.subr.bf16.mxu0 0
    %10012 = vmatpush2.bf16.msra.mxu0 0
    %10013 = vmatprep.subr.bf16.mxu0 0
    %10014 = vmatpush2.bf16.msra.mxu0 0
    %10015 = vmatprep.mubr.bf16.mxu0 0
    %10016 = vmatmul.mubr.bf16.gmra.mxu0 %v9531
    %v10017 = vpop.f32.mrf.mxu0
    %v10018 = vadd.f32 %v9977, %v10017
    %v10019 = vpop.f32.mrf.mxu0
    %v10020 = vadd.f32 %v9979, %v10019
    %v10021 = vpop.f32.mrf.mxu0
    %v10022 = vpop.f32.mrf.mxu0
    %10023 = vdwg.mxu0
    %v10024 = vadd.f32 %v9517, %v9608
    %v10025 = vadd.f32 %v9518, %v9610
    %v10026 = vadd.f32 %v9519, %v9690
    %v10027 = vadd.f32 %v9520, %v9692
    %v10028 = vadd.f32 %v9521, %v9772
    %v10029 = vadd.f32 %v9522, %v9774
    %v10030 = vadd.f32 %v9523, %v9854
    %v10031 = vadd.f32 %v9524, %v9856
    %v10032 = vadd.f32 %v9525, %v9936
    %v10033 = vadd.f32 %v9526, %v9938
    %v10034 = vadd.f32 %v9527, %v10018
    %v10035 = vadd.f32 %v9528, %v10020
    %v10036 = vpack.c.bf16 %v10024, %v10024
    %v10037 = vpack.c.bf16 %v10025, %v10025
    %v10038 = vpack.c.bf16 %v10026, %v10026
    %v10039 = vpack.c.bf16 %v10027, %v10027
    %v10040 = vpack.c.bf16 %v10028, %v10028
    %v10041 = vpack.c.bf16 %v10029, %v10029
    %v10042 = vpack.c.bf16 %v10030, %v10030
    %v10043 = vpack.c.bf16 %v10031, %v10031
    %v10044 = vpack.c.bf16 %v10032, %v10032
    %v10045 = vpack.c.bf16 %v10033, %v10033
    %v10046 = vpack.c.bf16 %v10034, %v10034
    %v10047 = vpack.c.bf16 %v10035, %v10035
    %v10048 = vxor.u32 %v10036, 2147516416
    %v10049 = vxor.u32 %v10037, 2147516416
    %v10050 = vxor.u32 %v10038, 2147516416
    %v10052 = vmul.bf16 %v10048, 1069105081
    %v10053 = vpow.bf16.pop %v10052
    %v10055 = vmul.bf16 %v10049, 1069105081
    %v10056 = vpow.bf16.pop %v10055
    %v10058 = vmul.bf16 %v10050, 1069105081
    %v10059 = vpow.bf16.pop %v10058
    %v10060 = vadd.bf16 %v10053, 1065369472
    %v10061 = vadd.bf16 %v10056, 1065369472
    %v10062 = vadd.bf16 %v10059, 1065369472
    %v10063 = vrcp.bf16.pop %v10060
    %v10064 = vmul.bf16 1065369472, %v10063
    %v10065 = vrcp.bf16.pop %v10061
    %v10066 = vmul.bf16 1065369472, %v10065
    %v10067 = vrcp.bf16.pop %v10062
    %v10068 = vmul.bf16 1065369472, %v10067
    %v10069 = vunpack.c.l.bf16 %v10064
    %v10070 = vunpack.c.l.bf16 %v10066
    %v10071 = vunpack.c.l.bf16 %v10068
    %v10072 = vxor.u32 %v10039, 2147516416
    %v10073 = vxor.u32 %v10040, 2147516416
    %v10074 = vxor.u32 %v10041, 2147516416
    %v10076 = vmul.bf16 %v10072, 1069105081
    %v10077 = vpow.bf16.pop %v10076
    %v10079 = vmul.bf16 %v10073, 1069105081
    %v10080 = vpow.bf16.pop %v10079
    %v10082 = vmul.bf16 %v10074, 1069105081
    %v10083 = vpow.bf16.pop %v10082
    %v10084 = vadd.bf16 %v10077, 1065369472
    %v10085 = vadd.bf16 %v10080, 1065369472
    %v10086 = vadd.bf16 %v10083, 1065369472
    %v10087 = vrcp.bf16.pop %v10084
    %v10088 = vmul.bf16 1065369472, %v10087
    %v10089 = vrcp.bf16.pop %v10085
    %v10090 = vmul.bf16 1065369472, %v10089
    %v10091 = vrcp.bf16.pop %v10086
    %v10092 = vmul.bf16 1065369472, %v10091
    %v10093 = vunpack.c.l.bf16 %v10088
    %v10094 = vunpack.c.l.bf16 %v10090
    %v10095 = vunpack.c.l.bf16 %v10092
    %v10096 = vtanh.bf16.pop %v10042
    %v10097 = vtanh.bf16.pop %v10043
    %v10098 = vtanh.bf16.pop %v10044
    %v10099 = vunpack.c.l.bf16 %v10096
    %v10100 = vunpack.c.l.bf16 %v10097
    %v10101 = vunpack.c.l.bf16 %v10098
    %v10102 = vxor.u32 %v10045, 2147516416
    %v10103 = vxor.u32 %v10046, 2147516416
    %v10104 = vxor.u32 %v10047, 2147516416
    %v10106 = vmul.bf16 %v10102, 1069105081
    %v10107 = vpow.bf16.pop %v10106
    %v10109 = vmul.bf16 %v10103, 1069105081
    %v10110 = vpow.bf16.pop %v10109
    %v10112 = vmul.bf16 %v10104, 1069105081
    %v10113 = vpow.bf16.pop %v10112
    %v10114 = vadd.bf16 %v10107, 1065369472
    %v10115 = vadd.bf16 %v10110, 1065369472
    %v10116 = vadd.bf16 %v10113, 1065369472
    %v10117 = vrcp.bf16.pop %v10114
    %v10118 = vmul.bf16 1065369472, %v10117
    %v10119 = vrcp.bf16.pop %v10115
    %v10120 = vmul.bf16 1065369472, %v10119
    %v10121 = vrcp.bf16.pop %v10116
    %v10122 = vmul.bf16 1065369472, %v10121
    %v10123 = vunpack.c.l.bf16 %v10118
    %v10124 = vunpack.c.l.bf16 %v10120
    %v10125 = vunpack.c.l.bf16 %v10122
    %v10126 = vmul.f32 %v10093, %v9496
    %v10127 = vmul.f32 %v10094, %v9497
    %v10128 = vmul.f32 %v10095, %v9498
    %v10129 = vmul.f32 %v10069, %v10099
    %v10130 = vmul.f32 %v10070, %v10100
    %v10131 = vmul.f32 %v10071, %v10101
    %v10132 = vadd.f32 %v10126, %v10129
    %v10133 = vadd.f32 %v10127, %v10130
    %v10134 = vadd.f32 %v10128, %v10131
    %v10135 = vpack.c.bf16 %v10132, %v10132
    %v10136 = vpack.c.bf16 %v10133, %v10133
    %v10137 = vpack.c.bf16 %v10134, %v10134
    %v10138 = vtanh.bf16.pop %v10135
    %v10139 = vtanh.bf16.pop %v10136
    %v10140 = vtanh.bf16.pop %v10137
    %v10141 = vunpack.c.l.bf16 %v10138
    %v10142 = vunpack.c.l.bf16 %v10139
    %v10143 = vunpack.c.l.bf16 %v10140
    %v10144 = vmul.f32 %v10123, %v10141
    %v10145 = vmul.f32 %v10124, %v10142
    %v10146 = vmul.f32 %v10125, %v10143
    %v10147 = vadd.f32 %v9511, %v10144
    %v10148 = vadd.f32 %v9512, %v10145
    %v10149 = vadd.f32 %v9513, %v10146
    %s10150 = smul.u32 6, 12
    %s10151 = smul.addr %s10150, 8
    %s10152 = scalar_lea.vmem [#allocation2], %s10151
    %v10153 = vld [vmem:[%s10152] sm:$0xff]
    %v10154 = vld [vmem:[%s10152 + $0x8] sm:$0xff]
    %v10155 = vld [vmem:[%s10152 + $0x10] sm:$0xff]
    %v10156 = vld [vmem:[%s10152 + $0x18] sm:$0xff]
    %v10157 = vld [vmem:[%s10152 + $0x20] sm:$0xff]
    %v10158 = vld [vmem:[%s10152 + $0x28] sm:$0xff]
    %v10159 = vld [vmem:[%s10152 + $0x30] sm:$0xff]
    %v10160 = vld [vmem:[%s10152 + $0x38] sm:$0xff]
    %v10161 = vld [vmem:[%s10152 + $0x40] sm:$0xff]
    %v10162 = vld [vmem:[%s10152 + $0x48] sm:$0xff]
    %v10163 = vld [vmem:[%s10152 + $0x50] sm:$0xff]
    %v10164 = vld [vmem:[%s10152 + $0x58] sm:$0xff]
    %v10165 = vpack.c.bf16 %v10144, %v10144
    %v10166 = vpack.c.bf16 %v10145, %v10145
    %v10167 = vpack.c.bf16 %v10146, %v10146
    %10168 = vmatprep.subr.bf16.mxu0 %v5861
    %10169 = vmatpush1.bf16.msra.mxu0 %v5860
    %10170 = vmatprep.subr.bf16.mxu0 %v5849
    %10171 = vmatpush1.bf16.msra.mxu0 %v5848
    %10172 = vmatprep.subr.bf16.mxu0 %v5837
    %10173 = vmatpush1.bf16.msra.mxu0 %v5836
    %10174 = vmatprep.subr.bf16.mxu0 %v5825
    %10175 = vmatpush1.bf16.msra.mxu0 %v5824
    %10176 = vmatprep.subr.bf16.mxu0 %v5813
    %10177 = vmatpush1.bf16.msra.mxu0 %v5812
    %10178 = vmatprep.subr.bf16.mxu0 %v5801
    %10179 = vmatpush1.bf16.msra.mxu0 %v5800
    %10180 = vmatprep.subr.bf16.mxu0 %v5789
    %10181 = vmatpush1.bf16.msra.mxu0 %v5788
    %10182 = vmatprep.subr.bf16.mxu0 %v5777
    %10183 = vmatpush1.bf16.msra.mxu0 %v5776
    %10184 = vmatprep.subr.bf16.mxu0 %v5957
    %10185 = vmatpush2.bf16.msra.mxu0 %v5956
    %10186 = vmatprep.subr.bf16.mxu0 %v5945
    %10187 = vmatpush2.bf16.msra.mxu0 %v5944
    %10188 = vmatprep.subr.bf16.mxu0 %v5933
    %10189 = vmatpush2.bf16.msra.mxu0 %v5932
    %10190 = vmatprep.subr.bf16.mxu0 %v5921
    %10191 = vmatpush2.bf16.msra.mxu0 %v5920
    %10192 = vmatprep.subr.bf16.mxu0 %v5909
    %10193 = vmatpush2.bf16.msra.mxu0 %v5908
    %10194 = vmatprep.subr.bf16.mxu0 %v5897
    %10195 = vmatpush2.bf16.msra.mxu0 %v5896
    %10196 = vmatprep.subr.bf16.mxu0 %v5885
    %10197 = vmatpush2.bf16.msra.mxu0 %v5884
    %10198 = vmatprep.subr.bf16.mxu0 %v5873
    %10199 = vmatpush2.bf16.msra.mxu0 %v5872
    %10200 = vmatprep.mubr.bf16.mxu0 %v10166
    %10201 = vmatmul.mubr.bf16.gmra.mxu0 %v10165
    %v10202 = vpop.f32.mrf.mxu0
    %v10203 = vadd.f32 0.0, %v10202
    %v10204 = vpop.f32.mrf.mxu0
    %v10205 = vadd.f32 0.0, %v10204
    %v10206 = vpop.f32.mrf.mxu0
    %v10207 = vpop.f32.mrf.mxu0
    %10208 = vdwg.mxu0
    %10209 = vmatprep.subr.bf16.mxu0 %v6053
    %10210 = vmatpush1.bf16.msra.mxu0 %v6052
    %10211 = vmatprep.subr.bf16.mxu0 %v6041
    %10212 = vmatpush1.bf16.msra.mxu0 %v6040
    %10213 = vmatprep.subr.bf16.mxu0 %v6029
    %10214 = vmatpush1.bf16.msra.mxu0 %v6028
    %10215 = vmatprep.subr.bf16.mxu0 %v6017
    %10216 = vmatpush1.bf16.msra.mxu0 %v6016
    %10217 = vmatprep.subr.bf16.mxu0 %v6005
    %10218 = vmatpush1.bf16.msra.mxu0 %v6004
    %10219 = vmatprep.subr.bf16.mxu0 %v5993
    %10220 = vmatpush1.bf16.msra.mxu0 %v5992
    %10221 = vmatprep.subr.bf16.mxu0 %v5981
    %10222 = vmatpush1.bf16.msra.mxu0 %v5980
    %10223 = vmatprep.subr.bf16.mxu0 %v5969
    %10224 = vmatpush1.bf16.msra.mxu0 %v5968
    %10225 = vmatprep.subr.bf16.mxu0 0
    %10226 = vmatpush2.bf16.msra.mxu0 0
    %10227 = vmatprep.subr.bf16.mxu0 0
    %10228 = vmatpush2.bf16.msra.mxu0 0
    %10229 = vmatprep.subr.bf16.mxu0 0
    %10230 = vmatpush2.bf16.msra.mxu0 0
    %10231 = vmatprep.subr.bf16.mxu0 0
    %10232 = vmatpush2.bf16.msra.mxu0 0
    %10233 = vmatprep.subr.bf16.mxu0 0
    %10234 = vmatpush2.bf16.msra.mxu0 0
    %10235 = vmatprep.subr.bf16.mxu0 0
    %10236 = vmatpush2.bf16.msra.mxu0 0
    %10237 = vmatprep.subr.bf16.mxu0 0
    %10238 = vmatpush2.bf16.msra.mxu0 0
    %10239 = vmatprep.subr.bf16.mxu0 0
    %10240 = vmatpush2.bf16.msra.mxu0 0
    %10241 = vmatprep.mubr.bf16.mxu0 0
    %10242 = vmatmul.mubr.bf16.gmra.mxu0 %v10167
    %v10243 = vpop.f32.mrf.mxu0
    %v10244 = vadd.f32 %v10203, %v10243
    %v10245 = vpop.f32.mrf.mxu0
    %v10246 = vadd.f32 %v10205, %v10245
    %v10247 = vpop.f32.mrf.mxu0
    %v10248 = vpop.f32.mrf.mxu0
    %10249 = vdwg.mxu0
    %10250 = vmatprep.subr.bf16.mxu0 %v5863
    %10251 = vmatpush1.bf16.msra.mxu0 %v5862
    %10252 = vmatprep.subr.bf16.mxu0 %v5851
    %10253 = vmatpush1.bf16.msra.mxu0 %v5850
    %10254 = vmatprep.subr.bf16.mxu0 %v5839
    %10255 = vmatpush1.bf16.msra.mxu0 %v5838
    %10256 = vmatprep.subr.bf16.mxu0 %v5827
    %10257 = vmatpush1.bf16.msra.mxu0 %v5826
    %10258 = vmatprep.subr.bf16.mxu0 %v5815
    %10259 = vmatpush1.bf16.msra.mxu0 %v5814
    %10260 = vmatprep.subr.bf16.mxu0 %v5803
    %10261 = vmatpush1.bf16.msra.mxu0 %v5802
    %10262 = vmatprep.subr.bf16.mxu0 %v5791
    %10263 = vmatpush1.bf16.msra.mxu0 %v5790
    %10264 = vmatprep.subr.bf16.mxu0 %v5779
    %10265 = vmatpush1.bf16.msra.mxu0 %v5778
    %10266 = vmatprep.subr.bf16.mxu0 %v5959
    %10267 = vmatpush2.bf16.msra.mxu0 %v5958
    %10268 = vmatprep.subr.bf16.mxu0 %v5947
    %10269 = vmatpush2.bf16.msra.mxu0 %v5946
    %10270 = vmatprep.subr.bf16.mxu0 %v5935
    %10271 = vmatpush2.bf16.msra.mxu0 %v5934
    %10272 = vmatprep.subr.bf16.mxu0 %v5923
    %10273 = vmatpush2.bf16.msra.mxu0 %v5922
    %10274 = vmatprep.subr.bf16.mxu0 %v5911
    %10275 = vmatpush2.bf16.msra.mxu0 %v5910
    %10276 = vmatprep.subr.bf16.mxu0 %v5899
    %10277 = vmatpush2.bf16.msra.mxu0 %v5898
    %10278 = vmatprep.subr.bf16.mxu0 %v5887
    %10279 = vmatpush2.bf16.msra.mxu0 %v5886
    %10280 = vmatprep.subr.bf16.mxu0 %v5875
    %10281 = vmatpush2.bf16.msra.mxu0 %v5874
    %10282 = vmatprep.mubr.bf16.mxu0 %v10166
    %10283 = vmatmul.mubr.bf16.gmra.mxu0 %v10165
    %v10284 = vpop.f32.mrf.mxu0
    %v10285 = vadd.f32 0.0, %v10284
    %v10286 = vpop.f32.mrf.mxu0
    %v10287 = vadd.f32 0.0, %v10286
    %v10288 = vpop.f32.mrf.mxu0
    %v10289 = vpop.f32.mrf.mxu0
    %10290 = vdwg.mxu0
    %10291 = vmatprep.subr.bf16.mxu0 %v6055
    %10292 = vmatpush1.bf16.msra.mxu0 %v6054
    %10293 = vmatprep.subr.bf16.mxu0 %v6043
    %10294 = vmatpush1.bf16.msra.mxu0 %v6042
    %10295 = vmatprep.subr.bf16.mxu0 %v6031
    %10296 = vmatpush1.bf16.msra.mxu0 %v6030
    %10297 = vmatprep.subr.bf16.mxu0 %v6019
    %10298 = vmatpush1.bf16.msra.mxu0 %v6018
    %10299 = vmatprep.subr.bf16.mxu0 %v6007
    %10300 = vmatpush1.bf16.msra.mxu0 %v6006
    %10301 = vmatprep.subr.bf16.mxu0 %v5995
    %10302 = vmatpush1.bf16.msra.mxu0 %v5994
    %10303 = vmatprep.subr.bf16.mxu0 %v5983
    %10304 = vmatpush1.bf16.msra.mxu0 %v5982
    %10305 = vmatprep.subr.bf16.mxu0 %v5971
    %10306 = vmatpush1.bf16.msra.mxu0 %v5970
    %10307 = vmatprep.subr.bf16.mxu0 0
    %10308 = vmatpush2.bf16.msra.mxu0 0
    %10309 = vmatprep.subr.bf16.mxu0 0
    %10310 = vmatpush2.bf16.msra.mxu0 0
    %10311 = vmatprep.subr.bf16.mxu0 0
    %10312 = vmatpush2.bf16.msra.mxu0 0
    %10313 = vmatprep.subr.bf16.mxu0 0
    %10314 = vmatpush2.bf16.msra.mxu0 0
    %10315 = vmatprep.subr.bf16.mxu0 0
    %10316 = vmatpush2.bf16.msra.mxu0 0
    %10317 = vmatprep.subr.bf16.mxu0 0
    %10318 = vmatpush2.bf16.msra.mxu0 0
    %10319 = vmatprep.subr.bf16.mxu0 0
    %10320 = vmatpush2.bf16.msra.mxu0 0
    %10321 = vmatprep.subr.bf16.mxu0 0
    %10322 = vmatpush2.bf16.msra.mxu0 0
    %10323 = vmatprep.mubr.bf16.mxu0 0
    %10324 = vmatmul.mubr.bf16.gmra.mxu0 %v10167
    %v10325 = vpop.f32.mrf.mxu0
    %v10326 = vadd.f32 %v10285, %v10325
    %v10327 = vpop.f32.mrf.mxu0
    %v10328 = vadd.f32 %v10287, %v10327
    %v10329 = vpop.f32.mrf.mxu0
    %v10330 = vpop.f32.mrf.mxu0
    %10331 = vdwg.mxu0
    %10332 = vmatprep.subr.bf16.mxu0 %v5865
    %10333 = vmatpush1.bf16.msra.mxu0 %v5864
    %10334 = vmatprep.subr.bf16.mxu0 %v5853
    %10335 = vmatpush1.bf16.msra.mxu0 %v5852
    %10336 = vmatprep.subr.bf16.mxu0 %v5841
    %10337 = vmatpush1.bf16.msra.mxu0 %v5840
    %10338 = vmatprep.subr.bf16.mxu0 %v5829
    %10339 = vmatpush1.bf16.msra.mxu0 %v5828
    %10340 = vmatprep.subr.bf16.mxu0 %v5817
    %10341 = vmatpush1.bf16.msra.mxu0 %v5816
    %10342 = vmatprep.subr.bf16.mxu0 %v5805
    %10343 = vmatpush1.bf16.msra.mxu0 %v5804
    %10344 = vmatprep.subr.bf16.mxu0 %v5793
    %10345 = vmatpush1.bf16.msra.mxu0 %v5792
    %10346 = vmatprep.subr.bf16.mxu0 %v5781
    %10347 = vmatpush1.bf16.msra.mxu0 %v5780
    %10348 = vmatprep.subr.bf16.mxu0 %v5961
    %10349 = vmatpush2.bf16.msra.mxu0 %v5960
    %10350 = vmatprep.subr.bf16.mxu0 %v5949
    %10351 = vmatpush2.bf16.msra.mxu0 %v5948
    %10352 = vmatprep.subr.bf16.mxu0 %v5937
    %10353 = vmatpush2.bf16.msra.mxu0 %v5936
    %10354 = vmatprep.subr.bf16.mxu0 %v5925
    %10355 = vmatpush2.bf16.msra.mxu0 %v5924
    %10356 = vmatprep.subr.bf16.mxu0 %v5913
    %10357 = vmatpush2.bf16.msra.mxu0 %v5912
    %10358 = vmatprep.subr.bf16.mxu0 %v5901
    %10359 = vmatpush2.bf16.msra.mxu0 %v5900
    %10360 = vmatprep.subr.bf16.mxu0 %v5889
    %10361 = vmatpush2.bf16.msra.mxu0 %v5888
    %10362 = vmatprep.subr.bf16.mxu0 %v5877
    %10363 = vmatpush2.bf16.msra.mxu0 %v5876
    %10364 = vmatprep.mubr.bf16.mxu0 %v10166
    %10365 = vmatmul.mubr.bf16.gmra.mxu0 %v10165
    %v10366 = vpop.f32.mrf.mxu0
    %v10367 = vadd.f32 0.0, %v10366
    %v10368 = vpop.f32.mrf.mxu0
    %v10369 = vadd.f32 0.0, %v10368
    %v10370 = vpop.f32.mrf.mxu0
    %v10371 = vpop.f32.mrf.mxu0
    %10372 = vdwg.mxu0
    %10373 = vmatprep.subr.bf16.mxu0 %v6057
    %10374 = vmatpush1.bf16.msra.mxu0 %v6056
    %10375 = vmatprep.subr.bf16.mxu0 %v6045
    %10376 = vmatpush1.bf16.msra.mxu0 %v6044
    %10377 = vmatprep.subr.bf16.mxu0 %v6033
    %10378 = vmatpush1.bf16.msra.mxu0 %v6032
    %10379 = vmatprep.subr.bf16.mxu0 %v6021
    %10380 = vmatpush1.bf16.msra.mxu0 %v6020
    %10381 = vmatprep.subr.bf16.mxu0 %v6009
    %10382 = vmatpush1.bf16.msra.mxu0 %v6008
    %10383 = vmatprep.subr.bf16.mxu0 %v5997
    %10384 = vmatpush1.bf16.msra.mxu0 %v5996
    %10385 = vmatprep.subr.bf16.mxu0 %v5985
    %10386 = vmatpush1.bf16.msra.mxu0 %v5984
    %10387 = vmatprep.subr.bf16.mxu0 %v5973
    %10388 = vmatpush1.bf16.msra.mxu0 %v5972
    %10389 = vmatprep.subr.bf16.mxu0 0
    %10390 = vmatpush2.bf16.msra.mxu0 0
    %10391 = vmatprep.subr.bf16.mxu0 0
    %10392 = vmatpush2.bf16.msra.mxu0 0
    %10393 = vmatprep.subr.bf16.mxu0 0
    %10394 = vmatpush2.bf16.msra.mxu0 0
    %10395 = vmatprep.subr.bf16.mxu0 0
    %10396 = vmatpush2.bf16.msra.mxu0 0
    %10397 = vmatprep.subr.bf16.mxu0 0
    %10398 = vmatpush2.bf16.msra.mxu0 0
    %10399 = vmatprep.subr.bf16.mxu0 0
    %10400 = vmatpush2.bf16.msra.mxu0 0
    %10401 = vmatprep.subr.bf16.mxu0 0
    %10402 = vmatpush2.bf16.msra.mxu0 0
    %10403 = vmatprep.subr.bf16.mxu0 0
    %10404 = vmatpush2.bf16.msra.mxu0 0
    %10405 = vmatprep.mubr.bf16.mxu0 0
    %10406 = vmatmul.mubr.bf16.gmra.mxu0 %v10167
    %v10407 = vpop.f32.mrf.mxu0
    %v10408 = vadd.f32 %v10367, %v10407
    %v10409 = vpop.f32.mrf.mxu0
    %v10410 = vadd.f32 %v10369, %v10409
    %v10411 = vpop.f32.mrf.mxu0
    %v10412 = vpop.f32.mrf.mxu0
    %10413 = vdwg.mxu0
    %10414 = vmatprep.subr.bf16.mxu0 %v5867
    %10415 = vmatpush1.bf16.msra.mxu0 %v5866
    %10416 = vmatprep.subr.bf16.mxu0 %v5855
    %10417 = vmatpush1.bf16.msra.mxu0 %v5854
    %10418 = vmatprep.subr.bf16.mxu0 %v5843
    %10419 = vmatpush1.bf16.msra.mxu0 %v5842
    %10420 = vmatprep.subr.bf16.mxu0 %v5831
    %10421 = vmatpush1.bf16.msra.mxu0 %v5830
    %10422 = vmatprep.subr.bf16.mxu0 %v5819
    %10423 = vmatpush1.bf16.msra.mxu0 %v5818
    %10424 = vmatprep.subr.bf16.mxu0 %v5807
    %10425 = vmatpush1.bf16.msra.mxu0 %v5806
    %10426 = vmatprep.subr.bf16.mxu0 %v5795
    %10427 = vmatpush1.bf16.msra.mxu0 %v5794
    %10428 = vmatprep.subr.bf16.mxu0 %v5783
    %10429 = vmatpush1.bf16.msra.mxu0 %v5782
    %10430 = vmatprep.subr.bf16.mxu0 %v5963
    %10431 = vmatpush2.bf16.msra.mxu0 %v5962
    %10432 = vmatprep.subr.bf16.mxu0 %v5951
    %10433 = vmatpush2.bf16.msra.mxu0 %v5950
    %10434 = vmatprep.subr.bf16.mxu0 %v5939
    %10435 = vmatpush2.bf16.msra.mxu0 %v5938
    %10436 = vmatprep.subr.bf16.mxu0 %v5927
    %10437 = vmatpush2.bf16.msra.mxu0 %v5926
    %10438 = vmatprep.subr.bf16.mxu0 %v5915
    %10439 = vmatpush2.bf16.msra.mxu0 %v5914
    %10440 = vmatprep.subr.bf16.mxu0 %v5903
    %10441 = vmatpush2.bf16.msra.mxu0 %v5902
    %10442 = vmatprep.subr.bf16.mxu0 %v5891
    %10443 = vmatpush2.bf16.msra.mxu0 %v5890
    %10444 = vmatprep.subr.bf16.mxu0 %v5879
    %10445 = vmatpush2.bf16.msra.mxu0 %v5878
    %10446 = vmatprep.mubr.bf16.mxu0 %v10166
    %10447 = vmatmul.mubr.bf16.gmra.mxu0 %v10165
    %v10448 = vpop.f32.mrf.mxu0
    %v10449 = vadd.f32 0.0, %v10448
    %v10450 = vpop.f32.mrf.mxu0
    %v10451 = vadd.f32 0.0, %v10450
    %v10452 = vpop.f32.mrf.mxu0
    %v10453 = vpop.f32.mrf.mxu0
    %10454 = vdwg.mxu0
    %10455 = vmatprep.subr.bf16.mxu0 %v6059
    %10456 = vmatpush1.bf16.msra.mxu0 %v6058
    %10457 = vmatprep.subr.bf16.mxu0 %v6047
    %10458 = vmatpush1.bf16.msra.mxu0 %v6046
    %10459 = vmatprep.subr.bf16.mxu0 %v6035
    %10460 = vmatpush1.bf16.msra.mxu0 %v6034
    %10461 = vmatprep.subr.bf16.mxu0 %v6023
    %10462 = vmatpush1.bf16.msra.mxu0 %v6022
    %10463 = vmatprep.subr.bf16.mxu0 %v6011
    %10464 = vmatpush1.bf16.msra.mxu0 %v6010
    %10465 = vmatprep.subr.bf16.mxu0 %v5999
    %10466 = vmatpush1.bf16.msra.mxu0 %v5998
    %10467 = vmatprep.subr.bf16.mxu0 %v5987
    %10468 = vmatpush1.bf16.msra.mxu0 %v5986
    %10469 = vmatprep.subr.bf16.mxu0 %v5975
    %10470 = vmatpush1.bf16.msra.mxu0 %v5974
    %10471 = vmatprep.subr.bf16.mxu0 0
    %10472 = vmatpush2.bf16.msra.mxu0 0
    %10473 = vmatprep.subr.bf16.mxu0 0
    %10474 = vmatpush2.bf16.msra.mxu0 0
    %10475 = vmatprep.subr.bf16.mxu0 0
    %10476 = vmatpush2.bf16.msra.mxu0 0
    %10477 = vmatprep.subr.bf16.mxu0 0
    %10478 = vmatpush2.bf16.msra.mxu0 0
    %10479 = vmatprep.subr.bf16.mxu0 0
    %10480 = vmatpush2.bf16.msra.mxu0 0
    %10481 = vmatprep.subr.bf16.mxu0 0
    %10482 = vmatpush2.bf16.msra.mxu0 0
    %10483 = vmatprep.subr.bf16.mxu0 0
    %10484 = vmatpush2.bf16.msra.mxu0 0
    %10485 = vmatprep.subr.bf16.mxu0 0
    %10486 = vmatpush2.bf16.msra.mxu0 0
    %10487 = vmatprep.mubr.bf16.mxu0 0
    %10488 = vmatmul.mubr.bf16.gmra.mxu0 %v10167
    %v10489 = vpop.f32.mrf.mxu0
    %v10490 = vadd.f32 %v10449, %v10489
    %v10491 = vpop.f32.mrf.mxu0
    %v10492 = vadd.f32 %v10451, %v10491
    %v10493 = vpop.f32.mrf.mxu0
    %v10494 = vpop.f32.mrf.mxu0
    %10495 = vdwg.mxu0
    %10496 = vmatprep.subr.bf16.mxu0 %v5869
    %10497 = vmatpush1.bf16.msra.mxu0 %v5868
    %10498 = vmatprep.subr.bf16.mxu0 %v5857
    %10499 = vmatpush1.bf16.msra.mxu0 %v5856
    %10500 = vmatprep.subr.bf16.mxu0 %v5845
    %10501 = vmatpush1.bf16.msra.mxu0 %v5844
    %10502 = vmatprep.subr.bf16.mxu0 %v5833
    %10503 = vmatpush1.bf16.msra.mxu0 %v5832
    %10504 = vmatprep.subr.bf16.mxu0 %v5821
    %10505 = vmatpush1.bf16.msra.mxu0 %v5820
    %10506 = vmatprep.subr.bf16.mxu0 %v5809
    %10507 = vmatpush1.bf16.msra.mxu0 %v5808
    %10508 = vmatprep.subr.bf16.mxu0 %v5797
    %10509 = vmatpush1.bf16.msra.mxu0 %v5796
    %10510 = vmatprep.subr.bf16.mxu0 %v5785
    %10511 = vmatpush1.bf16.msra.mxu0 %v5784
    %10512 = vmatprep.subr.bf16.mxu0 %v5965
    %10513 = vmatpush2.bf16.msra.mxu0 %v5964
    %10514 = vmatprep.subr.bf16.mxu0 %v5953
    %10515 = vmatpush2.bf16.msra.mxu0 %v5952
    %10516 = vmatprep.subr.bf16.mxu0 %v5941
    %10517 = vmatpush2.bf16.msra.mxu0 %v5940
    %10518 = vmatprep.subr.bf16.mxu0 %v5929
    %10519 = vmatpush2.bf16.msra.mxu0 %v5928
    %10520 = vmatprep.subr.bf16.mxu0 %v5917
    %10521 = vmatpush2.bf16.msra.mxu0 %v5916
    %10522 = vmatprep.subr.bf16.mxu0 %v5905
    %10523 = vmatpush2.bf16.msra.mxu0 %v5904
    %10524 = vmatprep.subr.bf16.mxu0 %v5893
    %10525 = vmatpush2.bf16.msra.mxu0 %v5892
    %10526 = vmatprep.subr.bf16.mxu0 %v5881
    %10527 = vmatpush2.bf16.msra.mxu0 %v5880
    %10528 = vmatprep.mubr.bf16.mxu0 %v10166
    %10529 = vmatmul.mubr.bf16.gmra.mxu0 %v10165
    %v10530 = vpop.f32.mrf.mxu0
    %v10531 = vadd.f32 0.0, %v10530
    %v10532 = vpop.f32.mrf.mxu0
    %v10533 = vadd.f32 0.0, %v10532
    %v10534 = vpop.f32.mrf.mxu0
    %v10535 = vpop.f32.mrf.mxu0
    %10536 = vdwg.mxu0
    %10537 = vmatprep.subr.bf16.mxu0 %v6061
    %10538 = vmatpush1.bf16.msra.mxu0 %v6060
    %10539 = vmatprep.subr.bf16.mxu0 %v6049
    %10540 = vmatpush1.bf16.msra.mxu0 %v6048
    %10541 = vmatprep.subr.bf16.mxu0 %v6037
    %10542 = vmatpush1.bf16.msra.mxu0 %v6036
    %10543 = vmatprep.subr.bf16.mxu0 %v6025
    %10544 = vmatpush1.bf16.msra.mxu0 %v6024
    %10545 = vmatprep.subr.bf16.mxu0 %v6013
    %10546 = vmatpush1.bf16.msra.mxu0 %v6012
    %10547 = vmatprep.subr.bf16.mxu0 %v6001
    %10548 = vmatpush1.bf16.msra.mxu0 %v6000
    %10549 = vmatprep.subr.bf16.mxu0 %v5989
    %10550 = vmatpush1.bf16.msra.mxu0 %v5988
    %10551 = vmatprep.subr.bf16.mxu0 %v5977
    %10552 = vmatpush1.bf16.msra.mxu0 %v5976
    %10553 = vmatprep.subr.bf16.mxu0 0
    %10554 = vmatpush2.bf16.msra.mxu0 0
    %10555 = vmatprep.subr.bf16.mxu0 0
    %10556 = vmatpush2.bf16.msra.mxu0 0
    %10557 = vmatprep.subr.bf16.mxu0 0
    %10558 = vmatpush2.bf16.msra.mxu0 0
    %10559 = vmatprep.subr.bf16.mxu0 0
    %10560 = vmatpush2.bf16.msra.mxu0 0
    %10561 = vmatprep.subr.bf16.mxu0 0
    %10562 = vmatpush2.bf16.msra.mxu0 0
    %10563 = vmatprep.subr.bf16.mxu0 0
    %10564 = vmatpush2.bf16.msra.mxu0 0
    %10565 = vmatprep.subr.bf16.mxu0 0
    %10566 = vmatpush2.bf16.msra.mxu0 0
    %10567 = vmatprep.subr.bf16.mxu0 0
    %10568 = vmatpush2.bf16.msra.mxu0 0
    %10569 = vmatprep.mubr.bf16.mxu0 0
    %10570 = vmatmul.mubr.bf16.gmra.mxu0 %v10167
    %v10571 = vpop.f32.mrf.mxu0
    %v10572 = vadd.f32 %v10531, %v10571
    %v10573 = vpop.f32.mrf.mxu0
    %v10574 = vadd.f32 %v10533, %v10573
    %v10575 = vpop.f32.mrf.mxu0
    %v10576 = vpop.f32.mrf.mxu0
    %10577 = vdwg.mxu0
    %10578 = vmatprep.subr.bf16.mxu0 %v5871
    %10579 = vmatpush1.bf16.msra.mxu0 %v5870
    %10580 = vmatprep.subr.bf16.mxu0 %v5859
    %10581 = vmatpush1.bf16.msra.mxu0 %v5858
    %10582 = vmatprep.subr.bf16.mxu0 %v5847
    %10583 = vmatpush1.bf16.msra.mxu0 %v5846
    %10584 = vmatprep.subr.bf16.mxu0 %v5835
    %10585 = vmatpush1.bf16.msra.mxu0 %v5834
    %10586 = vmatprep.subr.bf16.mxu0 %v5823
    %10587 = vmatpush1.bf16.msra.mxu0 %v5822
    %10588 = vmatprep.subr.bf16.mxu0 %v5811
    %10589 = vmatpush1.bf16.msra.mxu0 %v5810
    %10590 = vmatprep.subr.bf16.mxu0 %v5799
    %10591 = vmatpush1.bf16.msra.mxu0 %v5798
    %10592 = vmatprep.subr.bf16.mxu0 %v5787
    %10593 = vmatpush1.bf16.msra.mxu0 %v5786
    %10594 = vmatprep.subr.bf16.mxu0 %v5967
    %10595 = vmatpush2.bf16.msra.mxu0 %v5966
    %10596 = vmatprep.subr.bf16.mxu0 %v5955
    %10597 = vmatpush2.bf16.msra.mxu0 %v5954
    %10598 = vmatprep.subr.bf16.mxu0 %v5943
    %10599 = vmatpush2.bf16.msra.mxu0 %v5942
    %10600 = vmatprep.subr.bf16.mxu0 %v5931
    %10601 = vmatpush2.bf16.msra.mxu0 %v5930
    %10602 = vmatprep.subr.bf16.mxu0 %v5919
    %10603 = vmatpush2.bf16.msra.mxu0 %v5918
    %10604 = vmatprep.subr.bf16.mxu0 %v5907
    %10605 = vmatpush2.bf16.msra.mxu0 %v5906
    %10606 = vmatprep.subr.bf16.mxu0 %v5895
    %10607 = vmatpush2.bf16.msra.mxu0 %v5894
    %10608 = vmatprep.subr.bf16.mxu0 %v5883
    %10609 = vmatpush2.bf16.msra.mxu0 %v5882
    %10610 = vmatprep.mubr.bf16.mxu0 %v10166
    %10611 = vmatmul.mubr.bf16.gmra.mxu0 %v10165
    %v10612 = vpop.f32.mrf.mxu0
    %v10613 = vadd.f32 0.0, %v10612
    %v10614 = vpop.f32.mrf.mxu0
    %v10615 = vadd.f32 0.0, %v10614
    %v10616 = vpop.f32.mrf.mxu0
    %v10617 = vpop.f32.mrf.mxu0
    %10618 = vdwg.mxu0
    %10619 = vmatprep.subr.bf16.mxu0 %v6063
    %10620 = vmatpush1.bf16.msra.mxu0 %v6062
    %10621 = vmatprep.subr.bf16.mxu0 %v6051
    %10622 = vmatpush1.bf16.msra.mxu0 %v6050
    %10623 = vmatprep.subr.bf16.mxu0 %v6039
    %10624 = vmatpush1.bf16.msra.mxu0 %v6038
    %10625 = vmatprep.subr.bf16.mxu0 %v6027
    %10626 = vmatpush1.bf16.msra.mxu0 %v6026
    %10627 = vmatprep.subr.bf16.mxu0 %v6015
    %10628 = vmatpush1.bf16.msra.mxu0 %v6014
    %10629 = vmatprep.subr.bf16.mxu0 %v6003
    %10630 = vmatpush1.bf16.msra.mxu0 %v6002
    %10631 = vmatprep.subr.bf16.mxu0 %v5991
    %10632 = vmatpush1.bf16.msra.mxu0 %v5990
    %10633 = vmatprep.subr.bf16.mxu0 %v5979
    %10634 = vmatpush1.bf16.msra.mxu0 %v5978
    %10635 = vmatprep.subr.bf16.mxu0 0
    %10636 = vmatpush2.bf16.msra.mxu0 0
    %10637 = vmatprep.subr.bf16.mxu0 0
    %10638 = vmatpush2.bf16.msra.mxu0 0
    %10639 = vmatprep.subr.bf16.mxu0 0
    %10640 = vmatpush2.bf16.msra.mxu0 0
    %10641 = vmatprep.subr.bf16.mxu0 0
    %10642 = vmatpush2.bf16.msra.mxu0 0
    %10643 = vmatprep.subr.bf16.mxu0 0
    %10644 = vmatpush2.bf16.msra.mxu0 0
    %10645 = vmatprep.subr.bf16.mxu0 0
    %10646 = vmatpush2.bf16.msra.mxu0 0
    %10647 = vmatprep.subr.bf16.mxu0 0
    %10648 = vmatpush2.bf16.msra.mxu0 0
    %10649 = vmatprep.subr.bf16.mxu0 0
    %10650 = vmatpush2.bf16.msra.mxu0 0
    %10651 = vmatprep.mubr.bf16.mxu0 0
    %10652 = vmatmul.mubr.bf16.gmra.mxu0 %v10167
    %v10653 = vpop.f32.mrf.mxu0
    %v10654 = vadd.f32 %v10613, %v10653
    %v10655 = vpop.f32.mrf.mxu0
    %v10656 = vadd.f32 %v10615, %v10655
    %v10657 = vpop.f32.mrf.mxu0
    %v10658 = vpop.f32.mrf.mxu0
    %10659 = vdwg.mxu0
    %v10660 = vadd.f32 %v10153, %v10244
    %v10661 = vadd.f32 %v10154, %v10246
    %v10662 = vadd.f32 %v10155, %v10326
    %v10663 = vadd.f32 %v10156, %v10328
    %v10664 = vadd.f32 %v10157, %v10408
    %v10665 = vadd.f32 %v10158, %v10410
    %v10666 = vadd.f32 %v10159, %v10490
    %v10667 = vadd.f32 %v10160, %v10492
    %v10668 = vadd.f32 %v10161, %v10572
    %v10669 = vadd.f32 %v10162, %v10574
    %v10670 = vadd.f32 %v10163, %v10654
    %v10671 = vadd.f32 %v10164, %v10656
    %v10672 = vpack.c.bf16 %v10660, %v10660
    %v10673 = vpack.c.bf16 %v10661, %v10661
    %v10674 = vpack.c.bf16 %v10662, %v10662
    %v10675 = vpack.c.bf16 %v10663, %v10663
    %v10676 = vpack.c.bf16 %v10664, %v10664
    %v10677 = vpack.c.bf16 %v10665, %v10665
    %v10678 = vpack.c.bf16 %v10666, %v10666
    %v10679 = vpack.c.bf16 %v10667, %v10667
    %v10680 = vpack.c.bf16 %v10668, %v10668
    %v10681 = vpack.c.bf16 %v10669, %v10669
    %v10682 = vpack.c.bf16 %v10670, %v10670
    %v10683 = vpack.c.bf16 %v10671, %v10671
    %v10684 = vxor.u32 %v10672, 2147516416
    %v10685 = vxor.u32 %v10673, 2147516416
    %v10686 = vxor.u32 %v10674, 2147516416
    %v10688 = vmul.bf16 %v10684, 1069105081
    %v10689 = vpow.bf16.pop %v10688
    %v10691 = vmul.bf16 %v10685, 1069105081
    %v10692 = vpow.bf16.pop %v10691
    %v10694 = vmul.bf16 %v10686, 1069105081
    %v10695 = vpow.bf16.pop %v10694
    %v10696 = vadd.bf16 %v10689, 1065369472
    %v10697 = vadd.bf16 %v10692, 1065369472
    %v10698 = vadd.bf16 %v10695, 1065369472
    %v10699 = vrcp.bf16.pop %v10696
    %v10700 = vmul.bf16 1065369472, %v10699
    %v10701 = vrcp.bf16.pop %v10697
    %v10702 = vmul.bf16 1065369472, %v10701
    %v10703 = vrcp.bf16.pop %v10698
    %v10704 = vmul.bf16 1065369472, %v10703
    %v10705 = vunpack.c.l.bf16 %v10700
    %v10706 = vunpack.c.l.bf16 %v10702
    %v10707 = vunpack.c.l.bf16 %v10704
    %v10708 = vxor.u32 %v10675, 2147516416
    %v10709 = vxor.u32 %v10676, 2147516416
    %v10710 = vxor.u32 %v10677, 2147516416
    %v10712 = vmul.bf16 %v10708, 1069105081
    %v10713 = vpow.bf16.pop %v10712
    %v10715 = vmul.bf16 %v10709, 1069105081
    %v10716 = vpow.bf16.pop %v10715
    %v10718 = vmul.bf16 %v10710, 1069105081
    %v10719 = vpow.bf16.pop %v10718
    %v10720 = vadd.bf16 %v10713, 1065369472
    %v10721 = vadd.bf16 %v10716, 1065369472
    %v10722 = vadd.bf16 %v10719, 1065369472
    %v10723 = vrcp.bf16.pop %v10720
    %v10724 = vmul.bf16 1065369472, %v10723
    %v10725 = vrcp.bf16.pop %v10721
    %v10726 = vmul.bf16 1065369472, %v10725
    %v10727 = vrcp.bf16.pop %v10722
    %v10728 = vmul.bf16 1065369472, %v10727
    %v10729 = vunpack.c.l.bf16 %v10724
    %v10730 = vunpack.c.l.bf16 %v10726
    %v10731 = vunpack.c.l.bf16 %v10728
    %v10732 = vtanh.bf16.pop %v10678
    %v10733 = vtanh.bf16.pop %v10679
    %v10734 = vtanh.bf16.pop %v10680
    %v10735 = vunpack.c.l.bf16 %v10732
    %v10736 = vunpack.c.l.bf16 %v10733
    %v10737 = vunpack.c.l.bf16 %v10734
    %v10738 = vxor.u32 %v10681, 2147516416
    %v10739 = vxor.u32 %v10682, 2147516416
    %v10740 = vxor.u32 %v10683, 2147516416
    %v10742 = vmul.bf16 %v10738, 1069105081
    %v10743 = vpow.bf16.pop %v10742
    %v10745 = vmul.bf16 %v10739, 1069105081
    %v10746 = vpow.bf16.pop %v10745
    %v10748 = vmul.bf16 %v10740, 1069105081
    %v10749 = vpow.bf16.pop %v10748
    %v10750 = vadd.bf16 %v10743, 1065369472
    %v10751 = vadd.bf16 %v10746, 1065369472
    %v10752 = vadd.bf16 %v10749, 1065369472
    %v10753 = vrcp.bf16.pop %v10750
    %v10754 = vmul.bf16 1065369472, %v10753
    %v10755 = vrcp.bf16.pop %v10751
    %v10756 = vmul.bf16 1065369472, %v10755
    %v10757 = vrcp.bf16.pop %v10752
    %v10758 = vmul.bf16 1065369472, %v10757
    %v10759 = vunpack.c.l.bf16 %v10754
    %v10760 = vunpack.c.l.bf16 %v10756
    %v10761 = vunpack.c.l.bf16 %v10758
    %v10762 = vmul.f32 %v10729, %v10132
    %v10763 = vmul.f32 %v10730, %v10133
    %v10764 = vmul.f32 %v10731, %v10134
    %v10765 = vmul.f32 %v10705, %v10735
    %v10766 = vmul.f32 %v10706, %v10736
    %v10767 = vmul.f32 %v10707, %v10737
    %v10768 = vadd.f32 %v10762, %v10765
    %v10769 = vadd.f32 %v10763, %v10766
    %v10770 = vadd.f32 %v10764, %v10767
    %v10771 = vpack.c.bf16 %v10768, %v10768
    %v10772 = vpack.c.bf16 %v10769, %v10769
    %v10773 = vpack.c.bf16 %v10770, %v10770
    %v10774 = vtanh.bf16.pop %v10771
    %v10775 = vtanh.bf16.pop %v10772
    %v10776 = vtanh.bf16.pop %v10773
    %v10777 = vunpack.c.l.bf16 %v10774
    %v10778 = vunpack.c.l.bf16 %v10775
    %v10779 = vunpack.c.l.bf16 %v10776
    %v10780 = vmul.f32 %v10759, %v10777
    %v10781 = vmul.f32 %v10760, %v10778
    %v10782 = vmul.f32 %v10761, %v10779
    %v10783 = vadd.f32 %v10147, %v10780
    %v10784 = vadd.f32 %v10148, %v10781
    %v10785 = vadd.f32 %v10149, %v10782
    %s10786 = smul.u32 7, 12
    %s10787 = smul.addr %s10786, 8
    %s10788 = scalar_lea.vmem [#allocation2], %s10787
    %v10789 = vld [vmem:[%s10788] sm:$0xff]
    %v10790 = vld [vmem:[%s10788 + $0x8] sm:$0xff]
    %v10791 = vld [vmem:[%s10788 + $0x10] sm:$0xff]
    %v10792 = vld [vmem:[%s10788 + $0x18] sm:$0xff]
    %v10793 = vld [vmem:[%s10788 + $0x20] sm:$0xff]
    %v10794 = vld [vmem:[%s10788 + $0x28] sm:$0xff]
    %v10795 = vld [vmem:[%s10788 + $0x30] sm:$0xff]
    %v10796 = vld [vmem:[%s10788 + $0x38] sm:$0xff]
    %v10797 = vld [vmem:[%s10788 + $0x40] sm:$0xff]
    %v10798 = vld [vmem:[%s10788 + $0x48] sm:$0xff]
    %v10799 = vld [vmem:[%s10788 + $0x50] sm:$0xff]
    %v10800 = vld [vmem:[%s10788 + $0x58] sm:$0xff]
    %v10801 = vpack.c.bf16 %v10780, %v10780
    %v10802 = vpack.c.bf16 %v10781, %v10781
    %v10803 = vpack.c.bf16 %v10782, %v10782
    %10804 = vmatprep.subr.bf16.mxu0 %v5861
    %10805 = vmatpush1.bf16.msra.mxu0 %v5860
    %10806 = vmatprep.subr.bf16.mxu0 %v5849
    %10807 = vmatpush1.bf16.msra.mxu0 %v5848
    %10808 = vmatprep.subr.bf16.mxu0 %v5837
    %10809 = vmatpush1.bf16.msra.mxu0 %v5836
    %10810 = vmatprep.subr.bf16.mxu0 %v5825
    %10811 = vmatpush1.bf16.msra.mxu0 %v5824
    %10812 = vmatprep.subr.bf16.mxu0 %v5813
    %10813 = vmatpush1.bf16.msra.mxu0 %v5812
    %10814 = vmatprep.subr.bf16.mxu0 %v5801
    %10815 = vmatpush1.bf16.msra.mxu0 %v5800
    %10816 = vmatprep.subr.bf16.mxu0 %v5789
    %10817 = vmatpush1.bf16.msra.mxu0 %v5788
    %10818 = vmatprep.subr.bf16.mxu0 %v5777
    %10819 = vmatpush1.bf16.msra.mxu0 %v5776
    %10820 = vmatprep.subr.bf16.mxu0 %v5957
    %10821 = vmatpush2.bf16.msra.mxu0 %v5956
    %10822 = vmatprep.subr.bf16.mxu0 %v5945
    %10823 = vmatpush2.bf16.msra.mxu0 %v5944
    %10824 = vmatprep.subr.bf16.mxu0 %v5933
    %10825 = vmatpush2.bf16.msra.mxu0 %v5932
    %10826 = vmatprep.subr.bf16.mxu0 %v5921
    %10827 = vmatpush2.bf16.msra.mxu0 %v5920
    %10828 = vmatprep.subr.bf16.mxu0 %v5909
    %10829 = vmatpush2.bf16.msra.mxu0 %v5908
    %10830 = vmatprep.subr.bf16.mxu0 %v5897
    %10831 = vmatpush2.bf16.msra.mxu0 %v5896
    %10832 = vmatprep.subr.bf16.mxu0 %v5885
    %10833 = vmatpush2.bf16.msra.mxu0 %v5884
    %10834 = vmatprep.subr.bf16.mxu0 %v5873
    %10835 = vmatpush2.bf16.msra.mxu0 %v5872
    %10836 = vmatprep.mubr.bf16.mxu0 %v10802
    %10837 = vmatmul.mubr.bf16.gmra.mxu0 %v10801
    %v10838 = vpop.f32.mrf.mxu0
    %v10839 = vadd.f32 0.0, %v10838
    %v10840 = vpop.f32.mrf.mxu0
    %v10841 = vadd.f32 0.0, %v10840
    %v10842 = vpop.f32.mrf.mxu0
    %v10843 = vpop.f32.mrf.mxu0
    %10844 = vdwg.mxu0
    %10845 = vmatprep.subr.bf16.mxu0 %v6053
    %10846 = vmatpush1.bf16.msra.mxu0 %v6052
    %10847 = vmatprep.subr.bf16.mxu0 %v6041
    %10848 = vmatpush1.bf16.msra.mxu0 %v6040
    %10849 = vmatprep.subr.bf16.mxu0 %v6029
    %10850 = vmatpush1.bf16.msra.mxu0 %v6028
    %10851 = vmatprep.subr.bf16.mxu0 %v6017
    %10852 = vmatpush1.bf16.msra.mxu0 %v6016
    %10853 = vmatprep.subr.bf16.mxu0 %v6005
    %10854 = vmatpush1.bf16.msra.mxu0 %v6004
    %10855 = vmatprep.subr.bf16.mxu0 %v5993
    %10856 = vmatpush1.bf16.msra.mxu0 %v5992
    %10857 = vmatprep.subr.bf16.mxu0 %v5981
    %10858 = vmatpush1.bf16.msra.mxu0 %v5980
    %10859 = vmatprep.subr.bf16.mxu0 %v5969
    %10860 = vmatpush1.bf16.msra.mxu0 %v5968
    %10861 = vmatprep.subr.bf16.mxu0 0
    %10862 = vmatpush2.bf16.msra.mxu0 0
    %10863 = vmatprep.subr.bf16.mxu0 0
    %10864 = vmatpush2.bf16.msra.mxu0 0
    %10865 = vmatprep.subr.bf16.mxu0 0
    %10866 = vmatpush2.bf16.msra.mxu0 0
    %10867 = vmatprep.subr.bf16.mxu0 0
    %10868 = vmatpush2.bf16.msra.mxu0 0
    %10869 = vmatprep.subr.bf16.mxu0 0
    %10870 = vmatpush2.bf16.msra.mxu0 0
    %10871 = vmatprep.subr.bf16.mxu0 0
    %10872 = vmatpush2.bf16.msra.mxu0 0
    %10873 = vmatprep.subr.bf16.mxu0 0
    %10874 = vmatpush2.bf16.msra.mxu0 0
    %10875 = vmatprep.subr.bf16.mxu0 0
    %10876 = vmatpush2.bf16.msra.mxu0 0
    %10877 = vmatprep.mubr.bf16.mxu0 0
    %10878 = vmatmul.mubr.bf16.gmra.mxu0 %v10803
    %v10879 = vpop.f32.mrf.mxu0
    %v10880 = vadd.f32 %v10839, %v10879
    %v10881 = vpop.f32.mrf.mxu0
    %v10882 = vadd.f32 %v10841, %v10881
    %v10883 = vpop.f32.mrf.mxu0
    %v10884 = vpop.f32.mrf.mxu0
    %10885 = vdwg.mxu0
    %10886 = vmatprep.subr.bf16.mxu0 %v5863
    %10887 = vmatpush1.bf16.msra.mxu0 %v5862
    %10888 = vmatprep.subr.bf16.mxu0 %v5851
    %10889 = vmatpush1.bf16.msra.mxu0 %v5850
    %10890 = vmatprep.subr.bf16.mxu0 %v5839
    %10891 = vmatpush1.bf16.msra.mxu0 %v5838
    %10892 = vmatprep.subr.bf16.mxu0 %v5827
    %10893 = vmatpush1.bf16.msra.mxu0 %v5826
    %10894 = vmatprep.subr.bf16.mxu0 %v5815
    %10895 = vmatpush1.bf16.msra.mxu0 %v5814
    %10896 = vmatprep.subr.bf16.mxu0 %v5803
    %10897 = vmatpush1.bf16.msra.mxu0 %v5802
    %10898 = vmatprep.subr.bf16.mxu0 %v5791
    %10899 = vmatpush1.bf16.msra.mxu0 %v5790
    %10900 = vmatprep.subr.bf16.mxu0 %v5779
    %10901 = vmatpush1.bf16.msra.mxu0 %v5778
    %10902 = vmatprep.subr.bf16.mxu0 %v5959
    %10903 = vmatpush2.bf16.msra.mxu0 %v5958
    %10904 = vmatprep.subr.bf16.mxu0 %v5947
    %10905 = vmatpush2.bf16.msra.mxu0 %v5946
    %10906 = vmatprep.subr.bf16.mxu0 %v5935
    %10907 = vmatpush2.bf16.msra.mxu0 %v5934
    %10908 = vmatprep.subr.bf16.mxu0 %v5923
    %10909 = vmatpush2.bf16.msra.mxu0 %v5922
    %10910 = vmatprep.subr.bf16.mxu0 %v5911
    %10911 = vmatpush2.bf16.msra.mxu0 %v5910
    %10912 = vmatprep.subr.bf16.mxu0 %v5899
    %10913 = vmatpush2.bf16.msra.mxu0 %v5898
    %10914 = vmatprep.subr.bf16.mxu0 %v5887
    %10915 = vmatpush2.bf16.msra.mxu0 %v5886
    %10916 = vmatprep.subr.bf16.mxu0 %v5875
    %10917 = vmatpush2.bf16.msra.mxu0 %v5874
    %10918 = vmatprep.mubr.bf16.mxu0 %v10802
    %10919 = vmatmul.mubr.bf16.gmra.mxu0 %v10801
    %v10920 = vpop.f32.mrf.mxu0
    %v10921 = vadd.f32 0.0, %v10920
    %v10922 = vpop.f32.mrf.mxu0
    %v10923 = vadd.f32 0.0, %v10922
    %v10924 = vpop.f32.mrf.mxu0
    %v10925 = vpop.f32.mrf.mxu0
    %10926 = vdwg.mxu0
    %10927 = vmatprep.subr.bf16.mxu0 %v6055
    %10928 = vmatpush1.bf16.msra.mxu0 %v6054
    %10929 = vmatprep.subr.bf16.mxu0 %v6043
    %10930 = vmatpush1.bf16.msra.mxu0 %v6042
    %10931 = vmatprep.subr.bf16.mxu0 %v6031
    %10932 = vmatpush1.bf16.msra.mxu0 %v6030
    %10933 = vmatprep.subr.bf16.mxu0 %v6019
    %10934 = vmatpush1.bf16.msra.mxu0 %v6018
    %10935 = vmatprep.subr.bf16.mxu0 %v6007
    %10936 = vmatpush1.bf16.msra.mxu0 %v6006
    %10937 = vmatprep.subr.bf16.mxu0 %v5995
    %10938 = vmatpush1.bf16.msra.mxu0 %v5994
    %10939 = vmatprep.subr.bf16.mxu0 %v5983
    %10940 = vmatpush1.bf16.msra.mxu0 %v5982
    %10941 = vmatprep.subr.bf16.mxu0 %v5971
    %10942 = vmatpush1.bf16.msra.mxu0 %v5970
    %10943 = vmatprep.subr.bf16.mxu0 0
    %10944 = vmatpush2.bf16.msra.mxu0 0
    %10945 = vmatprep.subr.bf16.mxu0 0
    %10946 = vmatpush2.bf16.msra.mxu0 0
    %10947 = vmatprep.subr.bf16.mxu0 0
    %10948 = vmatpush2.bf16.msra.mxu0 0
    %10949 = vmatprep.subr.bf16.mxu0 0
    %10950 = vmatpush2.bf16.msra.mxu0 0
    %10951 = vmatprep.subr.bf16.mxu0 0
    %10952 = vmatpush2.bf16.msra.mxu0 0
    %10953 = vmatprep.subr.bf16.mxu0 0
    %10954 = vmatpush2.bf16.msra.mxu0 0
    %10955 = vmatprep.subr.bf16.mxu0 0
    %10956 = vmatpush2.bf16.msra.mxu0 0
    %10957 = vmatprep.subr.bf16.mxu0 0
    %10958 = vmatpush2.bf16.msra.mxu0 0
    %10959 = vmatprep.mubr.bf16.mxu0 0
    %10960 = vmatmul.mubr.bf16.gmra.mxu0 %v10803
    %v10961 = vpop.f32.mrf.mxu0
    %v10962 = vadd.f32 %v10921, %v10961
    %v10963 = vpop.f32.mrf.mxu0
    %v10964 = vadd.f32 %v10923, %v10963
    %v10965 = vpop.f32.mrf.mxu0
    %v10966 = vpop.f32.mrf.mxu0
    %10967 = vdwg.mxu0
    %10968 = vmatprep.subr.bf16.mxu0 %v5865
    %10969 = vmatpush1.bf16.msra.mxu0 %v5864
    %10970 = vmatprep.subr.bf16.mxu0 %v5853
    %10971 = vmatpush1.bf16.msra.mxu0 %v5852
    %10972 = vmatprep.subr.bf16.mxu0 %v5841
    %10973 = vmatpush1.bf16.msra.mxu0 %v5840
    %10974 = vmatprep.subr.bf16.mxu0 %v5829
    %10975 = vmatpush1.bf16.msra.mxu0 %v5828
    %10976 = vmatprep.subr.bf16.mxu0 %v5817
    %10977 = vmatpush1.bf16.msra.mxu0 %v5816
    %10978 = vmatprep.subr.bf16.mxu0 %v5805
    %10979 = vmatpush1.bf16.msra.mxu0 %v5804
    %10980 = vmatprep.subr.bf16.mxu0 %v5793
    %10981 = vmatpush1.bf16.msra.mxu0 %v5792
    %10982 = vmatprep.subr.bf16.mxu0 %v5781
    %10983 = vmatpush1.bf16.msra.mxu0 %v5780
    %10984 = vmatprep.subr.bf16.mxu0 %v5961
    %10985 = vmatpush2.bf16.msra.mxu0 %v5960
    %10986 = vmatprep.subr.bf16.mxu0 %v5949
    %10987 = vmatpush2.bf16.msra.mxu0 %v5948
    %10988 = vmatprep.subr.bf16.mxu0 %v5937
    %10989 = vmatpush2.bf16.msra.mxu0 %v5936
    %10990 = vmatprep.subr.bf16.mxu0 %v5925
    %10991 = vmatpush2.bf16.msra.mxu0 %v5924
    %10992 = vmatprep.subr.bf16.mxu0 %v5913
    %10993 = vmatpush2.bf16.msra.mxu0 %v5912
    %10994 = vmatprep.subr.bf16.mxu0 %v5901
    %10995 = vmatpush2.bf16.msra.mxu0 %v5900
    %10996 = vmatprep.subr.bf16.mxu0 %v5889
    %10997 = vmatpush2.bf16.msra.mxu0 %v5888
    %10998 = vmatprep.subr.bf16.mxu0 %v5877
    %10999 = vmatpush2.bf16.msra.mxu0 %v5876
    %11000 = vmatprep.mubr.bf16.mxu0 %v10802
    %11001 = vmatmul.mubr.bf16.gmra.mxu0 %v10801
    %v11002 = vpop.f32.mrf.mxu0
    %v11003 = vadd.f32 0.0, %v11002
    %v11004 = vpop.f32.mrf.mxu0
    %v11005 = vadd.f32 0.0, %v11004
    %v11006 = vpop.f32.mrf.mxu0
    %v11007 = vpop.f32.mrf.mxu0
    %11008 = vdwg.mxu0
    %11009 = vmatprep.subr.bf16.mxu0 %v6057
    %11010 = vmatpush1.bf16.msra.mxu0 %v6056
    %11011 = vmatprep.subr.bf16.mxu0 %v6045
    %11012 = vmatpush1.bf16.msra.mxu0 %v6044
    %11013 = vmatprep.subr.bf16.mxu0 %v6033
    %11014 = vmatpush1.bf16.msra.mxu0 %v6032
    %11015 = vmatprep.subr.bf16.mxu0 %v6021
    %11016 = vmatpush1.bf16.msra.mxu0 %v6020
    %11017 = vmatprep.subr.bf16.mxu0 %v6009
    %11018 = vmatpush1.bf16.msra.mxu0 %v6008
    %11019 = vmatprep.subr.bf16.mxu0 %v5997
    %11020 = vmatpush1.bf16.msra.mxu0 %v5996
    %11021 = vmatprep.subr.bf16.mxu0 %v5985
    %11022 = vmatpush1.bf16.msra.mxu0 %v5984
    %11023 = vmatprep.subr.bf16.mxu0 %v5973
    %11024 = vmatpush1.bf16.msra.mxu0 %v5972
    %11025 = vmatprep.subr.bf16.mxu0 0
    %11026 = vmatpush2.bf16.msra.mxu0 0
    %11027 = vmatprep.subr.bf16.mxu0 0
    %11028 = vmatpush2.bf16.msra.mxu0 0
    %11029 = vmatprep.subr.bf16.mxu0 0
    %11030 = vmatpush2.bf16.msra.mxu0 0
    %11031 = vmatprep.subr.bf16.mxu0 0
    %11032 = vmatpush2.bf16.msra.mxu0 0
    %11033 = vmatprep.subr.bf16.mxu0 0
    %11034 = vmatpush2.bf16.msra.mxu0 0
    %11035 = vmatprep.subr.bf16.mxu0 0
    %11036 = vmatpush2.bf16.msra.mxu0 0
    %11037 = vmatprep.subr.bf16.mxu0 0
    %11038 = vmatpush2.bf16.msra.mxu0 0
    %11039 = vmatprep.subr.bf16.mxu0 0
    %11040 = vmatpush2.bf16.msra.mxu0 0
    %11041 = vmatprep.mubr.bf16.mxu0 0
    %11042 = vmatmul.mubr.bf16.gmra.mxu0 %v10803
    %v11043 = vpop.f32.mrf.mxu0
    %v11044 = vadd.f32 %v11003, %v11043
    %v11045 = vpop.f32.mrf.mxu0
    %v11046 = vadd.f32 %v11005, %v11045
    %v11047 = vpop.f32.mrf.mxu0
    %v11048 = vpop.f32.mrf.mxu0
    %11049 = vdwg.mxu0
    %11050 = vmatprep.subr.bf16.mxu0 %v5867
    %11051 = vmatpush1.bf16.msra.mxu0 %v5866
    %11052 = vmatprep.subr.bf16.mxu0 %v5855
    %11053 = vmatpush1.bf16.msra.mxu0 %v5854
    %11054 = vmatprep.subr.bf16.mxu0 %v5843
    %11055 = vmatpush1.bf16.msra.mxu0 %v5842
    %11056 = vmatprep.subr.bf16.mxu0 %v5831
    %11057 = vmatpush1.bf16.msra.mxu0 %v5830
    %11058 = vmatprep.subr.bf16.mxu0 %v5819
    %11059 = vmatpush1.bf16.msra.mxu0 %v5818
    %11060 = vmatprep.subr.bf16.mxu0 %v5807
    %11061 = vmatpush1.bf16.msra.mxu0 %v5806
    %11062 = vmatprep.subr.bf16.mxu0 %v5795
    %11063 = vmatpush1.bf16.msra.mxu0 %v5794
    %11064 = vmatprep.subr.bf16.mxu0 %v5783
    %11065 = vmatpush1.bf16.msra.mxu0 %v5782
    %11066 = vmatprep.subr.bf16.mxu0 %v5963
    %11067 = vmatpush2.bf16.msra.mxu0 %v5962
    %11068 = vmatprep.subr.bf16.mxu0 %v5951
    %11069 = vmatpush2.bf16.msra.mxu0 %v5950
    %11070 = vmatprep.subr.bf16.mxu0 %v5939
    %11071 = vmatpush2.bf16.msra.mxu0 %v5938
    %11072 = vmatprep.subr.bf16.mxu0 %v5927
    %11073 = vmatpush2.bf16.msra.mxu0 %v5926
    %11074 = vmatprep.subr.bf16.mxu0 %v5915
    %11075 = vmatpush2.bf16.msra.mxu0 %v5914
    %11076 = vmatprep.subr.bf16.mxu0 %v5903
    %11077 = vmatpush2.bf16.msra.mxu0 %v5902
    %11078 = vmatprep.subr.bf16.mxu0 %v5891
    %11079 = vmatpush2.bf16.msra.mxu0 %v5890
    %11080 = vmatprep.subr.bf16.mxu0 %v5879
    %11081 = vmatpush2.bf16.msra.mxu0 %v5878
    %11082 = vmatprep.mubr.bf16.mxu0 %v10802
    %11083 = vmatmul.mubr.bf16.gmra.mxu0 %v10801
    %v11084 = vpop.f32.mrf.mxu0
    %v11085 = vadd.f32 0.0, %v11084
    %v11086 = vpop.f32.mrf.mxu0
    %v11087 = vadd.f32 0.0, %v11086
    %v11088 = vpop.f32.mrf.mxu0
    %v11089 = vpop.f32.mrf.mxu0
    %11090 = vdwg.mxu0
    %11091 = vmatprep.subr.bf16.mxu0 %v6059
    %11092 = vmatpush1.bf16.msra.mxu0 %v6058
    %11093 = vmatprep.subr.bf16.mxu0 %v6047
    %11094 = vmatpush1.bf16.msra.mxu0 %v6046
    %11095 = vmatprep.subr.bf16.mxu0 %v6035
    %11096 = vmatpush1.bf16.msra.mxu0 %v6034
    %11097 = vmatprep.subr.bf16.mxu0 %v6023
    %11098 = vmatpush1.bf16.msra.mxu0 %v6022
    %11099 = vmatprep.subr.bf16.mxu0 %v6011
    %11100 = vmatpush1.bf16.msra.mxu0 %v6010
    %11101 = vmatprep.subr.bf16.mxu0 %v5999
    %11102 = vmatpush1.bf16.msra.mxu0 %v5998
    %11103 = vmatprep.subr.bf16.mxu0 %v5987
    %11104 = vmatpush1.bf16.msra.mxu0 %v5986
    %11105 = vmatprep.subr.bf16.mxu0 %v5975
    %11106 = vmatpush1.bf16.msra.mxu0 %v5974
    %11107 = vmatprep.subr.bf16.mxu0 0
    %11108 = vmatpush2.bf16.msra.mxu0 0
    %11109 = vmatprep.subr.bf16.mxu0 0
    %11110 = vmatpush2.bf16.msra.mxu0 0
    %11111 = vmatprep.subr.bf16.mxu0 0
    %11112 = vmatpush2.bf16.msra.mxu0 0
    %11113 = vmatprep.subr.bf16.mxu0 0
    %11114 = vmatpush2.bf16.msra.mxu0 0
    %11115 = vmatprep.subr.bf16.mxu0 0
    %11116 = vmatpush2.bf16.msra.mxu0 0
    %11117 = vmatprep.subr.bf16.mxu0 0
    %11118 = vmatpush2.bf16.msra.mxu0 0
    %11119 = vmatprep.subr.bf16.mxu0 0
    %11120 = vmatpush2.bf16.msra.mxu0 0
    %11121 = vmatprep.subr.bf16.mxu0 0
    %11122 = vmatpush2.bf16.msra.mxu0 0
    %11123 = vmatprep.mubr.bf16.mxu0 0
    %11124 = vmatmul.mubr.bf16.gmra.mxu0 %v10803
    %v11125 = vpop.f32.mrf.mxu0
    %v11126 = vadd.f32 %v11085, %v11125
    %v11127 = vpop.f32.mrf.mxu0
    %v11128 = vadd.f32 %v11087, %v11127
    %v11129 = vpop.f32.mrf.mxu0
    %v11130 = vpop.f32.mrf.mxu0
    %11131 = vdwg.mxu0
    %11132 = vmatprep.subr.bf16.mxu0 %v5869
    %11133 = vmatpush1.bf16.msra.mxu0 %v5868
    %11134 = vmatprep.subr.bf16.mxu0 %v5857
    %11135 = vmatpush1.bf16.msra.mxu0 %v5856
    %11136 = vmatprep.subr.bf16.mxu0 %v5845
    %11137 = vmatpush1.bf16.msra.mxu0 %v5844
    %11138 = vmatprep.subr.bf16.mxu0 %v5833
    %11139 = vmatpush1.bf16.msra.mxu0 %v5832
    %11140 = vmatprep.subr.bf16.mxu0 %v5821
    %11141 = vmatpush1.bf16.msra.mxu0 %v5820
    %11142 = vmatprep.subr.bf16.mxu0 %v5809
    %11143 = vmatpush1.bf16.msra.mxu0 %v5808
    %11144 = vmatprep.subr.bf16.mxu0 %v5797
    %11145 = vmatpush1.bf16.msra.mxu0 %v5796
    %11146 = vmatprep.subr.bf16.mxu0 %v5785
    %11147 = vmatpush1.bf16.msra.mxu0 %v5784
    %11148 = vmatprep.subr.bf16.mxu0 %v5965
    %11149 = vmatpush2.bf16.msra.mxu0 %v5964
    %11150 = vmatprep.subr.bf16.mxu0 %v5953
    %11151 = vmatpush2.bf16.msra.mxu0 %v5952
    %11152 = vmatprep.subr.bf16.mxu0 %v5941
    %11153 = vmatpush2.bf16.msra.mxu0 %v5940
    %11154 = vmatprep.subr.bf16.mxu0 %v5929
    %11155 = vmatpush2.bf16.msra.mxu0 %v5928
    %11156 = vmatprep.subr.bf16.mxu0 %v5917
    %11157 = vmatpush2.bf16.msra.mxu0 %v5916
    %11158 = vmatprep.subr.bf16.mxu0 %v5905
    %11159 = vmatpush2.bf16.msra.mxu0 %v5904
    %11160 = vmatprep.subr.bf16.mxu0 %v5893
    %11161 = vmatpush2.bf16.msra.mxu0 %v5892
    %11162 = vmatprep.subr.bf16.mxu0 %v5881
    %11163 = vmatpush2.bf16.msra.mxu0 %v5880
    %11164 = vmatprep.mubr.bf16.mxu0 %v10802
    %11165 = vmatmul.mubr.bf16.gmra.mxu0 %v10801
    %v11166 = vpop.f32.mrf.mxu0
    %v11167 = vadd.f32 0.0, %v11166
    %v11168 = vpop.f32.mrf.mxu0
    %v11169 = vadd.f32 0.0, %v11168
    %v11170 = vpop.f32.mrf.mxu0
    %v11171 = vpop.f32.mrf.mxu0
    %11172 = vdwg.mxu0
    %11173 = vmatprep.subr.bf16.mxu0 %v6061
    %11174 = vmatpush1.bf16.msra.mxu0 %v6060
    %11175 = vmatprep.subr.bf16.mxu0 %v6049
    %11176 = vmatpush1.bf16.msra.mxu0 %v6048
    %11177 = vmatprep.subr.bf16.mxu0 %v6037
    %11178 = vmatpush1.bf16.msra.mxu0 %v6036
    %11179 = vmatprep.subr.bf16.mxu0 %v6025
    %11180 = vmatpush1.bf16.msra.mxu0 %v6024
    %11181 = vmatprep.subr.bf16.mxu0 %v6013
    %11182 = vmatpush1.bf16.msra.mxu0 %v6012
    %11183 = vmatprep.subr.bf16.mxu0 %v6001
    %11184 = vmatpush1.bf16.msra.mxu0 %v6000
    %11185 = vmatprep.subr.bf16.mxu0 %v5989
    %11186 = vmatpush1.bf16.msra.mxu0 %v5988
    %11187 = vmatprep.subr.bf16.mxu0 %v5977
    %11188 = vmatpush1.bf16.msra.mxu0 %v5976
    %11189 = vmatprep.subr.bf16.mxu0 0
    %11190 = vmatpush2.bf16.msra.mxu0 0
    %11191 = vmatprep.subr.bf16.mxu0 0
    %11192 = vmatpush2.bf16.msra.mxu0 0
    %11193 = vmatprep.subr.bf16.mxu0 0
    %11194 = vmatpush2.bf16.msra.mxu0 0
    %11195 = vmatprep.subr.bf16.mxu0 0
    %11196 = vmatpush2.bf16.msra.mxu0 0
    %11197 = vmatprep.subr.bf16.mxu0 0
    %11198 = vmatpush2.bf16.msra.mxu0 0
    %11199 = vmatprep.subr.bf16.mxu0 0
    %11200 = vmatpush2.bf16.msra.mxu0 0
    %11201 = vmatprep.subr.bf16.mxu0 0
    %11202 = vmatpush2.bf16.msra.mxu0 0
    %11203 = vmatprep.subr.bf16.mxu0 0
    %11204 = vmatpush2.bf16.msra.mxu0 0
    %11205 = vmatprep.mubr.bf16.mxu0 0
    %11206 = vmatmul.mubr.bf16.gmra.mxu0 %v10803
    %v11207 = vpop.f32.mrf.mxu0
    %v11208 = vadd.f32 %v11167, %v11207
    %v11209 = vpop.f32.mrf.mxu0
    %v11210 = vadd.f32 %v11169, %v11209
    %v11211 = vpop.f32.mrf.mxu0
    %v11212 = vpop.f32.mrf.mxu0
    %11213 = vdwg.mxu0
    %11214 = vmatprep.subr.bf16.mxu0 %v5871
    %11215 = vmatpush1.bf16.msra.mxu0 %v5870
    %11216 = vmatprep.subr.bf16.mxu0 %v5859
    %11217 = vmatpush1.bf16.msra.mxu0 %v5858
    %11218 = vmatprep.subr.bf16.mxu0 %v5847
    %11219 = vmatpush1.bf16.msra.mxu0 %v5846
    %11220 = vmatprep.subr.bf16.mxu0 %v5835
    %11221 = vmatpush1.bf16.msra.mxu0 %v5834
    %11222 = vmatprep.subr.bf16.mxu0 %v5823
    %11223 = vmatpush1.bf16.msra.mxu0 %v5822
    %11224 = vmatprep.subr.bf16.mxu0 %v5811
    %11225 = vmatpush1.bf16.msra.mxu0 %v5810
    %11226 = vmatprep.subr.bf16.mxu0 %v5799
    %11227 = vmatpush1.bf16.msra.mxu0 %v5798
    %11228 = vmatprep.subr.bf16.mxu0 %v5787
    %11229 = vmatpush1.bf16.msra.mxu0 %v5786
    %11230 = vmatprep.subr.bf16.mxu0 %v5967
    %11231 = vmatpush2.bf16.msra.mxu0 %v5966
    %11232 = vmatprep.subr.bf16.mxu0 %v5955
    %11233 = vmatpush2.bf16.msra.mxu0 %v5954
    %11234 = vmatprep.subr.bf16.mxu0 %v5943
    %11235 = vmatpush2.bf16.msra.mxu0 %v5942
    %11236 = vmatprep.subr.bf16.mxu0 %v5931
    %11237 = vmatpush2.bf16.msra.mxu0 %v5930
    %11238 = vmatprep.subr.bf16.mxu0 %v5919
    %11239 = vmatpush2.bf16.msra.mxu0 %v5918
    %11240 = vmatprep.subr.bf16.mxu0 %v5907
    %11241 = vmatpush2.bf16.msra.mxu0 %v5906
    %11242 = vmatprep.subr.bf16.mxu0 %v5895
    %11243 = vmatpush2.bf16.msra.mxu0 %v5894
    %11244 = vmatprep.subr.bf16.mxu0 %v5883
    %11245 = vmatpush2.bf16.msra.mxu0 %v5882
    %11246 = vmatprep.mubr.bf16.mxu0 %v10802
    %11247 = vmatmul.mubr.bf16.gmra.mxu0 %v10801
    %v11248 = vpop.f32.mrf.mxu0
    %v11249 = vadd.f32 0.0, %v11248
    %v11250 = vpop.f32.mrf.mxu0
    %v11251 = vadd.f32 0.0, %v11250
    %v11252 = vpop.f32.mrf.mxu0
    %v11253 = vpop.f32.mrf.mxu0
    %11254 = vdwg.mxu0
    %11255 = vmatprep.subr.bf16.mxu0 %v6063
    %11256 = vmatpush1.bf16.msra.mxu0 %v6062
    %11257 = vmatprep.subr.bf16.mxu0 %v6051
    %11258 = vmatpush1.bf16.msra.mxu0 %v6050
    %11259 = vmatprep.subr.bf16.mxu0 %v6039
    %11260 = vmatpush1.bf16.msra.mxu0 %v6038
    %11261 = vmatprep.subr.bf16.mxu0 %v6027
    %11262 = vmatpush1.bf16.msra.mxu0 %v6026
    %11263 = vmatprep.subr.bf16.mxu0 %v6015
    %11264 = vmatpush1.bf16.msra.mxu0 %v6014
    %11265 = vmatprep.subr.bf16.mxu0 %v6003
    %11266 = vmatpush1.bf16.msra.mxu0 %v6002
    %11267 = vmatprep.subr.bf16.mxu0 %v5991
    %11268 = vmatpush1.bf16.msra.mxu0 %v5990
    %11269 = vmatprep.subr.bf16.mxu0 %v5979
    %11270 = vmatpush1.bf16.msra.mxu0 %v5978
    %11271 = vmatprep.subr.bf16.mxu0 0
    %11272 = vmatpush2.bf16.msra.mxu0 0
    %11273 = vmatprep.subr.bf16.mxu0 0
    %11274 = vmatpush2.bf16.msra.mxu0 0
    %11275 = vmatprep.subr.bf16.mxu0 0
    %11276 = vmatpush2.bf16.msra.mxu0 0
    %11277 = vmatprep.subr.bf16.mxu0 0
    %11278 = vmatpush2.bf16.msra.mxu0 0
    %11279 = vmatprep.subr.bf16.mxu0 0
    %11280 = vmatpush2.bf16.msra.mxu0 0
    %11281 = vmatprep.subr.bf16.mxu0 0
    %11282 = vmatpush2.bf16.msra.mxu0 0
    %11283 = vmatprep.subr.bf16.mxu0 0
    %11284 = vmatpush2.bf16.msra.mxu0 0
    %11285 = vmatprep.subr.bf16.mxu0 0
    %11286 = vmatpush2.bf16.msra.mxu0 0
    %11287 = vmatprep.mubr.bf16.mxu0 0
    %11288 = vmatmul.mubr.bf16.gmra.mxu0 %v10803
    %v11289 = vpop.f32.mrf.mxu0
    %v11290 = vadd.f32 %v11249, %v11289
    %v11291 = vpop.f32.mrf.mxu0
    %v11292 = vadd.f32 %v11251, %v11291
    %v11293 = vpop.f32.mrf.mxu0
    %v11294 = vpop.f32.mrf.mxu0
    %11295 = vdwg.mxu0
    %v11296 = vadd.f32 %v10789, %v10880
    %v11297 = vadd.f32 %v10790, %v10882
    %v11298 = vadd.f32 %v10791, %v10962
    %v11299 = vadd.f32 %v10792, %v10964
    %v11300 = vadd.f32 %v10793, %v11044
    %v11301 = vadd.f32 %v10794, %v11046
    %v11302 = vadd.f32 %v10795, %v11126
    %v11303 = vadd.f32 %v10796, %v11128
    %v11304 = vadd.f32 %v10797, %v11208
    %v11305 = vadd.f32 %v10798, %v11210
    %v11306 = vadd.f32 %v10799, %v11290
    %v11307 = vadd.f32 %v10800, %v11292
    %v11308 = vpack.c.bf16 %v11296, %v11296
    %v11309 = vpack.c.bf16 %v11297, %v11297
    %v11310 = vpack.c.bf16 %v11298, %v11298
    %v11311 = vpack.c.bf16 %v11299, %v11299
    %v11312 = vpack.c.bf16 %v11300, %v11300
    %v11313 = vpack.c.bf16 %v11301, %v11301
    %v11314 = vpack.c.bf16 %v11302, %v11302
    %v11315 = vpack.c.bf16 %v11303, %v11303
    %v11316 = vpack.c.bf16 %v11304, %v11304
    %v11317 = vpack.c.bf16 %v11305, %v11305
    %v11318 = vpack.c.bf16 %v11306, %v11306
    %v11319 = vpack.c.bf16 %v11307, %v11307
    %v11320 = vxor.u32 %v11308, 2147516416
    %v11321 = vxor.u32 %v11309, 2147516416
    %v11322 = vxor.u32 %v11310, 2147516416
    %v11324 = vmul.bf16 %v11320, 1069105081
    %v11325 = vpow.bf16.pop %v11324
    %v11327 = vmul.bf16 %v11321, 1069105081
    %v11328 = vpow.bf16.pop %v11327
    %v11330 = vmul.bf16 %v11322, 1069105081
    %v11331 = vpow.bf16.pop %v11330
    %v11332 = vadd.bf16 %v11325, 1065369472
    %v11333 = vadd.bf16 %v11328, 1065369472
    %v11334 = vadd.bf16 %v11331, 1065369472
    %v11335 = vrcp.bf16.pop %v11332
    %v11336 = vmul.bf16 1065369472, %v11335
    %v11337 = vrcp.bf16.pop %v11333
    %v11338 = vmul.bf16 1065369472, %v11337
    %v11339 = vrcp.bf16.pop %v11334
    %v11340 = vmul.bf16 1065369472, %v11339
    %v11341 = vunpack.c.l.bf16 %v11336
    %v11342 = vunpack.c.l.bf16 %v11338
    %v11343 = vunpack.c.l.bf16 %v11340
    %v11344 = vxor.u32 %v11311, 2147516416
    %v11345 = vxor.u32 %v11312, 2147516416
    %v11346 = vxor.u32 %v11313, 2147516416
    %v11348 = vmul.bf16 %v11344, 1069105081
    %v11349 = vpow.bf16.pop %v11348
    %v11351 = vmul.bf16 %v11345, 1069105081
    %v11352 = vpow.bf16.pop %v11351
    %v11354 = vmul.bf16 %v11346, 1069105081
    %v11355 = vpow.bf16.pop %v11354
    %v11356 = vadd.bf16 %v11349, 1065369472
    %v11357 = vadd.bf16 %v11352, 1065369472
    %v11358 = vadd.bf16 %v11355, 1065369472
    %v11359 = vrcp.bf16.pop %v11356
    %v11360 = vmul.bf16 1065369472, %v11359
    %v11361 = vrcp.bf16.pop %v11357
    %v11362 = vmul.bf16 1065369472, %v11361
    %v11363 = vrcp.bf16.pop %v11358
    %v11364 = vmul.bf16 1065369472, %v11363
    %v11365 = vunpack.c.l.bf16 %v11360
    %v11366 = vunpack.c.l.bf16 %v11362
    %v11367 = vunpack.c.l.bf16 %v11364
    %v11368 = vtanh.bf16.pop %v11314
    %v11369 = vtanh.bf16.pop %v11315
    %v11370 = vtanh.bf16.pop %v11316
    %v11371 = vunpack.c.l.bf16 %v11368
    %v11372 = vunpack.c.l.bf16 %v11369
    %v11373 = vunpack.c.l.bf16 %v11370
    %v11374 = vxor.u32 %v11317, 2147516416
    %v11375 = vxor.u32 %v11318, 2147516416
    %v11376 = vxor.u32 %v11319, 2147516416
    %v11378 = vmul.bf16 %v11374, 1069105081
    %v11379 = vpow.bf16.pop %v11378
    %v11381 = vmul.bf16 %v11375, 1069105081
    %v11382 = vpow.bf16.pop %v11381
    %v11384 = vmul.bf16 %v11376, 1069105081
    %v11385 = vpow.bf16.pop %v11384
    %v11386 = vadd.bf16 %v11379, 1065369472
    %v11387 = vadd.bf16 %v11382, 1065369472
    %v11388 = vadd.bf16 %v11385, 1065369472
    %v11389 = vrcp.bf16.pop %v11386
    %v11390 = vmul.bf16 1065369472, %v11389
    %v11391 = vrcp.bf16.pop %v11387
    %v11392 = vmul.bf16 1065369472, %v11391
    %v11393 = vrcp.bf16.pop %v11388
    %v11394 = vmul.bf16 1065369472, %v11393
    %v11395 = vunpack.c.l.bf16 %v11390
    %v11396 = vunpack.c.l.bf16 %v11392
    %v11397 = vunpack.c.l.bf16 %v11394
    %v11398 = vmul.f32 %v11365, %v10768
    %v11399 = vmul.f32 %v11366, %v10769
    %v11400 = vmul.f32 %v11367, %v10770
    %v11401 = vmul.f32 %v11341, %v11371
    %v11402 = vmul.f32 %v11342, %v11372
    %v11403 = vmul.f32 %v11343, %v11373
    %v11404 = vadd.f32 %v11398, %v11401
    %v11405 = vadd.f32 %v11399, %v11402
    %v11406 = vadd.f32 %v11400, %v11403
    %v11407 = vpack.c.bf16 %v11404, %v11404
    %v11408 = vpack.c.bf16 %v11405, %v11405
    %v11409 = vpack.c.bf16 %v11406, %v11406
    %v11410 = vtanh.bf16.pop %v11407
    %v11411 = vtanh.bf16.pop %v11408
    %v11412 = vtanh.bf16.pop %v11409
    %v11413 = vunpack.c.l.bf16 %v11410
    %v11414 = vunpack.c.l.bf16 %v11411
    %v11415 = vunpack.c.l.bf16 %v11412
    %v11416 = vmul.f32 %v11395, %v11413
    %v11417 = vmul.f32 %v11396, %v11414
    %v11418 = vmul.f32 %v11397, %v11415
    %v11419 = vadd.f32 %v10783, %v11416
    %v11420 = vadd.f32 %v10784, %v11417
    %v11421 = vadd.f32 %v10785, %v11418
    %v11422 = vmul.f32 %v11419, 0.125
    %v11423 = vmul.f32 %v11420, 0.125
    %v11424 = vmul.f32 %v11421, 0.125
    %s11425 = smul.u32 %s4605, 1
    %s11426 = sshll.u32 %s11425, 4
    %11427 = dma.done %s99, %s11426
    %v11428 = vpack.c.bf16 %v11422, %v11422
    %v11429 = vpack.c.bf16 %v11423, %v11423
    %v11430 = vpack.c.bf16 %v11424, %v11424
    %v11431 = vld [vmem:[#allocation4] sm:$0xf]
    %v11432 = vld [vmem:[#allocation4 + $0x4] sm:$0xf]
    %v11433 = vld [vmem:[#allocation4 + $0x8] sm:$0xf]
    %v11434 = vld [vmem:[#allocation4 + $0xc] sm:$0xf]
    %v11435 = vld [vmem:[#allocation4 + $0x10] sm:$0xf]
    %v11436 = vld [vmem:[#allocation4 + $0x14] sm:$0xf]
    %v11437 = vld [vmem:[#allocation4 + $0x18] sm:$0xf]
    %v11438 = vld [vmem:[#allocation4 + $0x1c] sm:$0xf]
    %v11439 = vld [vmem:[#allocation4 + $0x20] sm:$0xf]
    %v11440 = vld [vmem:[#allocation4 + $0x24] sm:$0xf]
    %v11441 = vld [vmem:[#allocation4 + $0x28] sm:$0xf]
    %v11442 = vld [vmem:[#allocation4 + $0x2c] sm:$0xf]
    %v11443 = vld [vmem:[#allocation4 + $0x30] sm:$0xf]
    %v11444 = vld [vmem:[#allocation4 + $0x34] sm:$0xf]
    %v11445 = vld [vmem:[#allocation4 + $0x38] sm:$0xf]
    %v11446 = vld [vmem:[#allocation4 + $0x3c] sm:$0xf]
    %v11447 = vld [vmem:[#allocation4 + $0x40] sm:$0xf]
    %v11448 = vld [vmem:[#allocation4 + $0x44] sm:$0xf]
    %v11449 = vld [vmem:[#allocation4 + $0x48] sm:$0xf]
    %v11450 = vld [vmem:[#allocation4 + $0x4c] sm:$0xf]
    %v11451 = vld [vmem:[#allocation4 + $0x50] sm:$0xf]
    %v11452 = vld [vmem:[#allocation4 + $0x54] sm:$0xf]
    %v11453 = vld [vmem:[#allocation4 + $0x58] sm:$0xf]
    %v11454 = vld [vmem:[#allocation4 + $0x5c] sm:$0xf]
    %v11455 = vld [vmem:[#allocation4 + $0x60] sm:$0xf]
    %v11456 = vld [vmem:[#allocation4 + $0x64] sm:$0xf]
    %v11457 = vld [vmem:[#allocation4 + $0x68] sm:$0xf]
    %v11458 = vld [vmem:[#allocation4 + $0x6c] sm:$0xf]
    %v11459 = vld [vmem:[#allocation4 + $0x70] sm:$0xf]
    %v11460 = vld [vmem:[#allocation4 + $0x74] sm:$0xf]
    %v11461 = vld [vmem:[#allocation4 + $0x78] sm:$0xf]
    %v11462 = vld [vmem:[#allocation4 + $0x7c] sm:$0xf]
    %v11463 = vld [vmem:[#allocation4 + $0x80] sm:$0xf]
    %v11464 = vld [vmem:[#allocation4 + $0x84] sm:$0xf]
    %v11465 = vld [vmem:[#allocation4 + $0x88] sm:$0xf]
    %v11466 = vld [vmem:[#allocation4 + $0x8c] sm:$0xf]
    %v11467 = vld [vmem:[#allocation4 + $0x90] sm:$0xf]
    %v11468 = vld [vmem:[#allocation4 + $0x94] sm:$0xf]
    %v11469 = vld [vmem:[#allocation4 + $0x98] sm:$0xf]
    %v11470 = vld [vmem:[#allocation4 + $0x9c] sm:$0xf]
    %v11471 = vld [vmem:[#allocation4 + $0xa0] sm:$0xf]
    %v11472 = vld [vmem:[#allocation4 + $0xa4] sm:$0xf]
    %v11473 = vld [vmem:[#allocation4 + $0xa8] sm:$0xf]
    %v11474 = vld [vmem:[#allocation4 + $0xac] sm:$0xf]
    %v11475 = vld [vmem:[#allocation4 + $0xb0] sm:$0xf]
    %v11476 = vld [vmem:[#allocation4 + $0xb4] sm:$0xf]
    %v11477 = vld [vmem:[#allocation4 + $0xb8] sm:$0xf]
    %v11478 = vld [vmem:[#allocation4 + $0xbc] sm:$0xf]
    %v11479 = vld [vmem:[#allocation13] sm:$0x1]
    %v11481 = vlaneseq
    %v11482 = vshrl.u32 %v11481, 7
    %v11483 = vsub.s32 0, %v11482
    %v11484 = vrot.slane %v11479, %v11483
    %v11534 = vunpack.c.l.b16 %v11431
    %v11535 = vunpack.c.l.b16 %v11432
    %v11536 = vunpack.c.l.b16 %v11433
    %v11537 = vunpack.c.l.b16 %v11434
    %v11538 = vunpack.c.l.b16 %v11435
    %v11539 = vunpack.c.l.b16 %v11436
    %v11540 = vunpack.c.l.b16 %v11437
    %v11541 = vunpack.c.l.b16 %v11438
    %v11542 = vunpack.c.l.b16 %v11439
    %v11543 = vunpack.c.l.b16 %v11440
    %v11544 = vunpack.c.l.b16 %v11441
    %v11545 = vunpack.c.l.b16 %v11442
    %v11546 = vunpack.c.l.b16 %v11443
    %v11547 = vunpack.c.l.b16 %v11444
    %v11548 = vunpack.c.l.b16 %v11445
    %v11549 = vunpack.c.l.b16 %v11446
    %v11550 = vunpack.c.l.b16 %v11447
    %v11551 = vunpack.c.l.b16 %v11448
    %v11552 = vunpack.c.l.b16 %v11449
    %v11553 = vunpack.c.l.b16 %v11450
    %v11554 = vunpack.c.l.b16 %v11451
    %v11555 = vunpack.c.l.b16 %v11452
    %v11556 = vunpack.c.l.b16 %v11453
    %v11557 = vunpack.c.l.b16 %v11454
    %v11558 = vunpack.c.l.b16 %v11455
    %v11559 = vunpack.c.l.b16 %v11456
    %v11560 = vunpack.c.l.b16 %v11457
    %v11561 = vunpack.c.l.b16 %v11458
    %v11562 = vunpack.c.l.b16 %v11459
    %v11563 = vunpack.c.l.b16 %v11460
    %v11564 = vunpack.c.l.b16 %v11461
    %v11565 = vunpack.c.l.b16 %v11462
    %v11566 = vunpack.c.l.b16 %v11463
    %v11567 = vunpack.c.l.b16 %v11464
    %v11568 = vunpack.c.l.b16 %v11465
    %v11569 = vunpack.c.l.b16 %v11466
    %v11570 = vunpack.c.l.b16 %v11467
    %v11571 = vunpack.c.l.b16 %v11468
    %v11572 = vunpack.c.l.b16 %v11469
    %v11573 = vunpack.c.l.b16 %v11470
    %v11574 = vunpack.c.l.b16 %v11471
    %v11575 = vunpack.c.l.b16 %v11472
    %v11576 = vunpack.c.l.b16 %v11473
    %v11577 = vunpack.c.l.b16 %v11474
    %v11578 = vunpack.c.l.b16 %v11475
    %v11579 = vunpack.c.l.b16 %v11476
    %v11580 = vunpack.c.l.b16 %v11477
    %v11581 = vunpack.c.l.b16 %v11478
    %v11582 = vpack.c.b16 %v11535, %v11534
    %v11583 = vpack.c.b16 %v11537, %v11536
    %v11584 = vpack.c.b16 %v11539, %v11538
    %v11585 = vpack.c.b16 %v11541, %v11540
    %v11586 = vpack.c.b16 %v11543, %v11542
    %v11587 = vpack.c.b16 %v11545, %v11544
    %v11588 = vpack.c.b16 %v11547, %v11546
    %v11589 = vpack.c.b16 %v11549, %v11548
    %v11590 = vpack.c.b16 %v11551, %v11550
    %v11591 = vpack.c.b16 %v11553, %v11552
    %v11592 = vpack.c.b16 %v11555, %v11554
    %v11593 = vpack.c.b16 %v11557, %v11556
    %v11594 = vpack.c.b16 %v11559, %v11558
    %v11595 = vpack.c.b16 %v11561, %v11560
    %v11596 = vpack.c.b16 %v11563, %v11562
    %v11597 = vpack.c.b16 %v11565, %v11564
    %v11598 = vpack.c.b16 %v11567, %v11566
    %v11599 = vpack.c.b16 %v11569, %v11568
    %v11600 = vpack.c.b16 %v11571, %v11570
    %v11601 = vpack.c.b16 %v11573, %v11572
    %v11602 = vpack.c.b16 %v11575, %v11574
    %v11603 = vpack.c.b16 %v11577, %v11576
    %v11604 = vpack.c.b16 %v11579, %v11578
    %v11605 = vpack.c.b16 %v11581, %v11580
    %11630 = vmatprep.subr.bf16.mxu0 0
    %11631 = vmatpush1.bf16.msra.mxu0 %v11589
    %11632 = vmatprep.subr.bf16.mxu0 0
    %11633 = vmatpush1.bf16.msra.mxu0 %v11588
    %11634 = vmatprep.subr.bf16.mxu0 0
    %11635 = vmatpush1.bf16.msra.mxu0 %v11587
    %11636 = vmatprep.subr.bf16.mxu0 0
    %11637 = vmatpush1.bf16.msra.mxu0 %v11586
    %11638 = vmatprep.subr.bf16.mxu0 0
    %11639 = vmatpush1.bf16.msra.mxu0 %v11585
    %11640 = vmatprep.subr.bf16.mxu0 0
    %11641 = vmatpush1.bf16.msra.mxu0 %v11584
    %11642 = vmatprep.subr.bf16.mxu0 0
    %11643 = vmatpush1.bf16.msra.mxu0 %v11583
    %11644 = vmatprep.subr.bf16.mxu0 0
    %11645 = vmatpush1.bf16.msra.mxu0 %v11582
    %11646 = vmatprep.subr.bf16.mxu0 0
    %11647 = vmatpush2.bf16.msra.mxu0 %v11597
    %11648 = vmatprep.subr.bf16.mxu0 0
    %11649 = vmatpush2.bf16.msra.mxu0 %v11596
    %11650 = vmatprep.subr.bf16.mxu0 0
    %11651 = vmatpush2.bf16.msra.mxu0 %v11595
    %11652 = vmatprep.subr.bf16.mxu0 0
    %11653 = vmatpush2.bf16.msra.mxu0 %v11594
    %11654 = vmatprep.subr.bf16.mxu0 0
    %11655 = vmatpush2.bf16.msra.mxu0 %v11593
    %11656 = vmatprep.subr.bf16.mxu0 0
    %11657 = vmatpush2.bf16.msra.mxu0 %v11592
    %11658 = vmatprep.subr.bf16.mxu0 0
    %11659 = vmatpush2.bf16.msra.mxu0 %v11591
    %11660 = vmatprep.subr.bf16.mxu0 0
    %11661 = vmatpush2.bf16.msra.mxu0 %v11590
    %11662 = vmatprep.mubr.bf16.mxu0 %v11429
    %11663 = vmatmul.mubr.bf16.gmra.mxu0 %v11428
    %v11664 = vpop.f32.mrf.mxu0
    %v11665 = vadd.f32 %v11484, %v11664
    %v11666 = vpop.f32.mrf.mxu0
    %v11667 = vpop.f32.mrf.mxu0
    %v11668 = vpop.f32.mrf.mxu0
    %11669 = vdwg.mxu0
    %11670 = vmatprep.subr.bf16.mxu0 0
    %11671 = vmatpush1.bf16.msra.mxu0 %v11605
    %11672 = vmatprep.subr.bf16.mxu0 0
    %11673 = vmatpush1.bf16.msra.mxu0 %v11604
    %11674 = vmatprep.subr.bf16.mxu0 0
    %11675 = vmatpush1.bf16.msra.mxu0 %v11603
    %11676 = vmatprep.subr.bf16.mxu0 0
    %11677 = vmatpush1.bf16.msra.mxu0 %v11602
    %11678 = vmatprep.subr.bf16.mxu0 0
    %11679 = vmatpush1.bf16.msra.mxu0 %v11601
    %11680 = vmatprep.subr.bf16.mxu0 0
    %11681 = vmatpush1.bf16.msra.mxu0 %v11600
    %11682 = vmatprep.subr.bf16.mxu0 0
    %11683 = vmatpush1.bf16.msra.mxu0 %v11599
    %11684 = vmatprep.subr.bf16.mxu0 0
    %11685 = vmatpush1.bf16.msra.mxu0 %v11598
    %11686 = vmatprep.subr.bf16.mxu0 0
    %11687 = vmatpush2.bf16.msra.mxu0 0
    %11688 = vmatprep.subr.bf16.mxu0 0
    %11689 = vmatpush2.bf16.msra.mxu0 0
    %11690 = vmatprep.subr.bf16.mxu0 0
    %11691 = vmatpush2.bf16.msra.mxu0 0
    %11692 = vmatprep.subr.bf16.mxu0 0
    %11693 = vmatpush2.bf16.msra.mxu0 0
    %11694 = vmatprep.subr.bf16.mxu0 0
    %11695 = vmatpush2.bf16.msra.mxu0 0
    %11696 = vmatprep.subr.bf16.mxu0 0
    %11697 = vmatpush2.bf16.msra.mxu0 0
    %11698 = vmatprep.subr.bf16.mxu0 0
    %11699 = vmatpush2.bf16.msra.mxu0 0
    %11700 = vmatprep.subr.bf16.mxu0 0
    %11701 = vmatpush2.bf16.msra.mxu0 0
    %11702 = vmatprep.mubr.bf16.mxu0 0
    %11703 = vmatmul.mubr.bf16.gmra.mxu0 %v11430
    %v11704 = vpop.f32.mrf.mxu0
    %v11705 = vadd.f32 %v11665, %v11704
    %v11706 = vpop.f32.mrf.mxu0
    %v11707 = vpop.f32.mrf.mxu0
    %v11708 = vpop.f32.mrf.mxu0
    %11709 = vdwg.mxu0
    %v11710 = vxor.u32 %v11705, 2147483648
    %v11711 = vmul.f32 %v11710, 1.442695
    %v11712 = vpow.pop %v11711
    %v11713 = vadd.f32 %v11712, 1.0
    %v11714 = vrcp.pop %v11713
    %v11715 = vmul.f32 1.0, %v11714
    %s11716 = smul.u32 4, 16
    %s11717 = smul.u32 %s11716, 1
    %s11718 = sshll.u32 %s11717, 4
    %11719 = dma.done %s111, %s11718
    %v11720 = vpack.c.bf16 %v11715, %v11715
    %v11721 = vld [vmem:[#allocation5] sm:$0xf]
    %v11722 = vld [vmem:[#allocation5 + $0x4] sm:$0xf]
    %v11723 = vld [vmem:[#allocation5 + $0x8] sm:$0xf]
    %v11724 = vld [vmem:[#allocation5 + $0xc] sm:$0xf]
    %v11725 = vld [vmem:[#allocation5 + $0x10] sm:$0xf]
    %v11726 = vld [vmem:[#allocation5 + $0x14] sm:$0xf]
    %v11727 = vld [vmem:[#allocation5 + $0x18] sm:$0xf]
    %v11728 = vld [vmem:[#allocation5 + $0x1c] sm:$0xf]
    %v11729 = vld [vmem:[#allocation5 + $0x20] sm:$0xf]
    %v11730 = vld [vmem:[#allocation5 + $0x24] sm:$0xf]
    %v11731 = vld [vmem:[#allocation5 + $0x28] sm:$0xf]
    %v11732 = vld [vmem:[#allocation5 + $0x2c] sm:$0xf]
    %v11733 = vld [vmem:[#allocation5 + $0x30] sm:$0xf]
    %v11734 = vld [vmem:[#allocation5 + $0x34] sm:$0xf]
    %v11735 = vld [vmem:[#allocation5 + $0x38] sm:$0xf]
    %v11736 = vld [vmem:[#allocation5 + $0x3c] sm:$0xf]
    %v11737 = vld [vmem:[#allocation15] sm:$0x1]
    %v11739 = vlaneseq
    %v11740 = vshrl.u32 %v11739, 7
    %v11741 = vsub.s32 0, %v11740
    %v11742 = vrot.slane %v11737, %v11741
    %v11760 = vunpack.c.l.b16 %v11721
    %v11761 = vunpack.c.l.b16 %v11722
    %v11762 = vunpack.c.l.b16 %v11723
    %v11763 = vunpack.c.l.b16 %v11724
    %v11764 = vunpack.c.l.b16 %v11725
    %v11765 = vunpack.c.l.b16 %v11726
    %v11766 = vunpack.c.l.b16 %v11727
    %v11767 = vunpack.c.l.b16 %v11728
    %v11768 = vunpack.c.l.b16 %v11729
    %v11769 = vunpack.c.l.b16 %v11730
    %v11770 = vunpack.c.l.b16 %v11731
    %v11771 = vunpack.c.l.b16 %v11732
    %v11772 = vunpack.c.l.b16 %v11733
    %v11773 = vunpack.c.l.b16 %v11734
    %v11774 = vunpack.c.l.b16 %v11735
    %v11775 = vunpack.c.l.b16 %v11736
    %v11776 = vpack.c.b16 %v11761, %v11760
    %v11777 = vpack.c.b16 %v11763, %v11762
    %v11778 = vpack.c.b16 %v11765, %v11764
    %v11779 = vpack.c.b16 %v11767, %v11766
    %v11780 = vpack.c.b16 %v11769, %v11768
    %v11781 = vpack.c.b16 %v11771, %v11770
    %v11782 = vpack.c.b16 %v11773, %v11772
    %v11783 = vpack.c.b16 %v11775, %v11774
    %11792 = vmatprep.subr.bf16.mxu0 0
    %11793 = vmatpush1.bf16.msra.mxu0 %v11783
    %11794 = vmatprep.subr.bf16.mxu0 0
    %11795 = vmatpush1.bf16.msra.mxu0 %v11782
    %11796 = vmatprep.subr.bf16.mxu0 0
    %11797 = vmatpush1.bf16.msra.mxu0 %v11781
    %11798 = vmatprep.subr.bf16.mxu0 0
    %11799 = vmatpush1.bf16.msra.mxu0 %v11780
    %11800 = vmatprep.subr.bf16.mxu0 0
    %11801 = vmatpush1.bf16.msra.mxu0 %v11779
    %11802 = vmatprep.subr.bf16.mxu0 0
    %11803 = vmatpush1.bf16.msra.mxu0 %v11778
    %11804 = vmatprep.subr.bf16.mxu0 0
    %11805 = vmatpush1.bf16.msra.mxu0 %v11777
    %11806 = vmatprep.subr.bf16.mxu0 0
    %11807 = vmatpush1.bf16.msra.mxu0 %v11776
    %11808 = vmatprep.subr.bf16.mxu0 0
    %11809 = vmatpush2.bf16.msra.mxu0 0
    %11810 = vmatprep.subr.bf16.mxu0 0
    %11811 = vmatpush2.bf16.msra.mxu0 0
    %11812 = vmatprep.subr.bf16.mxu0 0
    %11813 = vmatpush2.bf16.msra.mxu0 0
    %11814 = vmatprep.subr.bf16.mxu0 0
    %11815 = vmatpush2.bf16.msra.mxu0 0
    %11816 = vmatprep.subr.bf16.mxu0 0
    %11817 = vmatpush2.bf16.msra.mxu0 0
    %11818 = vmatprep.subr.bf16.mxu0 0
    %11819 = vmatpush2.bf16.msra.mxu0 0
    %11820 = vmatprep.subr.bf16.mxu0 0
    %11821 = vmatpush2.bf16.msra.mxu0 0
    %11822 = vmatprep.subr.bf16.mxu0 0
    %11823 = vmatpush2.bf16.msra.mxu0 0
    %11824 = vmatprep.mubr.bf16.mxu0 0
    %11825 = vmatmul.mubr.bf16.gmra.mxu0 %v11720
    %v11826 = vpop.f32.mrf.mxu0
    %v11827 = vadd.f32 %v11742, %v11826
    %v11828 = vpop.f32.mrf.mxu0
    %v11829 = vpop.f32.mrf.mxu0
    %v11830 = vpop.f32.mrf.mxu0
    %11831 = vdwg.mxu0
    %v11832 = vxor.u32 %v11827, 2147483648
    %v11833 = vmul.f32 %v11832, 1.442695
    %v11834 = vpow.pop %v11833
    %v11835 = vadd.f32 %v11834, 1.0
    %v11836 = vrcp.pop %v11835
    %v11837 = vmul.f32 1.0, %v11836
    %v11838 = vlaneseq
    %v11839 = vand.u32 %v11838, 127
    %vm11840 = vcmp.lt.s32.totalorder %v11839, 4
    %v11841 = vsel %vm11840, %v11837, -inf
    %11842 = vmax.xlane.f32.xlu0 %v11841
    %v11843 = vpop.xlane.xlu0 %11842
    %v11844 = vsub.f32 %v11837, %v11843
    %v11845 = vmul.f32 %v11844, 1.442695
    %v11846 = vpow.pop %v11845
    %v11847 = vsel %vm11840, %v11846, 0.0
    %11848 = vadd.xlane.f32.xlu0 %v11847
    %v11849 = vpop.xlane.xlu0 %11848
    %v11850 = vlog2.pop %v11849
    %v11851 = vmul.f32 %v11850, 0.6931472
    %v11852 = vadd.f32 %v11851, %v11843
    %v11853 = vsub.f32 %v11837, %v11852
    %v11854 = vsel %vm11840, %v11853, 0.0
    %11855 = vst [vmem:[#allocation16] sm:$0xff] %v11854
    // Predicated region
    $region54: #{tpu_custom_call.1} parent=1 // pred_check
      _
    $region55: #{tpu_custom_call.1} parent=1 // pred_check_branch
      %11857 = sbr.rel (0) target = $region57
    $region56: #{tpu_custom_call.1} parent=1 // pred_region
      %s11859 = ssub.s32 128, 128
      %11860 = vsyncadd [#allocation9], %s11859
      %s11862 = sshll.u32 [#allocation16], 4
      %s11863 = int_to_ptr.vmem [resolvable:$true] %s11862
      %11865 = dma.vmem_to_hbm [thread:$0]  %s11863, 128, %s8, [#allocation9]
    $region57: #{tpu_custom_call.1} parent=1 // pred_fallthru
      _
    // Predicated region
    $region58: #{tpu_custom_call.1} parent=1 // pred_check
      _
    $region59: #{tpu_custom_call.1} parent=1 // pred_check_branch
      %11867 = sbr.rel (0) target = $region61
    $region60: #{tpu_custom_call.1} parent=1 // pred_region
      %11868 = dma.done [#allocation9], 128
    $region61: #{tpu_custom_call.1} parent=1 // pred_fallthru
      _
    %11869 = vsyncpa [#allocation8], 1
    %11870 = vsyncpa [#allocation11], 1
    %11871 = vsyncpa [#allocation14], 1
    %11872 = vsyncpa [#allocation9], 1
  %11873 = vsyncmov [#allocation6]
  %s11874 = vpop.sfrf %11873
  %p11875 = scmp.eq.s32.totalorder %s11874, 0
  %p11876 = pneg %p11875
  %11878 = shalt.err (%p11876)
  %s11879 = scalar_lea.sflag [#allocation6], 1
  %11880 = vsyncmov %s11879
  %s11881 = vpop.sfrf %11880
  %p11882 = scmp.eq.s32.totalorder %s11881, 0
  %p11883 = pneg %p11882
  %11885 = shalt.err (%p11883)
  %s11886 = scalar_lea.sflag [#allocation6], 2
  %11887 = vsyncmov %s11886
  %s11888 = vpop.sfrf %11887
  %p11889 = scmp.eq.s32.totalorder %s11888, 0
  %p11890 = pneg %p11889
  %11892 = shalt.err (%p11890)

</llo_original>
